<compile_context>
chip_gen: v5e
topology: v5e:2x2
jax: 0.10.0
libtpu: 0.0.40
codegen_flags: <defaults>
</compile_context>

<pallas_src>
import jax
import jax.numpy as jnp
from jax.experimental import pallas as pl
from jax.experimental.pallas import tpu as pltpu


# ---------------------------------------------------------------------------
# Tile-size helpers
# ---------------------------------------------------------------------------

def _map_tile(total, target):
    """Tile for a pure-map axis: full extent if small, else a multiple of 128
    (ragged last tile is safe: OOB reads are only fed to masked OOB stores)."""
    if total <= target:
        return total
    return max((target // 128) * 128, 128)


def _exact_tile(total, target):
    """Tile that exactly divides `total` (required when the kernel REDUCES over
    the tile -- a ragged tile would sum garbage). Multiple of 128 when possible."""
    if total <= target:
        return total
    t = (target // 128) * 128
    while t >= 128:
        if total % t == 0:
            return t
        t -= 128
    return total  # fallback: single block


# ---------------------------------------------------------------------------
# Pallas kernels
# ---------------------------------------------------------------------------

def pallas_d1_pointwise(x_b1hw, w3, b3):
    """d1 branch: out[b, c, p] = x[b, 0, p] * w_eff[c] + bias[c].

    The K=3 matmul of the original 1x1 conv (on 3 identical channels) is folded
    into w_eff, so this is a pure VPU broadcast/FMA. Output is produced directly
    in NCHW-flat layout (pixels on lanes). Tiled over (B, HW) and fully parallel.
    """
    B, _, HW = x_b1hw.shape
    Cout = w3.shape[1]
    thw = _map_tile(HW, 8192)
    grid = (B, pl.cdiv(HW, thw))

    def kernel(x_ref, w_ref, b_ref, o_ref):
        # (1,1,thw) * (1,Cout,1) + (1,Cout,1) -> (1,Cout,thw)
        o_ref[...] = x_ref[...] * w_ref[...] + b_ref[...]

    return pl.pallas_call(
        kernel,
        out_shape=jax.ShapeDtypeStruct((B, Cout, HW), jnp.float32),
        grid=grid,
        in_specs=[
            pl.BlockSpec((1, 1, thw), lambda b, t: (b, 0, t)),
            pl.BlockSpec((1, Cout, 1), lambda b, t: (0, 0, 0)),
            pl.BlockSpec((1, Cout, 1), lambda b, t: (0, 0, 0)),
        ],
        out_specs=pl.BlockSpec((1, Cout, thw), lambda b, t: (b, 0, t)),
        compiler_params=pltpu.CompilerParams(
            dimension_semantics=("parallel", "parallel")),
    )(x_b1hw, w3, b3)


def pallas_stem_conv(patches_cm, w_t, bias, n_pix):
    """Stem 7x7/s2 conv + folded BN + ReLU, channel-major.

    patches_cm: (B, K=56, P) bf16 im2col patches, taps on sublanes, PIXELS on lanes.
    w_t:        (64, 56) bf16 (BN-folded, channel-repeat-summed, K-padded).
    bias:       (64, 1)  f32.
    Output:     (B, 64, P) f32 -- NCHW-flat, lane-dense stores (P-tile multiple of 128).
    """
    B, K, P = patches_cm.shape
    Cout = w_t.shape[0]
    tp = _map_tile(n_pix, 4096)
    grid = (B, pl.cdiv(n_pix, tp))

    def kernel(p_ref, w_ref, b_ref, o_ref):
        acc = jnp.dot(w_ref[...], p_ref[0],
                      preferred_element_type=jnp.float32)      # (Cout, tp) f32
        o_ref[0] = jnp.maximum(acc + b_ref[...], 0.0)

    return pl.pallas_call(
        kernel,
        out_shape=jax.ShapeDtypeStruct((B, Cout, P), jnp.float32),
        grid=grid,
        in_specs=[
            pl.BlockSpec((1, K, tp), lambda b, t: (b, 0, t)),
            pl.BlockSpec((Cout, K), lambda b, t: (0, 0)),
            pl.BlockSpec((Cout, 1), lambda b, t: (0, 0)),
        ],
        out_specs=pl.BlockSpec((1, Cout, tp), lambda b, t: (b, 0, t)),
        compiler_params=pltpu.CompilerParams(
            dimension_semantics=("parallel", "parallel")),
    )(patches_cm, w_t, bias)


def pallas_classifier_tail(pooled_cm, proj_wt, proj_b, cls_w, cls_b):
    """Fused stand-in densenet tail + classifier, channel-major, streaming.

    Per (batch, pixel-tile) grid step:
        feat = relu(proj_wT(1920,64) @ pooled_tile(64,TP))      (MXU, bf16 operands)
        acc(1920,1) += sum_lanes(feat)                           (XLU, VMEM scratch)
    At the last tile of each batch:
        gap    = acc / P2
        logits = sum_sublanes(gap * cls_w(1920,3)) + cls_b       -> (1, 3)
    No (M2,1920) feat ever hits HBM; GAP needs no dense averaging matrix.
    """
    B, C, P2 = pooled_cm.shape
    Fd = proj_wt.shape[0]
    O = cls_w.shape[1]
    tp2 = _exact_tile(P2, 1024)          # must divide P2: we sum over the tile
    nt = P2 // tp2
    inv_p2 = 1.0 / float(P2)

    def kernel(p_ref, pw_ref, pb_ref, cw_ref, cb_ref, o_ref, acc_ref):
        t = pl.program_id(1)

        @pl.when(t == 0)
        def _():
            acc_ref[...] = jnp.zeros_like(acc_ref)

        x = p_ref[0].astype(jnp.bfloat16)                         # (64, tp2)
        feat = jnp.dot(pw_ref[...], x,
                       preferred_element_type=jnp.float32)        # (Fd, tp2) f32
        feat = jnp.maximum(feat + pb_ref[...], 0.0)
        acc_ref[...] += jnp.sum(feat, axis=1, keepdims=True)      # (Fd, 1)

        @pl.when(t == nt - 1)
        def _():
            gap = acc_ref[...] * inv_p2                           # (Fd, 1)
            logits = jnp.sum(gap * cw_ref[...], axis=0,
                             keepdims=True) + cb_ref[...]         # (1, O)
            o_ref[0] = logits

    out = pl.pallas_call(
        kernel,
        out_shape=jax.ShapeDtypeStruct((B, 1, O), jnp.float32),
        grid=(B, nt),
        in_specs=[
            pl.BlockSpec((1, C, tp2), lambda b, t: (b, 0, t)),
            pl.BlockSpec((Fd, C), lambda b, t: (0, 0)),
            pl.BlockSpec((Fd, 1), lambda b, t: (0, 0)),
            pl.BlockSpec((Fd, O), lambda b, t: (0, 0)),
            pl.BlockSpec((1, O), lambda b, t: (0, 0)),
        ],
        out_specs=pl.BlockSpec((1, 1, O), lambda b, t: (b, 0, 0)),
        scratch_shapes=[pltpu.VMEM((Fd, 1), jnp.float32)],
        compiler_params=pltpu.CompilerParams(
            dimension_semantics=("parallel", "arbitrary")),
    )(pooled_cm, proj_wt, proj_b, cls_w, cls_b)
    return out.reshape(B, O)


# ---------------------------------------------------------------------------
# JAX glue (layout plumbing only)
# ---------------------------------------------------------------------------

def _im2col_channel_major(x_bhw, kh, kw, stride, pad, k_pad):
    """Channel-major im2col for a SINGLE-channel image.

    Returns (B, k_pad, Ho*Wo) bf16: conv taps on sublanes, pixels on lanes, ready
    for the channel-major stem matmul (lane-dense output). bf16 halves the HBM
    traffic of this intermediate.
    TODO(synk): fully fold the 7x7/s2 patch build + 3x3/s2 maxpool into the stem
                Pallas kernel to remove this HBM intermediate entirely.
    """
    B, H, W = x_bhw.shape
    xp = jnp.pad(x_bhw, ((0, 0), (pad, pad), (pad, pad)))
    Hp, Wp = H + 2 * pad, W + 2 * pad
    Ho = (Hp - kh) // stride + 1
    Wo = (Wp - kw) // stride + 1
    taps = []
    for dh in range(kh):
        for dw in range(kw):
            sl = jax.lax.slice(
                xp, (0, dh, dw),
                (B, dh + (Ho - 1) * stride + 1, dw + (Wo - 1) * stride + 1),
                (1, stride, stride))                       # (B, Ho, Wo)
            taps.append(sl.reshape(B, 1, Ho * Wo))
    pt = jnp.concatenate(taps, axis=1)                     # (B, 49, Ho*Wo)
    if k_pad > kh * kw:
        pt = jnp.pad(pt, ((0, 0), (0, k_pad - kh * kw), (0, 0)))
    return pt.astype(jnp.bfloat16), Ho, Wo


# ---------------------------------------------------------------------------
# Parameters (deterministic synthetic init) + exact algebraic folds
# ---------------------------------------------------------------------------

def init_params(key):
    ks = jax.random.split(key, 9)
    n = lambda k, s, scale: jax.random.normal(k, s, jnp.float32) * scale
    eps = 1e-5

    # self.conv = Conv2d(3, 64, k=1, bias=True) -- weight as (Cin, Cout)
    d1_w = n(ks[0], (3, 64), 0.2)
    d1_b = n(ks[1], (64,), 0.05)
    # densenet201 stem: Conv2d(3, 64, k=7, s=2, p=3, bias=False), weight (taps, Cin, Cout)
    stem_w = n(ks[2], (49, 3, 64), 1.0 / jnp.sqrt(147.0))
    bn_gamma = 1.0 + n(ks[3], (64,), 0.05)
    bn_beta = n(ks[4], (64,), 0.05)
    # stand-in 1x1 projection to densenet201.classifier.in_features = 1920
    proj_w = n(ks[5], (64, 1920), 1.0 / jnp.sqrt(64.0))
    proj_b = n(ks[6], (1920,), 0.02)
    # replaced classifier: Linear(1920, 3)
    cls_w = n(ks[7], (1920, 3), 1.0 / jnp.sqrt(1920.0))
    cls_b = n(ks[8], (3,), 0.02)

    # --- exact algebraic folds (eval mode) ---
    # x.repeat(1,3,1,1) feeds 3 identical channels -> sum conv weights over Cin.
    d1_w_eff = d1_w.sum(axis=0)                              # (64,)
    # Eval-mode BN (running_mean=0, running_var=1 -- exact for this synthetic init;
    # substitute real running stats before reusing with a real checkpoint).
    bn_scale = bn_gamma / jnp.sqrt(1.0 + eps)
    stem_w_eff = stem_w.sum(axis=1) * bn_scale[None, :]      # (49, 64)
    stem_w_eff = jnp.pad(stem_w_eff, ((0, 7), (0, 0)))       # (56, 64): K mult-of-8

    return {
        "d1_w3": d1_w_eff.reshape(1, 64, 1),                 # f32
        "d1_b3": d1_b.reshape(1, 64, 1),                     # f32
        "stem_wT": stem_w_eff.T.astype(jnp.bfloat16),        # (64, 56) bf16 (MXU)
        "stem_b": bn_beta.reshape(64, 1),                    # (64, 1)  f32
        "proj_wT": proj_w.T.astype(jnp.bfloat16),            # (1920, 64) bf16 (MXU)
        "proj_b2": proj_b.reshape(1920, 1),                  # f32
        "cls_w": cls_w,                                      # (1920, 3) f32
        "cls_b2": cls_b.reshape(1, 3),                       # f32
    }


# ---------------------------------------------------------------------------
# Forward
# ---------------------------------------------------------------------------

def unet_chunk_forward(x, params):
    """x: (B, 1, H, W) NCHW float32 -> (class_out (B,3), d1 (B,64,H,W))."""
    B, C, H, W = x.shape
    assert C == 1, "UNet_Chunk's repeat(1,3,1,1) + 3-channel convs imply 1 input channel"
    HW = H * W

    # ---- d1 = Conv2d(3, 64, k=1)(x.repeat(1,3,1,1)) ----  (channel repeat folded)
    d1_flat = pallas_d1_pointwise(x.reshape(B, 1, HW),
                                  params["d1_w3"], params["d1_b3"])     # (B,64,HW) f32
    d1 = d1_flat.reshape(B, 64, H, W)

    # ---- class_out: densenet201 stem -> (stand-in features) -> GAP -> Linear ----
    patches, Ho, Wo = _im2col_channel_major(x.reshape(B, H, W), 7, 7, 2, 3, k_pad=56)
    stem = pallas_stem_conv(patches, params["stem_wT"], params["stem_b"],
                            Ho * Wo)                                    # (B,64,Ho*Wo) f32
    stem = stem.reshape(B, 64, Ho, Wo)                                  # NCHW, no transpose

    # 3x3/s2/p1 maxpool (densenet stem pool).
    # TODO(synk): fuse this maxpool into the stem kernel epilogue to avoid the
    #             HBM round trip of the full stem activation.
    pooled = jax.lax.reduce_window(
        stem, -jnp.inf, jax.lax.max,
        (1, 1, 3, 3), (1, 1, 2, 2),
        ((0, 0), (0, 0), (1, 1), (1, 1)))                               # (B,64,Hp,Wp)
    Hp, Wp = pooled.shape[2], pooled.shape[3]

    class_out = pallas_classifier_tail(
        pooled.reshape(B, 64, Hp * Wp),
        params["proj_wT"], params["proj_b2"], params["cls_w"], params["cls_b2"])

    return class_out, d1


# ---------------------------------------------------------------------------

if __name__ == "__main__":
    key = jax.random.PRNGKey(0)
    kx, kp = jax.random.split(key)

    x = jax.random.normal(kx, (2, 1, 16, 16), jnp.float32)   # NCHW, single channel
    params = init_params(kp)

    fwd = jax.jit(lambda xx: unet_chunk_forward(xx, params))
    class_out, d1 = fwd(x)
    jax.block_until_ready((class_out, d1))

    assert class_out.shape == (2, 3), class_out.shape
    assert d1.shape == (2, 64, 16, 16), d1.shape
    assert class_out.dtype == jnp.float32 and d1.dtype == jnp.float32
    print("KERNEL_OK")
</pallas_src>

<mosaic_0001>
module attributes {stable_mosaic.version = 11 : i64} {
  func.func @kernel(%arg0: i32, %arg1: i32, %arg2: memref<1x56x64xbf16, #tpu.memory_space<vmem>>, %arg3: memref<64x56xbf16, #tpu.memory_space<vmem>>, %arg4: memref<64x1xf32, #tpu.memory_space<vmem>>, %arg5: memref<1x64x64xf32, #tpu.memory_space<vmem>>) attributes {dimension_semantics = [#tpu.dimension_semantics<parallel>, #tpu.dimension_semantics<parallel>], iteration_bounds = array<i64: 2, 1>, scalar_prefetch = 0 : i64, scratch_operands = 0 : i64, tpu.core_type = #tpu.core_type<tc>, window_params = [{transform_indices = @transform_0, window_bounds = array<i64: 1, 56, 64>}, {pipeline_mode = #tpu.pipeline_mode<synchronous>, transform_indices = @transform_1, window_bounds = array<i64: 64, 56>}, {pipeline_mode = #tpu.pipeline_mode<synchronous>, transform_indices = @transform_2, window_bounds = array<i64: 64, 1>}, {transform_indices = @transform_3, window_bounds = array<i64: 1, 64, 64>}]} {
    %c0 = arith.constant 0 : index
    %c0_0 = arith.constant 0 : index
    %0 = vector.load %arg3[%c0, %c0_0] : memref<64x56xbf16, #tpu.memory_space<vmem>>, vector<64x56xbf16>
    %c0_1 = arith.constant 0 : index
    %c0_2 = arith.constant 0 : index
    %c0_3 = arith.constant 0 : index
    %1 = vector.load %arg2[%c0_1, %c0_2, %c0_3] : memref<1x56x64xbf16, #tpu.memory_space<vmem>>, vector<1x56x64xbf16>
    %2 = vector.shape_cast %1 : vector<1x56x64xbf16> to vector<56x64xbf16>
    %cst = arith.constant dense<0.000000e+00> : vector<64x64xf32>
    %3 = tpu.matmul %0, %2, %cst {dimension_numbers = #tpu.dot_dimension_numbers<[1], [0], [0], [1], [0, 0, 1, 1], [], []>} : vector<64x56xbf16>, vector<56x64xbf16>, vector<64x64xf32> -> vector<64x64xf32>
    %c0_4 = arith.constant 0 : index
    %c0_5 = arith.constant 0 : index
    %4 = vector.load %arg4[%c0_4, %c0_5] : memref<64x1xf32, #tpu.memory_space<vmem>>, vector<64x1xf32>
    %5 = vector.broadcast %4 : vector<64x1xf32> to vector<64x64xf32>
    %6 = arith.addf %3, %5 : vector<64x64xf32>
    %cst_6 = arith.constant 0.000000e+00 : f32
    %7 = vector.broadcast %cst_6 : f32 to vector<64x64xf32>
    %8 = arith.maximumf %6, %7 : vector<64x64xf32>
    %c0_7 = arith.constant 0 : index
    %c0_8 = arith.constant 0 : index
    %c0_9 = arith.constant 0 : index
    %9 = vector.load %arg5[%c0_7, %c0_8, %c0_9] : memref<1x64x64xf32, #tpu.memory_space<vmem>>, vector<1x64x64xf32>
    %10 = vector.shape_cast %9 : vector<1x64x64xf32> to vector<64x64xf32>
    %11 = vector.shape_cast %8 : vector<64x64xf32> to vector<1x64x64xf32>
    tpu.vector_store %arg5[%c0_7, %c0_8, %c0_9], %11 {strides = array<i32>} : memref<1x64x64xf32, #tpu.memory_space<vmem>>, vector<1x64x64xf32>,
    return
  }
  func.func @transform_0(%arg0: i32, %arg1: i32) -> (i32, i32, i32) {
    %c0_i32 = arith.constant 0 : i32
    %c0_i32_0 = arith.constant 0 : i32
    return %arg0, %c0_i32, %arg1 : i32, i32, i32
  }
  func.func @transform_1(%arg0: i32, %arg1: i32) -> (i32, i32) {
    %c0_i32 = arith.constant 0 : i32
    %c0_i32_0 = arith.constant 0 : i32
    %c0_i32_1 = arith.constant 0 : i32
    return %c0_i32, %c0_i32_0 : i32, i32
  }
  func.func @transform_2(%arg0: i32, %arg1: i32) -> (i32, i32) {
    %c0_i32 = arith.constant 0 : i32
    %c0_i32_0 = arith.constant 0 : i32
    %c0_i32_1 = arith.constant 0 : i32
    return %c0_i32, %c0_i32_0 : i32, i32
  }
  func.func @transform_3(%arg0: i32, %arg1: i32) -> (i32, i32, i32) {
    %c0_i32 = arith.constant 0 : i32
    %c0_i32_0 = arith.constant 0 : i32
    return %arg0, %c0_i32, %arg1 : i32, i32, i32
  }
}

module attributes {stable_mosaic.version = 11 : i64} {
  func.func @kernel(%arg0: i32, %arg1: i32, %arg2: memref<1x1x256xf32, #tpu.memory_space<vmem>>, %arg3: memref<1x64x1xf32, #tpu.memory_space<vmem>>, %arg4: memref<1x64x1xf32, #tpu.memory_space<vmem>>, %arg5: memref<1x64x256xf32, #tpu.memory_space<vmem>>) attributes {dimension_semantics = [#tpu.dimension_semantics<parallel>, #tpu.dimension_semantics<parallel>], iteration_bounds = array<i64: 2, 1>, scalar_prefetch = 0 : i64, scratch_operands = 0 : i64, tpu.core_type = #tpu.core_type<tc>, window_params = [{transform_indices = @transform_0, window_bounds = array<i64: 1, 1, 256>}, {pipeline_mode = #tpu.pipeline_mode<synchronous>, transform_indices = @transform_1, window_bounds = array<i64: 1, 64, 1>}, {pipeline_mode = #tpu.pipeline_mode<synchronous>, transform_indices = @transform_2, window_bounds = array<i64: 1, 64, 1>}, {transform_indices = @transform_3, window_bounds = array<i64: 1, 64, 256>}]} {
    %c0 = arith.constant 0 : index
    %c0_0 = arith.constant 0 : index
    %c0_1 = arith.constant 0 : index
    %0 = vector.load %arg2[%c0, %c0_0, %c0_1] : memref<1x1x256xf32, #tpu.memory_space<vmem>>, vector<1x1x256xf32>
    %c0_2 = arith.constant 0 : index
    %c0_3 = arith.constant 0 : index
    %c0_4 = arith.constant 0 : index
    %1 = vector.load %arg3[%c0_2, %c0_3, %c0_4] : memref<1x64x1xf32, #tpu.memory_space<vmem>>, vector<1x64x1xf32>
    %2 = vector.broadcast %0 : vector<1x1x256xf32> to vector<1x64x256xf32>
    %3 = vector.broadcast %1 : vector<1x64x1xf32> to vector<1x64x256xf32>
    %4 = arith.mulf %2, %3 : vector<1x64x256xf32>
    %c0_5 = arith.constant 0 : index
    %c0_6 = arith.constant 0 : index
    %c0_7 = arith.constant 0 : index
    %5 = vector.load %arg4[%c0_5, %c0_6, %c0_7] : memref<1x64x1xf32, #tpu.memory_space<vmem>>, vector<1x64x1xf32>
    %6 = vector.broadcast %5 : vector<1x64x1xf32> to vector<1x64x256xf32>
    %7 = arith.addf %4, %6 : vector<1x64x256xf32>
    %c0_8 = arith.constant 0 : index
    %c0_9 = arith.constant 0 : index
    %c0_10 = arith.constant 0 : index
    %8 = vector.load %arg5[%c0_8, %c0_9, %c0_10] : memref<1x64x256xf32, #tpu.memory_space<vmem>>, vector<1x64x256xf32>
    tpu.vector_store %arg5[%c0_8, %c0_9, %c0_10], %7 {strides = array<i32>} : memref<1x64x256xf32, #tpu.memory_space<vmem>>, vector<1x64x256xf32>,
    return
  }
  func.func @transform_0(%arg0: i32, %arg1: i32) -> (i32, i32, i32) {
    %c0_i32 = arith.constant 0 : i32
    %c0_i32_0 = arith.constant 0 : i32
    return %arg0, %c0_i32, %arg1 : i32, i32, i32
  }
  func.func @transform_1(%arg0: i32, %arg1: i32) -> (i32, i32, i32) {
    %c0_i32 = arith.constant 0 : i32
    %c0_i32_0 = arith.constant 0 : i32
    %c0_i32_1 = arith.constant 0 : i32
    %c0_i32_2 = arith.constant 0 : i32
    return %c0_i32, %c0_i32_0, %c0_i32_1 : i32, i32, i32
  }
  func.func @transform_2(%arg0: i32, %arg1: i32) -> (i32, i32, i32) {
    %c0_i32 = arith.constant 0 : i32
    %c0_i32_0 = arith.constant 0 : i32
    %c0_i32_1 = arith.constant 0 : i32
    %c0_i32_2 = arith.constant 0 : i32
    return %c0_i32, %c0_i32_0, %c0_i32_1 : i32, i32, i32
  }
  func.func @transform_3(%arg0: i32, %arg1: i32) -> (i32, i32, i32) {
    %c0_i32 = arith.constant 0 : i32
    %c0_i32_0 = arith.constant 0 : i32
    return %arg0, %c0_i32, %arg1 : i32, i32, i32
  }
}

module attributes {stable_mosaic.version = 11 : i64} {
  func.func @kernel(%arg0: i32, %arg1: i32, %arg2: memref<1x64x16xf32, #tpu.memory_space<vmem>>, %arg3: memref<1920x64xbf16, #tpu.memory_space<vmem>>, %arg4: memref<1920x1xf32, #tpu.memory_space<vmem>>, %arg5: memref<1920x3xf32, #tpu.memory_space<vmem>>, %arg6: memref<1x3xf32, #tpu.memory_space<vmem>>, %arg7: memref<1x1x3xf32, #tpu.memory_space<vmem>>, %arg8: memref<1920x1xf32, #tpu.memory_space<vmem>>) attributes {dimension_semantics = [#tpu.dimension_semantics<parallel>, #tpu.dimension_semantics<arbitrary>], iteration_bounds = array<i64: 2, 1>, scalar_prefetch = 0 : i64, scratch_operands = 1 : i64, tpu.core_type = #tpu.core_type<tc>, window_params = [{transform_indices = @transform_0, window_bounds = array<i64: 1, 64, 16>}, {pipeline_mode = #tpu.pipeline_mode<synchronous>, transform_indices = @transform_1, window_bounds = array<i64: 1920, 64>}, {pipeline_mode = #tpu.pipeline_mode<synchronous>, transform_indices = @transform_2, window_bounds = array<i64: 1920, 1>}, {pipeline_mode = #tpu.pipeline_mode<synchronous>, transform_indices = @transform_3, window_bounds = array<i64: 1920, 3>}, {pipeline_mode = #tpu.pipeline_mode<synchronous>, transform_indices = @transform_4, window_bounds = array<i64: 1, 3>}, {transform_indices = @transform_5, window_bounds = array<i64: 1, 1, 3>}]} {
    %c0_i32 = arith.constant 0 : i32
    %0 = arith.cmpi eq, %arg1, %c0_i32 : i32
    %1 = arith.extui %0 : i1 to i32
    %c0_i32_0 = arith.constant 0 : i32
    %2 = arith.cmpi ne, %1, %c0_i32_0 : i32
    scf.if %2 {
      %cst_15 = arith.constant 0.000000e+00 : f32
      %21 = vector.broadcast %cst_15 : f32 to vector<1920x1xf32>
      %c0_16 = arith.constant 0 : index
      %c0_17 = arith.constant 0 : index
      %22 = vector.load %arg8[%c0_16, %c0_17] : memref<1920x1xf32, #tpu.memory_space<vmem>>, vector<1920x1xf32>
      tpu.vector_store %arg8[%c0_16, %c0_17], %21 {strides = array<i32>} : memref<1920x1xf32, #tpu.memory_space<vmem>>, vector<1920x1xf32>,
    } else {
    }
    %c0 = arith.constant 0 : index
    %c0_1 = arith.constant 0 : index
    %c0_2 = arith.constant 0 : index
    %3 = vector.load %arg2[%c0, %c0_1, %c0_2] : memref<1x64x16xf32, #tpu.memory_space<vmem>>, vector<1x64x16xf32>
    %4 = vector.shape_cast %3 : vector<1x64x16xf32> to vector<64x16xf32>
    %5 = arith.truncf %4 : vector<64x16xf32> to vector<64x16xbf16>
    %c0_3 = arith.constant 0 : index
    %c0_4 = arith.constant 0 : index
    %6 = vector.load %arg3[%c0_3, %c0_4] : memref<1920x64xbf16, #tpu.memory_space<vmem>>, vector<1920x64xbf16>
    %cst = arith.constant dense<0.000000e+00> : vector<1920x16xf32>
    %7 = tpu.matmul %6, %5, %cst {dimension_numbers = #tpu.dot_dimension_numbers<[1], [0], [0], [1], [0, 0, 1, 1], [], []>} : vector<1920x64xbf16>, vector<64x16xbf16>, vector<1920x16xf32> -> vector<1920x16xf32>
    %c0_5 = arith.constant 0 : index
    %c0_6 = arith.constant 0 : index
    %8 = vector.load %arg4[%c0_5, %c0_6] : memref<1920x1xf32, #tpu.memory_space<vmem>>, vector<1920x1xf32>
    %9 = vector.broadcast %8 : vector<1920x1xf32> to vector<1920x16xf32>
    %10 = arith.addf %7, %9 : vector<1920x16xf32>
    %cst_7 = arith.constant 0.000000e+00 : f32
    %11 = vector.broadcast %cst_7 : f32 to vector<1920x16xf32>
    %12 = arith.maximumf %10, %11 : vector<1920x16xf32>
    %c0_8 = arith.constant 0 : index
    %c0_9 = arith.constant 0 : index
    %13 = vector.load %arg8[%c0_8, %c0_9] : memref<1920x1xf32, #tpu.memory_space<vmem>>, vector<1920x1xf32>
    %cst_10 = arith.constant dense<0.000000e+00> : vector<1920xf32>
    %14 = vector.multi_reduction <add>, %12, %cst_10 [1] : vector<1920x16xf32> to vector<1920xf32>
    %15 = vector.shape_cast %14 : vector<1920xf32> to vector<1920x1xf32>
    %16 = arith.addf %13, %15 : vector<1920x1xf32>
    %c0_11 = arith.constant 0 : index
    %c0_12 = arith.constant 0 : index
    %17 = vector.load %arg8[%c0_11, %c0_12] : memref<1920x1xf32, #tpu.memory_space<vmem>>, vector<1920x1xf32>
    tpu.vector_store %arg8[%c0_11, %c0_12], %16 {strides = array<i32>} : memref<1920x1xf32, #tpu.memory_space<vmem>>, vector<1920x1xf32>,
    %c0_i32_13 = arith.constant 0 : i32
    %18 = arith.cmpi eq, %arg1, %c0_i32_13 : i32
    %19 = arith.extui %18 : i1 to i32
    %c0_i32_14 = arith.constant 0 : i32
    %20 = arith.cmpi ne, %19, %c0_i32_14 : i32
    scf.if %20 {
      %c0_15 = arith.constant 0 : index
      %c0_16 = arith.constant 0 : index
      %21 = vector.load %arg8[%c0_15, %c0_16] : memref<1920x1xf32, #tpu.memory_space<vmem>>, vector<1920x1xf32>
      %cst_17 = arith.constant 6.250000e-02 : f32
      %22 = vector.broadcast %cst_17 : f32 to vector<1920x1xf32>
      %23 = arith.mulf %21, %22 : vector<1920x1xf32>
      %c0_18 = arith.constant 0 : index
      %c0_19 = arith.constant 0 : index
      %24 = vector.load %arg5[%c0_18, %c0_19] : memref<1920x3xf32, #tpu.memory_space<vmem>>, vector<1920x3xf32>
      %25 = vector.broadcast %23 : vector<1920x1xf32> to vector<1920x3xf32>
      %26 = arith.mulf %25, %24 : vector<1920x3xf32>
      %cst_20 = arith.constant dense<0.000000e+00> : vector<3xf32>
      %27 = vector.multi_reduction <add>, %26, %cst_20 [0] : vector<1920x3xf32> to vector<3xf32>
      %28 = vector.shape_cast %27 : vector<3xf32> to vector<1x3xf32>
      %c0_21 = arith.constant 0 : index
      %c0_22 = arith.constant 0 : index
      %29 = vector.load %arg6[%c0_21, %c0_22] : memref<1x3xf32, #tpu.memory_space<vmem>>, vector<1x3xf32>
      %30 = arith.addf %28, %29 : vector<1x3xf32>
      %c0_23 = arith.constant 0 : index
      %c0_24 = arith.constant 0 : index
      %c0_25 = arith.constant 0 : index
      %31 = vector.load %arg7[%c0_23, %c0_24, %c0_25] : memref<1x1x3xf32, #tpu.memory_space<vmem>>, vector<1x1x3xf32>
      %32 = vector.shape_cast %31 : vector<1x1x3xf32> to vector<1x3xf32>
      %33 = vector.shape_cast %30 : vector<1x3xf32> to vector<1x1x3xf32>
      tpu.vector_store %arg7[%c0_23, %c0_24, %c0_25], %33 {strides = array<i32>} : memref<1x1x3xf32, #tpu.memory_space<vmem>>, vector<1x1x3xf32>,
    } else {
    }
    return
  }
  func.func @transform_0(%arg0: i32, %arg1: i32) -> (i32, i32, i32) {
    %c0_i32 = arith.constant 0 : i32
    %c0_i32_0 = arith.constant 0 : i32
    return %arg0, %c0_i32, %arg1 : i32, i32, i32
  }
  func.func @transform_1(%arg0: i32, %arg1: i32) -> (i32, i32) {
    %c0_i32 = arith.constant 0 : i32
    %c0_i32_0 = arith.constant 0 : i32
    %c0_i32_1 = arith.constant 0 : i32
    return %c0_i32, %c0_i32_0 : i32, i32
  }
  func.func @transform_2(%arg0: i32, %arg1: i32) -> (i32, i32) {
    %c0_i32 = arith.constant 0 : i32
    %c0_i32_0 = arith.constant 0 : i32
    %c0_i32_1 = arith.constant 0 : i32
    return %c0_i32, %c0_i32_0 : i32, i32
  }
  func.func @transform_3(%arg0: i32, %arg1: i32) -> (i32, i32) {
    %c0_i32 = arith.constant 0 : i32
    %c0_i32_0 = arith.constant 0 : i32
    %c0_i32_1 = arith.constant 0 : i32
    return %c0_i32, %c0_i32_0 : i32, i32
  }
  func.func @transform_4(%arg0: i32, %arg1: i32) -> (i32, i32) {
    %c0_i32 = arith.constant 0 : i32
    %c0_i32_0 = arith.constant 0 : i32
    %c0_i32_1 = arith.constant 0 : i32
    return %c0_i32, %c0_i32_0 : i32, i32
  }
  func.func @transform_5(%arg0: i32, %arg1: i32) -> (i32, i32, i32) {
    %c0_i32 = arith.constant 0 : i32
    %c0_i32_0 = arith.constant 0 : i32
    %c0_i32_1 = arith.constant 0 : i32
    return %arg0, %c0_i32, %c0_i32_0 : i32, i32, i32
  }
}

</mosaic_0001>

<llo_original>
// kernel: _lambda_.4
$region0: #{_lambda_.4}
  #allocation0 [shape = 'u32[]', space=smem, size = 0x4, offset = 0x4, fixed_abs, tag = 'smem constant byte address 0x4 - core index']
  #allocation1 [shape = 'u32[72,128]{1,0:T(1,128)}', space=vmem, size = 0x9000, scoped, tag = 'internal scratch']
  %s0 = inlined_call_operand.vmem [shape: bf16[2,56,64], index: 0, kind: input, shape index: {}]
  %s1 = inlined_call_operand.hbm [shape: bf16[64,56], index: 1, kind: input, shape index: {}]
  %s2 = inlined_call_operand.hbm [shape: f32[64,1], index: 2, kind: input, shape index: {}]
  %s3 = inlined_call_operand.vmem [shape: f32[2,64,64], index: 3, kind: output, shape index: {}]
  %s4 = sld [smem:[#allocation0]]
  $region53: #{_lambda_.4} parent=0
    _
  %s6 = ssub.s32 1, %s4
  %s7 = scalar_select 0, %s6, %s4
  $region1: #{_lambda_.4} parent=0
    #allocation2 [shape = 'u8[16384]{0}', space=vmem, size = 0x4000, scoped, tag = 'input window, operand 1, single buffered']
    #allocation3 [shape = 's32[2]{0}', space=sflag, size = 0x8, scoped, tag = 'scoped memory for _lambda_.4']
    #allocation4 [shape = 'u8[32768]{0}', space=vmem, size = 0x8000, scoped, tag = 'input window, operand 2, single buffered']
    #allocation5 [shape = 's32[1]{0}', space=sflag, size = 0x4, scoped, tag = 'scoped memory for _lambda_.4']
    %8 = vsyncpa [#allocation3], 0
    %9 = vsyncpa [#allocation5], 0
    loop: start=0, step=1, limit=4
    $region2: #{_lambda_.4} parent=1 // loop_pre_header
      _
    $region3: #{_lambda_.4} parent=1 // loop_header
      %s11 = sphi 0, %s15
      %p12 = scmp.ge.s32.totalorder %s11, 4
      %s18 = sphi 0, %s30
      %s19 = sphi 0, %s26
      %s20 = sphi 0, %s18
      %s21 = sphi 0, %s19
      %s22 = sphi 0, %s20
      %s23 = sphi 0, %s21
      %s35 = sphi 0, %s37
      %s38 = sphi 0, %s35
      %s39 = sphi 0, %s38
      %s55 = sphi 0, %s39
      %s59 = sphi 0, %s59
      %s61 = sphi 0, %s59
      %s62 = sphi 0, %s61
      %s76 = sphi 0, %s62
      %s80 = sphi 0, %s80
      %s82 = sphi 0, %s80
      %s83 = sphi 0, %s82
      %s97 = sphi 0, %s83
      %s105 = sphi 0, %s107
      %s108 = sphi 0, %s105
      %s109 = sphi 0, %s108
      %s125 = sphi 0, %s109
    $region4: #{_lambda_.4} parent=1 // loop_header_branch
      %14 = sbr.rel (%p12) target = $region8
    $region5: #{_lambda_.4} parent=1 // loop_body
      %s16 = ssub.s32 %s11, 1
      %s17 = ssub.s32 %s11, 2
      %s24 = sadd.s32 1, %s19
      %p25 = scmp.ge.s32.totalorder %s24, 1
      %s26 = scalar_select %p25, 0, %s24
      %s27 = sadd.s32 1, %s18
      %s28 = scalar_select %p25, %s27, %s18
      %p29 = scmp.ge.s32.totalorder %s28, 2
      %s30 = scalar_select %p29, 0, %s28
      %s31 = ssub.s32 %s18, %s30
      %s32 = ssub.s32 %s19, %s26
      %s33 = sor.u32 %s31, %s32
      %p34 = scmp.eq.s32.totalorder %s33, 0
      %s36 = sadd.s32 %s35, 1
      %s37 = scalar_select %p34, %s35, %s36
      %p40 = pneg %p34
      %p41 = scmp.eq.s32.totalorder %s11, 1
      %p42 = por %p40, %p41
      %p43 = scmp.ne.s32.totalorder %s35, %s38
      %p44 = scmp.eq.s32.totalorder %s11, 0
      %p45 = por %p43, %p44
      %p46 = scmp.ne.s32.totalorder %s35, %s38
      %p47 = scmp.eq.s32.totalorder %s16, 1
      %p48 = por %p46, %p47
      %p49 = scmp.ne.s32.totalorder %s38, %s39
      %p50 = scmp.eq.s32.totalorder %s16, 0
      %p51 = por %p49, %p50
      %p52 = scmp.ne.s32.totalorder %s38, %s39
      %p53 = scmp.eq.s32.totalorder %s17, 1
      %p54 = por %p52, %p53
      %p56 = scmp.ne.s32.totalorder %s39, %s55
      %p57 = scmp.eq.s32.totalorder %s17, 0
      %p58 = por %p56, %p57
      %s60 = sadd.s32 %s59, 1
      %p63 = scmp.eq.s32.totalorder %s11, 1
      %p64 = scmp.ne.s32.totalorder %s59, %s61
      %p65 = scmp.eq.s32.totalorder %s11, 0
      %p66 = por %p64, %p65
      %p67 = scmp.ne.s32.totalorder %s59, %s61
      %p68 = scmp.eq.s32.totalorder %s16, 1
      %p69 = por %p67, %p68
      %p70 = scmp.ne.s32.totalorder %s61, %s62
      %p71 = scmp.eq.s32.totalorder %s16, 0
      %p72 = por %p70, %p71
      %p73 = scmp.ne.s32.totalorder %s61, %s62
      %p74 = scmp.eq.s32.totalorder %s17, 1
      %p75 = por %p73, %p74
      %p77 = scmp.ne.s32.totalorder %s62, %s76
      %p78 = scmp.eq.s32.totalorder %s17, 0
      %p79 = por %p77, %p78
      %s81 = sadd.s32 %s80, 1
      %p84 = scmp.eq.s32.totalorder %s11, 1
      %p85 = scmp.ne.s32.totalorder %s80, %s82
      %p86 = scmp.eq.s32.totalorder %s11, 0
      %p87 = por %p85, %p86
      %p88 = scmp.ne.s32.totalorder %s80, %s82
      %p89 = scmp.eq.s32.totalorder %s16, 1
      %p90 = por %p88, %p89
      %p91 = scmp.ne.s32.totalorder %s82, %s83
      %p92 = scmp.eq.s32.totalorder %s16, 0
      %p93 = por %p91, %p92
      %p94 = scmp.ne.s32.totalorder %s82, %s83
      %p95 = scmp.eq.s32.totalorder %s17, 1
      %p96 = por %p94, %p95
      %p98 = scmp.ne.s32.totalorder %s83, %s97
      %p99 = scmp.eq.s32.totalorder %s17, 0
      %p100 = por %p98, %p99
      %s101 = ssub.s32 %s18, %s30
      %s102 = ssub.s32 %s19, %s26
      %s103 = sor.u32 %s101, %s102
      %p104 = scmp.eq.s32.totalorder %s103, 0
      %s106 = sadd.s32 %s105, 1
      %s107 = scalar_select %p104, %s105, %s106
      %p110 = pneg %p104
      %p111 = scmp.eq.s32.totalorder %s11, 1
      %p112 = por %p110, %p111
      %p113 = scmp.ne.s32.totalorder %s105, %s108
      %p114 = scmp.eq.s32.totalorder %s11, 0
      %p115 = por %p113, %p114
      %p116 = scmp.ne.s32.totalorder %s105, %s108
      %p117 = scmp.eq.s32.totalorder %s16, 1
      %p118 = por %p116, %p117
      %p119 = scmp.ne.s32.totalorder %s108, %s109
      %p120 = scmp.eq.s32.totalorder %s16, 0
      %p121 = por %p119, %p120
      %p122 = scmp.ne.s32.totalorder %s108, %s109
      %p123 = scmp.eq.s32.totalorder %s17, 1
      %p124 = por %p122, %p123
      %p126 = scmp.ne.s32.totalorder %s109, %s125
      %p127 = scmp.eq.s32.totalorder %s17, 0
      %p128 = por %p126, %p127
      %p129 = scmp.le.s32.totalorder 1, %s11
      %p130 = scmp.lt.s32.totalorder %s11, 3
      %p131 = pnand %p129, %p130
      %p132 = pneg %p131
      // Predicated region
      $region9: #{_lambda_.4} parent=5 // pred_check
        _
      $region10: #{_lambda_.4} parent=5 // pred_check_branch
        %134 = sbr.rel (%p131) target = $region12
      $region11: #{_lambda_.4} parent=5 // pred_region
        %s135 = ssub.s32 %s11, 1
        // Predicated region
        $region13: #{_lambda_.4} parent=11 // pred_check
          %p136 = pneg %p72
        $region14: #{_lambda_.4} parent=11 // pred_check_branch
          %138 = sbr.rel (%p136) target = $region16
        $region15: #{_lambda_.4} parent=11 // pred_region
          %140 = vsyncadd [#allocation3], 0
          %s141 = sshll.u32 %s1, 4
          %s142 = int_to_ptr.hbm [resolvable:$true] %s141
          %s143 = sshll.u32 [#allocation2], 4
          %s144 = int_to_ptr.vmem [resolvable:$true] %s143
          %149 = dma.hbm_to_vmem [thread:$0]  %s142, 512, %s144, [#allocation3], 64, 64, 4
        $region16: #{_lambda_.4} parent=11 // pred_fallthru
          _
        // Predicated region
        $region17: #{_lambda_.4} parent=11 // pred_check
          %p150 = pneg %p93
        $region18: #{_lambda_.4} parent=11 // pred_check_branch
          %152 = sbr.rel (%p150) target = $region20
        $region19: #{_lambda_.4} parent=11 // pred_region
          %154 = vsyncadd [#allocation5], 0
          %s155 = sshll.u32 %s2, 4
          %s156 = int_to_ptr.hbm [resolvable:$true] %s155
          %s157 = sshll.u32 [#allocation4], 4
          %s158 = int_to_ptr.vmem [resolvable:$true] %s157
          %163 = dma.hbm_to_vmem [thread:$0]  %s156, 1024, %s158, [#allocation5], 128, 128, 8
        $region20: #{_lambda_.4} parent=11 // pred_fallthru
          _
      $region12: #{_lambda_.4} parent=5 // pred_fallthru
        _
      %p164 = scmp.lt.s32.totalorder %s11, 2
      // Predicated region
      $region21: #{_lambda_.4} parent=5 // pred_check
        %p165 = pneg %p164
      $region22: #{_lambda_.4} parent=5 // pred_check_branch
        %167 = sbr.rel (%p165) target = $region24
      $region23: #{_lambda_.4} parent=5 // pred_region
        // Predicated region
        $region25: #{_lambda_.4} parent=23 // pred_check
          %p168 = pneg %p45
        $region26: #{_lambda_.4} parent=23 // pred_check_branch
          %170 = sbr.rel (%p168) target = $region28
        $region27: #{_lambda_.4} parent=23 // pred_region
          %p171 = scmp.lt.s32.totalorder %s18, 1
          %s172 = scalar_select %p171, %s18, 1
          %p173 = scmp.lt.s32.totalorder %s19, 0
          %s174 = scalar_select %p173, %s19, 0
          %s175 = smul.addr %s172, 7
          %s176 = sadd.s32 %s174, %s175
          %s177 = smul.addr %s176, 4
          %s178 = scalar_lea.vmem %s0, %s177
        $region28: #{_lambda_.4} parent=23 // pred_fallthru
          _
      $region24: #{_lambda_.4} parent=5 // pred_fallthru
        _
      %p179 = scmp.le.s32.totalorder 1, %s11
      %p180 = scmp.lt.s32.totalorder %s11, 3
      %p181 = pnand %p179, %p180
      %p182 = pneg %p181
      // Predicated region
      $region29: #{_lambda_.4} parent=5 // pred_check
        _
      $region30: #{_lambda_.4} parent=5 // pred_check_branch
        %184 = sbr.rel (%p181) target = $region32
      $region31: #{_lambda_.4} parent=5 // pred_region
        %s185 = ssub.s32 %s11, 1
        // Predicated region
        $region33: #{_lambda_.4} parent=31 // pred_check
          %p186 = pneg %p72
        $region34: #{_lambda_.4} parent=31 // pred_check_branch
          %188 = sbr.rel (%p186) target = $region36
        $region35: #{_lambda_.4} parent=31 // pred_region
          %190 = dma.done [#allocation3], 512
        $region36: #{_lambda_.4} parent=31 // pred_fallthru
          _
        // Predicated region
        $region37: #{_lambda_.4} parent=31 // pred_check
          %p191 = pneg %p93
        $region38: #{_lambda_.4} parent=31 // pred_check_branch
          %193 = sbr.rel (%p191) target = $region40
        $region39: #{_lambda_.4} parent=31 // pred_region
          %195 = dma.done [#allocation5], 1024
        $region40: #{_lambda_.4} parent=31 // pred_fallthru
          _
        %p196 = scmp.lt.s32.totalorder %s20, 1
        %s197 = scalar_select %p196, %s20, 1
        %p198 = scmp.lt.s32.totalorder %s21, 0
        %s199 = scalar_select %p198, %s21, 0
        %s200 = smul.addr %s197, 7
        %s201 = sadd.s32 %s199, %s200
        %s202 = smul.addr %s201, 4
        %s203 = scalar_lea.vmem %s0, %s202
        %p204 = pneg %p51
        %p205 = pneg %p48
        %p206 = pneg %p72
        %p207 = pneg %p69
        %p208 = pneg %p93
        %p209 = pneg %p90
        %p210 = pneg %p121
        %p211 = pneg %p118
        %p212 = scmp.lt.s32.totalorder %s20, 1
        %s213 = scalar_select %p212, %s20, 1
        %p214 = scmp.lt.s32.totalorder %s21, 0
        %s215 = scalar_select %p214, %s21, 0
        %s216 = smul.addr %s213, 8
        %s217 = sadd.s32 %s215, %s216
        %s218 = smul.addr %s217, 8
        %s219 = scalar_lea.vmem %s3, %s218
        %p220 = scmp.lt.s32.totalorder %s20, 1
        %s221 = scalar_select %p220, %s20, 1
        %p222 = scmp.lt.s32.totalorder %s21, 0
        %s223 = scalar_select %p222, %s21, 0
        %s224 = smul.addr %s221, 7
        %s225 = sadd.s32 %s223, %s224
        %s226 = smul.addr %s225, 4
        %s227 = scalar_lea.vmem %s0, %s226
        %p228 = scmp.lt.s32.totalorder %s20, 1
        %s229 = scalar_select %p228, %s20, 1
        %p230 = scmp.lt.s32.totalorder %s21, 0
        %s231 = scalar_select %p230, %s21, 0
        %s232 = smul.addr %s229, 8
        %s233 = sadd.s32 %s231, %s232
        %s234 = smul.addr %s233, 8
        %s235 = scalar_lea.vmem %s3, %s234
        %v237 = vld [vmem:[#allocation2] sm:$0xf]
        %v238 = vld [vmem:[#allocation2 + $0x4] sm:$0xf]
        %v239 = vld [vmem:[#allocation2 + $0x8] sm:$0xf]
        %v240 = vld [vmem:[#allocation2 + $0xc] sm:$0xf]
        %v241 = vld [vmem:[#allocation2 + $0x10] sm:$0xf]
        %v242 = vld [vmem:[#allocation2 + $0x14] sm:$0xf]
        %v243 = vld [vmem:[#allocation2 + $0x18] sm:$0xf]
        %v244 = vld [vmem:[#allocation2 + $0x1c] sm:$0xf]
        %v245 = vld [vmem:[%s227] sm:$0xf]
        %v246 = vld [vmem:[%s227 + $0x4] sm:$0xf]
        %v247 = vld [vmem:[%s227 + $0x8] sm:$0xf]
        %v248 = vld [vmem:[%s227 + $0xc] sm:$0xf]
        %v249 = vld [vmem:[%s227 + $0x10] sm:$0xf]
        %v250 = vld [vmem:[%s227 + $0x14] sm:$0xf]
        %v251 = vld [vmem:[%s227 + $0x18] sm:$0xf]
        %v252 = vld [vmem:[#allocation4] sm:$0xff]
        %v253 = vld [vmem:[#allocation4 + $0x8] sm:$0xff]
        %v254 = vld [vmem:[#allocation4 + $0x10] sm:$0xff]
        %v255 = vld [vmem:[#allocation4 + $0x18] sm:$0xff]
        %v256 = vld [vmem:[#allocation4 + $0x20] sm:$0xff]
        %v257 = vld [vmem:[#allocation4 + $0x28] sm:$0xff]
        %v258 = vld [vmem:[#allocation4 + $0x30] sm:$0xff]
        %v259 = vld [vmem:[#allocation4 + $0x38] sm:$0xff]
        %261 = vset.pattern.permute.xlu0 0
        %262 = vperm.xlu0 %261, %v252
        %v263 = vpop.permute.xlu0 %262
        %266 = vset.pattern.permute.xlu0 0
        %267 = vperm.xlu0 %266, %v253
        %v268 = vpop.permute.xlu0 %267
        %271 = vset.pattern.permute.xlu0 0
        %272 = vperm.xlu0 %271, %v254
        %v273 = vpop.permute.xlu0 %272
        %276 = vset.pattern.permute.xlu0 0
        %277 = vperm.xlu0 %276, %v255
        %v278 = vpop.permute.xlu0 %277
        %281 = vset.pattern.permute.xlu0 0
        %282 = vperm.xlu0 %281, %v256
        %v283 = vpop.permute.xlu0 %282
        %286 = vset.pattern.permute.xlu0 0
        %287 = vperm.xlu0 %286, %v257
        %v288 = vpop.permute.xlu0 %287
        %291 = vset.pattern.permute.xlu0 0
        %292 = vperm.xlu0 %291, %v258
        %v293 = vpop.permute.xlu0 %292
        %296 = vset.pattern.permute.xlu0 0
        %297 = vperm.xlu0 %296, %v259
        %v298 = vpop.permute.xlu0 %297
        %v308 = vunpack.c.l.b16 %v237
        %v309 = vunpack.c.l.b16 %v238
        %v310 = vunpack.c.l.b16 %v239
        %v311 = vunpack.c.l.b16 %v240
        %v312 = vunpack.c.l.b16 %v241
        %v313 = vunpack.c.l.b16 %v242
        %v314 = vunpack.c.l.b16 %v243
        %v315 = vunpack.c.l.b16 %v244
        %v316 = vpack.c.b16 %v309, %v308
        %v317 = vpack.c.b16 %v311, %v310
        %v318 = vpack.c.b16 %v313, %v312
        %v319 = vpack.c.b16 %v315, %v314
        %v327 = vunpack.c.l.b16 %v245
        %v328 = vunpack.c.l.b16 %v246
        %v329 = vunpack.c.l.b16 %v247
        %v330 = vunpack.c.l.b16 %v248
        %v331 = vunpack.c.l.b16 %v249
        %v332 = vunpack.c.l.b16 %v250
        %v333 = vunpack.c.l.b16 %v251
        %v334 = vpack.c.b16 %v328, %v327
        %v335 = vpack.c.b16 %v330, %v329
        %v336 = vpack.c.b16 %v332, %v331
        %v337 = vpack.c.b16 %v333, %v333
        %vm341 = vcmask 457728
        %v343 = vsel %vm341, %v316, 0
        %v346 = vsel %vm341, %v317, 0
        %v349 = vsel %vm341, %v318, 0
        %v352 = vsel %vm341, %v319, 0
        %vm354 = vcmask 1043456
        %v356 = vsel %vm354, %v337, 0
        %358 = vmatpush.bf16.msra.mxu0 0
        %359 = vmatpush.bf16.msra.mxu0 0
        %360 = vmatpush.bf16.msra.mxu0 0
        %361 = vmatpush.bf16.msra.mxu0 0
        %362 = vmatpush.bf16.msra.mxu0 %v356
        %363 = vmatpush.bf16.msra.mxu0 %v336
        %364 = vmatpush.bf16.msra.mxu0 %v335
        %365 = vmatpush.bf16.msra.mxu0 %v334
        %366 = vmatmul.bf16.gmra.mxu0 %v343
        %v367 = vpop.f32.mrf.mxu0
        %v368 = vadd.f32 %v263, %v367
        %v369 = vpop.f32.mrf.mxu0
        %v370 = vadd.f32 %v268, %v369
        %371 = vmatmul.bf16.gmra.mxu0 %v346
        %v372 = vpop.f32.mrf.mxu0
        %v373 = vadd.f32 %v273, %v372
        %v374 = vpop.f32.mrf.mxu0
        %v375 = vadd.f32 %v278, %v374
        %376 = vmatmul.bf16.gmra.mxu0 %v349
        %v377 = vpop.f32.mrf.mxu0
        %v378 = vadd.f32 %v283, %v377
        %v379 = vpop.f32.mrf.mxu0
        %v380 = vadd.f32 %v288, %v379
        %381 = vmatmul.bf16.gmra.mxu0 %v352
        %v382 = vpop.f32.mrf.mxu0
        %v383 = vadd.f32 %v293, %v382
        %v384 = vpop.f32.mrf.mxu0
        %v385 = vadd.f32 %v298, %v384
        %386 = vdwg.mxu0
        %v387 = vmax.f32 %v368, 0.0
        %v388 = vmax.f32 %v370, 0.0
        %v389 = vmax.f32 %v373, 0.0
        %v390 = vmax.f32 %v375, 0.0
        %v391 = vmax.f32 %v378, 0.0
        %v392 = vmax.f32 %v380, 0.0
        %v393 = vmax.f32 %v383, 0.0
        %v394 = vmax.f32 %v385, 0.0
        %vm395 = vcmask 523264
        %396 = vst.msk [vmem:[%s235] sm:$0xff] %vm395, %v387
        %397 = vst.msk [vmem:[%s235 + $0x8] sm:$0xff] %vm395, %v388
        %398 = vst.msk [vmem:[%s235 + $0x10] sm:$0xff] %vm395, %v389
        %399 = vst.msk [vmem:[%s235 + $0x18] sm:$0xff] %vm395, %v390
        %400 = vst.msk [vmem:[%s235 + $0x20] sm:$0xff] %vm395, %v391
        %401 = vst.msk [vmem:[%s235 + $0x28] sm:$0xff] %vm395, %v392
        %402 = vst.msk [vmem:[%s235 + $0x30] sm:$0xff] %vm395, %v393
        %403 = vst.msk [vmem:[%s235 + $0x38] sm:$0xff] %vm395, %v394
        %p404 = scmp.lt.s32.totalorder %s20, 1
        %s405 = scalar_select %p404, %s20, 1
        %p406 = scmp.lt.s32.totalorder %s21, 0
        %s407 = scalar_select %p406, %s21, 0
        %s408 = smul.addr %s405, 8
        %s409 = sadd.s32 %s407, %s408
        %s410 = smul.addr %s409, 8
        %s411 = scalar_lea.vmem %s3, %s410
        // Predicated region
        $region41: #{_lambda_.4} parent=31 // pred_check
          %p412 = pneg %p118
        $region42: #{_lambda_.4} parent=31 // pred_check_branch
          %414 = sbr.rel (%p412) target = $region44
        $region43: #{_lambda_.4} parent=31 // pred_region
          _
        $region44: #{_lambda_.4} parent=31 // pred_fallthru
          _
      $region32: #{_lambda_.4} parent=5 // pred_fallthru
        _
      %p415 = scmp.le.s32.totalorder 2, %s11
      // Predicated region
      $region45: #{_lambda_.4} parent=5 // pred_check
        %p416 = pneg %p415
      $region46: #{_lambda_.4} parent=5 // pred_check_branch
        %418 = sbr.rel (%p416) target = $region48
      $region47: #{_lambda_.4} parent=5 // pred_region
        %s419 = ssub.s32 %s11, 2
        // Predicated region
        $region49: #{_lambda_.4} parent=47 // pred_check
          %p420 = pneg %p124
        $region50: #{_lambda_.4} parent=47 // pred_check_branch
          %422 = sbr.rel (%p420) target = $region52
        $region51: #{_lambda_.4} parent=47 // pred_region
          %p423 = scmp.lt.s32.totalorder %s22, 1
          %s424 = scalar_select %p423, %s22, 1
          %p425 = scmp.lt.s32.totalorder %s23, 0
          %s426 = scalar_select %p425, %s23, 0
          %s427 = smul.addr %s424, 8
          %s428 = sadd.s32 %s426, %s427
          %s429 = smul.addr %s428, 8
          %s430 = scalar_lea.vmem %s3, %s429
        $region52: #{_lambda_.4} parent=47 // pred_fallthru
          _
      $region48: #{_lambda_.4} parent=5 // pred_fallthru
        _
    $region6: #{_lambda_.4} parent=1 // loop_footer
      %s15 = sadd.s32 1, %s11
    $region7: #{_lambda_.4} parent=1 // loop_footer_branch
      %10 = sbr.rel target = $region3
    $region8: #{_lambda_.4} parent=1 // loop_exit
      _
    %431 = vsyncpa [#allocation3], 1
    %s432 = scalar_lea.sflag [#allocation3], 1
    %433 = vsyncpa %s432, 1
    %434 = vsyncpa [#allocation5], 1

// kernel: _lambda_.3
$region0: #{_lambda_.3}
  #allocation0 [shape = 'u32[]', space=smem, size = 0x4, offset = 0x4, fixed_abs, tag = 'smem constant byte address 0x4 - core index']
  #allocation1 [shape = 'u32[72,128]{1,0:T(1,128)}', space=vmem, size = 0x9000, scoped, tag = 'internal scratch']
  %s0 = inlined_call_operand.vmem [shape: f32[2,1,256], index: 0, kind: input, shape index: {}]
  %s1 = inlined_call_operand.vmem [shape: f32[1,64,1], index: 1, kind: input, shape index: {}]
  %s2 = inlined_call_operand.vmem [shape: f32[1,64,1], index: 2, kind: input, shape index: {}]
  %s3 = inlined_call_operand.vmem [shape: f32[2,64,256], index: 3, kind: output, shape index: {}]
  %s4 = sld [smem:[#allocation0]]
  $region45: #{_lambda_.3} parent=0
    _
  %s6 = ssub.s32 1, %s4
  %s7 = scalar_select 0, %s6, %s4
  loop: start=0, step=1, limit=4
  $region2: #{_lambda_.3} parent=0 // loop_pre_header
    _
  $region3: #{_lambda_.3} parent=0 // loop_header
    %s9 = sphi 0, %s13
    %p10 = scmp.ge.s32.totalorder %s9, 4
    %s16 = sphi 0, %s28
    %s17 = sphi 0, %s24
    %s18 = sphi 0, %s16
    %s19 = sphi 0, %s17
    %s20 = sphi 0, %s18
    %s21 = sphi 0, %s19
    %s33 = sphi 0, %s35
    %s36 = sphi 0, %s33
    %s37 = sphi 0, %s36
    %s53 = sphi 0, %s37
    %s57 = sphi 0, %s57
    %s59 = sphi 0, %s57
    %s60 = sphi 0, %s59
    %s74 = sphi 0, %s60
    %s78 = sphi 0, %s78
    %s80 = sphi 0, %s78
    %s81 = sphi 0, %s80
    %s95 = sphi 0, %s81
    %s103 = sphi 0, %s105
    %s106 = sphi 0, %s103
    %s107 = sphi 0, %s106
    %s123 = sphi 0, %s107
  $region4: #{_lambda_.3} parent=0 // loop_header_branch
    %12 = sbr.rel (%p10) target = $region8
  $region5: #{_lambda_.3} parent=0 // loop_body
    %s14 = ssub.s32 %s9, 1
    %s15 = ssub.s32 %s9, 2
    %s22 = sadd.s32 1, %s17
    %p23 = scmp.ge.s32.totalorder %s22, 1
    %s24 = scalar_select %p23, 0, %s22
    %s25 = sadd.s32 1, %s16
    %s26 = scalar_select %p23, %s25, %s16
    %p27 = scmp.ge.s32.totalorder %s26, 2
    %s28 = scalar_select %p27, 0, %s26
    %s29 = ssub.s32 %s16, %s28
    %s30 = ssub.s32 %s17, %s24
    %s31 = sor.u32 %s29, %s30
    %p32 = scmp.eq.s32.totalorder %s31, 0
    %s34 = sadd.s32 %s33, 1
    %s35 = scalar_select %p32, %s33, %s34
    %p38 = pneg %p32
    %p39 = scmp.eq.s32.totalorder %s9, 1
    %p40 = por %p38, %p39
    %p41 = scmp.ne.s32.totalorder %s33, %s36
    %p42 = scmp.eq.s32.totalorder %s9, 0
    %p43 = por %p41, %p42
    %p44 = scmp.ne.s32.totalorder %s33, %s36
    %p45 = scmp.eq.s32.totalorder %s14, 1
    %p46 = por %p44, %p45
    %p47 = scmp.ne.s32.totalorder %s36, %s37
    %p48 = scmp.eq.s32.totalorder %s14, 0
    %p49 = por %p47, %p48
    %p50 = scmp.ne.s32.totalorder %s36, %s37
    %p51 = scmp.eq.s32.totalorder %s15, 1
    %p52 = por %p50, %p51
    %p54 = scmp.ne.s32.totalorder %s37, %s53
    %p55 = scmp.eq.s32.totalorder %s15, 0
    %p56 = por %p54, %p55
    %s58 = sadd.s32 %s57, 1
    %p61 = scmp.eq.s32.totalorder %s9, 1
    %p62 = scmp.ne.s32.totalorder %s57, %s59
    %p63 = scmp.eq.s32.totalorder %s9, 0
    %p64 = por %p62, %p63
    %p65 = scmp.ne.s32.totalorder %s57, %s59
    %p66 = scmp.eq.s32.totalorder %s14, 1
    %p67 = por %p65, %p66
    %p68 = scmp.ne.s32.totalorder %s59, %s60
    %p69 = scmp.eq.s32.totalorder %s14, 0
    %p70 = por %p68, %p69
    %p71 = scmp.ne.s32.totalorder %s59, %s60
    %p72 = scmp.eq.s32.totalorder %s15, 1
    %p73 = por %p71, %p72
    %p75 = scmp.ne.s32.totalorder %s60, %s74
    %p76 = scmp.eq.s32.totalorder %s15, 0
    %p77 = por %p75, %p76
    %s79 = sadd.s32 %s78, 1
    %p82 = scmp.eq.s32.totalorder %s9, 1
    %p83 = scmp.ne.s32.totalorder %s78, %s80
    %p84 = scmp.eq.s32.totalorder %s9, 0
    %p85 = por %p83, %p84
    %p86 = scmp.ne.s32.totalorder %s78, %s80
    %p87 = scmp.eq.s32.totalorder %s14, 1
    %p88 = por %p86, %p87
    %p89 = scmp.ne.s32.totalorder %s80, %s81
    %p90 = scmp.eq.s32.totalorder %s14, 0
    %p91 = por %p89, %p90
    %p92 = scmp.ne.s32.totalorder %s80, %s81
    %p93 = scmp.eq.s32.totalorder %s15, 1
    %p94 = por %p92, %p93
    %p96 = scmp.ne.s32.totalorder %s81, %s95
    %p97 = scmp.eq.s32.totalorder %s15, 0
    %p98 = por %p96, %p97
    %s99 = ssub.s32 %s16, %s28
    %s100 = ssub.s32 %s17, %s24
    %s101 = sor.u32 %s99, %s100
    %p102 = scmp.eq.s32.totalorder %s101, 0
    %s104 = sadd.s32 %s103, 1
    %s105 = scalar_select %p102, %s103, %s104
    %p108 = pneg %p102
    %p109 = scmp.eq.s32.totalorder %s9, 1
    %p110 = por %p108, %p109
    %p111 = scmp.ne.s32.totalorder %s103, %s106
    %p112 = scmp.eq.s32.totalorder %s9, 0
    %p113 = por %p111, %p112
    %p114 = scmp.ne.s32.totalorder %s103, %s106
    %p115 = scmp.eq.s32.totalorder %s14, 1
    %p116 = por %p114, %p115
    %p117 = scmp.ne.s32.totalorder %s106, %s107
    %p118 = scmp.eq.s32.totalorder %s14, 0
    %p119 = por %p117, %p118
    %p120 = scmp.ne.s32.totalorder %s106, %s107
    %p121 = scmp.eq.s32.totalorder %s15, 1
    %p122 = por %p120, %p121
    %p124 = scmp.ne.s32.totalorder %s107, %s123
    %p125 = scmp.eq.s32.totalorder %s15, 0
    %p126 = por %p124, %p125
    %p127 = scmp.le.s32.totalorder 1, %s9
    %p128 = scmp.lt.s32.totalorder %s9, 3
    %p129 = pnand %p127, %p128
    %p130 = pneg %p129
    // Predicated region
    $region9: #{_lambda_.3} parent=5 // pred_check
      _
    $region10: #{_lambda_.3} parent=5 // pred_check_branch
      %132 = sbr.rel (%p129) target = $region12
    $region11: #{_lambda_.3} parent=5 // pred_region
      %s133 = ssub.s32 %s9, 1
      // Predicated region
      $region13: #{_lambda_.3} parent=11 // pred_check
        %p134 = pneg %p70
      $region14: #{_lambda_.3} parent=11 // pred_check_branch
        %136 = sbr.rel (%p134) target = $region16
      $region15: #{_lambda_.3} parent=11 // pred_region
        _
      $region16: #{_lambda_.3} parent=11 // pred_fallthru
        _
      // Predicated region
      $region17: #{_lambda_.3} parent=11 // pred_check
        %p137 = pneg %p91
      $region18: #{_lambda_.3} parent=11 // pred_check_branch
        %139 = sbr.rel (%p137) target = $region20
      $region19: #{_lambda_.3} parent=11 // pred_region
        _
      $region20: #{_lambda_.3} parent=11 // pred_fallthru
        _
    $region12: #{_lambda_.3} parent=5 // pred_fallthru
      _
    %p140 = scmp.lt.s32.totalorder %s9, 2
    // Predicated region
    $region21: #{_lambda_.3} parent=5 // pred_check
      %p141 = pneg %p140
    $region22: #{_lambda_.3} parent=5 // pred_check_branch
      %143 = sbr.rel (%p141) target = $region24
    $region23: #{_lambda_.3} parent=5 // pred_region
      // Predicated region
      $region25: #{_lambda_.3} parent=23 // pred_check
        %p144 = pneg %p43
      $region26: #{_lambda_.3} parent=23 // pred_check_branch
        %146 = sbr.rel (%p144) target = $region28
      $region27: #{_lambda_.3} parent=23 // pred_region
        %s147 = smul.u32 2, %s17
        %p148 = scmp.lt.s32.totalorder %s16, 1
        %s149 = scalar_select %p148, %s16, 1
        %p150 = scmp.lt.s32.totalorder %s147, 1
        %s151 = scalar_select %p150, %s147, 1
        %s152 = smul.addr %s149, 2
        %s153 = sadd.s32 %s151, %s152
        %s154 = scalar_lea.vmem %s0, %s153
        %s155 = smul.u32 2, %s17
      $region28: #{_lambda_.3} parent=23 // pred_fallthru
        _
    $region24: #{_lambda_.3} parent=5 // pred_fallthru
      _
    %p156 = scmp.le.s32.totalorder 1, %s9
    %p157 = scmp.lt.s32.totalorder %s9, 3
    %p158 = pnand %p156, %p157
    %p159 = pneg %p158
    // Predicated region
    $region29: #{_lambda_.3} parent=5 // pred_check
      _
    $region30: #{_lambda_.3} parent=5 // pred_check_branch
      %161 = sbr.rel (%p158) target = $region32
    $region31: #{_lambda_.3} parent=5 // pred_region
      %s162 = ssub.s32 %s9, 1
      %s163 = smul.u32 2, %s19
      %p164 = scmp.lt.s32.totalorder %s18, 1
      %s165 = scalar_select %p164, %s18, 1
      %p166 = scmp.lt.s32.totalorder %s163, 1
      %s167 = scalar_select %p166, %s163, 1
      %s168 = smul.addr %s165, 2
      %s169 = sadd.s32 %s167, %s168
      %s170 = scalar_lea.vmem %s0, %s169
      %p171 = pneg %p49
      %p172 = pneg %p46
      %p173 = pneg %p70
      %p174 = pneg %p67
      %p175 = pneg %p91
      %p176 = pneg %p88
      %p177 = pneg %p119
      %p178 = pneg %p116
      %s179 = smul.u32 2, %s19
      %p180 = scmp.lt.s32.totalorder %s18, 1
      %s181 = scalar_select %p180, %s18, 1
      %p182 = scmp.lt.s32.totalorder %s179, 1
      %s183 = scalar_select %p182, %s179, 1
      %s184 = smul.addr %s181, 16
      %s185 = sadd.s32 %s183, %s184
      %s186 = smul.addr %s185, 8
      %s187 = scalar_lea.vmem %s3, %s186
      %s188 = smul.u32 2, %s19
      %p189 = scmp.lt.s32.totalorder %s18, 1
      %s190 = scalar_select %p189, %s18, 1
      %p191 = scmp.lt.s32.totalorder %s188, 1
      %s192 = scalar_select %p191, %s188, 1
      %s193 = smul.addr %s190, 2
      %s194 = sadd.s32 %s192, %s193
      %s195 = scalar_lea.vmem %s0, %s194
      %s196 = smul.u32 2, %s19
      %s197 = smul.u32 2, %s19
      %p198 = scmp.lt.s32.totalorder %s18, 1
      %s199 = scalar_select %p198, %s18, 1
      %p200 = scmp.lt.s32.totalorder %s197, 1
      %s201 = scalar_select %p200, %s197, 1
      %s202 = smul.addr %s199, 16
      %s203 = sadd.s32 %s201, %s202
      %s204 = smul.addr %s203, 8
      %s205 = scalar_lea.vmem %s3, %s204
      %s206 = smul.u32 2, %s19
      %v207 = vld [vmem:[%s195] sm:$0x3]
      %v208 = vld [vmem:[%s1] sm:$0xff]
      %v209 = vld [vmem:[%s1 + $0x8] sm:$0xff]
      %v210 = vld [vmem:[%s1 + $0x10] sm:$0xff]
      %v211 = vld [vmem:[%s1 + $0x18] sm:$0xff]
      %v212 = vld [vmem:[%s1 + $0x20] sm:$0xff]
      %v213 = vld [vmem:[%s1 + $0x28] sm:$0xff]
      %v214 = vld [vmem:[%s1 + $0x30] sm:$0xff]
      %v215 = vld [vmem:[%s1 + $0x38] sm:$0xff]
      %v217 = vperm.slane %v207, 0
      %v218 = vperm.slane %v207, 1
      %222 = vset.pattern.permute.xlu0 0
      %223 = vperm.xlu0 %222, %v208
      %v224 = vpop.permute.xlu0 %223
      %227 = vset.pattern.permute.xlu0 0
      %228 = vperm.xlu0 %227, %v209
      %v229 = vpop.permute.xlu0 %228
      %232 = vset.pattern.permute.xlu0 0
      %233 = vperm.xlu0 %232, %v210
      %v234 = vpop.permute.xlu0 %233
      %237 = vset.pattern.permute.xlu0 0
      %238 = vperm.xlu0 %237, %v211
      %v239 = vpop.permute.xlu0 %238
      %242 = vset.pattern.permute.xlu0 0
      %243 = vperm.xlu0 %242, %v212
      %v244 = vpop.permute.xlu0 %243
      %247 = vset.pattern.permute.xlu0 0
      %248 = vperm.xlu0 %247, %v213
      %v249 = vpop.permute.xlu0 %248
      %252 = vset.pattern.permute.xlu0 0
      %253 = vperm.xlu0 %252, %v214
      %v254 = vpop.permute.xlu0 %253
      %257 = vset.pattern.permute.xlu0 0
      %258 = vperm.xlu0 %257, %v215
      %v259 = vpop.permute.xlu0 %258
      %v261 = vmul.f32 %v217, %v224
      %v262 = vmul.f32 %v218, %v224
      %v263 = vmul.f32 %v217, %v229
      %v264 = vmul.f32 %v218, %v229
      %v265 = vmul.f32 %v217, %v234
      %v266 = vmul.f32 %v218, %v234
      %v267 = vmul.f32 %v217, %v239
      %v268 = vmul.f32 %v218, %v239
      %v269 = vmul.f32 %v217, %v244
      %v270 = vmul.f32 %v218, %v244
      %v271 = vmul.f32 %v217, %v249
      %v272 = vmul.f32 %v218, %v249
      %v273 = vmul.f32 %v217, %v254
      %v274 = vmul.f32 %v218, %v254
      %v275 = vmul.f32 %v217, %v259
      %v276 = vmul.f32 %v218, %v259
      %v277 = vld [vmem:[%s2] sm:$0xff]
      %v278 = vld [vmem:[%s2 + $0x8] sm:$0xff]
      %v279 = vld [vmem:[%s2 + $0x10] sm:$0xff]
      %v280 = vld [vmem:[%s2 + $0x18] sm:$0xff]
      %v281 = vld [vmem:[%s2 + $0x20] sm:$0xff]
      %v282 = vld [vmem:[%s2 + $0x28] sm:$0xff]
      %v283 = vld [vmem:[%s2 + $0x30] sm:$0xff]
      %v284 = vld [vmem:[%s2 + $0x38] sm:$0xff]
      %286 = vset.pattern.permute.xlu0 0
      %287 = vperm.xlu0 %286, %v277
      %v288 = vpop.permute.xlu0 %287
      %291 = vset.pattern.permute.xlu0 0
      %292 = vperm.xlu0 %291, %v278
      %v293 = vpop.permute.xlu0 %292
      %296 = vset.pattern.permute.xlu0 0
      %297 = vperm.xlu0 %296, %v279
      %v298 = vpop.permute.xlu0 %297
      %301 = vset.pattern.permute.xlu0 0
      %302 = vperm.xlu0 %301, %v280
      %v303 = vpop.permute.xlu0 %302
      %306 = vset.pattern.permute.xlu0 0
      %307 = vperm.xlu0 %306, %v281
      %v308 = vpop.permute.xlu0 %307
      %311 = vset.pattern.permute.xlu0 0
      %312 = vperm.xlu0 %311, %v282
      %v313 = vpop.permute.xlu0 %312
      %316 = vset.pattern.permute.xlu0 0
      %317 = vperm.xlu0 %316, %v283
      %v318 = vpop.permute.xlu0 %317
      %321 = vset.pattern.permute.xlu0 0
      %322 = vperm.xlu0 %321, %v284
      %v323 = vpop.permute.xlu0 %322
      %v325 = vadd.f32 %v261, %v288
      %v326 = vadd.f32 %v262, %v288
      %v327 = vadd.f32 %v263, %v293
      %v328 = vadd.f32 %v264, %v293
      %v329 = vadd.f32 %v265, %v298
      %v330 = vadd.f32 %v266, %v298
      %v331 = vadd.f32 %v267, %v303
      %v332 = vadd.f32 %v268, %v303
      %v333 = vadd.f32 %v269, %v308
      %v334 = vadd.f32 %v270, %v308
      %v335 = vadd.f32 %v271, %v313
      %v336 = vadd.f32 %v272, %v313
      %v337 = vadd.f32 %v273, %v318
      %v338 = vadd.f32 %v274, %v318
      %v339 = vadd.f32 %v275, %v323
      %v340 = vadd.f32 %v276, %v323
      %341 = vst [vmem:[%s205] sm:$0xff] %v325
      %342 = vst [vmem:[%s205 + $0x8] sm:$0xff] %v326
      %343 = vst [vmem:[%s205 + $0x10] sm:$0xff] %v327
      %344 = vst [vmem:[%s205 + $0x18] sm:$0xff] %v328
      %345 = vst [vmem:[%s205 + $0x20] sm:$0xff] %v329
      %346 = vst [vmem:[%s205 + $0x28] sm:$0xff] %v330
      %347 = vst [vmem:[%s205 + $0x30] sm:$0xff] %v331
      %348 = vst [vmem:[%s205 + $0x38] sm:$0xff] %v332
      %349 = vst [vmem:[%s205 + $0x40] sm:$0xff] %v333
      %350 = vst [vmem:[%s205 + $0x48] sm:$0xff] %v334
      %351 = vst [vmem:[%s205 + $0x50] sm:$0xff] %v335
      %352 = vst [vmem:[%s205 + $0x58] sm:$0xff] %v336
      %353 = vst [vmem:[%s205 + $0x60] sm:$0xff] %v337
      %354 = vst [vmem:[%s205 + $0x68] sm:$0xff] %v338
      %355 = vst [vmem:[%s205 + $0x70] sm:$0xff] %v339
      %356 = vst [vmem:[%s205 + $0x78] sm:$0xff] %v340
      %s357 = smul.u32 2, %s19
      %p358 = scmp.lt.s32.totalorder %s18, 1
      %s359 = scalar_select %p358, %s18, 1
      %p360 = scmp.lt.s32.totalorder %s357, 1
      %s361 = scalar_select %p360, %s357, 1
      %s362 = smul.addr %s359, 16
      %s363 = sadd.s32 %s361, %s362
      %s364 = smul.addr %s363, 8
      %s365 = scalar_lea.vmem %s3, %s364
      // Predicated region
      $region33: #{_lambda_.3} parent=31 // pred_check
        %p366 = pneg %p116
      $region34: #{_lambda_.3} parent=31 // pred_check_branch
        %368 = sbr.rel (%p366) target = $region36
      $region35: #{_lambda_.3} parent=31 // pred_region
        %s369 = smul.u32 2, %s19
      $region36: #{_lambda_.3} parent=31 // pred_fallthru
        _
    $region32: #{_lambda_.3} parent=5 // pred_fallthru
      _
    %p370 = scmp.le.s32.totalorder 2, %s9
    // Predicated region
    $region37: #{_lambda_.3} parent=5 // pred_check
      %p371 = pneg %p370
    $region38: #{_lambda_.3} parent=5 // pred_check_branch
      %373 = sbr.rel (%p371) target = $region40
    $region39: #{_lambda_.3} parent=5 // pred_region
      %s374 = ssub.s32 %s9, 2
      // Predicated region
      $region41: #{_lambda_.3} parent=39 // pred_check
        %p375 = pneg %p122
      $region42: #{_lambda_.3} parent=39 // pred_check_branch
        %377 = sbr.rel (%p375) target = $region44
      $region43: #{_lambda_.3} parent=39 // pred_region
        %s378 = smul.u32 2, %s21
        %p379 = scmp.lt.s32.totalorder %s20, 1
        %s380 = scalar_select %p379, %s20, 1
        %p381 = scmp.lt.s32.totalorder %s378, 1
        %s382 = scalar_select %p381, %s378, 1
        %s383 = smul.addr %s380, 16
        %s384 = sadd.s32 %s382, %s383
        %s385 = smul.addr %s384, 8
        %s386 = scalar_lea.vmem %s3, %s385
      $region44: #{_lambda_.3} parent=39 // pred_fallthru
        _
    $region40: #{_lambda_.3} parent=5 // pred_fallthru
      _
  $region6: #{_lambda_.3} parent=0 // loop_footer
    %s13 = sadd.s32 1, %s9
  $region7: #{_lambda_.3} parent=0 // loop_footer_branch
    %8 = sbr.rel target = $region3
  $region8: #{_lambda_.3} parent=0 // loop_exit
    _

// kernel: _lambda_.5
$region0: #{_lambda_.5}
  #allocation0 [shape = 'u32[]', space=smem, size = 0x4, offset = 0x4, fixed_abs, tag = 'smem constant byte address 0x4 - core index']
  #allocation1 [shape = 'u32[72,128]{1,0:T(1,128)}', space=vmem, size = 0x9000, scoped, tag = 'internal scratch']
  #allocation2 [shape = 'f32[1920,1]{1,0:T(8,128)}', space=vmem, size = 0xf0000, scoped, tag = 'scratch operand']
  %s0 = inlined_call_operand.vmem [shape: f32[2,64,16], index: 0, kind: input, shape index: {}]
  %s1 = inlined_call_operand.hbm [shape: bf16[1920,64], index: 1, kind: input, shape index: {}]
  %s2 = inlined_call_operand.hbm [shape: f32[1920,1], index: 2, kind: input, shape index: {}]
  %s3 = inlined_call_operand.vmem [shape: f32[1920,3], index: 3, kind: input, shape index: {}]
  %s4 = inlined_call_operand.vmem [shape: f32[1,3], index: 4, kind: input, shape index: {}]
  %s5 = inlined_call_operand.hbm [shape: f32[2,1,3], index: 5, kind: output, shape index: {}]
  %s6 = sld [smem:[#allocation0]]
  $region69: #{_lambda_.5} parent=0
    _
  %s8 = ssub.s32 1, %s6
  %s9 = scalar_select 0, %s8, %s6
  $region1: #{_lambda_.5} parent=0
    #allocation3 [shape = 'u8[491520]{0}', space=vmem, size = 0x78000, scoped, tag = 'input window, operand 1, single buffered']
    #allocation4 [shape = 's32[2]{0}', space=sflag, size = 0x8, scoped, tag = 'scoped memory for _lambda_.5']
    #allocation5 [shape = 's32[2]{0}', space=sflag, size = 0x8, scoped, tag = 'scoped memory for _lambda_.5']
    #allocation6 [shape = 'u8[983040]{0}', space=vmem, size = 0xf0000, scoped, tag = 'input window, operand 2, single buffered']
    #allocation7 [shape = 's32[1]{0}', space=sflag, size = 0x4, scoped, tag = 'scoped memory for _lambda_.5']
    #allocation8 [shape = 'u8[1024]{0}', space=vmem, size = 0x400, scoped, tag = 'output window, operand 0']
    %10 = vsyncpa [#allocation4], 0
    %11 = vsyncpa [#allocation7], 0
    %12 = vsyncpa [#allocation5], 0
    %s13 = scalar_lea.sflag [#allocation5], 1
    %14 = vsyncpa %s13, 0
    loop: start=0, step=1, limit=4
    $region2: #{_lambda_.5} parent=1 // loop_pre_header
      _
    $region3: #{_lambda_.5} parent=1 // loop_header
      %s16 = sphi 0, %s20
      %p17 = scmp.ge.s32.totalorder %s16, 4
      %s23 = sphi 0, %s35
      %s24 = sphi 0, %s31
      %s25 = sphi 0, %s23
      %s26 = sphi 0, %s24
      %s27 = sphi 0, %s25
      %s28 = sphi 0, %s26
      %s40 = sphi 0, %s42
      %s43 = sphi 0, %s40
      %s44 = sphi 0, %s43
      %s60 = sphi 0, %s44
      %s64 = sphi 0, %s64
      %s66 = sphi 0, %s64
      %s67 = sphi 0, %s66
      %s81 = sphi 0, %s67
      %s85 = sphi 0, %s85
      %s87 = sphi 0, %s85
      %s88 = sphi 0, %s87
      %s102 = sphi 0, %s88
      %s106 = sphi 0, %s106
      %s108 = sphi 0, %s106
      %s109 = sphi 0, %s108
      %s123 = sphi 0, %s109
      %s127 = sphi 0, %s127
      %s129 = sphi 0, %s127
      %s130 = sphi 0, %s129
      %s144 = sphi 0, %s130
      %s150 = sphi 0, %s152
      %s153 = sphi 0, %s150
      %s154 = sphi 0, %s153
      %s170 = sphi 0, %s154
    $region4: #{_lambda_.5} parent=1 // loop_header_branch
      %19 = sbr.rel (%p17) target = $region8
    $region5: #{_lambda_.5} parent=1 // loop_body
      %s21 = ssub.s32 %s16, 1
      %s22 = ssub.s32 %s16, 2
      %s29 = sadd.s32 1, %s24
      %p30 = scmp.ge.s32.totalorder %s29, 1
      %s31 = scalar_select %p30, 0, %s29
      %s32 = sadd.s32 1, %s23
      %s33 = scalar_select %p30, %s32, %s23
      %p34 = scmp.ge.s32.totalorder %s33, 2
      %s35 = scalar_select %p34, 0, %s33
      %s36 = ssub.s32 %s23, %s35
      %s37 = ssub.s32 %s24, %s31
      %s38 = sor.u32 %s36, %s37
      %p39 = scmp.eq.s32.totalorder %s38, 0
      %s41 = sadd.s32 %s40, 1
      %s42 = scalar_select %p39, %s40, %s41
      %p45 = pneg %p39
      %p46 = scmp.eq.s32.totalorder %s16, 1
      %p47 = por %p45, %p46
      %p48 = scmp.ne.s32.totalorder %s40, %s43
      %p49 = scmp.eq.s32.totalorder %s16, 0
      %p50 = por %p48, %p49
      %p51 = scmp.ne.s32.totalorder %s40, %s43
      %p52 = scmp.eq.s32.totalorder %s21, 1
      %p53 = por %p51, %p52
      %p54 = scmp.ne.s32.totalorder %s43, %s44
      %p55 = scmp.eq.s32.totalorder %s21, 0
      %p56 = por %p54, %p55
      %p57 = scmp.ne.s32.totalorder %s43, %s44
      %p58 = scmp.eq.s32.totalorder %s22, 1
      %p59 = por %p57, %p58
      %p61 = scmp.ne.s32.totalorder %s44, %s60
      %p62 = scmp.eq.s32.totalorder %s22, 0
      %p63 = por %p61, %p62
      %s65 = sadd.s32 %s64, 1
      %p68 = scmp.eq.s32.totalorder %s16, 1
      %p69 = scmp.ne.s32.totalorder %s64, %s66
      %p70 = scmp.eq.s32.totalorder %s16, 0
      %p71 = por %p69, %p70
      %p72 = scmp.ne.s32.totalorder %s64, %s66
      %p73 = scmp.eq.s32.totalorder %s21, 1
      %p74 = por %p72, %p73
      %p75 = scmp.ne.s32.totalorder %s66, %s67
      %p76 = scmp.eq.s32.totalorder %s21, 0
      %p77 = por %p75, %p76
      %p78 = scmp.ne.s32.totalorder %s66, %s67
      %p79 = scmp.eq.s32.totalorder %s22, 1
      %p80 = por %p78, %p79
      %p82 = scmp.ne.s32.totalorder %s67, %s81
      %p83 = scmp.eq.s32.totalorder %s22, 0
      %p84 = por %p82, %p83
      %s86 = sadd.s32 %s85, 1
      %p89 = scmp.eq.s32.totalorder %s16, 1
      %p90 = scmp.ne.s32.totalorder %s85, %s87
      %p91 = scmp.eq.s32.totalorder %s16, 0
      %p92 = por %p90, %p91
      %p93 = scmp.ne.s32.totalorder %s85, %s87
      %p94 = scmp.eq.s32.totalorder %s21, 1
      %p95 = por %p93, %p94
      %p96 = scmp.ne.s32.totalorder %s87, %s88
      %p97 = scmp.eq.s32.totalorder %s21, 0
      %p98 = por %p96, %p97
      %p99 = scmp.ne.s32.totalorder %s87, %s88
      %p100 = scmp.eq.s32.totalorder %s22, 1
      %p101 = por %p99, %p100
      %p103 = scmp.ne.s32.totalorder %s88, %s102
      %p104 = scmp.eq.s32.totalorder %s22, 0
      %p105 = por %p103, %p104
      %s107 = sadd.s32 %s106, 1
      %p110 = scmp.eq.s32.totalorder %s16, 1
      %p111 = scmp.ne.s32.totalorder %s106, %s108
      %p112 = scmp.eq.s32.totalorder %s16, 0
      %p113 = por %p111, %p112
      %p114 = scmp.ne.s32.totalorder %s106, %s108
      %p115 = scmp.eq.s32.totalorder %s21, 1
      %p116 = por %p114, %p115
      %p117 = scmp.ne.s32.totalorder %s108, %s109
      %p118 = scmp.eq.s32.totalorder %s21, 0
      %p119 = por %p117, %p118
      %p120 = scmp.ne.s32.totalorder %s108, %s109
      %p121 = scmp.eq.s32.totalorder %s22, 1
      %p122 = por %p120, %p121
      %p124 = scmp.ne.s32.totalorder %s109, %s123
      %p125 = scmp.eq.s32.totalorder %s22, 0
      %p126 = por %p124, %p125
      %s128 = sadd.s32 %s127, 1
      %p131 = scmp.eq.s32.totalorder %s16, 1
      %p132 = scmp.ne.s32.totalorder %s127, %s129
      %p133 = scmp.eq.s32.totalorder %s16, 0
      %p134 = por %p132, %p133
      %p135 = scmp.ne.s32.totalorder %s127, %s129
      %p136 = scmp.eq.s32.totalorder %s21, 1
      %p137 = por %p135, %p136
      %p138 = scmp.ne.s32.totalorder %s129, %s130
      %p139 = scmp.eq.s32.totalorder %s21, 0
      %p140 = por %p138, %p139
      %p141 = scmp.ne.s32.totalorder %s129, %s130
      %p142 = scmp.eq.s32.totalorder %s22, 1
      %p143 = por %p141, %p142
      %p145 = scmp.ne.s32.totalorder %s130, %s144
      %p146 = scmp.eq.s32.totalorder %s22, 0
      %p147 = por %p145, %p146
      %s148 = ssub.s32 %s23, %s35
      %p149 = scmp.eq.s32.totalorder %s148, 0
      %s151 = sadd.s32 %s150, 1
      %s152 = scalar_select %p149, %s150, %s151
      %p155 = pneg %p149
      %p156 = scmp.eq.s32.totalorder %s16, 1
      %p157 = por %p155, %p156
      %p158 = scmp.ne.s32.totalorder %s150, %s153
      %p159 = scmp.eq.s32.totalorder %s16, 0
      %p160 = por %p158, %p159
      %p161 = scmp.ne.s32.totalorder %s150, %s153
      %p162 = scmp.eq.s32.totalorder %s21, 1
      %p163 = por %p161, %p162
      %p164 = scmp.ne.s32.totalorder %s153, %s154
      %p165 = scmp.eq.s32.totalorder %s21, 0
      %p166 = por %p164, %p165
      %p167 = scmp.ne.s32.totalorder %s153, %s154
      %p168 = scmp.eq.s32.totalorder %s22, 1
      %p169 = por %p167, %p168
      %p171 = scmp.ne.s32.totalorder %s154, %s170
      %p172 = scmp.eq.s32.totalorder %s22, 0
      %p173 = por %p171, %p172
      %p174 = scmp.le.s32.totalorder 1, %s16
      %p175 = scmp.lt.s32.totalorder %s16, 3
      %p176 = pnand %p174, %p175
      %p177 = pneg %p176
      // Predicated region
      $region9: #{_lambda_.5} parent=5 // pred_check
        _
      $region10: #{_lambda_.5} parent=5 // pred_check_branch
        %179 = sbr.rel (%p176) target = $region12
      $region11: #{_lambda_.5} parent=5 // pred_region
        %s180 = ssub.s32 %s16, 1
        // Predicated region
        $region13: #{_lambda_.5} parent=11 // pred_check
          %p181 = pneg %p77
        $region14: #{_lambda_.5} parent=11 // pred_check_branch
          %183 = sbr.rel (%p181) target = $region16
        $region15: #{_lambda_.5} parent=11 // pred_region
          %185 = vsyncadd [#allocation4], 0
          %s186 = sshll.u32 %s1, 4
          %s187 = int_to_ptr.hbm [resolvable:$true] %s186
          %s188 = sshll.u32 [#allocation3], 4
          %s189 = int_to_ptr.vmem [resolvable:$true] %s188
          %194 = dma.hbm_to_vmem [thread:$0]  %s187, 15360, %s189, [#allocation4], 64, 64, 4
        $region16: #{_lambda_.5} parent=11 // pred_fallthru
          _
        // Predicated region
        $region17: #{_lambda_.5} parent=11 // pred_check
          %p195 = pneg %p98
        $region18: #{_lambda_.5} parent=11 // pred_check_branch
          %197 = sbr.rel (%p195) target = $region20
        $region19: #{_lambda_.5} parent=11 // pred_region
          %199 = vsyncadd [#allocation7], 0
          %s200 = sshll.u32 %s2, 4
          %s201 = int_to_ptr.hbm [resolvable:$true] %s200
          %s202 = sshll.u32 [#allocation6], 4
          %s203 = int_to_ptr.vmem [resolvable:$true] %s202
          %208 = dma.hbm_to_vmem [thread:$0]  %s201, 30720, %s203, [#allocation7], 128, 128, 8
        $region20: #{_lambda_.5} parent=11 // pred_fallthru
          _
        // Predicated region
        $region21: #{_lambda_.5} parent=11 // pred_check
          %p209 = pneg %p119
        $region22: #{_lambda_.5} parent=11 // pred_check_branch
          %211 = sbr.rel (%p209) target = $region24
        $region23: #{_lambda_.5} parent=11 // pred_region
          _
        $region24: #{_lambda_.5} parent=11 // pred_fallthru
          _
        // Predicated region
        $region25: #{_lambda_.5} parent=11 // pred_check
          %p212 = pneg %p140
        $region26: #{_lambda_.5} parent=11 // pred_check_branch
          %214 = sbr.rel (%p212) target = $region28
        $region27: #{_lambda_.5} parent=11 // pred_region
          _
        $region28: #{_lambda_.5} parent=11 // pred_fallthru
          _
      $region12: #{_lambda_.5} parent=5 // pred_fallthru
        _
      %p215 = scmp.lt.s32.totalorder %s16, 2
      // Predicated region
      $region29: #{_lambda_.5} parent=5 // pred_check
        %p216 = pneg %p215
      $region30: #{_lambda_.5} parent=5 // pred_check_branch
        %218 = sbr.rel (%p216) target = $region32
      $region31: #{_lambda_.5} parent=5 // pred_region
        // Predicated region
        $region33: #{_lambda_.5} parent=31 // pred_check
          %p219 = pneg %p50
        $region34: #{_lambda_.5} parent=31 // pred_check_branch
          %221 = sbr.rel (%p219) target = $region36
        $region35: #{_lambda_.5} parent=31 // pred_region
          %p222 = scmp.lt.s32.totalorder %s23, 1
          %s223 = scalar_select %p222, %s23, 1
          %p224 = scmp.lt.s32.totalorder %s24, 0
          %s225 = scalar_select %p224, %s24, 0
          %s226 = smul.addr %s223, 8
          %s227 = sadd.s32 %s225, %s226
          %s228 = smul.addr %s227, 8
          %s229 = scalar_lea.vmem %s0, %s228
        $region36: #{_lambda_.5} parent=31 // pred_fallthru
          _
      $region32: #{_lambda_.5} parent=5 // pred_fallthru
        _
      %p230 = scmp.le.s32.totalorder 1, %s16
      %p231 = scmp.lt.s32.totalorder %s16, 3
      %p232 = pnand %p230, %p231
      %p233 = pneg %p232
      // Predicated region
      $region37: #{_lambda_.5} parent=5 // pred_check
        _
      $region38: #{_lambda_.5} parent=5 // pred_check_branch
        %235 = sbr.rel (%p232) target = $region40
      $region39: #{_lambda_.5} parent=5 // pred_region
        %s236 = ssub.s32 %s16, 1
        // Predicated region
        $region41: #{_lambda_.5} parent=39 // pred_check
          %p237 = pneg %p77
        $region42: #{_lambda_.5} parent=39 // pred_check_branch
          %239 = sbr.rel (%p237) target = $region44
        $region43: #{_lambda_.5} parent=39 // pred_region
          %241 = dma.done [#allocation4], 15360
        $region44: #{_lambda_.5} parent=39 // pred_fallthru
          _
        // Predicated region
        $region45: #{_lambda_.5} parent=39 // pred_check
          %p242 = pneg %p98
        $region46: #{_lambda_.5} parent=39 // pred_check_branch
          %244 = sbr.rel (%p242) target = $region48
        $region47: #{_lambda_.5} parent=39 // pred_region
          %246 = dma.done [#allocation7], 30720
        $region48: #{_lambda_.5} parent=39 // pred_fallthru
          _
        %p247 = scmp.lt.s32.totalorder %s25, 1
        %s248 = scalar_select %p247, %s25, 1
        %p249 = scmp.lt.s32.totalorder %s26, 0
        %s250 = scalar_select %p249, %s26, 0
        %s251 = smul.addr %s248, 8
        %s252 = sadd.s32 %s250, %s251
        %s253 = smul.addr %s252, 8
        %s254 = scalar_lea.vmem %s0, %s253
        %p255 = pneg %p56
        %p256 = pneg %p53
        %p257 = pneg %p77
        %p258 = pneg %p74
        %p259 = pneg %p98
        %p260 = pneg %p95
        %p261 = pneg %p119
        %p262 = pneg %p116
        %p263 = pneg %p140
        %p264 = pneg %p137
        %p265 = pneg %p166
        %p266 = pneg %p163
        %s267 = sand.u32 %s153, 1
        %s268 = scalar_lea.sflag [#allocation5], %s267
        %s269 = sand.u32 %s153, 1
        %s270 = scalar_lea.vmem [#allocation8], %s269
        %p271 = scmp.lt.s32.totalorder %s25, 1
        %s272 = scalar_select %p271, %s25, 1
        %p273 = scmp.lt.s32.totalorder %s26, 0
        %s274 = scalar_select %p273, %s26, 0
        %s275 = smul.addr %s272, 8
        %s276 = sadd.s32 %s274, %s275
        %s277 = smul.addr %s276, 8
        %s278 = scalar_lea.vmem %s0, %s277
        %p280 = scmp.eq.s32.totalorder %s26, 0
        // Predicated region
        $region49: #{_lambda_.5} parent=39 // pred_check
          %p281 = pneg %p280
        $region50: #{_lambda_.5} parent=39 // pred_check_branch
          %283 = sbr.rel (%p281) target = $region52
        $region51: #{_lambda_.5} parent=39 // pred_region
          %vm284 = vcmask 7168
          %285 = vst.msk [vmem:[#allocation2] sm:$0xff] %vm284, 0.0
          %286 = vst.msk [vmem:[#allocation2 + $0x8] sm:$0xff] %vm284, 0.0
          %287 = vst.msk [vmem:[#allocation2 + $0x10] sm:$0xff] %vm284, 0.0
          %288 = vst.msk [vmem:[#allocation2 + $0x18] sm:$0xff] %vm284, 0.0
          %289 = vst.msk [vmem:[#allocation2 + $0x20] sm:$0xff] %vm284, 0.0
          %290 = vst.msk [vmem:[#allocation2 + $0x28] sm:$0xff] %vm284, 0.0
          %291 = vst.msk [vmem:[#allocation2 + $0x30] sm:$0xff] %vm284, 0.0
          %292 = vst.msk [vmem:[#allocation2 + $0x38] sm:$0xff] %vm284, 0.0
          %293 = vst.msk [vmem:[#allocation2 + $0x40] sm:$0xff] %vm284, 0.0
          %294 = vst.msk [vmem:[#allocation2 + $0x48] sm:$0xff] %vm284, 0.0
          %295 = vst.msk [vmem:[#allocation2 + $0x50] sm:$0xff] %vm284, 0.0
          %296 = vst.msk [vmem:[#allocation2 + $0x58] sm:$0xff] %vm284, 0.0
          %297 = vst.msk [vmem:[#allocation2 + $0x60] sm:$0xff] %vm284, 0.0
          %298 = vst.msk [vmem:[#allocation2 + $0x68] sm:$0xff] %vm284, 0.0
          %299 = vst.msk [vmem:[#allocation2 + $0x70] sm:$0xff] %vm284, 0.0
          %300 = vst.msk [vmem:[#allocation2 + $0x78] sm:$0xff] %vm284, 0.0
          %301 = vst.msk [vmem:[#allocation2 + $0x80] sm:$0xff] %vm284, 0.0
          %302 = vst.msk [vmem:[#allocation2 + $0x88] sm:$0xff] %vm284, 0.0
          %303 = vst.msk [vmem:[#allocation2 + $0x90] sm:$0xff] %vm284, 0.0
          %304 = vst.msk [vmem:[#allocation2 + $0x98] sm:$0xff] %vm284, 0.0
          %305 = vst.msk [vmem:[#allocation2 + $0xa0] sm:$0xff] %vm284, 0.0
          %306 = vst.msk [vmem:[#allocation2 + $0xa8] sm:$0xff] %vm284, 0.0
          %307 = vst.msk [vmem:[#allocation2 + $0xb0] sm:$0xff] %vm284, 0.0
          %308 = vst.msk [vmem:[#allocation2 + $0xb8] sm:$0xff] %vm284, 0.0
          %309 = vst.msk [vmem:[#allocation2 + $0xc0] sm:$0xff] %vm284, 0.0
          %310 = vst.msk [vmem:[#allocation2 + $0xc8] sm:$0xff] %vm284, 0.0
          %311 = vst.msk [vmem:[#allocation2 + $0xd0] sm:$0xff] %vm284, 0.0
          %312 = vst.msk [vmem:[#allocation2 + $0xd8] sm:$0xff] %vm284, 0.0
          %313 = vst.msk [vmem:[#allocation2 + $0xe0] sm:$0xff] %vm284, 0.0
          %314 = vst.msk [vmem:[#allocation2 + $0xe8] sm:$0xff] %vm284, 0.0
          %315 = vst.msk [vmem:[#allocation2 + $0xf0] sm:$0xff] %vm284, 0.0
          %316 = vst.msk [vmem:[#allocation2 + $0xf8] sm:$0xff] %vm284, 0.0
          %317 = vst.msk [vmem:[#allocation2 + $0x100] sm:$0xff] %vm284, 0.0
          %318 = vst.msk [vmem:[#allocation2 + $0x108] sm:$0xff] %vm284, 0.0
          %319 = vst.msk [vmem:[#allocation2 + $0x110] sm:$0xff] %vm284, 0.0
          %320 = vst.msk [vmem:[#allocation2 + $0x118] sm:$0xff] %vm284, 0.0
          %321 = vst.msk [vmem:[#allocation2 + $0x120] sm:$0xff] %vm284, 0.0
          %322 = vst.msk [vmem:[#allocation2 + $0x128] sm:$0xff] %vm284, 0.0
          %323 = vst.msk [vmem:[#allocation2 + $0x130] sm:$0xff] %vm284, 0.0
          %324 = vst.msk [vmem:[#allocation2 + $0x138] sm:$0xff] %vm284, 0.0
          %325 = vst.msk [vmem:[#allocation2 + $0x140] sm:$0xff] %vm284, 0.0
          %326 = vst.msk [vmem:[#allocation2 + $0x148] sm:$0xff] %vm284, 0.0
          %327 = vst.msk [vmem:[#allocation2 + $0x150] sm:$0xff] %vm284, 0.0
          %328 = vst.msk [vmem:[#allocation2 + $0x158] sm:$0xff] %vm284, 0.0
          %329 = vst.msk [vmem:[#allocation2 + $0x160] sm:$0xff] %vm284, 0.0
          %330 = vst.msk [vmem:[#allocation2 + $0x168] sm:$0xff] %vm284, 0.0
          %331 = vst.msk [vmem:[#allocation2 + $0x170] sm:$0xff] %vm284, 0.0
          %332 = vst.msk [vmem:[#allocation2 + $0x178] sm:$0xff] %vm284, 0.0
          %333 = vst.msk [vmem:[#allocation2 + $0x180] sm:$0xff] %vm284, 0.0
          %334 = vst.msk [vmem:[#allocation2 + $0x188] sm:$0xff] %vm284, 0.0
          %335 = vst.msk [vmem:[#allocation2 + $0x190] sm:$0xff] %vm284, 0.0
          %336 = vst.msk [vmem:[#allocation2 + $0x198] sm:$0xff] %vm284, 0.0
          %337 = vst.msk [vmem:[#allocation2 + $0x1a0] sm:$0xff] %vm284, 0.0
          %338 = vst.msk [vmem:[#allocation2 + $0x1a8] sm:$0xff] %vm284, 0.0
          %339 = vst.msk [vmem:[#allocation2 + $0x1b0] sm:$0xff] %vm284, 0.0
          %340 = vst.msk [vmem:[#allocation2 + $0x1b8] sm:$0xff] %vm284, 0.0
          %341 = vst.msk [vmem:[#allocation2 + $0x1c0] sm:$0xff] %vm284, 0.0
          %342 = vst.msk [vmem:[#allocation2 + $0x1c8] sm:$0xff] %vm284, 0.0
          %343 = vst.msk [vmem:[#allocation2 + $0x1d0] sm:$0xff] %vm284, 0.0
          %344 = vst.msk [vmem:[#allocation2 + $0x1d8] sm:$0xff] %vm284, 0.0
          %345 = vst.msk [vmem:[#allocation2 + $0x1e0] sm:$0xff] %vm284, 0.0
          %346 = vst.msk [vmem:[#allocation2 + $0x1e8] sm:$0xff] %vm284, 0.0
          %347 = vst.msk [vmem:[#allocation2 + $0x1f0] sm:$0xff] %vm284, 0.0
          %348 = vst.msk [vmem:[#allocation2 + $0x1f8] sm:$0xff] %vm284, 0.0
          %349 = vst.msk [vmem:[#allocation2 + $0x200] sm:$0xff] %vm284, 0.0
          %350 = vst.msk [vmem:[#allocation2 + $0x208] sm:$0xff] %vm284, 0.0
          %351 = vst.msk [vmem:[#allocation2 + $0x210] sm:$0xff] %vm284, 0.0
          %352 = vst.msk [vmem:[#allocation2 + $0x218] sm:$0xff] %vm284, 0.0
          %353 = vst.msk [vmem:[#allocation2 + $0x220] sm:$0xff] %vm284, 0.0
          %354 = vst.msk [vmem:[#allocation2 + $0x228] sm:$0xff] %vm284, 0.0
          %355 = vst.msk [vmem:[#allocation2 + $0x230] sm:$0xff] %vm284, 0.0
          %356 = vst.msk [vmem:[#allocation2 + $0x238] sm:$0xff] %vm284, 0.0
          %357 = vst.msk [vmem:[#allocation2 + $0x240] sm:$0xff] %vm284, 0.0
          %358 = vst.msk [vmem:[#allocation2 + $0x248] sm:$0xff] %vm284, 0.0
          %359 = vst.msk [vmem:[#allocation2 + $0x250] sm:$0xff] %vm284, 0.0
          %360 = vst.msk [vmem:[#allocation2 + $0x258] sm:$0xff] %vm284, 0.0
          %361 = vst.msk [vmem:[#allocation2 + $0x260] sm:$0xff] %vm284, 0.0
          %362 = vst.msk [vmem:[#allocation2 + $0x268] sm:$0xff] %vm284, 0.0
          %363 = vst.msk [vmem:[#allocation2 + $0x270] sm:$0xff] %vm284, 0.0
          %364 = vst.msk [vmem:[#allocation2 + $0x278] sm:$0xff] %vm284, 0.0
          %365 = vst.msk [vmem:[#allocation2 + $0x280] sm:$0xff] %vm284, 0.0
          %366 = vst.msk [vmem:[#allocation2 + $0x288] sm:$0xff] %vm284, 0.0
          %367 = vst.msk [vmem:[#allocation2 + $0x290] sm:$0xff] %vm284, 0.0
          %368 = vst.msk [vmem:[#allocation2 + $0x298] sm:$0xff] %vm284, 0.0
          %369 = vst.msk [vmem:[#allocation2 + $0x2a0] sm:$0xff] %vm284, 0.0
          %370 = vst.msk [vmem:[#allocation2 + $0x2a8] sm:$0xff] %vm284, 0.0
          %371 = vst.msk [vmem:[#allocation2 + $0x2b0] sm:$0xff] %vm284, 0.0
          %372 = vst.msk [vmem:[#allocation2 + $0x2b8] sm:$0xff] %vm284, 0.0
          %373 = vst.msk [vmem:[#allocation2 + $0x2c0] sm:$0xff] %vm284, 0.0
          %374 = vst.msk [vmem:[#allocation2 + $0x2c8] sm:$0xff] %vm284, 0.0
          %375 = vst.msk [vmem:[#allocation2 + $0x2d0] sm:$0xff] %vm284, 0.0
          %376 = vst.msk [vmem:[#allocation2 + $0x2d8] sm:$0xff] %vm284, 0.0
          %377 = vst.msk [vmem:[#allocation2 + $0x2e0] sm:$0xff] %vm284, 0.0
          %378 = vst.msk [vmem:[#allocation2 + $0x2e8] sm:$0xff] %vm284, 0.0
          %379 = vst.msk [vmem:[#allocation2 + $0x2f0] sm:$0xff] %vm284, 0.0
          %380 = vst.msk [vmem:[#allocation2 + $0x2f8] sm:$0xff] %vm284, 0.0
          %381 = vst.msk [vmem:[#allocation2 + $0x300] sm:$0xff] %vm284, 0.0
          %382 = vst.msk [vmem:[#allocation2 + $0x308] sm:$0xff] %vm284, 0.0
          %383 = vst.msk [vmem:[#allocation2 + $0x310] sm:$0xff] %vm284, 0.0
          %384 = vst.msk [vmem:[#allocation2 + $0x318] sm:$0xff] %vm284, 0.0
          %385 = vst.msk [vmem:[#allocation2 + $0x320] sm:$0xff] %vm284, 0.0
          %386 = vst.msk [vmem:[#allocation2 + $0x328] sm:$0xff] %vm284, 0.0
          %387 = vst.msk [vmem:[#allocation2 + $0x330] sm:$0xff] %vm284, 0.0
          %388 = vst.msk [vmem:[#allocation2 + $0x338] sm:$0xff] %vm284, 0.0
          %389 = vst.msk [vmem:[#allocation2 + $0x340] sm:$0xff] %vm284, 0.0
          %390 = vst.msk [vmem:[#allocation2 + $0x348] sm:$0xff] %vm284, 0.0
          %391 = vst.msk [vmem:[#allocation2 + $0x350] sm:$0xff] %vm284, 0.0
          %392 = vst.msk [vmem:[#allocation2 + $0x358] sm:$0xff] %vm284, 0.0
          %393 = vst.msk [vmem:[#allocation2 + $0x360] sm:$0xff] %vm284, 0.0
          %394 = vst.msk [vmem:[#allocation2 + $0x368] sm:$0xff] %vm284, 0.0
          %395 = vst.msk [vmem:[#allocation2 + $0x370] sm:$0xff] %vm284, 0.0
          %396 = vst.msk [vmem:[#allocation2 + $0x378] sm:$0xff] %vm284, 0.0
          %397 = vst.msk [vmem:[#allocation2 + $0x380] sm:$0xff] %vm284, 0.0
          %398 = vst.msk [vmem:[#allocation2 + $0x388] sm:$0xff] %vm284, 0.0
          %399 = vst.msk [vmem:[#allocation2 + $0x390] sm:$0xff] %vm284, 0.0
          %400 = vst.msk [vmem:[#allocation2 + $0x398] sm:$0xff] %vm284, 0.0
          %401 = vst.msk [vmem:[#allocation2 + $0x3a0] sm:$0xff] %vm284, 0.0
          %402 = vst.msk [vmem:[#allocation2 + $0x3a8] sm:$0xff] %vm284, 0.0
          %403 = vst.msk [vmem:[#allocation2 + $0x3b0] sm:$0xff] %vm284, 0.0
          %404 = vst.msk [vmem:[#allocation2 + $0x3b8] sm:$0xff] %vm284, 0.0
          %405 = vst.msk [vmem:[#allocation2 + $0x3c0] sm:$0xff] %vm284, 0.0
          %406 = vst.msk [vmem:[#allocation2 + $0x3c8] sm:$0xff] %vm284, 0.0
          %407 = vst.msk [vmem:[#allocation2 + $0x3d0] sm:$0xff] %vm284, 0.0
          %408 = vst.msk [vmem:[#allocation2 + $0x3d8] sm:$0xff] %vm284, 0.0
          %409 = vst.msk [vmem:[#allocation2 + $0x3e0] sm:$0xff] %vm284, 0.0
          %410 = vst.msk [vmem:[#allocation2 + $0x3e8] sm:$0xff] %vm284, 0.0
          %411 = vst.msk [vmem:[#allocation2 + $0x3f0] sm:$0xff] %vm284, 0.0
          %412 = vst.msk [vmem:[#allocation2 + $0x3f8] sm:$0xff] %vm284, 0.0
          %413 = vst.msk [vmem:[#allocation2 + $0x400] sm:$0xff] %vm284, 0.0
          %414 = vst.msk [vmem:[#allocation2 + $0x408] sm:$0xff] %vm284, 0.0
          %415 = vst.msk [vmem:[#allocation2 + $0x410] sm:$0xff] %vm284, 0.0
          %416 = vst.msk [vmem:[#allocation2 + $0x418] sm:$0xff] %vm284, 0.0
          %417 = vst.msk [vmem:[#allocation2 + $0x420] sm:$0xff] %vm284, 0.0
          %418 = vst.msk [vmem:[#allocation2 + $0x428] sm:$0xff] %vm284, 0.0
          %419 = vst.msk [vmem:[#allocation2 + $0x430] sm:$0xff] %vm284, 0.0
          %420 = vst.msk [vmem:[#allocation2 + $0x438] sm:$0xff] %vm284, 0.0
          %421 = vst.msk [vmem:[#allocation2 + $0x440] sm:$0xff] %vm284, 0.0
          %422 = vst.msk [vmem:[#allocation2 + $0x448] sm:$0xff] %vm284, 0.0
          %423 = vst.msk [vmem:[#allocation2 + $0x450] sm:$0xff] %vm284, 0.0
          %424 = vst.msk [vmem:[#allocation2 + $0x458] sm:$0xff] %vm284, 0.0
          %425 = vst.msk [vmem:[#allocation2 + $0x460] sm:$0xff] %vm284, 0.0
          %426 = vst.msk [vmem:[#allocation2 + $0x468] sm:$0xff] %vm284, 0.0
          %427 = vst.msk [vmem:[#allocation2 + $0x470] sm:$0xff] %vm284, 0.0
          %428 = vst.msk [vmem:[#allocation2 + $0x478] sm:$0xff] %vm284, 0.0
          %429 = vst.msk [vmem:[#allocation2 + $0x480] sm:$0xff] %vm284, 0.0
          %430 = vst.msk [vmem:[#allocation2 + $0x488] sm:$0xff] %vm284, 0.0
          %431 = vst.msk [vmem:[#allocation2 + $0x490] sm:$0xff] %vm284, 0.0
          %432 = vst.msk [vmem:[#allocation2 + $0x498] sm:$0xff] %vm284, 0.0
          %433 = vst.msk [vmem:[#allocation2 + $0x4a0] sm:$0xff] %vm284, 0.0
          %434 = vst.msk [vmem:[#allocation2 + $0x4a8] sm:$0xff] %vm284, 0.0
          %435 = vst.msk [vmem:[#allocation2 + $0x4b0] sm:$0xff] %vm284, 0.0
          %436 = vst.msk [vmem:[#allocation2 + $0x4b8] sm:$0xff] %vm284, 0.0
          %437 = vst.msk [vmem:[#allocation2 + $0x4c0] sm:$0xff] %vm284, 0.0
          %438 = vst.msk [vmem:[#allocation2 + $0x4c8] sm:$0xff] %vm284, 0.0
          %439 = vst.msk [vmem:[#allocation2 + $0x4d0] sm:$0xff] %vm284, 0.0
          %440 = vst.msk [vmem:[#allocation2 + $0x4d8] sm:$0xff] %vm284, 0.0
          %441 = vst.msk [vmem:[#allocation2 + $0x4e0] sm:$0xff] %vm284, 0.0
          %442 = vst.msk [vmem:[#allocation2 + $0x4e8] sm:$0xff] %vm284, 0.0
          %443 = vst.msk [vmem:[#allocation2 + $0x4f0] sm:$0xff] %vm284, 0.0
          %444 = vst.msk [vmem:[#allocation2 + $0x4f8] sm:$0xff] %vm284, 0.0
          %445 = vst.msk [vmem:[#allocation2 + $0x500] sm:$0xff] %vm284, 0.0
          %446 = vst.msk [vmem:[#allocation2 + $0x508] sm:$0xff] %vm284, 0.0
          %447 = vst.msk [vmem:[#allocation2 + $0x510] sm:$0xff] %vm284, 0.0
          %448 = vst.msk [vmem:[#allocation2 + $0x518] sm:$0xff] %vm284, 0.0
          %449 = vst.msk [vmem:[#allocation2 + $0x520] sm:$0xff] %vm284, 0.0
          %450 = vst.msk [vmem:[#allocation2 + $0x528] sm:$0xff] %vm284, 0.0
          %451 = vst.msk [vmem:[#allocation2 + $0x530] sm:$0xff] %vm284, 0.0
          %452 = vst.msk [vmem:[#allocation2 + $0x538] sm:$0xff] %vm284, 0.0
          %453 = vst.msk [vmem:[#allocation2 + $0x540] sm:$0xff] %vm284, 0.0
          %454 = vst.msk [vmem:[#allocation2 + $0x548] sm:$0xff] %vm284, 0.0
          %455 = vst.msk [vmem:[#allocation2 + $0x550] sm:$0xff] %vm284, 0.0
          %456 = vst.msk [vmem:[#allocation2 + $0x558] sm:$0xff] %vm284, 0.0
          %457 = vst.msk [vmem:[#allocation2 + $0x560] sm:$0xff] %vm284, 0.0
          %458 = vst.msk [vmem:[#allocation2 + $0x568] sm:$0xff] %vm284, 0.0
          %459 = vst.msk [vmem:[#allocation2 + $0x570] sm:$0xff] %vm284, 0.0
          %460 = vst.msk [vmem:[#allocation2 + $0x578] sm:$0xff] %vm284, 0.0
          %461 = vst.msk [vmem:[#allocation2 + $0x580] sm:$0xff] %vm284, 0.0
          %462 = vst.msk [vmem:[#allocation2 + $0x588] sm:$0xff] %vm284, 0.0
          %463 = vst.msk [vmem:[#allocation2 + $0x590] sm:$0xff] %vm284, 0.0
          %464 = vst.msk [vmem:[#allocation2 + $0x598] sm:$0xff] %vm284, 0.0
          %465 = vst.msk [vmem:[#allocation2 + $0x5a0] sm:$0xff] %vm284, 0.0
          %466 = vst.msk [vmem:[#allocation2 + $0x5a8] sm:$0xff] %vm284, 0.0
          %467 = vst.msk [vmem:[#allocation2 + $0x5b0] sm:$0xff] %vm284, 0.0
          %468 = vst.msk [vmem:[#allocation2 + $0x5b8] sm:$0xff] %vm284, 0.0
          %469 = vst.msk [vmem:[#allocation2 + $0x5c0] sm:$0xff] %vm284, 0.0
          %470 = vst.msk [vmem:[#allocation2 + $0x5c8] sm:$0xff] %vm284, 0.0
          %471 = vst.msk [vmem:[#allocation2 + $0x5d0] sm:$0xff] %vm284, 0.0
          %472 = vst.msk [vmem:[#allocation2 + $0x5d8] sm:$0xff] %vm284, 0.0
          %473 = vst.msk [vmem:[#allocation2 + $0x5e0] sm:$0xff] %vm284, 0.0
          %474 = vst.msk [vmem:[#allocation2 + $0x5e8] sm:$0xff] %vm284, 0.0
          %475 = vst.msk [vmem:[#allocation2 + $0x5f0] sm:$0xff] %vm284, 0.0
          %476 = vst.msk [vmem:[#allocation2 + $0x5f8] sm:$0xff] %vm284, 0.0
          %477 = vst.msk [vmem:[#allocation2 + $0x600] sm:$0xff] %vm284, 0.0
          %478 = vst.msk [vmem:[#allocation2 + $0x608] sm:$0xff] %vm284, 0.0
          %479 = vst.msk [vmem:[#allocation2 + $0x610] sm:$0xff] %vm284, 0.0
          %480 = vst.msk [vmem:[#allocation2 + $0x618] sm:$0xff] %vm284, 0.0
          %481 = vst.msk [vmem:[#allocation2 + $0x620] sm:$0xff] %vm284, 0.0
          %482 = vst.msk [vmem:[#allocation2 + $0x628] sm:$0xff] %vm284, 0.0
          %483 = vst.msk [vmem:[#allocation2 + $0x630] sm:$0xff] %vm284, 0.0
          %484 = vst.msk [vmem:[#allocation2 + $0x638] sm:$0xff] %vm284, 0.0
          %485 = vst.msk [vmem:[#allocation2 + $0x640] sm:$0xff] %vm284, 0.0
          %486 = vst.msk [vmem:[#allocation2 + $0x648] sm:$0xff] %vm284, 0.0
          %487 = vst.msk [vmem:[#allocation2 + $0x650] sm:$0xff] %vm284, 0.0
          %488 = vst.msk [vmem:[#allocation2 + $0x658] sm:$0xff] %vm284, 0.0
          %489 = vst.msk [vmem:[#allocation2 + $0x660] sm:$0xff] %vm284, 0.0
          %490 = vst.msk [vmem:[#allocation2 + $0x668] sm:$0xff] %vm284, 0.0
          %491 = vst.msk [vmem:[#allocation2 + $0x670] sm:$0xff] %vm284, 0.0
          %492 = vst.msk [vmem:[#allocation2 + $0x678] sm:$0xff] %vm284, 0.0
          %493 = vst.msk [vmem:[#allocation2 + $0x680] sm:$0xff] %vm284, 0.0
          %494 = vst.msk [vmem:[#allocation2 + $0x688] sm:$0xff] %vm284, 0.0
          %495 = vst.msk [vmem:[#allocation2 + $0x690] sm:$0xff] %vm284, 0.0
          %496 = vst.msk [vmem:[#allocation2 + $0x698] sm:$0xff] %vm284, 0.0
          %497 = vst.msk [vmem:[#allocation2 + $0x6a0] sm:$0xff] %vm284, 0.0
          %498 = vst.msk [vmem:[#allocation2 + $0x6a8] sm:$0xff] %vm284, 0.0
          %499 = vst.msk [vmem:[#allocation2 + $0x6b0] sm:$0xff] %vm284, 0.0
          %500 = vst.msk [vmem:[#allocation2 + $0x6b8] sm:$0xff] %vm284, 0.0
          %501 = vst.msk [vmem:[#allocation2 + $0x6c0] sm:$0xff] %vm284, 0.0
          %502 = vst.msk [vmem:[#allocation2 + $0x6c8] sm:$0xff] %vm284, 0.0
          %503 = vst.msk [vmem:[#allocation2 + $0x6d0] sm:$0xff] %vm284, 0.0
          %504 = vst.msk [vmem:[#allocation2 + $0x6d8] sm:$0xff] %vm284, 0.0
          %505 = vst.msk [vmem:[#allocation2 + $0x6e0] sm:$0xff] %vm284, 0.0
          %506 = vst.msk [vmem:[#allocation2 + $0x6e8] sm:$0xff] %vm284, 0.0
          %507 = vst.msk [vmem:[#allocation2 + $0x6f0] sm:$0xff] %vm284, 0.0
          %508 = vst.msk [vmem:[#allocation2 + $0x6f8] sm:$0xff] %vm284, 0.0
          %509 = vst.msk [vmem:[#allocation2 + $0x700] sm:$0xff] %vm284, 0.0
          %510 = vst.msk [vmem:[#allocation2 + $0x708] sm:$0xff] %vm284, 0.0
          %511 = vst.msk [vmem:[#allocation2 + $0x710] sm:$0xff] %vm284, 0.0
          %512 = vst.msk [vmem:[#allocation2 + $0x718] sm:$0xff] %vm284, 0.0
          %513 = vst.msk [vmem:[#allocation2 + $0x720] sm:$0xff] %vm284, 0.0
          %514 = vst.msk [vmem:[#allocation2 + $0x728] sm:$0xff] %vm284, 0.0
          %515 = vst.msk [vmem:[#allocation2 + $0x730] sm:$0xff] %vm284, 0.0
          %516 = vst.msk [vmem:[#allocation2 + $0x738] sm:$0xff] %vm284, 0.0
          %517 = vst.msk [vmem:[#allocation2 + $0x740] sm:$0xff] %vm284, 0.0
          %518 = vst.msk [vmem:[#allocation2 + $0x748] sm:$0xff] %vm284, 0.0
          %519 = vst.msk [vmem:[#allocation2 + $0x750] sm:$0xff] %vm284, 0.0
          %520 = vst.msk [vmem:[#allocation2 + $0x758] sm:$0xff] %vm284, 0.0
          %521 = vst.msk [vmem:[#allocation2 + $0x760] sm:$0xff] %vm284, 0.0
          %522 = vst.msk [vmem:[#allocation2 + $0x768] sm:$0xff] %vm284, 0.0
          %523 = vst.msk [vmem:[#allocation2 + $0x770] sm:$0xff] %vm284, 0.0
          %524 = vst.msk [vmem:[#allocation2 + $0x778] sm:$0xff] %vm284, 0.0
        $region52: #{_lambda_.5} parent=39 // pred_fallthru
          _
        %v525 = vld [vmem:[%s278] sm:$0xff]
        %v526 = vld [vmem:[%s278 + $0x8] sm:$0xff]
        %v527 = vld [vmem:[%s278 + $0x10] sm:$0xff]
        %v528 = vld [vmem:[%s278 + $0x18] sm:$0xff]
        %v529 = vld [vmem:[%s278 + $0x20] sm:$0xff]
        %v530 = vld [vmem:[%s278 + $0x28] sm:$0xff]
        %v531 = vld [vmem:[%s278 + $0x30] sm:$0xff]
        %v532 = vld [vmem:[%s278 + $0x38] sm:$0xff]
        %v533 = vpack.c.bf16 %v526, %v525
        %v534 = vpack.c.bf16 %v528, %v527
        %v535 = vpack.c.bf16 %v530, %v529
        %v536 = vpack.c.bf16 %v532, %v531
        %v537 = vld [vmem:[#allocation3] sm:$0xf]
        %v538 = vld [vmem:[#allocation3 + $0x4] sm:$0xf]
        %v539 = vld [vmem:[#allocation3 + $0x8] sm:$0xf]
        %v540 = vld [vmem:[#allocation3 + $0xc] sm:$0xf]
        %v541 = vld [vmem:[#allocation3 + $0x10] sm:$0xf]
        %v542 = vld [vmem:[#allocation3 + $0x14] sm:$0xf]
        %v543 = vld [vmem:[#allocation3 + $0x18] sm:$0xf]
        %v544 = vld [vmem:[#allocation3 + $0x1c] sm:$0xf]
        %v545 = vld [vmem:[#allocation3 + $0x20] sm:$0xf]
        %v546 = vld [vmem:[#allocation3 + $0x24] sm:$0xf]
        %v547 = vld [vmem:[#allocation3 + $0x28] sm:$0xf]
        %v548 = vld [vmem:[#allocation3 + $0x2c] sm:$0xf]
        %v549 = vld [vmem:[#allocation3 + $0x30] sm:$0xf]
        %v550 = vld [vmem:[#allocation3 + $0x34] sm:$0xf]
        %v551 = vld [vmem:[#allocation3 + $0x38] sm:$0xf]
        %v552 = vld [vmem:[#allocation3 + $0x3c] sm:$0xf]
        %v553 = vld [vmem:[#allocation3 + $0x40] sm:$0xf]
        %v554 = vld [vmem:[#allocation3 + $0x44] sm:$0xf]
        %v555 = vld [vmem:[#allocation3 + $0x48] sm:$0xf]
        %v556 = vld [vmem:[#allocation3 + $0x4c] sm:$0xf]
        %v557 = vld [vmem:[#allocation3 + $0x50] sm:$0xf]
        %v558 = vld [vmem:[#allocation3 + $0x54] sm:$0xf]
        %v559 = vld [vmem:[#allocation3 + $0x58] sm:$0xf]
        %v560 = vld [vmem:[#allocation3 + $0x5c] sm:$0xf]
        %v561 = vld [vmem:[#allocation3 + $0x60] sm:$0xf]
        %v562 = vld [vmem:[#allocation3 + $0x64] sm:$0xf]
        %v563 = vld [vmem:[#allocation3 + $0x68] sm:$0xf]
        %v564 = vld [vmem:[#allocation3 + $0x6c] sm:$0xf]
        %v565 = vld [vmem:[#allocation3 + $0x70] sm:$0xf]
        %v566 = vld [vmem:[#allocation3 + $0x74] sm:$0xf]
        %v567 = vld [vmem:[#allocation3 + $0x78] sm:$0xf]
        %v568 = vld [vmem:[#allocation3 + $0x7c] sm:$0xf]
        %v569 = vld [vmem:[#allocation3 + $0x80] sm:$0xf]
        %v570 = vld [vmem:[#allocation3 + $0x84] sm:$0xf]
        %v571 = vld [vmem:[#allocation3 + $0x88] sm:$0xf]
        %v572 = vld [vmem:[#allocation3 + $0x8c] sm:$0xf]
        %v573 = vld [vmem:[#allocation3 + $0x90] sm:$0xf]
        %v574 = vld [vmem:[#allocation3 + $0x94] sm:$0xf]
        %v575 = vld [vmem:[#allocation3 + $0x98] sm:$0xf]
        %v576 = vld [vmem:[#allocation3 + $0x9c] sm:$0xf]
        %v577 = vld [vmem:[#allocation3 + $0xa0] sm:$0xf]
        %v578 = vld [vmem:[#allocation3 + $0xa4] sm:$0xf]
        %v579 = vld [vmem:[#allocation3 + $0xa8] sm:$0xf]
        %v580 = vld [vmem:[#allocation3 + $0xac] sm:$0xf]
        %v581 = vld [vmem:[#allocation3 + $0xb0] sm:$0xf]
        %v582 = vld [vmem:[#allocation3 + $0xb4] sm:$0xf]
        %v583 = vld [vmem:[#allocation3 + $0xb8] sm:$0xf]
        %v584 = vld [vmem:[#allocation3 + $0xbc] sm:$0xf]
        %v585 = vld [vmem:[#allocation3 + $0xc0] sm:$0xf]
        %v586 = vld [vmem:[#allocation3 + $0xc4] sm:$0xf]
        %v587 = vld [vmem:[#allocation3 + $0xc8] sm:$0xf]
        %v588 = vld [vmem:[#allocation3 + $0xcc] sm:$0xf]
        %v589 = vld [vmem:[#allocation3 + $0xd0] sm:$0xf]
        %v590 = vld [vmem:[#allocation3 + $0xd4] sm:$0xf]
        %v591 = vld [vmem:[#allocation3 + $0xd8] sm:$0xf]
        %v592 = vld [vmem:[#allocation3 + $0xdc] sm:$0xf]
        %v593 = vld [vmem:[#allocation3 + $0xe0] sm:$0xf]
        %v594 = vld [vmem:[#allocation3 + $0xe4] sm:$0xf]
        %v595 = vld [vmem:[#allocation3 + $0xe8] sm:$0xf]
        %v596 = vld [vmem:[#allocation3 + $0xec] sm:$0xf]
        %v597 = vld [vmem:[#allocation3 + $0xf0] sm:$0xf]
        %v598 = vld [vmem:[#allocation3 + $0xf4] sm:$0xf]
        %v599 = vld [vmem:[#allocation3 + $0xf8] sm:$0xf]
        %v600 = vld [vmem:[#allocation3 + $0xfc] sm:$0xf]
        %v601 = vld [vmem:[#allocation3 + $0x100] sm:$0xf]
        %v602 = vld [vmem:[#allocation3 + $0x104] sm:$0xf]
        %v603 = vld [vmem:[#allocation3 + $0x108] sm:$0xf]
        %v604 = vld [vmem:[#allocation3 + $0x10c] sm:$0xf]
        %v605 = vld [vmem:[#allocation3 + $0x110] sm:$0xf]
        %v606 = vld [vmem:[#allocation3 + $0x114] sm:$0xf]
        %v607 = vld [vmem:[#allocation3 + $0x118] sm:$0xf]
        %v608 = vld [vmem:[#allocation3 + $0x11c] sm:$0xf]
        %v609 = vld [vmem:[#allocation3 + $0x120] sm:$0xf]
        %v610 = vld [vmem:[#allocation3 + $0x124] sm:$0xf]
        %v611 = vld [vmem:[#allocation3 + $0x128] sm:$0xf]
        %v612 = vld [vmem:[#allocation3 + $0x12c] sm:$0xf]
        %v613 = vld [vmem:[#allocation3 + $0x130] sm:$0xf]
        %v614 = vld [vmem:[#allocation3 + $0x134] sm:$0xf]
        %v615 = vld [vmem:[#allocation3 + $0x138] sm:$0xf]
        %v616 = vld [vmem:[#allocation3 + $0x13c] sm:$0xf]
        %v617 = vld [vmem:[#allocation3 + $0x140] sm:$0xf]
        %v618 = vld [vmem:[#allocation3 + $0x144] sm:$0xf]
        %v619 = vld [vmem:[#allocation3 + $0x148] sm:$0xf]
        %v620 = vld [vmem:[#allocation3 + $0x14c] sm:$0xf]
        %v621 = vld [vmem:[#allocation3 + $0x150] sm:$0xf]
        %v622 = vld [vmem:[#allocation3 + $0x154] sm:$0xf]
        %v623 = vld [vmem:[#allocation3 + $0x158] sm:$0xf]
        %v624 = vld [vmem:[#allocation3 + $0x15c] sm:$0xf]
        %v625 = vld [vmem:[#allocation3 + $0x160] sm:$0xf]
        %v626 = vld [vmem:[#allocation3 + $0x164] sm:$0xf]
        %v627 = vld [vmem:[#allocation3 + $0x168] sm:$0xf]
        %v628 = vld [vmem:[#allocation3 + $0x16c] sm:$0xf]
        %v629 = vld [vmem:[#allocation3 + $0x170] sm:$0xf]
        %v630 = vld [vmem:[#allocation3 + $0x174] sm:$0xf]
        %v631 = vld [vmem:[#allocation3 + $0x178] sm:$0xf]
        %v632 = vld [vmem:[#allocation3 + $0x17c] sm:$0xf]
        %v633 = vld [vmem:[#allocation3 + $0x180] sm:$0xf]
        %v634 = vld [vmem:[#allocation3 + $0x184] sm:$0xf]
        %v635 = vld [vmem:[#allocation3 + $0x188] sm:$0xf]
        %v636 = vld [vmem:[#allocation3 + $0x18c] sm:$0xf]
        %v637 = vld [vmem:[#allocation3 + $0x190] sm:$0xf]
        %v638 = vld [vmem:[#allocation3 + $0x194] sm:$0xf]
        %v639 = vld [vmem:[#allocation3 + $0x198] sm:$0xf]
        %v640 = vld [vmem:[#allocation3 + $0x19c] sm:$0xf]
        %v641 = vld [vmem:[#allocation3 + $0x1a0] sm:$0xf]
        %v642 = vld [vmem:[#allocation3 + $0x1a4] sm:$0xf]
        %v643 = vld [vmem:[#allocation3 + $0x1a8] sm:$0xf]
        %v644 = vld [vmem:[#allocation3 + $0x1ac] sm:$0xf]
        %v645 = vld [vmem:[#allocation3 + $0x1b0] sm:$0xf]
        %v646 = vld [vmem:[#allocation3 + $0x1b4] sm:$0xf]
        %v647 = vld [vmem:[#allocation3 + $0x1b8] sm:$0xf]
        %v648 = vld [vmem:[#allocation3 + $0x1bc] sm:$0xf]
        %v649 = vld [vmem:[#allocation3 + $0x1c0] sm:$0xf]
        %v650 = vld [vmem:[#allocation3 + $0x1c4] sm:$0xf]
        %v651 = vld [vmem:[#allocation3 + $0x1c8] sm:$0xf]
        %v652 = vld [vmem:[#allocation3 + $0x1cc] sm:$0xf]
        %v653 = vld [vmem:[#allocation3 + $0x1d0] sm:$0xf]
        %v654 = vld [vmem:[#allocation3 + $0x1d4] sm:$0xf]
        %v655 = vld [vmem:[#allocation3 + $0x1d8] sm:$0xf]
        %v656 = vld [vmem:[#allocation3 + $0x1dc] sm:$0xf]
        %v657 = vld [vmem:[#allocation3 + $0x1e0] sm:$0xf]
        %v658 = vld [vmem:[#allocation3 + $0x1e4] sm:$0xf]
        %v659 = vld [vmem:[#allocation3 + $0x1e8] sm:$0xf]
        %v660 = vld [vmem:[#allocation3 + $0x1ec] sm:$0xf]
        %v661 = vld [vmem:[#allocation3 + $0x1f0] sm:$0xf]
        %v662 = vld [vmem:[#allocation3 + $0x1f4] sm:$0xf]
        %v663 = vld [vmem:[#allocation3 + $0x1f8] sm:$0xf]
        %v664 = vld [vmem:[#allocation3 + $0x1fc] sm:$0xf]
        %v665 = vld [vmem:[#allocation3 + $0x200] sm:$0xf]
        %v666 = vld [vmem:[#allocation3 + $0x204] sm:$0xf]
        %v667 = vld [vmem:[#allocation3 + $0x208] sm:$0xf]
        %v668 = vld [vmem:[#allocation3 + $0x20c] sm:$0xf]
        %v669 = vld [vmem:[#allocation3 + $0x210] sm:$0xf]
        %v670 = vld [vmem:[#allocation3 + $0x214] sm:$0xf]
        %v671 = vld [vmem:[#allocation3 + $0x218] sm:$0xf]
        %v672 = vld [vmem:[#allocation3 + $0x21c] sm:$0xf]
        %v673 = vld [vmem:[#allocation3 + $0x220] sm:$0xf]
        %v674 = vld [vmem:[#allocation3 + $0x224] sm:$0xf]
        %v675 = vld [vmem:[#allocation3 + $0x228] sm:$0xf]
        %v676 = vld [vmem:[#allocation3 + $0x22c] sm:$0xf]
        %v677 = vld [vmem:[#allocation3 + $0x230] sm:$0xf]
        %v678 = vld [vmem:[#allocation3 + $0x234] sm:$0xf]
        %v679 = vld [vmem:[#allocation3 + $0x238] sm:$0xf]
        %v680 = vld [vmem:[#allocation3 + $0x23c] sm:$0xf]
        %v681 = vld [vmem:[#allocation3 + $0x240] sm:$0xf]
        %v682 = vld [vmem:[#allocation3 + $0x244] sm:$0xf]
        %v683 = vld [vmem:[#allocation3 + $0x248] sm:$0xf]
        %v684 = vld [vmem:[#allocation3 + $0x24c] sm:$0xf]
        %v685 = vld [vmem:[#allocation3 + $0x250] sm:$0xf]
        %v686 = vld [vmem:[#allocation3 + $0x254] sm:$0xf]
        %v687 = vld [vmem:[#allocation3 + $0x258] sm:$0xf]
        %v688 = vld [vmem:[#allocation3 + $0x25c] sm:$0xf]
        %v689 = vld [vmem:[#allocation3 + $0x260] sm:$0xf]
        %v690 = vld [vmem:[#allocation3 + $0x264] sm:$0xf]
        %v691 = vld [vmem:[#allocation3 + $0x268] sm:$0xf]
        %v692 = vld [vmem:[#allocation3 + $0x26c] sm:$0xf]
        %v693 = vld [vmem:[#allocation3 + $0x270] sm:$0xf]
        %v694 = vld [vmem:[#allocation3 + $0x274] sm:$0xf]
        %v695 = vld [vmem:[#allocation3 + $0x278] sm:$0xf]
        %v696 = vld [vmem:[#allocation3 + $0x27c] sm:$0xf]
        %v697 = vld [vmem:[#allocation3 + $0x280] sm:$0xf]
        %v698 = vld [vmem:[#allocation3 + $0x284] sm:$0xf]
        %v699 = vld [vmem:[#allocation3 + $0x288] sm:$0xf]
        %v700 = vld [vmem:[#allocation3 + $0x28c] sm:$0xf]
        %v701 = vld [vmem:[#allocation3 + $0x290] sm:$0xf]
        %v702 = vld [vmem:[#allocation3 + $0x294] sm:$0xf]
        %v703 = vld [vmem:[#allocation3 + $0x298] sm:$0xf]
        %v704 = vld [vmem:[#allocation3 + $0x29c] sm:$0xf]
        %v705 = vld [vmem:[#allocation3 + $0x2a0] sm:$0xf]
        %v706 = vld [vmem:[#allocation3 + $0x2a4] sm:$0xf]
        %v707 = vld [vmem:[#allocation3 + $0x2a8] sm:$0xf]
        %v708 = vld [vmem:[#allocation3 + $0x2ac] sm:$0xf]
        %v709 = vld [vmem:[#allocation3 + $0x2b0] sm:$0xf]
        %v710 = vld [vmem:[#allocation3 + $0x2b4] sm:$0xf]
        %v711 = vld [vmem:[#allocation3 + $0x2b8] sm:$0xf]
        %v712 = vld [vmem:[#allocation3 + $0x2bc] sm:$0xf]
        %v713 = vld [vmem:[#allocation3 + $0x2c0] sm:$0xf]
        %v714 = vld [vmem:[#allocation3 + $0x2c4] sm:$0xf]
        %v715 = vld [vmem:[#allocation3 + $0x2c8] sm:$0xf]
        %v716 = vld [vmem:[#allocation3 + $0x2cc] sm:$0xf]
        %v717 = vld [vmem:[#allocation3 + $0x2d0] sm:$0xf]
        %v718 = vld [vmem:[#allocation3 + $0x2d4] sm:$0xf]
        %v719 = vld [vmem:[#allocation3 + $0x2d8] sm:$0xf]
        %v720 = vld [vmem:[#allocation3 + $0x2dc] sm:$0xf]
        %v721 = vld [vmem:[#allocation3 + $0x2e0] sm:$0xf]
        %v722 = vld [vmem:[#allocation3 + $0x2e4] sm:$0xf]
        %v723 = vld [vmem:[#allocation3 + $0x2e8] sm:$0xf]
        %v724 = vld [vmem:[#allocation3 + $0x2ec] sm:$0xf]
        %v725 = vld [vmem:[#allocation3 + $0x2f0] sm:$0xf]
        %v726 = vld [vmem:[#allocation3 + $0x2f4] sm:$0xf]
        %v727 = vld [vmem:[#allocation3 + $0x2f8] sm:$0xf]
        %v728 = vld [vmem:[#allocation3 + $0x2fc] sm:$0xf]
        %v729 = vld [vmem:[#allocation3 + $0x300] sm:$0xf]
        %v730 = vld [vmem:[#allocation3 + $0x304] sm:$0xf]
        %v731 = vld [vmem:[#allocation3 + $0x308] sm:$0xf]
        %v732 = vld [vmem:[#allocation3 + $0x30c] sm:$0xf]
        %v733 = vld [vmem:[#allocation3 + $0x310] sm:$0xf]
        %v734 = vld [vmem:[#allocation3 + $0x314] sm:$0xf]
        %v735 = vld [vmem:[#allocation3 + $0x318] sm:$0xf]
        %v736 = vld [vmem:[#allocation3 + $0x31c] sm:$0xf]
        %v737 = vld [vmem:[#allocation3 + $0x320] sm:$0xf]
        %v738 = vld [vmem:[#allocation3 + $0x324] sm:$0xf]
        %v739 = vld [vmem:[#allocation3 + $0x328] sm:$0xf]
        %v740 = vld [vmem:[#allocation3 + $0x32c] sm:$0xf]
        %v741 = vld [vmem:[#allocation3 + $0x330] sm:$0xf]
        %v742 = vld [vmem:[#allocation3 + $0x334] sm:$0xf]
        %v743 = vld [vmem:[#allocation3 + $0x338] sm:$0xf]
        %v744 = vld [vmem:[#allocation3 + $0x33c] sm:$0xf]
        %v745 = vld [vmem:[#allocation3 + $0x340] sm:$0xf]
        %v746 = vld [vmem:[#allocation3 + $0x344] sm:$0xf]
        %v747 = vld [vmem:[#allocation3 + $0x348] sm:$0xf]
        %v748 = vld [vmem:[#allocation3 + $0x34c] sm:$0xf]
        %v749 = vld [vmem:[#allocation3 + $0x350] sm:$0xf]
        %v750 = vld [vmem:[#allocation3 + $0x354] sm:$0xf]
        %v751 = vld [vmem:[#allocation3 + $0x358] sm:$0xf]
        %v752 = vld [vmem:[#allocation3 + $0x35c] sm:$0xf]
        %v753 = vld [vmem:[#allocation3 + $0x360] sm:$0xf]
        %v754 = vld [vmem:[#allocation3 + $0x364] sm:$0xf]
        %v755 = vld [vmem:[#allocation3 + $0x368] sm:$0xf]
        %v756 = vld [vmem:[#allocation3 + $0x36c] sm:$0xf]
        %v757 = vld [vmem:[#allocation3 + $0x370] sm:$0xf]
        %v758 = vld [vmem:[#allocation3 + $0x374] sm:$0xf]
        %v759 = vld [vmem:[#allocation3 + $0x378] sm:$0xf]
        %v760 = vld [vmem:[#allocation3 + $0x37c] sm:$0xf]
        %v761 = vld [vmem:[#allocation3 + $0x380] sm:$0xf]
        %v762 = vld [vmem:[#allocation3 + $0x384] sm:$0xf]
        %v763 = vld [vmem:[#allocation3 + $0x388] sm:$0xf]
        %v764 = vld [vmem:[#allocation3 + $0x38c] sm:$0xf]
        %v765 = vld [vmem:[#allocation3 + $0x390] sm:$0xf]
        %v766 = vld [vmem:[#allocation3 + $0x394] sm:$0xf]
        %v767 = vld [vmem:[#allocation3 + $0x398] sm:$0xf]
        %v768 = vld [vmem:[#allocation3 + $0x39c] sm:$0xf]
        %v769 = vld [vmem:[#allocation3 + $0x3a0] sm:$0xf]
        %v770 = vld [vmem:[#allocation3 + $0x3a4] sm:$0xf]
        %v771 = vld [vmem:[#allocation3 + $0x3a8] sm:$0xf]
        %v772 = vld [vmem:[#allocation3 + $0x3ac] sm:$0xf]
        %v773 = vld [vmem:[#allocation3 + $0x3b0] sm:$0xf]
        %v774 = vld [vmem:[#allocation3 + $0x3b4] sm:$0xf]
        %v775 = vld [vmem:[#allocation3 + $0x3b8] sm:$0xf]
        %v776 = vld [vmem:[#allocation3 + $0x3bc] sm:$0xf]
        %v777 = vld [vmem:[#allocation6] sm:$0xff]
        %v778 = vld [vmem:[#allocation6 + $0x8] sm:$0xff]
        %v779 = vld [vmem:[#allocation6 + $0x10] sm:$0xff]
        %v780 = vld [vmem:[#allocation6 + $0x18] sm:$0xff]
        %v781 = vld [vmem:[#allocation6 + $0x20] sm:$0xff]
        %v782 = vld [vmem:[#allocation6 + $0x28] sm:$0xff]
        %v783 = vld [vmem:[#allocation6 + $0x30] sm:$0xff]
        %v784 = vld [vmem:[#allocation6 + $0x38] sm:$0xff]
        %v785 = vld [vmem:[#allocation6 + $0x40] sm:$0xff]
        %v786 = vld [vmem:[#allocation6 + $0x48] sm:$0xff]
        %v787 = vld [vmem:[#allocation6 + $0x50] sm:$0xff]
        %v788 = vld [vmem:[#allocation6 + $0x58] sm:$0xff]
        %v789 = vld [vmem:[#allocation6 + $0x60] sm:$0xff]
        %v790 = vld [vmem:[#allocation6 + $0x68] sm:$0xff]
        %v791 = vld [vmem:[#allocation6 + $0x70] sm:$0xff]
        %v792 = vld [vmem:[#allocation6 + $0x78] sm:$0xff]
        %v793 = vld [vmem:[#allocation6 + $0x80] sm:$0xff]
        %v794 = vld [vmem:[#allocation6 + $0x88] sm:$0xff]
        %v795 = vld [vmem:[#allocation6 + $0x90] sm:$0xff]
        %v796 = vld [vmem:[#allocation6 + $0x98] sm:$0xff]
        %v797 = vld [vmem:[#allocation6 + $0xa0] sm:$0xff]
        %v798 = vld [vmem:[#allocation6 + $0xa8] sm:$0xff]
        %v799 = vld [vmem:[#allocation6 + $0xb0] sm:$0xff]
        %v800 = vld [vmem:[#allocation6 + $0xb8] sm:$0xff]
        %v801 = vld [vmem:[#allocation6 + $0xc0] sm:$0xff]
        %v802 = vld [vmem:[#allocation6 + $0xc8] sm:$0xff]
        %v803 = vld [vmem:[#allocation6 + $0xd0] sm:$0xff]
        %v804 = vld [vmem:[#allocation6 + $0xd8] sm:$0xff]
        %v805 = vld [vmem:[#allocation6 + $0xe0] sm:$0xff]
        %v806 = vld [vmem:[#allocation6 + $0xe8] sm:$0xff]
        %v807 = vld [vmem:[#allocation6 + $0xf0] sm:$0xff]
        %v808 = vld [vmem:[#allocation6 + $0xf8] sm:$0xff]
        %v809 = vld [vmem:[#allocation6 + $0x100] sm:$0xff]
        %v810 = vld [vmem:[#allocation6 + $0x108] sm:$0xff]
        %v811 = vld [vmem:[#allocation6 + $0x110] sm:$0xff]
        %v812 = vld [vmem:[#allocation6 + $0x118] sm:$0xff]
        %v813 = vld [vmem:[#allocation6 + $0x120] sm:$0xff]
        %v814 = vld [vmem:[#allocation6 + $0x128] sm:$0xff]
        %v815 = vld [vmem:[#allocation6 + $0x130] sm:$0xff]
        %v816 = vld [vmem:[#allocation6 + $0x138] sm:$0xff]
        %v817 = vld [vmem:[#allocation6 + $0x140] sm:$0xff]
        %v818 = vld [vmem:[#allocation6 + $0x148] sm:$0xff]
        %v819 = vld [vmem:[#allocation6 + $0x150] sm:$0xff]
        %v820 = vld [vmem:[#allocation6 + $0x158] sm:$0xff]
        %v821 = vld [vmem:[#allocation6 + $0x160] sm:$0xff]
        %v822 = vld [vmem:[#allocation6 + $0x168] sm:$0xff]
        %v823 = vld [vmem:[#allocation6 + $0x170] sm:$0xff]
        %v824 = vld [vmem:[#allocation6 + $0x178] sm:$0xff]
        %v825 = vld [vmem:[#allocation6 + $0x180] sm:$0xff]
        %v826 = vld [vmem:[#allocation6 + $0x188] sm:$0xff]
        %v827 = vld [vmem:[#allocation6 + $0x190] sm:$0xff]
        %v828 = vld [vmem:[#allocation6 + $0x198] sm:$0xff]
        %v829 = vld [vmem:[#allocation6 + $0x1a0] sm:$0xff]
        %v830 = vld [vmem:[#allocation6 + $0x1a8] sm:$0xff]
        %v831 = vld [vmem:[#allocation6 + $0x1b0] sm:$0xff]
        %v832 = vld [vmem:[#allocation6 + $0x1b8] sm:$0xff]
        %v833 = vld [vmem:[#allocation6 + $0x1c0] sm:$0xff]
        %v834 = vld [vmem:[#allocation6 + $0x1c8] sm:$0xff]
        %v835 = vld [vmem:[#allocation6 + $0x1d0] sm:$0xff]
        %v836 = vld [vmem:[#allocation6 + $0x1d8] sm:$0xff]
        %v837 = vld [vmem:[#allocation6 + $0x1e0] sm:$0xff]
        %v838 = vld [vmem:[#allocation6 + $0x1e8] sm:$0xff]
        %v839 = vld [vmem:[#allocation6 + $0x1f0] sm:$0xff]
        %v840 = vld [vmem:[#allocation6 + $0x1f8] sm:$0xff]
        %v841 = vld [vmem:[#allocation6 + $0x200] sm:$0xff]
        %v842 = vld [vmem:[#allocation6 + $0x208] sm:$0xff]
        %v843 = vld [vmem:[#allocation6 + $0x210] sm:$0xff]
        %v844 = vld [vmem:[#allocation6 + $0x218] sm:$0xff]
        %v845 = vld [vmem:[#allocation6 + $0x220] sm:$0xff]
        %v846 = vld [vmem:[#allocation6 + $0x228] sm:$0xff]
        %v847 = vld [vmem:[#allocation6 + $0x230] sm:$0xff]
        %v848 = vld [vmem:[#allocation6 + $0x238] sm:$0xff]
        %v849 = vld [vmem:[#allocation6 + $0x240] sm:$0xff]
        %v850 = vld [vmem:[#allocation6 + $0x248] sm:$0xff]
        %v851 = vld [vmem:[#allocation6 + $0x250] sm:$0xff]
        %v852 = vld [vmem:[#allocation6 + $0x258] sm:$0xff]
        %v853 = vld [vmem:[#allocation6 + $0x260] sm:$0xff]
        %v854 = vld [vmem:[#allocation6 + $0x268] sm:$0xff]
        %v855 = vld [vmem:[#allocation6 + $0x270] sm:$0xff]
        %v856 = vld [vmem:[#allocation6 + $0x278] sm:$0xff]
        %v857 = vld [vmem:[#allocation6 + $0x280] sm:$0xff]
        %v858 = vld [vmem:[#allocation6 + $0x288] sm:$0xff]
        %v859 = vld [vmem:[#allocation6 + $0x290] sm:$0xff]
        %v860 = vld [vmem:[#allocation6 + $0x298] sm:$0xff]
        %v861 = vld [vmem:[#allocation6 + $0x2a0] sm:$0xff]
        %v862 = vld [vmem:[#allocation6 + $0x2a8] sm:$0xff]
        %v863 = vld [vmem:[#allocation6 + $0x2b0] sm:$0xff]
        %v864 = vld [vmem:[#allocation6 + $0x2b8] sm:$0xff]
        %v865 = vld [vmem:[#allocation6 + $0x2c0] sm:$0xff]
        %v866 = vld [vmem:[#allocation6 + $0x2c8] sm:$0xff]
        %v867 = vld [vmem:[#allocation6 + $0x2d0] sm:$0xff]
        %v868 = vld [vmem:[#allocation6 + $0x2d8] sm:$0xff]
        %v869 = vld [vmem:[#allocation6 + $0x2e0] sm:$0xff]
        %v870 = vld [vmem:[#allocation6 + $0x2e8] sm:$0xff]
        %v871 = vld [vmem:[#allocation6 + $0x2f0] sm:$0xff]
        %v872 = vld [vmem:[#allocation6 + $0x2f8] sm:$0xff]
        %v873 = vld [vmem:[#allocation6 + $0x300] sm:$0xff]
        %v874 = vld [vmem:[#allocation6 + $0x308] sm:$0xff]
        %v875 = vld [vmem:[#allocation6 + $0x310] sm:$0xff]
        %v876 = vld [vmem:[#allocation6 + $0x318] sm:$0xff]
        %v877 = vld [vmem:[#allocation6 + $0x320] sm:$0xff]
        %v878 = vld [vmem:[#allocation6 + $0x328] sm:$0xff]
        %v879 = vld [vmem:[#allocation6 + $0x330] sm:$0xff]
        %v880 = vld [vmem:[#allocation6 + $0x338] sm:$0xff]
        %v881 = vld [vmem:[#allocation6 + $0x340] sm:$0xff]
        %v882 = vld [vmem:[#allocation6 + $0x348] sm:$0xff]
        %v883 = vld [vmem:[#allocation6 + $0x350] sm:$0xff]
        %v884 = vld [vmem:[#allocation6 + $0x358] sm:$0xff]
        %v885 = vld [vmem:[#allocation6 + $0x360] sm:$0xff]
        %v886 = vld [vmem:[#allocation6 + $0x368] sm:$0xff]
        %v887 = vld [vmem:[#allocation6 + $0x370] sm:$0xff]
        %v888 = vld [vmem:[#allocation6 + $0x378] sm:$0xff]
        %v889 = vld [vmem:[#allocation6 + $0x380] sm:$0xff]
        %v890 = vld [vmem:[#allocation6 + $0x388] sm:$0xff]
        %v891 = vld [vmem:[#allocation6 + $0x390] sm:$0xff]
        %v892 = vld [vmem:[#allocation6 + $0x398] sm:$0xff]
        %v893 = vld [vmem:[#allocation6 + $0x3a0] sm:$0xff]
        %v894 = vld [vmem:[#allocation6 + $0x3a8] sm:$0xff]
        %v895 = vld [vmem:[#allocation6 + $0x3b0] sm:$0xff]
        %v896 = vld [vmem:[#allocation6 + $0x3b8] sm:$0xff]
        %v897 = vld [vmem:[#allocation6 + $0x3c0] sm:$0xff]
        %v898 = vld [vmem:[#allocation6 + $0x3c8] sm:$0xff]
        %v899 = vld [vmem:[#allocation6 + $0x3d0] sm:$0xff]
        %v900 = vld [vmem:[#allocation6 + $0x3d8] sm:$0xff]
        %v901 = vld [vmem:[#allocation6 + $0x3e0] sm:$0xff]
        %v902 = vld [vmem:[#allocation6 + $0x3e8] sm:$0xff]
        %v903 = vld [vmem:[#allocation6 + $0x3f0] sm:$0xff]
        %v904 = vld [vmem:[#allocation6 + $0x3f8] sm:$0xff]
        %v905 = vld [vmem:[#allocation6 + $0x400] sm:$0xff]
        %v906 = vld [vmem:[#allocation6 + $0x408] sm:$0xff]
        %v907 = vld [vmem:[#allocation6 + $0x410] sm:$0xff]
        %v908 = vld [vmem:[#allocation6 + $0x418] sm:$0xff]
        %v909 = vld [vmem:[#allocation6 + $0x420] sm:$0xff]
        %v910 = vld [vmem:[#allocation6 + $0x428] sm:$0xff]
        %v911 = vld [vmem:[#allocation6 + $0x430] sm:$0xff]
        %v912 = vld [vmem:[#allocation6 + $0x438] sm:$0xff]
        %v913 = vld [vmem:[#allocation6 + $0x440] sm:$0xff]
        %v914 = vld [vmem:[#allocation6 + $0x448] sm:$0xff]
        %v915 = vld [vmem:[#allocation6 + $0x450] sm:$0xff]
        %v916 = vld [vmem:[#allocation6 + $0x458] sm:$0xff]
        %v917 = vld [vmem:[#allocation6 + $0x460] sm:$0xff]
        %v918 = vld [vmem:[#allocation6 + $0x468] sm:$0xff]
        %v919 = vld [vmem:[#allocation6 + $0x470] sm:$0xff]
        %v920 = vld [vmem:[#allocation6 + $0x478] sm:$0xff]
        %v921 = vld [vmem:[#allocation6 + $0x480] sm:$0xff]
        %v922 = vld [vmem:[#allocation6 + $0x488] sm:$0xff]
        %v923 = vld [vmem:[#allocation6 + $0x490] sm:$0xff]
        %v924 = vld [vmem:[#allocation6 + $0x498] sm:$0xff]
        %v925 = vld [vmem:[#allocation6 + $0x4a0] sm:$0xff]
        %v926 = vld [vmem:[#allocation6 + $0x4a8] sm:$0xff]
        %v927 = vld [vmem:[#allocation6 + $0x4b0] sm:$0xff]
        %v928 = vld [vmem:[#allocation6 + $0x4b8] sm:$0xff]
        %v929 = vld [vmem:[#allocation6 + $0x4c0] sm:$0xff]
        %v930 = vld [vmem:[#allocation6 + $0x4c8] sm:$0xff]
        %v931 = vld [vmem:[#allocation6 + $0x4d0] sm:$0xff]
        %v932 = vld [vmem:[#allocation6 + $0x4d8] sm:$0xff]
        %v933 = vld [vmem:[#allocation6 + $0x4e0] sm:$0xff]
        %v934 = vld [vmem:[#allocation6 + $0x4e8] sm:$0xff]
        %v935 = vld [vmem:[#allocation6 + $0x4f0] sm:$0xff]
        %v936 = vld [vmem:[#allocation6 + $0x4f8] sm:$0xff]
        %v937 = vld [vmem:[#allocation6 + $0x500] sm:$0xff]
        %v938 = vld [vmem:[#allocation6 + $0x508] sm:$0xff]
        %v939 = vld [vmem:[#allocation6 + $0x510] sm:$0xff]
        %v940 = vld [vmem:[#allocation6 + $0x518] sm:$0xff]
        %v941 = vld [vmem:[#allocation6 + $0x520] sm:$0xff]
        %v942 = vld [vmem:[#allocation6 + $0x528] sm:$0xff]
        %v943 = vld [vmem:[#allocation6 + $0x530] sm:$0xff]
        %v944 = vld [vmem:[#allocation6 + $0x538] sm:$0xff]
        %v945 = vld [vmem:[#allocation6 + $0x540] sm:$0xff]
        %v946 = vld [vmem:[#allocation6 + $0x548] sm:$0xff]
        %v947 = vld [vmem:[#allocation6 + $0x550] sm:$0xff]
        %v948 = vld [vmem:[#allocation6 + $0x558] sm:$0xff]
        %v949 = vld [vmem:[#allocation6 + $0x560] sm:$0xff]
        %v950 = vld [vmem:[#allocation6 + $0x568] sm:$0xff]
        %v951 = vld [vmem:[#allocation6 + $0x570] sm:$0xff]
        %v952 = vld [vmem:[#allocation6 + $0x578] sm:$0xff]
        %v953 = vld [vmem:[#allocation6 + $0x580] sm:$0xff]
        %v954 = vld [vmem:[#allocation6 + $0x588] sm:$0xff]
        %v955 = vld [vmem:[#allocation6 + $0x590] sm:$0xff]
        %v956 = vld [vmem:[#allocation6 + $0x598] sm:$0xff]
        %v957 = vld [vmem:[#allocation6 + $0x5a0] sm:$0xff]
        %v958 = vld [vmem:[#allocation6 + $0x5a8] sm:$0xff]
        %v959 = vld [vmem:[#allocation6 + $0x5b0] sm:$0xff]
        %v960 = vld [vmem:[#allocation6 + $0x5b8] sm:$0xff]
        %v961 = vld [vmem:[#allocation6 + $0x5c0] sm:$0xff]
        %v962 = vld [vmem:[#allocation6 + $0x5c8] sm:$0xff]
        %v963 = vld [vmem:[#allocation6 + $0x5d0] sm:$0xff]
        %v964 = vld [vmem:[#allocation6 + $0x5d8] sm:$0xff]
        %v965 = vld [vmem:[#allocation6 + $0x5e0] sm:$0xff]
        %v966 = vld [vmem:[#allocation6 + $0x5e8] sm:$0xff]
        %v967 = vld [vmem:[#allocation6 + $0x5f0] sm:$0xff]
        %v968 = vld [vmem:[#allocation6 + $0x5f8] sm:$0xff]
        %v969 = vld [vmem:[#allocation6 + $0x600] sm:$0xff]
        %v970 = vld [vmem:[#allocation6 + $0x608] sm:$0xff]
        %v971 = vld [vmem:[#allocation6 + $0x610] sm:$0xff]
        %v972 = vld [vmem:[#allocation6 + $0x618] sm:$0xff]
        %v973 = vld [vmem:[#allocation6 + $0x620] sm:$0xff]
        %v974 = vld [vmem:[#allocation6 + $0x628] sm:$0xff]
        %v975 = vld [vmem:[#allocation6 + $0x630] sm:$0xff]
        %v976 = vld [vmem:[#allocation6 + $0x638] sm:$0xff]
        %v977 = vld [vmem:[#allocation6 + $0x640] sm:$0xff]
        %v978 = vld [vmem:[#allocation6 + $0x648] sm:$0xff]
        %v979 = vld [vmem:[#allocation6 + $0x650] sm:$0xff]
        %v980 = vld [vmem:[#allocation6 + $0x658] sm:$0xff]
        %v981 = vld [vmem:[#allocation6 + $0x660] sm:$0xff]
        %v982 = vld [vmem:[#allocation6 + $0x668] sm:$0xff]
        %v983 = vld [vmem:[#allocation6 + $0x670] sm:$0xff]
        %v984 = vld [vmem:[#allocation6 + $0x678] sm:$0xff]
        %v985 = vld [vmem:[#allocation6 + $0x680] sm:$0xff]
        %v986 = vld [vmem:[#allocation6 + $0x688] sm:$0xff]
        %v987 = vld [vmem:[#allocation6 + $0x690] sm:$0xff]
        %v988 = vld [vmem:[#allocation6 + $0x698] sm:$0xff]
        %v989 = vld [vmem:[#allocation6 + $0x6a0] sm:$0xff]
        %v990 = vld [vmem:[#allocation6 + $0x6a8] sm:$0xff]
        %v991 = vld [vmem:[#allocation6 + $0x6b0] sm:$0xff]
        %v992 = vld [vmem:[#allocation6 + $0x6b8] sm:$0xff]
        %v993 = vld [vmem:[#allocation6 + $0x6c0] sm:$0xff]
        %v994 = vld [vmem:[#allocation6 + $0x6c8] sm:$0xff]
        %v995 = vld [vmem:[#allocation6 + $0x6d0] sm:$0xff]
        %v996 = vld [vmem:[#allocation6 + $0x6d8] sm:$0xff]
        %v997 = vld [vmem:[#allocation6 + $0x6e0] sm:$0xff]
        %v998 = vld [vmem:[#allocation6 + $0x6e8] sm:$0xff]
        %v999 = vld [vmem:[#allocation6 + $0x6f0] sm:$0xff]
        %v1000 = vld [vmem:[#allocation6 + $0x6f8] sm:$0xff]
        %v1001 = vld [vmem:[#allocation6 + $0x700] sm:$0xff]
        %v1002 = vld [vmem:[#allocation6 + $0x708] sm:$0xff]
        %v1003 = vld [vmem:[#allocation6 + $0x710] sm:$0xff]
        %v1004 = vld [vmem:[#allocation6 + $0x718] sm:$0xff]
        %v1005 = vld [vmem:[#allocation6 + $0x720] sm:$0xff]
        %v1006 = vld [vmem:[#allocation6 + $0x728] sm:$0xff]
        %v1007 = vld [vmem:[#allocation6 + $0x730] sm:$0xff]
        %v1008 = vld [vmem:[#allocation6 + $0x738] sm:$0xff]
        %v1009 = vld [vmem:[#allocation6 + $0x740] sm:$0xff]
        %v1010 = vld [vmem:[#allocation6 + $0x748] sm:$0xff]
        %v1011 = vld [vmem:[#allocation6 + $0x750] sm:$0xff]
        %v1012 = vld [vmem:[#allocation6 + $0x758] sm:$0xff]
        %v1013 = vld [vmem:[#allocation6 + $0x760] sm:$0xff]
        %v1014 = vld [vmem:[#allocation6 + $0x768] sm:$0xff]
        %v1015 = vld [vmem:[#allocation6 + $0x770] sm:$0xff]
        %v1016 = vld [vmem:[#allocation6 + $0x778] sm:$0xff]
        %1018 = vset.pattern.permute.xlu0 0
        %1019 = vperm.xlu0 %1018, %v777
        %v1020 = vpop.permute.xlu0 %1019
        %1023 = vset.pattern.permute.xlu0 0
        %1024 = vperm.xlu0 %1023, %v778
        %v1025 = vpop.permute.xlu0 %1024
        %1028 = vset.pattern.permute.xlu0 0
        %1029 = vperm.xlu0 %1028, %v779
        %v1030 = vpop.permute.xlu0 %1029
        %1033 = vset.pattern.permute.xlu0 0
        %1034 = vperm.xlu0 %1033, %v780
        %v1035 = vpop.permute.xlu0 %1034
        %1038 = vset.pattern.permute.xlu0 0
        %1039 = vperm.xlu0 %1038, %v781
        %v1040 = vpop.permute.xlu0 %1039
        %1043 = vset.pattern.permute.xlu0 0
        %1044 = vperm.xlu0 %1043, %v782
        %v1045 = vpop.permute.xlu0 %1044
        %1048 = vset.pattern.permute.xlu0 0
        %1049 = vperm.xlu0 %1048, %v783
        %v1050 = vpop.permute.xlu0 %1049
        %1053 = vset.pattern.permute.xlu0 0
        %1054 = vperm.xlu0 %1053, %v784
        %v1055 = vpop.permute.xlu0 %1054
        %1058 = vset.pattern.permute.xlu0 0
        %1059 = vperm.xlu0 %1058, %v785
        %v1060 = vpop.permute.xlu0 %1059
        %1063 = vset.pattern.permute.xlu0 0
        %1064 = vperm.xlu0 %1063, %v786
        %v1065 = vpop.permute.xlu0 %1064
        %1068 = vset.pattern.permute.xlu0 0
        %1069 = vperm.xlu0 %1068, %v787
        %v1070 = vpop.permute.xlu0 %1069
        %1073 = vset.pattern.permute.xlu0 0
        %1074 = vperm.xlu0 %1073, %v788
        %v1075 = vpop.permute.xlu0 %1074
        %1078 = vset.pattern.permute.xlu0 0
        %1079 = vperm.xlu0 %1078, %v789
        %v1080 = vpop.permute.xlu0 %1079
        %1083 = vset.pattern.permute.xlu0 0
        %1084 = vperm.xlu0 %1083, %v790
        %v1085 = vpop.permute.xlu0 %1084
        %1088 = vset.pattern.permute.xlu0 0
        %1089 = vperm.xlu0 %1088, %v791
        %v1090 = vpop.permute.xlu0 %1089
        %1093 = vset.pattern.permute.xlu0 0
        %1094 = vperm.xlu0 %1093, %v792
        %v1095 = vpop.permute.xlu0 %1094
        %1098 = vset.pattern.permute.xlu0 0
        %1099 = vperm.xlu0 %1098, %v793
        %v1100 = vpop.permute.xlu0 %1099
        %1103 = vset.pattern.permute.xlu0 0
        %1104 = vperm.xlu0 %1103, %v794
        %v1105 = vpop.permute.xlu0 %1104
        %1108 = vset.pattern.permute.xlu0 0
        %1109 = vperm.xlu0 %1108, %v795
        %v1110 = vpop.permute.xlu0 %1109
        %1113 = vset.pattern.permute.xlu0 0
        %1114 = vperm.xlu0 %1113, %v796
        %v1115 = vpop.permute.xlu0 %1114
        %1118 = vset.pattern.permute.xlu0 0
        %1119 = vperm.xlu0 %1118, %v797
        %v1120 = vpop.permute.xlu0 %1119
        %1123 = vset.pattern.permute.xlu0 0
        %1124 = vperm.xlu0 %1123, %v798
        %v1125 = vpop.permute.xlu0 %1124
        %1128 = vset.pattern.permute.xlu0 0
        %1129 = vperm.xlu0 %1128, %v799
        %v1130 = vpop.permute.xlu0 %1129
        %1133 = vset.pattern.permute.xlu0 0
        %1134 = vperm.xlu0 %1133, %v800
        %v1135 = vpop.permute.xlu0 %1134
        %1138 = vset.pattern.permute.xlu0 0
        %1139 = vperm.xlu0 %1138, %v801
        %v1140 = vpop.permute.xlu0 %1139
        %1143 = vset.pattern.permute.xlu0 0
        %1144 = vperm.xlu0 %1143, %v802
        %v1145 = vpop.permute.xlu0 %1144
        %1148 = vset.pattern.permute.xlu0 0
        %1149 = vperm.xlu0 %1148, %v803
        %v1150 = vpop.permute.xlu0 %1149
        %1153 = vset.pattern.permute.xlu0 0
        %1154 = vperm.xlu0 %1153, %v804
        %v1155 = vpop.permute.xlu0 %1154
        %1158 = vset.pattern.permute.xlu0 0
        %1159 = vperm.xlu0 %1158, %v805
        %v1160 = vpop.permute.xlu0 %1159
        %1163 = vset.pattern.permute.xlu0 0
        %1164 = vperm.xlu0 %1163, %v806
        %v1165 = vpop.permute.xlu0 %1164
        %1168 = vset.pattern.permute.xlu0 0
        %1169 = vperm.xlu0 %1168, %v807
        %v1170 = vpop.permute.xlu0 %1169
        %1173 = vset.pattern.permute.xlu0 0
        %1174 = vperm.xlu0 %1173, %v808
        %v1175 = vpop.permute.xlu0 %1174
        %1178 = vset.pattern.permute.xlu0 0
        %1179 = vperm.xlu0 %1178, %v809
        %v1180 = vpop.permute.xlu0 %1179
        %1183 = vset.pattern.permute.xlu0 0
        %1184 = vperm.xlu0 %1183, %v810
        %v1185 = vpop.permute.xlu0 %1184
        %1188 = vset.pattern.permute.xlu0 0
        %1189 = vperm.xlu0 %1188, %v811
        %v1190 = vpop.permute.xlu0 %1189
        %1193 = vset.pattern.permute.xlu0 0
        %1194 = vperm.xlu0 %1193, %v812
        %v1195 = vpop.permute.xlu0 %1194
        %1198 = vset.pattern.permute.xlu0 0
        %1199 = vperm.xlu0 %1198, %v813
        %v1200 = vpop.permute.xlu0 %1199
        %1203 = vset.pattern.permute.xlu0 0
        %1204 = vperm.xlu0 %1203, %v814
        %v1205 = vpop.permute.xlu0 %1204
        %1208 = vset.pattern.permute.xlu0 0
        %1209 = vperm.xlu0 %1208, %v815
        %v1210 = vpop.permute.xlu0 %1209
        %1213 = vset.pattern.permute.xlu0 0
        %1214 = vperm.xlu0 %1213, %v816
        %v1215 = vpop.permute.xlu0 %1214
        %1218 = vset.pattern.permute.xlu0 0
        %1219 = vperm.xlu0 %1218, %v817
        %v1220 = vpop.permute.xlu0 %1219
        %1223 = vset.pattern.permute.xlu0 0
        %1224 = vperm.xlu0 %1223, %v818
        %v1225 = vpop.permute.xlu0 %1224
        %1228 = vset.pattern.permute.xlu0 0
        %1229 = vperm.xlu0 %1228, %v819
        %v1230 = vpop.permute.xlu0 %1229
        %1233 = vset.pattern.permute.xlu0 0
        %1234 = vperm.xlu0 %1233, %v820
        %v1235 = vpop.permute.xlu0 %1234
        %1238 = vset.pattern.permute.xlu0 0
        %1239 = vperm.xlu0 %1238, %v821
        %v1240 = vpop.permute.xlu0 %1239
        %1243 = vset.pattern.permute.xlu0 0
        %1244 = vperm.xlu0 %1243, %v822
        %v1245 = vpop.permute.xlu0 %1244
        %1248 = vset.pattern.permute.xlu0 0
        %1249 = vperm.xlu0 %1248, %v823
        %v1250 = vpop.permute.xlu0 %1249
        %1253 = vset.pattern.permute.xlu0 0
        %1254 = vperm.xlu0 %1253, %v824
        %v1255 = vpop.permute.xlu0 %1254
        %1258 = vset.pattern.permute.xlu0 0
        %1259 = vperm.xlu0 %1258, %v825
        %v1260 = vpop.permute.xlu0 %1259
        %1263 = vset.pattern.permute.xlu0 0
        %1264 = vperm.xlu0 %1263, %v826
        %v1265 = vpop.permute.xlu0 %1264
        %1268 = vset.pattern.permute.xlu0 0
        %1269 = vperm.xlu0 %1268, %v827
        %v1270 = vpop.permute.xlu0 %1269
        %1273 = vset.pattern.permute.xlu0 0
        %1274 = vperm.xlu0 %1273, %v828
        %v1275 = vpop.permute.xlu0 %1274
        %1278 = vset.pattern.permute.xlu0 0
        %1279 = vperm.xlu0 %1278, %v829
        %v1280 = vpop.permute.xlu0 %1279
        %1283 = vset.pattern.permute.xlu0 0
        %1284 = vperm.xlu0 %1283, %v830
        %v1285 = vpop.permute.xlu0 %1284
        %1288 = vset.pattern.permute.xlu0 0
        %1289 = vperm.xlu0 %1288, %v831
        %v1290 = vpop.permute.xlu0 %1289
        %1293 = vset.pattern.permute.xlu0 0
        %1294 = vperm.xlu0 %1293, %v832
        %v1295 = vpop.permute.xlu0 %1294
        %1298 = vset.pattern.permute.xlu0 0
        %1299 = vperm.xlu0 %1298, %v833
        %v1300 = vpop.permute.xlu0 %1299
        %1303 = vset.pattern.permute.xlu0 0
        %1304 = vperm.xlu0 %1303, %v834
        %v1305 = vpop.permute.xlu0 %1304
        %1308 = vset.pattern.permute.xlu0 0
        %1309 = vperm.xlu0 %1308, %v835
        %v1310 = vpop.permute.xlu0 %1309
        %1313 = vset.pattern.permute.xlu0 0
        %1314 = vperm.xlu0 %1313, %v836
        %v1315 = vpop.permute.xlu0 %1314
        %1318 = vset.pattern.permute.xlu0 0
        %1319 = vperm.xlu0 %1318, %v837
        %v1320 = vpop.permute.xlu0 %1319
        %1323 = vset.pattern.permute.xlu0 0
        %1324 = vperm.xlu0 %1323, %v838
        %v1325 = vpop.permute.xlu0 %1324
        %1328 = vset.pattern.permute.xlu0 0
        %1329 = vperm.xlu0 %1328, %v839
        %v1330 = vpop.permute.xlu0 %1329
        %1333 = vset.pattern.permute.xlu0 0
        %1334 = vperm.xlu0 %1333, %v840
        %v1335 = vpop.permute.xlu0 %1334
        %1338 = vset.pattern.permute.xlu0 0
        %1339 = vperm.xlu0 %1338, %v841
        %v1340 = vpop.permute.xlu0 %1339
        %1343 = vset.pattern.permute.xlu0 0
        %1344 = vperm.xlu0 %1343, %v842
        %v1345 = vpop.permute.xlu0 %1344
        %1348 = vset.pattern.permute.xlu0 0
        %1349 = vperm.xlu0 %1348, %v843
        %v1350 = vpop.permute.xlu0 %1349
        %1353 = vset.pattern.permute.xlu0 0
        %1354 = vperm.xlu0 %1353, %v844
        %v1355 = vpop.permute.xlu0 %1354
        %1358 = vset.pattern.permute.xlu0 0
        %1359 = vperm.xlu0 %1358, %v845
        %v1360 = vpop.permute.xlu0 %1359
        %1363 = vset.pattern.permute.xlu0 0
        %1364 = vperm.xlu0 %1363, %v846
        %v1365 = vpop.permute.xlu0 %1364
        %1368 = vset.pattern.permute.xlu0 0
        %1369 = vperm.xlu0 %1368, %v847
        %v1370 = vpop.permute.xlu0 %1369
        %1373 = vset.pattern.permute.xlu0 0
        %1374 = vperm.xlu0 %1373, %v848
        %v1375 = vpop.permute.xlu0 %1374
        %1378 = vset.pattern.permute.xlu0 0
        %1379 = vperm.xlu0 %1378, %v849
        %v1380 = vpop.permute.xlu0 %1379
        %1383 = vset.pattern.permute.xlu0 0
        %1384 = vperm.xlu0 %1383, %v850
        %v1385 = vpop.permute.xlu0 %1384
        %1388 = vset.pattern.permute.xlu0 0
        %1389 = vperm.xlu0 %1388, %v851
        %v1390 = vpop.permute.xlu0 %1389
        %1393 = vset.pattern.permute.xlu0 0
        %1394 = vperm.xlu0 %1393, %v852
        %v1395 = vpop.permute.xlu0 %1394
        %1398 = vset.pattern.permute.xlu0 0
        %1399 = vperm.xlu0 %1398, %v853
        %v1400 = vpop.permute.xlu0 %1399
        %1403 = vset.pattern.permute.xlu0 0
        %1404 = vperm.xlu0 %1403, %v854
        %v1405 = vpop.permute.xlu0 %1404
        %1408 = vset.pattern.permute.xlu0 0
        %1409 = vperm.xlu0 %1408, %v855
        %v1410 = vpop.permute.xlu0 %1409
        %1413 = vset.pattern.permute.xlu0 0
        %1414 = vperm.xlu0 %1413, %v856
        %v1415 = vpop.permute.xlu0 %1414
        %1418 = vset.pattern.permute.xlu0 0
        %1419 = vperm.xlu0 %1418, %v857
        %v1420 = vpop.permute.xlu0 %1419
        %1423 = vset.pattern.permute.xlu0 0
        %1424 = vperm.xlu0 %1423, %v858
        %v1425 = vpop.permute.xlu0 %1424
        %1428 = vset.pattern.permute.xlu0 0
        %1429 = vperm.xlu0 %1428, %v859
        %v1430 = vpop.permute.xlu0 %1429
        %1433 = vset.pattern.permute.xlu0 0
        %1434 = vperm.xlu0 %1433, %v860
        %v1435 = vpop.permute.xlu0 %1434
        %1438 = vset.pattern.permute.xlu0 0
        %1439 = vperm.xlu0 %1438, %v861
        %v1440 = vpop.permute.xlu0 %1439
        %1443 = vset.pattern.permute.xlu0 0
        %1444 = vperm.xlu0 %1443, %v862
        %v1445 = vpop.permute.xlu0 %1444
        %1448 = vset.pattern.permute.xlu0 0
        %1449 = vperm.xlu0 %1448, %v863
        %v1450 = vpop.permute.xlu0 %1449
        %1453 = vset.pattern.permute.xlu0 0
        %1454 = vperm.xlu0 %1453, %v864
        %v1455 = vpop.permute.xlu0 %1454
        %1458 = vset.pattern.permute.xlu0 0
        %1459 = vperm.xlu0 %1458, %v865
        %v1460 = vpop.permute.xlu0 %1459
        %1463 = vset.pattern.permute.xlu0 0
        %1464 = vperm.xlu0 %1463, %v866
        %v1465 = vpop.permute.xlu0 %1464
        %1468 = vset.pattern.permute.xlu0 0
        %1469 = vperm.xlu0 %1468, %v867
        %v1470 = vpop.permute.xlu0 %1469
        %1473 = vset.pattern.permute.xlu0 0
        %1474 = vperm.xlu0 %1473, %v868
        %v1475 = vpop.permute.xlu0 %1474
        %1478 = vset.pattern.permute.xlu0 0
        %1479 = vperm.xlu0 %1478, %v869
        %v1480 = vpop.permute.xlu0 %1479
        %1483 = vset.pattern.permute.xlu0 0
        %1484 = vperm.xlu0 %1483, %v870
        %v1485 = vpop.permute.xlu0 %1484
        %1488 = vset.pattern.permute.xlu0 0
        %1489 = vperm.xlu0 %1488, %v871
        %v1490 = vpop.permute.xlu0 %1489
        %1493 = vset.pattern.permute.xlu0 0
        %1494 = vperm.xlu0 %1493, %v872
        %v1495 = vpop.permute.xlu0 %1494
        %1498 = vset.pattern.permute.xlu0 0
        %1499 = vperm.xlu0 %1498, %v873
        %v1500 = vpop.permute.xlu0 %1499
        %1503 = vset.pattern.permute.xlu0 0
        %1504 = vperm.xlu0 %1503, %v874
        %v1505 = vpop.permute.xlu0 %1504
        %1508 = vset.pattern.permute.xlu0 0
        %1509 = vperm.xlu0 %1508, %v875
        %v1510 = vpop.permute.xlu0 %1509
        %1513 = vset.pattern.permute.xlu0 0
        %1514 = vperm.xlu0 %1513, %v876
        %v1515 = vpop.permute.xlu0 %1514
        %1518 = vset.pattern.permute.xlu0 0
        %1519 = vperm.xlu0 %1518, %v877
        %v1520 = vpop.permute.xlu0 %1519
        %1523 = vset.pattern.permute.xlu0 0
        %1524 = vperm.xlu0 %1523, %v878
        %v1525 = vpop.permute.xlu0 %1524
        %1528 = vset.pattern.permute.xlu0 0
        %1529 = vperm.xlu0 %1528, %v879
        %v1530 = vpop.permute.xlu0 %1529
        %1533 = vset.pattern.permute.xlu0 0
        %1534 = vperm.xlu0 %1533, %v880
        %v1535 = vpop.permute.xlu0 %1534
        %1538 = vset.pattern.permute.xlu0 0
        %1539 = vperm.xlu0 %1538, %v881
        %v1540 = vpop.permute.xlu0 %1539
        %1543 = vset.pattern.permute.xlu0 0
        %1544 = vperm.xlu0 %1543, %v882
        %v1545 = vpop.permute.xlu0 %1544
        %1548 = vset.pattern.permute.xlu0 0
        %1549 = vperm.xlu0 %1548, %v883
        %v1550 = vpop.permute.xlu0 %1549
        %1553 = vset.pattern.permute.xlu0 0
        %1554 = vperm.xlu0 %1553, %v884
        %v1555 = vpop.permute.xlu0 %1554
        %1558 = vset.pattern.permute.xlu0 0
        %1559 = vperm.xlu0 %1558, %v885
        %v1560 = vpop.permute.xlu0 %1559
        %1563 = vset.pattern.permute.xlu0 0
        %1564 = vperm.xlu0 %1563, %v886
        %v1565 = vpop.permute.xlu0 %1564
        %1568 = vset.pattern.permute.xlu0 0
        %1569 = vperm.xlu0 %1568, %v887
        %v1570 = vpop.permute.xlu0 %1569
        %1573 = vset.pattern.permute.xlu0 0
        %1574 = vperm.xlu0 %1573, %v888
        %v1575 = vpop.permute.xlu0 %1574
        %1578 = vset.pattern.permute.xlu0 0
        %1579 = vperm.xlu0 %1578, %v889
        %v1580 = vpop.permute.xlu0 %1579
        %1583 = vset.pattern.permute.xlu0 0
        %1584 = vperm.xlu0 %1583, %v890
        %v1585 = vpop.permute.xlu0 %1584
        %1588 = vset.pattern.permute.xlu0 0
        %1589 = vperm.xlu0 %1588, %v891
        %v1590 = vpop.permute.xlu0 %1589
        %1593 = vset.pattern.permute.xlu0 0
        %1594 = vperm.xlu0 %1593, %v892
        %v1595 = vpop.permute.xlu0 %1594
        %1598 = vset.pattern.permute.xlu0 0
        %1599 = vperm.xlu0 %1598, %v893
        %v1600 = vpop.permute.xlu0 %1599
        %1603 = vset.pattern.permute.xlu0 0
        %1604 = vperm.xlu0 %1603, %v894
        %v1605 = vpop.permute.xlu0 %1604
        %1608 = vset.pattern.permute.xlu0 0
        %1609 = vperm.xlu0 %1608, %v895
        %v1610 = vpop.permute.xlu0 %1609
        %1613 = vset.pattern.permute.xlu0 0
        %1614 = vperm.xlu0 %1613, %v896
        %v1615 = vpop.permute.xlu0 %1614
        %1618 = vset.pattern.permute.xlu0 0
        %1619 = vperm.xlu0 %1618, %v897
        %v1620 = vpop.permute.xlu0 %1619
        %1623 = vset.pattern.permute.xlu0 0
        %1624 = vperm.xlu0 %1623, %v898
        %v1625 = vpop.permute.xlu0 %1624
        %1628 = vset.pattern.permute.xlu0 0
        %1629 = vperm.xlu0 %1628, %v899
        %v1630 = vpop.permute.xlu0 %1629
        %1633 = vset.pattern.permute.xlu0 0
        %1634 = vperm.xlu0 %1633, %v900
        %v1635 = vpop.permute.xlu0 %1634
        %1638 = vset.pattern.permute.xlu0 0
        %1639 = vperm.xlu0 %1638, %v901
        %v1640 = vpop.permute.xlu0 %1639
        %1643 = vset.pattern.permute.xlu0 0
        %1644 = vperm.xlu0 %1643, %v902
        %v1645 = vpop.permute.xlu0 %1644
        %1648 = vset.pattern.permute.xlu0 0
        %1649 = vperm.xlu0 %1648, %v903
        %v1650 = vpop.permute.xlu0 %1649
        %1653 = vset.pattern.permute.xlu0 0
        %1654 = vperm.xlu0 %1653, %v904
        %v1655 = vpop.permute.xlu0 %1654
        %1658 = vset.pattern.permute.xlu0 0
        %1659 = vperm.xlu0 %1658, %v905
        %v1660 = vpop.permute.xlu0 %1659
        %1663 = vset.pattern.permute.xlu0 0
        %1664 = vperm.xlu0 %1663, %v906
        %v1665 = vpop.permute.xlu0 %1664
        %1668 = vset.pattern.permute.xlu0 0
        %1669 = vperm.xlu0 %1668, %v907
        %v1670 = vpop.permute.xlu0 %1669
        %1673 = vset.pattern.permute.xlu0 0
        %1674 = vperm.xlu0 %1673, %v908
        %v1675 = vpop.permute.xlu0 %1674
        %1678 = vset.pattern.permute.xlu0 0
        %1679 = vperm.xlu0 %1678, %v909
        %v1680 = vpop.permute.xlu0 %1679
        %1683 = vset.pattern.permute.xlu0 0
        %1684 = vperm.xlu0 %1683, %v910
        %v1685 = vpop.permute.xlu0 %1684
        %1688 = vset.pattern.permute.xlu0 0
        %1689 = vperm.xlu0 %1688, %v911
        %v1690 = vpop.permute.xlu0 %1689
        %1693 = vset.pattern.permute.xlu0 0
        %1694 = vperm.xlu0 %1693, %v912
        %v1695 = vpop.permute.xlu0 %1694
        %1698 = vset.pattern.permute.xlu0 0
        %1699 = vperm.xlu0 %1698, %v913
        %v1700 = vpop.permute.xlu0 %1699
        %1703 = vset.pattern.permute.xlu0 0
        %1704 = vperm.xlu0 %1703, %v914
        %v1705 = vpop.permute.xlu0 %1704
        %1708 = vset.pattern.permute.xlu0 0
        %1709 = vperm.xlu0 %1708, %v915
        %v1710 = vpop.permute.xlu0 %1709
        %1713 = vset.pattern.permute.xlu0 0
        %1714 = vperm.xlu0 %1713, %v916
        %v1715 = vpop.permute.xlu0 %1714
        %1718 = vset.pattern.permute.xlu0 0
        %1719 = vperm.xlu0 %1718, %v917
        %v1720 = vpop.permute.xlu0 %1719
        %1723 = vset.pattern.permute.xlu0 0
        %1724 = vperm.xlu0 %1723, %v918
        %v1725 = vpop.permute.xlu0 %1724
        %1728 = vset.pattern.permute.xlu0 0
        %1729 = vperm.xlu0 %1728, %v919
        %v1730 = vpop.permute.xlu0 %1729
        %1733 = vset.pattern.permute.xlu0 0
        %1734 = vperm.xlu0 %1733, %v920
        %v1735 = vpop.permute.xlu0 %1734
        %1738 = vset.pattern.permute.xlu0 0
        %1739 = vperm.xlu0 %1738, %v921
        %v1740 = vpop.permute.xlu0 %1739
        %1743 = vset.pattern.permute.xlu0 0
        %1744 = vperm.xlu0 %1743, %v922
        %v1745 = vpop.permute.xlu0 %1744
        %1748 = vset.pattern.permute.xlu0 0
        %1749 = vperm.xlu0 %1748, %v923
        %v1750 = vpop.permute.xlu0 %1749
        %1753 = vset.pattern.permute.xlu0 0
        %1754 = vperm.xlu0 %1753, %v924
        %v1755 = vpop.permute.xlu0 %1754
        %1758 = vset.pattern.permute.xlu0 0
        %1759 = vperm.xlu0 %1758, %v925
        %v1760 = vpop.permute.xlu0 %1759
        %1763 = vset.pattern.permute.xlu0 0
        %1764 = vperm.xlu0 %1763, %v926
        %v1765 = vpop.permute.xlu0 %1764
        %1768 = vset.pattern.permute.xlu0 0
        %1769 = vperm.xlu0 %1768, %v927
        %v1770 = vpop.permute.xlu0 %1769
        %1773 = vset.pattern.permute.xlu0 0
        %1774 = vperm.xlu0 %1773, %v928
        %v1775 = vpop.permute.xlu0 %1774
        %1778 = vset.pattern.permute.xlu0 0
        %1779 = vperm.xlu0 %1778, %v929
        %v1780 = vpop.permute.xlu0 %1779
        %1783 = vset.pattern.permute.xlu0 0
        %1784 = vperm.xlu0 %1783, %v930
        %v1785 = vpop.permute.xlu0 %1784
        %1788 = vset.pattern.permute.xlu0 0
        %1789 = vperm.xlu0 %1788, %v931
        %v1790 = vpop.permute.xlu0 %1789
        %1793 = vset.pattern.permute.xlu0 0
        %1794 = vperm.xlu0 %1793, %v932
        %v1795 = vpop.permute.xlu0 %1794
        %1798 = vset.pattern.permute.xlu0 0
        %1799 = vperm.xlu0 %1798, %v933
        %v1800 = vpop.permute.xlu0 %1799
        %1803 = vset.pattern.permute.xlu0 0
        %1804 = vperm.xlu0 %1803, %v934
        %v1805 = vpop.permute.xlu0 %1804
        %1808 = vset.pattern.permute.xlu0 0
        %1809 = vperm.xlu0 %1808, %v935
        %v1810 = vpop.permute.xlu0 %1809
        %1813 = vset.pattern.permute.xlu0 0
        %1814 = vperm.xlu0 %1813, %v936
        %v1815 = vpop.permute.xlu0 %1814
        %1818 = vset.pattern.permute.xlu0 0
        %1819 = vperm.xlu0 %1818, %v937
        %v1820 = vpop.permute.xlu0 %1819
        %1823 = vset.pattern.permute.xlu0 0
        %1824 = vperm.xlu0 %1823, %v938
        %v1825 = vpop.permute.xlu0 %1824
        %1828 = vset.pattern.permute.xlu0 0
        %1829 = vperm.xlu0 %1828, %v939
        %v1830 = vpop.permute.xlu0 %1829
        %1833 = vset.pattern.permute.xlu0 0
        %1834 = vperm.xlu0 %1833, %v940
        %v1835 = vpop.permute.xlu0 %1834
        %1838 = vset.pattern.permute.xlu0 0
        %1839 = vperm.xlu0 %1838, %v941
        %v1840 = vpop.permute.xlu0 %1839
        %1843 = vset.pattern.permute.xlu0 0
        %1844 = vperm.xlu0 %1843, %v942
        %v1845 = vpop.permute.xlu0 %1844
        %1848 = vset.pattern.permute.xlu0 0
        %1849 = vperm.xlu0 %1848, %v943
        %v1850 = vpop.permute.xlu0 %1849
        %1853 = vset.pattern.permute.xlu0 0
        %1854 = vperm.xlu0 %1853, %v944
        %v1855 = vpop.permute.xlu0 %1854
        %1858 = vset.pattern.permute.xlu0 0
        %1859 = vperm.xlu0 %1858, %v945
        %v1860 = vpop.permute.xlu0 %1859
        %1863 = vset.pattern.permute.xlu0 0
        %1864 = vperm.xlu0 %1863, %v946
        %v1865 = vpop.permute.xlu0 %1864
        %1868 = vset.pattern.permute.xlu0 0
        %1869 = vperm.xlu0 %1868, %v947
        %v1870 = vpop.permute.xlu0 %1869
        %1873 = vset.pattern.permute.xlu0 0
        %1874 = vperm.xlu0 %1873, %v948
        %v1875 = vpop.permute.xlu0 %1874
        %1878 = vset.pattern.permute.xlu0 0
        %1879 = vperm.xlu0 %1878, %v949
        %v1880 = vpop.permute.xlu0 %1879
        %1883 = vset.pattern.permute.xlu0 0
        %1884 = vperm.xlu0 %1883, %v950
        %v1885 = vpop.permute.xlu0 %1884
        %1888 = vset.pattern.permute.xlu0 0
        %1889 = vperm.xlu0 %1888, %v951
        %v1890 = vpop.permute.xlu0 %1889
        %1893 = vset.pattern.permute.xlu0 0
        %1894 = vperm.xlu0 %1893, %v952
        %v1895 = vpop.permute.xlu0 %1894
        %1898 = vset.pattern.permute.xlu0 0
        %1899 = vperm.xlu0 %1898, %v953
        %v1900 = vpop.permute.xlu0 %1899
        %1903 = vset.pattern.permute.xlu0 0
        %1904 = vperm.xlu0 %1903, %v954
        %v1905 = vpop.permute.xlu0 %1904
        %1908 = vset.pattern.permute.xlu0 0
        %1909 = vperm.xlu0 %1908, %v955
        %v1910 = vpop.permute.xlu0 %1909
        %1913 = vset.pattern.permute.xlu0 0
        %1914 = vperm.xlu0 %1913, %v956
        %v1915 = vpop.permute.xlu0 %1914
        %1918 = vset.pattern.permute.xlu0 0
        %1919 = vperm.xlu0 %1918, %v957
        %v1920 = vpop.permute.xlu0 %1919
        %1923 = vset.pattern.permute.xlu0 0
        %1924 = vperm.xlu0 %1923, %v958
        %v1925 = vpop.permute.xlu0 %1924
        %1928 = vset.pattern.permute.xlu0 0
        %1929 = vperm.xlu0 %1928, %v959
        %v1930 = vpop.permute.xlu0 %1929
        %1933 = vset.pattern.permute.xlu0 0
        %1934 = vperm.xlu0 %1933, %v960
        %v1935 = vpop.permute.xlu0 %1934
        %1938 = vset.pattern.permute.xlu0 0
        %1939 = vperm.xlu0 %1938, %v961
        %v1940 = vpop.permute.xlu0 %1939
        %1943 = vset.pattern.permute.xlu0 0
        %1944 = vperm.xlu0 %1943, %v962
        %v1945 = vpop.permute.xlu0 %1944
        %1948 = vset.pattern.permute.xlu0 0
        %1949 = vperm.xlu0 %1948, %v963
        %v1950 = vpop.permute.xlu0 %1949
        %1953 = vset.pattern.permute.xlu0 0
        %1954 = vperm.xlu0 %1953, %v964
        %v1955 = vpop.permute.xlu0 %1954
        %1958 = vset.pattern.permute.xlu0 0
        %1959 = vperm.xlu0 %1958, %v965
        %v1960 = vpop.permute.xlu0 %1959
        %1963 = vset.pattern.permute.xlu0 0
        %1964 = vperm.xlu0 %1963, %v966
        %v1965 = vpop.permute.xlu0 %1964
        %1968 = vset.pattern.permute.xlu0 0
        %1969 = vperm.xlu0 %1968, %v967
        %v1970 = vpop.permute.xlu0 %1969
        %1973 = vset.pattern.permute.xlu0 0
        %1974 = vperm.xlu0 %1973, %v968
        %v1975 = vpop.permute.xlu0 %1974
        %1978 = vset.pattern.permute.xlu0 0
        %1979 = vperm.xlu0 %1978, %v969
        %v1980 = vpop.permute.xlu0 %1979
        %1983 = vset.pattern.permute.xlu0 0
        %1984 = vperm.xlu0 %1983, %v970
        %v1985 = vpop.permute.xlu0 %1984
        %1988 = vset.pattern.permute.xlu0 0
        %1989 = vperm.xlu0 %1988, %v971
        %v1990 = vpop.permute.xlu0 %1989
        %1993 = vset.pattern.permute.xlu0 0
        %1994 = vperm.xlu0 %1993, %v972
        %v1995 = vpop.permute.xlu0 %1994
        %1998 = vset.pattern.permute.xlu0 0
        %1999 = vperm.xlu0 %1998, %v973
        %v2000 = vpop.permute.xlu0 %1999
        %2003 = vset.pattern.permute.xlu0 0
        %2004 = vperm.xlu0 %2003, %v974
        %v2005 = vpop.permute.xlu0 %2004
        %2008 = vset.pattern.permute.xlu0 0
        %2009 = vperm.xlu0 %2008, %v975
        %v2010 = vpop.permute.xlu0 %2009
        %2013 = vset.pattern.permute.xlu0 0
        %2014 = vperm.xlu0 %2013, %v976
        %v2015 = vpop.permute.xlu0 %2014
        %2018 = vset.pattern.permute.xlu0 0
        %2019 = vperm.xlu0 %2018, %v977
        %v2020 = vpop.permute.xlu0 %2019
        %2023 = vset.pattern.permute.xlu0 0
        %2024 = vperm.xlu0 %2023, %v978
        %v2025 = vpop.permute.xlu0 %2024
        %2028 = vset.pattern.permute.xlu0 0
        %2029 = vperm.xlu0 %2028, %v979
        %v2030 = vpop.permute.xlu0 %2029
        %2033 = vset.pattern.permute.xlu0 0
        %2034 = vperm.xlu0 %2033, %v980
        %v2035 = vpop.permute.xlu0 %2034
        %2038 = vset.pattern.permute.xlu0 0
        %2039 = vperm.xlu0 %2038, %v981
        %v2040 = vpop.permute.xlu0 %2039
        %2043 = vset.pattern.permute.xlu0 0
        %2044 = vperm.xlu0 %2043, %v982
        %v2045 = vpop.permute.xlu0 %2044
        %2048 = vset.pattern.permute.xlu0 0
        %2049 = vperm.xlu0 %2048, %v983
        %v2050 = vpop.permute.xlu0 %2049
        %2053 = vset.pattern.permute.xlu0 0
        %2054 = vperm.xlu0 %2053, %v984
        %v2055 = vpop.permute.xlu0 %2054
        %2058 = vset.pattern.permute.xlu0 0
        %2059 = vperm.xlu0 %2058, %v985
        %v2060 = vpop.permute.xlu0 %2059
        %2063 = vset.pattern.permute.xlu0 0
        %2064 = vperm.xlu0 %2063, %v986
        %v2065 = vpop.permute.xlu0 %2064
        %2068 = vset.pattern.permute.xlu0 0
        %2069 = vperm.xlu0 %2068, %v987
        %v2070 = vpop.permute.xlu0 %2069
        %2073 = vset.pattern.permute.xlu0 0
        %2074 = vperm.xlu0 %2073, %v988
        %v2075 = vpop.permute.xlu0 %2074
        %2078 = vset.pattern.permute.xlu0 0
        %2079 = vperm.xlu0 %2078, %v989
        %v2080 = vpop.permute.xlu0 %2079
        %2083 = vset.pattern.permute.xlu0 0
        %2084 = vperm.xlu0 %2083, %v990
        %v2085 = vpop.permute.xlu0 %2084
        %2088 = vset.pattern.permute.xlu0 0
        %2089 = vperm.xlu0 %2088, %v991
        %v2090 = vpop.permute.xlu0 %2089
        %2093 = vset.pattern.permute.xlu0 0
        %2094 = vperm.xlu0 %2093, %v992
        %v2095 = vpop.permute.xlu0 %2094
        %2098 = vset.pattern.permute.xlu0 0
        %2099 = vperm.xlu0 %2098, %v993
        %v2100 = vpop.permute.xlu0 %2099
        %2103 = vset.pattern.permute.xlu0 0
        %2104 = vperm.xlu0 %2103, %v994
        %v2105 = vpop.permute.xlu0 %2104
        %2108 = vset.pattern.permute.xlu0 0
        %2109 = vperm.xlu0 %2108, %v995
        %v2110 = vpop.permute.xlu0 %2109
        %2113 = vset.pattern.permute.xlu0 0
        %2114 = vperm.xlu0 %2113, %v996
        %v2115 = vpop.permute.xlu0 %2114
        %2118 = vset.pattern.permute.xlu0 0
        %2119 = vperm.xlu0 %2118, %v997
        %v2120 = vpop.permute.xlu0 %2119
        %2123 = vset.pattern.permute.xlu0 0
        %2124 = vperm.xlu0 %2123, %v998
        %v2125 = vpop.permute.xlu0 %2124
        %2128 = vset.pattern.permute.xlu0 0
        %2129 = vperm.xlu0 %2128, %v999
        %v2130 = vpop.permute.xlu0 %2129
        %2133 = vset.pattern.permute.xlu0 0
        %2134 = vperm.xlu0 %2133, %v1000
        %v2135 = vpop.permute.xlu0 %2134
        %2138 = vset.pattern.permute.xlu0 0
        %2139 = vperm.xlu0 %2138, %v1001
        %v2140 = vpop.permute.xlu0 %2139
        %2143 = vset.pattern.permute.xlu0 0
        %2144 = vperm.xlu0 %2143, %v1002
        %v2145 = vpop.permute.xlu0 %2144
        %2148 = vset.pattern.permute.xlu0 0
        %2149 = vperm.xlu0 %2148, %v1003
        %v2150 = vpop.permute.xlu0 %2149
        %2153 = vset.pattern.permute.xlu0 0
        %2154 = vperm.xlu0 %2153, %v1004
        %v2155 = vpop.permute.xlu0 %2154
        %2158 = vset.pattern.permute.xlu0 0
        %2159 = vperm.xlu0 %2158, %v1005
        %v2160 = vpop.permute.xlu0 %2159
        %2163 = vset.pattern.permute.xlu0 0
        %2164 = vperm.xlu0 %2163, %v1006
        %v2165 = vpop.permute.xlu0 %2164
        %2168 = vset.pattern.permute.xlu0 0
        %2169 = vperm.xlu0 %2168, %v1007
        %v2170 = vpop.permute.xlu0 %2169
        %2173 = vset.pattern.permute.xlu0 0
        %2174 = vperm.xlu0 %2173, %v1008
        %v2175 = vpop.permute.xlu0 %2174
        %2178 = vset.pattern.permute.xlu0 0
        %2179 = vperm.xlu0 %2178, %v1009
        %v2180 = vpop.permute.xlu0 %2179
        %2183 = vset.pattern.permute.xlu0 0
        %2184 = vperm.xlu0 %2183, %v1010
        %v2185 = vpop.permute.xlu0 %2184
        %2188 = vset.pattern.permute.xlu0 0
        %2189 = vperm.xlu0 %2188, %v1011
        %v2190 = vpop.permute.xlu0 %2189
        %2193 = vset.pattern.permute.xlu0 0
        %2194 = vperm.xlu0 %2193, %v1012
        %v2195 = vpop.permute.xlu0 %2194
        %2198 = vset.pattern.permute.xlu0 0
        %2199 = vperm.xlu0 %2198, %v1013
        %v2200 = vpop.permute.xlu0 %2199
        %2203 = vset.pattern.permute.xlu0 0
        %2204 = vperm.xlu0 %2203, %v1014
        %v2205 = vpop.permute.xlu0 %2204
        %2208 = vset.pattern.permute.xlu0 0
        %2209 = vperm.xlu0 %2208, %v1015
        %v2210 = vpop.permute.xlu0 %2209
        %2213 = vset.pattern.permute.xlu0 0
        %2214 = vperm.xlu0 %2213, %v1016
        %v2215 = vpop.permute.xlu0 %2214
        %v2457 = vunpack.c.l.b16 %v537
        %v2458 = vunpack.c.l.b16 %v538
        %v2459 = vunpack.c.l.b16 %v539
        %v2460 = vunpack.c.l.b16 %v540
        %v2461 = vunpack.c.l.b16 %v541
        %v2462 = vunpack.c.l.b16 %v542
        %v2463 = vunpack.c.l.b16 %v543
        %v2464 = vunpack.c.l.b16 %v544
        %v2465 = vunpack.c.l.b16 %v545
        %v2466 = vunpack.c.l.b16 %v546
        %v2467 = vunpack.c.l.b16 %v547
        %v2468 = vunpack.c.l.b16 %v548
        %v2469 = vunpack.c.l.b16 %v549
        %v2470 = vunpack.c.l.b16 %v550
        %v2471 = vunpack.c.l.b16 %v551
        %v2472 = vunpack.c.l.b16 %v552
        %v2473 = vunpack.c.l.b16 %v553
        %v2474 = vunpack.c.l.b16 %v554
        %v2475 = vunpack.c.l.b16 %v555
        %v2476 = vunpack.c.l.b16 %v556
        %v2477 = vunpack.c.l.b16 %v557
        %v2478 = vunpack.c.l.b16 %v558
        %v2479 = vunpack.c.l.b16 %v559
        %v2480 = vunpack.c.l.b16 %v560
        %v2481 = vunpack.c.l.b16 %v561
        %v2482 = vunpack.c.l.b16 %v562
        %v2483 = vunpack.c.l.b16 %v563
        %v2484 = vunpack.c.l.b16 %v564
        %v2485 = vunpack.c.l.b16 %v565
        %v2486 = vunpack.c.l.b16 %v566
        %v2487 = vunpack.c.l.b16 %v567
        %v2488 = vunpack.c.l.b16 %v568
        %v2489 = vunpack.c.l.b16 %v569
        %v2490 = vunpack.c.l.b16 %v570
        %v2491 = vunpack.c.l.b16 %v571
        %v2492 = vunpack.c.l.b16 %v572
        %v2493 = vunpack.c.l.b16 %v573
        %v2494 = vunpack.c.l.b16 %v574
        %v2495 = vunpack.c.l.b16 %v575
        %v2496 = vunpack.c.l.b16 %v576
        %v2497 = vunpack.c.l.b16 %v577
        %v2498 = vunpack.c.l.b16 %v578
        %v2499 = vunpack.c.l.b16 %v579
        %v2500 = vunpack.c.l.b16 %v580
        %v2501 = vunpack.c.l.b16 %v581
        %v2502 = vunpack.c.l.b16 %v582
        %v2503 = vunpack.c.l.b16 %v583
        %v2504 = vunpack.c.l.b16 %v584
        %v2505 = vunpack.c.l.b16 %v585
        %v2506 = vunpack.c.l.b16 %v586
        %v2507 = vunpack.c.l.b16 %v587
        %v2508 = vunpack.c.l.b16 %v588
        %v2509 = vunpack.c.l.b16 %v589
        %v2510 = vunpack.c.l.b16 %v590
        %v2511 = vunpack.c.l.b16 %v591
        %v2512 = vunpack.c.l.b16 %v592
        %v2513 = vunpack.c.l.b16 %v593
        %v2514 = vunpack.c.l.b16 %v594
        %v2515 = vunpack.c.l.b16 %v595
        %v2516 = vunpack.c.l.b16 %v596
        %v2517 = vunpack.c.l.b16 %v597
        %v2518 = vunpack.c.l.b16 %v598
        %v2519 = vunpack.c.l.b16 %v599
        %v2520 = vunpack.c.l.b16 %v600
        %v2521 = vunpack.c.l.b16 %v601
        %v2522 = vunpack.c.l.b16 %v602
        %v2523 = vunpack.c.l.b16 %v603
        %v2524 = vunpack.c.l.b16 %v604
        %v2525 = vunpack.c.l.b16 %v605
        %v2526 = vunpack.c.l.b16 %v606
        %v2527 = vunpack.c.l.b16 %v607
        %v2528 = vunpack.c.l.b16 %v608
        %v2529 = vunpack.c.l.b16 %v609
        %v2530 = vunpack.c.l.b16 %v610
        %v2531 = vunpack.c.l.b16 %v611
        %v2532 = vunpack.c.l.b16 %v612
        %v2533 = vunpack.c.l.b16 %v613
        %v2534 = vunpack.c.l.b16 %v614
        %v2535 = vunpack.c.l.b16 %v615
        %v2536 = vunpack.c.l.b16 %v616
        %v2537 = vunpack.c.l.b16 %v617
        %v2538 = vunpack.c.l.b16 %v618
        %v2539 = vunpack.c.l.b16 %v619
        %v2540 = vunpack.c.l.b16 %v620
        %v2541 = vunpack.c.l.b16 %v621
        %v2542 = vunpack.c.l.b16 %v622
        %v2543 = vunpack.c.l.b16 %v623
        %v2544 = vunpack.c.l.b16 %v624
        %v2545 = vunpack.c.l.b16 %v625
        %v2546 = vunpack.c.l.b16 %v626
        %v2547 = vunpack.c.l.b16 %v627
        %v2548 = vunpack.c.l.b16 %v628
        %v2549 = vunpack.c.l.b16 %v629
        %v2550 = vunpack.c.l.b16 %v630
        %v2551 = vunpack.c.l.b16 %v631
        %v2552 = vunpack.c.l.b16 %v632
        %v2553 = vunpack.c.l.b16 %v633
        %v2554 = vunpack.c.l.b16 %v634
        %v2555 = vunpack.c.l.b16 %v635
        %v2556 = vunpack.c.l.b16 %v636
        %v2557 = vunpack.c.l.b16 %v637
        %v2558 = vunpack.c.l.b16 %v638
        %v2559 = vunpack.c.l.b16 %v639
        %v2560 = vunpack.c.l.b16 %v640
        %v2561 = vunpack.c.l.b16 %v641
        %v2562 = vunpack.c.l.b16 %v642
        %v2563 = vunpack.c.l.b16 %v643
        %v2564 = vunpack.c.l.b16 %v644
        %v2565 = vunpack.c.l.b16 %v645
        %v2566 = vunpack.c.l.b16 %v646
        %v2567 = vunpack.c.l.b16 %v647
        %v2568 = vunpack.c.l.b16 %v648
        %v2569 = vunpack.c.l.b16 %v649
        %v2570 = vunpack.c.l.b16 %v650
        %v2571 = vunpack.c.l.b16 %v651
        %v2572 = vunpack.c.l.b16 %v652
        %v2573 = vunpack.c.l.b16 %v653
        %v2574 = vunpack.c.l.b16 %v654
        %v2575 = vunpack.c.l.b16 %v655
        %v2576 = vunpack.c.l.b16 %v656
        %v2577 = vunpack.c.l.b16 %v657
        %v2578 = vunpack.c.l.b16 %v658
        %v2579 = vunpack.c.l.b16 %v659
        %v2580 = vunpack.c.l.b16 %v660
        %v2581 = vunpack.c.l.b16 %v661
        %v2582 = vunpack.c.l.b16 %v662
        %v2583 = vunpack.c.l.b16 %v663
        %v2584 = vunpack.c.l.b16 %v664
        %v2585 = vunpack.c.l.b16 %v665
        %v2586 = vunpack.c.l.b16 %v666
        %v2587 = vunpack.c.l.b16 %v667
        %v2588 = vunpack.c.l.b16 %v668
        %v2589 = vunpack.c.l.b16 %v669
        %v2590 = vunpack.c.l.b16 %v670
        %v2591 = vunpack.c.l.b16 %v671
        %v2592 = vunpack.c.l.b16 %v672
        %v2593 = vunpack.c.l.b16 %v673
        %v2594 = vunpack.c.l.b16 %v674
        %v2595 = vunpack.c.l.b16 %v675
        %v2596 = vunpack.c.l.b16 %v676
        %v2597 = vunpack.c.l.b16 %v677
        %v2598 = vunpack.c.l.b16 %v678
        %v2599 = vunpack.c.l.b16 %v679
        %v2600 = vunpack.c.l.b16 %v680
        %v2601 = vunpack.c.l.b16 %v681
        %v2602 = vunpack.c.l.b16 %v682
        %v2603 = vunpack.c.l.b16 %v683
        %v2604 = vunpack.c.l.b16 %v684
        %v2605 = vunpack.c.l.b16 %v685
        %v2606 = vunpack.c.l.b16 %v686
        %v2607 = vunpack.c.l.b16 %v687
        %v2608 = vunpack.c.l.b16 %v688
        %v2609 = vunpack.c.l.b16 %v689
        %v2610 = vunpack.c.l.b16 %v690
        %v2611 = vunpack.c.l.b16 %v691
        %v2612 = vunpack.c.l.b16 %v692
        %v2613 = vunpack.c.l.b16 %v693
        %v2614 = vunpack.c.l.b16 %v694
        %v2615 = vunpack.c.l.b16 %v695
        %v2616 = vunpack.c.l.b16 %v696
        %v2617 = vunpack.c.l.b16 %v697
        %v2618 = vunpack.c.l.b16 %v698
        %v2619 = vunpack.c.l.b16 %v699
        %v2620 = vunpack.c.l.b16 %v700
        %v2621 = vunpack.c.l.b16 %v701
        %v2622 = vunpack.c.l.b16 %v702
        %v2623 = vunpack.c.l.b16 %v703
        %v2624 = vunpack.c.l.b16 %v704
        %v2625 = vunpack.c.l.b16 %v705
        %v2626 = vunpack.c.l.b16 %v706
        %v2627 = vunpack.c.l.b16 %v707
        %v2628 = vunpack.c.l.b16 %v708
        %v2629 = vunpack.c.l.b16 %v709
        %v2630 = vunpack.c.l.b16 %v710
        %v2631 = vunpack.c.l.b16 %v711
        %v2632 = vunpack.c.l.b16 %v712
        %v2633 = vunpack.c.l.b16 %v713
        %v2634 = vunpack.c.l.b16 %v714
        %v2635 = vunpack.c.l.b16 %v715
        %v2636 = vunpack.c.l.b16 %v716
        %v2637 = vunpack.c.l.b16 %v717
        %v2638 = vunpack.c.l.b16 %v718
        %v2639 = vunpack.c.l.b16 %v719
        %v2640 = vunpack.c.l.b16 %v720
        %v2641 = vunpack.c.l.b16 %v721
        %v2642 = vunpack.c.l.b16 %v722
        %v2643 = vunpack.c.l.b16 %v723
        %v2644 = vunpack.c.l.b16 %v724
        %v2645 = vunpack.c.l.b16 %v725
        %v2646 = vunpack.c.l.b16 %v726
        %v2647 = vunpack.c.l.b16 %v727
        %v2648 = vunpack.c.l.b16 %v728
        %v2649 = vunpack.c.l.b16 %v729
        %v2650 = vunpack.c.l.b16 %v730
        %v2651 = vunpack.c.l.b16 %v731
        %v2652 = vunpack.c.l.b16 %v732
        %v2653 = vunpack.c.l.b16 %v733
        %v2654 = vunpack.c.l.b16 %v734
        %v2655 = vunpack.c.l.b16 %v735
        %v2656 = vunpack.c.l.b16 %v736
        %v2657 = vunpack.c.l.b16 %v737
        %v2658 = vunpack.c.l.b16 %v738
        %v2659 = vunpack.c.l.b16 %v739
        %v2660 = vunpack.c.l.b16 %v740
        %v2661 = vunpack.c.l.b16 %v741
        %v2662 = vunpack.c.l.b16 %v742
        %v2663 = vunpack.c.l.b16 %v743
        %v2664 = vunpack.c.l.b16 %v744
        %v2665 = vunpack.c.l.b16 %v745
        %v2666 = vunpack.c.l.b16 %v746
        %v2667 = vunpack.c.l.b16 %v747
        %v2668 = vunpack.c.l.b16 %v748
        %v2669 = vunpack.c.l.b16 %v749
        %v2670 = vunpack.c.l.b16 %v750
        %v2671 = vunpack.c.l.b16 %v751
        %v2672 = vunpack.c.l.b16 %v752
        %v2673 = vunpack.c.l.b16 %v753
        %v2674 = vunpack.c.l.b16 %v754
        %v2675 = vunpack.c.l.b16 %v755
        %v2676 = vunpack.c.l.b16 %v756
        %v2677 = vunpack.c.l.b16 %v757
        %v2678 = vunpack.c.l.b16 %v758
        %v2679 = vunpack.c.l.b16 %v759
        %v2680 = vunpack.c.l.b16 %v760
        %v2681 = vunpack.c.l.b16 %v761
        %v2682 = vunpack.c.l.b16 %v762
        %v2683 = vunpack.c.l.b16 %v763
        %v2684 = vunpack.c.l.b16 %v764
        %v2685 = vunpack.c.l.b16 %v765
        %v2686 = vunpack.c.l.b16 %v766
        %v2687 = vunpack.c.l.b16 %v767
        %v2688 = vunpack.c.l.b16 %v768
        %v2689 = vunpack.c.l.b16 %v769
        %v2690 = vunpack.c.l.b16 %v770
        %v2691 = vunpack.c.l.b16 %v771
        %v2692 = vunpack.c.l.b16 %v772
        %v2693 = vunpack.c.l.b16 %v773
        %v2694 = vunpack.c.l.b16 %v774
        %v2695 = vunpack.c.l.b16 %v775
        %v2696 = vunpack.c.l.b16 %v776
        %v2697 = vpack.c.b16 %v2458, %v2457
        %v2698 = vpack.c.b16 %v2460, %v2459
        %v2699 = vpack.c.b16 %v2462, %v2461
        %v2700 = vpack.c.b16 %v2464, %v2463
        %v2701 = vpack.c.b16 %v2466, %v2465
        %v2702 = vpack.c.b16 %v2468, %v2467
        %v2703 = vpack.c.b16 %v2470, %v2469
        %v2704 = vpack.c.b16 %v2472, %v2471
        %v2705 = vpack.c.b16 %v2474, %v2473
        %v2706 = vpack.c.b16 %v2476, %v2475
        %v2707 = vpack.c.b16 %v2478, %v2477
        %v2708 = vpack.c.b16 %v2480, %v2479
        %v2709 = vpack.c.b16 %v2482, %v2481
        %v2710 = vpack.c.b16 %v2484, %v2483
        %v2711 = vpack.c.b16 %v2486, %v2485
        %v2712 = vpack.c.b16 %v2488, %v2487
        %v2713 = vpack.c.b16 %v2490, %v2489
        %v2714 = vpack.c.b16 %v2492, %v2491
        %v2715 = vpack.c.b16 %v2494, %v2493
        %v2716 = vpack.c.b16 %v2496, %v2495
        %v2717 = vpack.c.b16 %v2498, %v2497
        %v2718 = vpack.c.b16 %v2500, %v2499
        %v2719 = vpack.c.b16 %v2502, %v2501
        %v2720 = vpack.c.b16 %v2504, %v2503
        %v2721 = vpack.c.b16 %v2506, %v2505
        %v2722 = vpack.c.b16 %v2508, %v2507
        %v2723 = vpack.c.b16 %v2510, %v2509
        %v2724 = vpack.c.b16 %v2512, %v2511
        %v2725 = vpack.c.b16 %v2514, %v2513
        %v2726 = vpack.c.b16 %v2516, %v2515
        %v2727 = vpack.c.b16 %v2518, %v2517
        %v2728 = vpack.c.b16 %v2520, %v2519
        %v2729 = vpack.c.b16 %v2522, %v2521
        %v2730 = vpack.c.b16 %v2524, %v2523
        %v2731 = vpack.c.b16 %v2526, %v2525
        %v2732 = vpack.c.b16 %v2528, %v2527
        %v2733 = vpack.c.b16 %v2530, %v2529
        %v2734 = vpack.c.b16 %v2532, %v2531
        %v2735 = vpack.c.b16 %v2534, %v2533
        %v2736 = vpack.c.b16 %v2536, %v2535
        %v2737 = vpack.c.b16 %v2538, %v2537
        %v2738 = vpack.c.b16 %v2540, %v2539
        %v2739 = vpack.c.b16 %v2542, %v2541
        %v2740 = vpack.c.b16 %v2544, %v2543
        %v2741 = vpack.c.b16 %v2546, %v2545
        %v2742 = vpack.c.b16 %v2548, %v2547
        %v2743 = vpack.c.b16 %v2550, %v2549
        %v2744 = vpack.c.b16 %v2552, %v2551
        %v2745 = vpack.c.b16 %v2554, %v2553
        %v2746 = vpack.c.b16 %v2556, %v2555
        %v2747 = vpack.c.b16 %v2558, %v2557
        %v2748 = vpack.c.b16 %v2560, %v2559
        %v2749 = vpack.c.b16 %v2562, %v2561
        %v2750 = vpack.c.b16 %v2564, %v2563
        %v2751 = vpack.c.b16 %v2566, %v2565
        %v2752 = vpack.c.b16 %v2568, %v2567
        %v2753 = vpack.c.b16 %v2570, %v2569
        %v2754 = vpack.c.b16 %v2572, %v2571
        %v2755 = vpack.c.b16 %v2574, %v2573
        %v2756 = vpack.c.b16 %v2576, %v2575
        %v2757 = vpack.c.b16 %v2578, %v2577
        %v2758 = vpack.c.b16 %v2580, %v2579
        %v2759 = vpack.c.b16 %v2582, %v2581
        %v2760 = vpack.c.b16 %v2584, %v2583
        %v2761 = vpack.c.b16 %v2586, %v2585
        %v2762 = vpack.c.b16 %v2588, %v2587
        %v2763 = vpack.c.b16 %v2590, %v2589
        %v2764 = vpack.c.b16 %v2592, %v2591
        %v2765 = vpack.c.b16 %v2594, %v2593
        %v2766 = vpack.c.b16 %v2596, %v2595
        %v2767 = vpack.c.b16 %v2598, %v2597
        %v2768 = vpack.c.b16 %v2600, %v2599
        %v2769 = vpack.c.b16 %v2602, %v2601
        %v2770 = vpack.c.b16 %v2604, %v2603
        %v2771 = vpack.c.b16 %v2606, %v2605
        %v2772 = vpack.c.b16 %v2608, %v2607
        %v2773 = vpack.c.b16 %v2610, %v2609
        %v2774 = vpack.c.b16 %v2612, %v2611
        %v2775 = vpack.c.b16 %v2614, %v2613
        %v2776 = vpack.c.b16 %v2616, %v2615
        %v2777 = vpack.c.b16 %v2618, %v2617
        %v2778 = vpack.c.b16 %v2620, %v2619
        %v2779 = vpack.c.b16 %v2622, %v2621
        %v2780 = vpack.c.b16 %v2624, %v2623
        %v2781 = vpack.c.b16 %v2626, %v2625
        %v2782 = vpack.c.b16 %v2628, %v2627
        %v2783 = vpack.c.b16 %v2630, %v2629
        %v2784 = vpack.c.b16 %v2632, %v2631
        %v2785 = vpack.c.b16 %v2634, %v2633
        %v2786 = vpack.c.b16 %v2636, %v2635
        %v2787 = vpack.c.b16 %v2638, %v2637
        %v2788 = vpack.c.b16 %v2640, %v2639
        %v2789 = vpack.c.b16 %v2642, %v2641
        %v2790 = vpack.c.b16 %v2644, %v2643
        %v2791 = vpack.c.b16 %v2646, %v2645
        %v2792 = vpack.c.b16 %v2648, %v2647
        %v2793 = vpack.c.b16 %v2650, %v2649
        %v2794 = vpack.c.b16 %v2652, %v2651
        %v2795 = vpack.c.b16 %v2654, %v2653
        %v2796 = vpack.c.b16 %v2656, %v2655
        %v2797 = vpack.c.b16 %v2658, %v2657
        %v2798 = vpack.c.b16 %v2660, %v2659
        %v2799 = vpack.c.b16 %v2662, %v2661
        %v2800 = vpack.c.b16 %v2664, %v2663
        %v2801 = vpack.c.b16 %v2666, %v2665
        %v2802 = vpack.c.b16 %v2668, %v2667
        %v2803 = vpack.c.b16 %v2670, %v2669
        %v2804 = vpack.c.b16 %v2672, %v2671
        %v2805 = vpack.c.b16 %v2674, %v2673
        %v2806 = vpack.c.b16 %v2676, %v2675
        %v2807 = vpack.c.b16 %v2678, %v2677
        %v2808 = vpack.c.b16 %v2680, %v2679
        %v2809 = vpack.c.b16 %v2682, %v2681
        %v2810 = vpack.c.b16 %v2684, %v2683
        %v2811 = vpack.c.b16 %v2686, %v2685
        %v2812 = vpack.c.b16 %v2688, %v2687
        %v2813 = vpack.c.b16 %v2690, %v2689
        %v2814 = vpack.c.b16 %v2692, %v2691
        %v2815 = vpack.c.b16 %v2694, %v2693
        %v2816 = vpack.c.b16 %v2696, %v2695
        %vm2817 = vcmask 523264
        %v2819 = vsel %vm2817, %v2697, 0
        %v2822 = vsel %vm2817, %v2698, 0
        %v2825 = vsel %vm2817, %v2699, 0
        %v2828 = vsel %vm2817, %v2700, 0
        %v2831 = vsel %vm2817, %v2701, 0
        %v2834 = vsel %vm2817, %v2702, 0
        %v2837 = vsel %vm2817, %v2703, 0
        %v2840 = vsel %vm2817, %v2704, 0
        %v2843 = vsel %vm2817, %v2705, 0
        %v2846 = vsel %vm2817, %v2706, 0
        %v2849 = vsel %vm2817, %v2707, 0
        %v2852 = vsel %vm2817, %v2708, 0
        %v2855 = vsel %vm2817, %v2709, 0
        %v2858 = vsel %vm2817, %v2710, 0
        %v2861 = vsel %vm2817, %v2711, 0
        %v2864 = vsel %vm2817, %v2712, 0
        %v2867 = vsel %vm2817, %v2713, 0
        %v2870 = vsel %vm2817, %v2714, 0
        %v2873 = vsel %vm2817, %v2715, 0
        %v2876 = vsel %vm2817, %v2716, 0
        %v2879 = vsel %vm2817, %v2717, 0
        %v2882 = vsel %vm2817, %v2718, 0
        %v2885 = vsel %vm2817, %v2719, 0
        %v2888 = vsel %vm2817, %v2720, 0
        %v2891 = vsel %vm2817, %v2721, 0
        %v2894 = vsel %vm2817, %v2722, 0
        %v2897 = vsel %vm2817, %v2723, 0
        %v2900 = vsel %vm2817, %v2724, 0
        %v2903 = vsel %vm2817, %v2725, 0
        %v2906 = vsel %vm2817, %v2726, 0
        %v2909 = vsel %vm2817, %v2727, 0
        %v2912 = vsel %vm2817, %v2728, 0
        %v2915 = vsel %vm2817, %v2729, 0
        %v2918 = vsel %vm2817, %v2730, 0
        %v2921 = vsel %vm2817, %v2731, 0
        %v2924 = vsel %vm2817, %v2732, 0
        %v2927 = vsel %vm2817, %v2733, 0
        %v2930 = vsel %vm2817, %v2734, 0
        %v2933 = vsel %vm2817, %v2735, 0
        %v2936 = vsel %vm2817, %v2736, 0
        %v2939 = vsel %vm2817, %v2737, 0
        %v2942 = vsel %vm2817, %v2738, 0
        %v2945 = vsel %vm2817, %v2739, 0
        %v2948 = vsel %vm2817, %v2740, 0
        %v2951 = vsel %vm2817, %v2741, 0
        %v2954 = vsel %vm2817, %v2742, 0
        %v2957 = vsel %vm2817, %v2743, 0
        %v2960 = vsel %vm2817, %v2744, 0
        %v2963 = vsel %vm2817, %v2745, 0
        %v2966 = vsel %vm2817, %v2746, 0
        %v2969 = vsel %vm2817, %v2747, 0
        %v2972 = vsel %vm2817, %v2748, 0
        %v2975 = vsel %vm2817, %v2749, 0
        %v2978 = vsel %vm2817, %v2750, 0
        %v2981 = vsel %vm2817, %v2751, 0
        %v2984 = vsel %vm2817, %v2752, 0
        %v2987 = vsel %vm2817, %v2753, 0
        %v2990 = vsel %vm2817, %v2754, 0
        %v2993 = vsel %vm2817, %v2755, 0
        %v2996 = vsel %vm2817, %v2756, 0
        %v2999 = vsel %vm2817, %v2757, 0
        %v3002 = vsel %vm2817, %v2758, 0
        %v3005 = vsel %vm2817, %v2759, 0
        %v3008 = vsel %vm2817, %v2760, 0
        %v3011 = vsel %vm2817, %v2761, 0
        %v3014 = vsel %vm2817, %v2762, 0
        %v3017 = vsel %vm2817, %v2763, 0
        %v3020 = vsel %vm2817, %v2764, 0
        %v3023 = vsel %vm2817, %v2765, 0
        %v3026 = vsel %vm2817, %v2766, 0
        %v3029 = vsel %vm2817, %v2767, 0
        %v3032 = vsel %vm2817, %v2768, 0
        %v3035 = vsel %vm2817, %v2769, 0
        %v3038 = vsel %vm2817, %v2770, 0
        %v3041 = vsel %vm2817, %v2771, 0
        %v3044 = vsel %vm2817, %v2772, 0
        %v3047 = vsel %vm2817, %v2773, 0
        %v3050 = vsel %vm2817, %v2774, 0
        %v3053 = vsel %vm2817, %v2775, 0
        %v3056 = vsel %vm2817, %v2776, 0
        %v3059 = vsel %vm2817, %v2777, 0
        %v3062 = vsel %vm2817, %v2778, 0
        %v3065 = vsel %vm2817, %v2779, 0
        %v3068 = vsel %vm2817, %v2780, 0
        %v3071 = vsel %vm2817, %v2781, 0
        %v3074 = vsel %vm2817, %v2782, 0
        %v3077 = vsel %vm2817, %v2783, 0
        %v3080 = vsel %vm2817, %v2784, 0
        %v3083 = vsel %vm2817, %v2785, 0
        %v3086 = vsel %vm2817, %v2786, 0
        %v3089 = vsel %vm2817, %v2787, 0
        %v3092 = vsel %vm2817, %v2788, 0
        %v3095 = vsel %vm2817, %v2789, 0
        %v3098 = vsel %vm2817, %v2790, 0
        %v3101 = vsel %vm2817, %v2791, 0
        %v3104 = vsel %vm2817, %v2792, 0
        %v3107 = vsel %vm2817, %v2793, 0
        %v3110 = vsel %vm2817, %v2794, 0
        %v3113 = vsel %vm2817, %v2795, 0
        %v3116 = vsel %vm2817, %v2796, 0
        %v3119 = vsel %vm2817, %v2797, 0
        %v3122 = vsel %vm2817, %v2798, 0
        %v3125 = vsel %vm2817, %v2799, 0
        %v3128 = vsel %vm2817, %v2800, 0
        %v3131 = vsel %vm2817, %v2801, 0
        %v3134 = vsel %vm2817, %v2802, 0
        %v3137 = vsel %vm2817, %v2803, 0
        %v3140 = vsel %vm2817, %v2804, 0
        %v3143 = vsel %vm2817, %v2805, 0
        %v3146 = vsel %vm2817, %v2806, 0
        %v3149 = vsel %vm2817, %v2807, 0
        %v3152 = vsel %vm2817, %v2808, 0
        %v3155 = vsel %vm2817, %v2809, 0
        %v3158 = vsel %vm2817, %v2810, 0
        %v3161 = vsel %vm2817, %v2811, 0
        %v3164 = vsel %vm2817, %v2812, 0
        %v3167 = vsel %vm2817, %v2813, 0
        %v3170 = vsel %vm2817, %v2814, 0
        %v3173 = vsel %vm2817, %v2815, 0
        %v3176 = vsel %vm2817, %v2816, 0
        %3178 = vmatpush.bf16.msra.mxu0 0
        %3179 = vmatpush.bf16.msra.mxu0 0
        %3180 = vmatpush.bf16.msra.mxu0 0
        %3181 = vmatpush.bf16.msra.mxu0 0
        %3182 = vmatpush.bf16.msra.mxu0 %v536
        %3183 = vmatpush.bf16.msra.mxu0 %v535
        %3184 = vmatpush.bf16.msra.mxu0 %v534
        %3185 = vmatpush.bf16.msra.mxu0 %v533
        %3186 = vmatmul.bf16.gmra.mxu0 %v2819
        %v3187 = vpop.f32.mrf.mxu0
        %v3188 = vadd.f32 %v1020, %v3187
        %v3189 = vpop.f32.mrf.mxu0
        %v3190 = vadd.f32 %v1025, %v3189
        %3191 = vmatmul.bf16.gmra.mxu0 %v2822
        %v3192 = vpop.f32.mrf.mxu0
        %v3193 = vadd.f32 %v1030, %v3192
        %v3194 = vpop.f32.mrf.mxu0
        %v3195 = vadd.f32 %v1035, %v3194
        %3196 = vmatmul.bf16.gmra.mxu0 %v2825
        %v3197 = vpop.f32.mrf.mxu0
        %v3198 = vadd.f32 %v1040, %v3197
        %v3199 = vpop.f32.mrf.mxu0
        %v3200 = vadd.f32 %v1045, %v3199
        %3201 = vmatmul.bf16.gmra.mxu0 %v2828
        %v3202 = vpop.f32.mrf.mxu0
        %v3203 = vadd.f32 %v1050, %v3202
        %v3204 = vpop.f32.mrf.mxu0
        %v3205 = vadd.f32 %v1055, %v3204
        %3206 = vmatmul.bf16.gmra.mxu0 %v2831
        %v3207 = vpop.f32.mrf.mxu0
        %v3208 = vadd.f32 %v1060, %v3207
        %v3209 = vpop.f32.mrf.mxu0
        %v3210 = vadd.f32 %v1065, %v3209
        %3211 = vmatmul.bf16.gmra.mxu0 %v2834
        %v3212 = vpop.f32.mrf.mxu0
        %v3213 = vadd.f32 %v1070, %v3212
        %v3214 = vpop.f32.mrf.mxu0
        %v3215 = vadd.f32 %v1075, %v3214
        %3216 = vmatmul.bf16.gmra.mxu0 %v2837
        %v3217 = vpop.f32.mrf.mxu0
        %v3218 = vadd.f32 %v1080, %v3217
        %v3219 = vpop.f32.mrf.mxu0
        %v3220 = vadd.f32 %v1085, %v3219
        %3221 = vmatmul.bf16.gmra.mxu0 %v2840
        %v3222 = vpop.f32.mrf.mxu0
        %v3223 = vadd.f32 %v1090, %v3222
        %v3224 = vpop.f32.mrf.mxu0
        %v3225 = vadd.f32 %v1095, %v3224
        %3226 = vmatmul.bf16.gmra.mxu0 %v2843
        %v3227 = vpop.f32.mrf.mxu0
        %v3228 = vadd.f32 %v1100, %v3227
        %v3229 = vpop.f32.mrf.mxu0
        %v3230 = vadd.f32 %v1105, %v3229
        %3231 = vmatmul.bf16.gmra.mxu0 %v2846
        %v3232 = vpop.f32.mrf.mxu0
        %v3233 = vadd.f32 %v1110, %v3232
        %v3234 = vpop.f32.mrf.mxu0
        %v3235 = vadd.f32 %v1115, %v3234
        %3236 = vmatmul.bf16.gmra.mxu0 %v2849
        %v3237 = vpop.f32.mrf.mxu0
        %v3238 = vadd.f32 %v1120, %v3237
        %v3239 = vpop.f32.mrf.mxu0
        %v3240 = vadd.f32 %v1125, %v3239
        %3241 = vmatmul.bf16.gmra.mxu0 %v2852
        %v3242 = vpop.f32.mrf.mxu0
        %v3243 = vadd.f32 %v1130, %v3242
        %v3244 = vpop.f32.mrf.mxu0
        %v3245 = vadd.f32 %v1135, %v3244
        %3246 = vmatmul.bf16.gmra.mxu0 %v2855
        %v3247 = vpop.f32.mrf.mxu0
        %v3248 = vadd.f32 %v1140, %v3247
        %v3249 = vpop.f32.mrf.mxu0
        %v3250 = vadd.f32 %v1145, %v3249
        %3251 = vmatmul.bf16.gmra.mxu0 %v2858
        %v3252 = vpop.f32.mrf.mxu0
        %v3253 = vadd.f32 %v1150, %v3252
        %v3254 = vpop.f32.mrf.mxu0
        %v3255 = vadd.f32 %v1155, %v3254
        %3256 = vmatmul.bf16.gmra.mxu0 %v2861
        %v3257 = vpop.f32.mrf.mxu0
        %v3258 = vadd.f32 %v1160, %v3257
        %v3259 = vpop.f32.mrf.mxu0
        %v3260 = vadd.f32 %v1165, %v3259
        %3261 = vmatmul.bf16.gmra.mxu0 %v2864
        %v3262 = vpop.f32.mrf.mxu0
        %v3263 = vadd.f32 %v1170, %v3262
        %v3264 = vpop.f32.mrf.mxu0
        %v3265 = vadd.f32 %v1175, %v3264
        %3266 = vmatmul.bf16.gmra.mxu0 %v2867
        %v3267 = vpop.f32.mrf.mxu0
        %v3268 = vadd.f32 %v1180, %v3267
        %v3269 = vpop.f32.mrf.mxu0
        %v3270 = vadd.f32 %v1185, %v3269
        %3271 = vmatmul.bf16.gmra.mxu0 %v2870
        %v3272 = vpop.f32.mrf.mxu0
        %v3273 = vadd.f32 %v1190, %v3272
        %v3274 = vpop.f32.mrf.mxu0
        %v3275 = vadd.f32 %v1195, %v3274
        %3276 = vmatmul.bf16.gmra.mxu0 %v2873
        %v3277 = vpop.f32.mrf.mxu0
        %v3278 = vadd.f32 %v1200, %v3277
        %v3279 = vpop.f32.mrf.mxu0
        %v3280 = vadd.f32 %v1205, %v3279
        %3281 = vmatmul.bf16.gmra.mxu0 %v2876
        %v3282 = vpop.f32.mrf.mxu0
        %v3283 = vadd.f32 %v1210, %v3282
        %v3284 = vpop.f32.mrf.mxu0
        %v3285 = vadd.f32 %v1215, %v3284
        %3286 = vmatmul.bf16.gmra.mxu0 %v2879
        %v3287 = vpop.f32.mrf.mxu0
        %v3288 = vadd.f32 %v1220, %v3287
        %v3289 = vpop.f32.mrf.mxu0
        %v3290 = vadd.f32 %v1225, %v3289
        %3291 = vmatmul.bf16.gmra.mxu0 %v2882
        %v3292 = vpop.f32.mrf.mxu0
        %v3293 = vadd.f32 %v1230, %v3292
        %v3294 = vpop.f32.mrf.mxu0
        %v3295 = vadd.f32 %v1235, %v3294
        %3296 = vmatmul.bf16.gmra.mxu0 %v2885
        %v3297 = vpop.f32.mrf.mxu0
        %v3298 = vadd.f32 %v1240, %v3297
        %v3299 = vpop.f32.mrf.mxu0
        %v3300 = vadd.f32 %v1245, %v3299
        %3301 = vmatmul.bf16.gmra.mxu0 %v2888
        %v3302 = vpop.f32.mrf.mxu0
        %v3303 = vadd.f32 %v1250, %v3302
        %v3304 = vpop.f32.mrf.mxu0
        %v3305 = vadd.f32 %v1255, %v3304
        %3306 = vmatmul.bf16.gmra.mxu0 %v2891
        %v3307 = vpop.f32.mrf.mxu0
        %v3308 = vadd.f32 %v1260, %v3307
        %v3309 = vpop.f32.mrf.mxu0
        %v3310 = vadd.f32 %v1265, %v3309
        %3311 = vmatmul.bf16.gmra.mxu0 %v2894
        %v3312 = vpop.f32.mrf.mxu0
        %v3313 = vadd.f32 %v1270, %v3312
        %v3314 = vpop.f32.mrf.mxu0
        %v3315 = vadd.f32 %v1275, %v3314
        %3316 = vmatmul.bf16.gmra.mxu0 %v2897
        %v3317 = vpop.f32.mrf.mxu0
        %v3318 = vadd.f32 %v1280, %v3317
        %v3319 = vpop.f32.mrf.mxu0
        %v3320 = vadd.f32 %v1285, %v3319
        %3321 = vmatmul.bf16.gmra.mxu0 %v2900
        %v3322 = vpop.f32.mrf.mxu0
        %v3323 = vadd.f32 %v1290, %v3322
        %v3324 = vpop.f32.mrf.mxu0
        %v3325 = vadd.f32 %v1295, %v3324
        %3326 = vmatmul.bf16.gmra.mxu0 %v2903
        %v3327 = vpop.f32.mrf.mxu0
        %v3328 = vadd.f32 %v1300, %v3327
        %v3329 = vpop.f32.mrf.mxu0
        %v3330 = vadd.f32 %v1305, %v3329
        %3331 = vmatmul.bf16.gmra.mxu0 %v2906
        %v3332 = vpop.f32.mrf.mxu0
        %v3333 = vadd.f32 %v1310, %v3332
        %v3334 = vpop.f32.mrf.mxu0
        %v3335 = vadd.f32 %v1315, %v3334
        %3336 = vmatmul.bf16.gmra.mxu0 %v2909
        %v3337 = vpop.f32.mrf.mxu0
        %v3338 = vadd.f32 %v1320, %v3337
        %v3339 = vpop.f32.mrf.mxu0
        %v3340 = vadd.f32 %v1325, %v3339
        %3341 = vmatmul.bf16.gmra.mxu0 %v2912
        %v3342 = vpop.f32.mrf.mxu0
        %v3343 = vadd.f32 %v1330, %v3342
        %v3344 = vpop.f32.mrf.mxu0
        %v3345 = vadd.f32 %v1335, %v3344
        %3346 = vmatmul.bf16.gmra.mxu0 %v2915
        %v3347 = vpop.f32.mrf.mxu0
        %v3348 = vadd.f32 %v1340, %v3347
        %v3349 = vpop.f32.mrf.mxu0
        %v3350 = vadd.f32 %v1345, %v3349
        %3351 = vmatmul.bf16.gmra.mxu0 %v2918
        %v3352 = vpop.f32.mrf.mxu0
        %v3353 = vadd.f32 %v1350, %v3352
        %v3354 = vpop.f32.mrf.mxu0
        %v3355 = vadd.f32 %v1355, %v3354
        %3356 = vmatmul.bf16.gmra.mxu0 %v2921
        %v3357 = vpop.f32.mrf.mxu0
        %v3358 = vadd.f32 %v1360, %v3357
        %v3359 = vpop.f32.mrf.mxu0
        %v3360 = vadd.f32 %v1365, %v3359
        %3361 = vmatmul.bf16.gmra.mxu0 %v2924
        %v3362 = vpop.f32.mrf.mxu0
        %v3363 = vadd.f32 %v1370, %v3362
        %v3364 = vpop.f32.mrf.mxu0
        %v3365 = vadd.f32 %v1375, %v3364
        %3366 = vmatmul.bf16.gmra.mxu0 %v2927
        %v3367 = vpop.f32.mrf.mxu0
        %v3368 = vadd.f32 %v1380, %v3367
        %v3369 = vpop.f32.mrf.mxu0
        %v3370 = vadd.f32 %v1385, %v3369
        %3371 = vmatmul.bf16.gmra.mxu0 %v2930
        %v3372 = vpop.f32.mrf.mxu0
        %v3373 = vadd.f32 %v1390, %v3372
        %v3374 = vpop.f32.mrf.mxu0
        %v3375 = vadd.f32 %v1395, %v3374
        %3376 = vmatmul.bf16.gmra.mxu0 %v2933
        %v3377 = vpop.f32.mrf.mxu0
        %v3378 = vadd.f32 %v1400, %v3377
        %v3379 = vpop.f32.mrf.mxu0
        %v3380 = vadd.f32 %v1405, %v3379
        %3381 = vmatmul.bf16.gmra.mxu0 %v2936
        %v3382 = vpop.f32.mrf.mxu0
        %v3383 = vadd.f32 %v1410, %v3382
        %v3384 = vpop.f32.mrf.mxu0
        %v3385 = vadd.f32 %v1415, %v3384
        %3386 = vmatmul.bf16.gmra.mxu0 %v2939
        %v3387 = vpop.f32.mrf.mxu0
        %v3388 = vadd.f32 %v1420, %v3387
        %v3389 = vpop.f32.mrf.mxu0
        %v3390 = vadd.f32 %v1425, %v3389
        %3391 = vmatmul.bf16.gmra.mxu0 %v2942
        %v3392 = vpop.f32.mrf.mxu0
        %v3393 = vadd.f32 %v1430, %v3392
        %v3394 = vpop.f32.mrf.mxu0
        %v3395 = vadd.f32 %v1435, %v3394
        %3396 = vmatmul.bf16.gmra.mxu0 %v2945
        %v3397 = vpop.f32.mrf.mxu0
        %v3398 = vadd.f32 %v1440, %v3397
        %v3399 = vpop.f32.mrf.mxu0
        %v3400 = vadd.f32 %v1445, %v3399
        %3401 = vmatmul.bf16.gmra.mxu0 %v2948
        %v3402 = vpop.f32.mrf.mxu0
        %v3403 = vadd.f32 %v1450, %v3402
        %v3404 = vpop.f32.mrf.mxu0
        %v3405 = vadd.f32 %v1455, %v3404
        %3406 = vmatmul.bf16.gmra.mxu0 %v2951
        %v3407 = vpop.f32.mrf.mxu0
        %v3408 = vadd.f32 %v1460, %v3407
        %v3409 = vpop.f32.mrf.mxu0
        %v3410 = vadd.f32 %v1465, %v3409
        %3411 = vmatmul.bf16.gmra.mxu0 %v2954
        %v3412 = vpop.f32.mrf.mxu0
        %v3413 = vadd.f32 %v1470, %v3412
        %v3414 = vpop.f32.mrf.mxu0
        %v3415 = vadd.f32 %v1475, %v3414
        %3416 = vmatmul.bf16.gmra.mxu0 %v2957
        %v3417 = vpop.f32.mrf.mxu0
        %v3418 = vadd.f32 %v1480, %v3417
        %v3419 = vpop.f32.mrf.mxu0
        %v3420 = vadd.f32 %v1485, %v3419
        %3421 = vmatmul.bf16.gmra.mxu0 %v2960
        %v3422 = vpop.f32.mrf.mxu0
        %v3423 = vadd.f32 %v1490, %v3422
        %v3424 = vpop.f32.mrf.mxu0
        %v3425 = vadd.f32 %v1495, %v3424
        %3426 = vmatmul.bf16.gmra.mxu0 %v2963
        %v3427 = vpop.f32.mrf.mxu0
        %v3428 = vadd.f32 %v1500, %v3427
        %v3429 = vpop.f32.mrf.mxu0
        %v3430 = vadd.f32 %v1505, %v3429
        %3431 = vmatmul.bf16.gmra.mxu0 %v2966
        %v3432 = vpop.f32.mrf.mxu0
        %v3433 = vadd.f32 %v1510, %v3432
        %v3434 = vpop.f32.mrf.mxu0
        %v3435 = vadd.f32 %v1515, %v3434
        %3436 = vmatmul.bf16.gmra.mxu0 %v2969
        %v3437 = vpop.f32.mrf.mxu0
        %v3438 = vadd.f32 %v1520, %v3437
        %v3439 = vpop.f32.mrf.mxu0
        %v3440 = vadd.f32 %v1525, %v3439
        %3441 = vmatmul.bf16.gmra.mxu0 %v2972
        %v3442 = vpop.f32.mrf.mxu0
        %v3443 = vadd.f32 %v1530, %v3442
        %v3444 = vpop.f32.mrf.mxu0
        %v3445 = vadd.f32 %v1535, %v3444
        %3446 = vmatmul.bf16.gmra.mxu0 %v2975
        %v3447 = vpop.f32.mrf.mxu0
        %v3448 = vadd.f32 %v1540, %v3447
        %v3449 = vpop.f32.mrf.mxu0
        %v3450 = vadd.f32 %v1545, %v3449
        %3451 = vmatmul.bf16.gmra.mxu0 %v2978
        %v3452 = vpop.f32.mrf.mxu0
        %v3453 = vadd.f32 %v1550, %v3452
        %v3454 = vpop.f32.mrf.mxu0
        %v3455 = vadd.f32 %v1555, %v3454
        %3456 = vmatmul.bf16.gmra.mxu0 %v2981
        %v3457 = vpop.f32.mrf.mxu0
        %v3458 = vadd.f32 %v1560, %v3457
        %v3459 = vpop.f32.mrf.mxu0
        %v3460 = vadd.f32 %v1565, %v3459
        %3461 = vmatmul.bf16.gmra.mxu0 %v2984
        %v3462 = vpop.f32.mrf.mxu0
        %v3463 = vadd.f32 %v1570, %v3462
        %v3464 = vpop.f32.mrf.mxu0
        %v3465 = vadd.f32 %v1575, %v3464
        %3466 = vmatmul.bf16.gmra.mxu0 %v2987
        %v3467 = vpop.f32.mrf.mxu0
        %v3468 = vadd.f32 %v1580, %v3467
        %v3469 = vpop.f32.mrf.mxu0
        %v3470 = vadd.f32 %v1585, %v3469
        %3471 = vmatmul.bf16.gmra.mxu0 %v2990
        %v3472 = vpop.f32.mrf.mxu0
        %v3473 = vadd.f32 %v1590, %v3472
        %v3474 = vpop.f32.mrf.mxu0
        %v3475 = vadd.f32 %v1595, %v3474
        %3476 = vmatmul.bf16.gmra.mxu0 %v2993
        %v3477 = vpop.f32.mrf.mxu0
        %v3478 = vadd.f32 %v1600, %v3477
        %v3479 = vpop.f32.mrf.mxu0
        %v3480 = vadd.f32 %v1605, %v3479
        %3481 = vmatmul.bf16.gmra.mxu0 %v2996
        %v3482 = vpop.f32.mrf.mxu0
        %v3483 = vadd.f32 %v1610, %v3482
        %v3484 = vpop.f32.mrf.mxu0
        %v3485 = vadd.f32 %v1615, %v3484
        %3486 = vmatmul.bf16.gmra.mxu0 %v2999
        %v3487 = vpop.f32.mrf.mxu0
        %v3488 = vadd.f32 %v1620, %v3487
        %v3489 = vpop.f32.mrf.mxu0
        %v3490 = vadd.f32 %v1625, %v3489
        %3491 = vmatmul.bf16.gmra.mxu0 %v3002
        %v3492 = vpop.f32.mrf.mxu0
        %v3493 = vadd.f32 %v1630, %v3492
        %v3494 = vpop.f32.mrf.mxu0
        %v3495 = vadd.f32 %v1635, %v3494
        %3496 = vmatmul.bf16.gmra.mxu0 %v3005
        %v3497 = vpop.f32.mrf.mxu0
        %v3498 = vadd.f32 %v1640, %v3497
        %v3499 = vpop.f32.mrf.mxu0
        %v3500 = vadd.f32 %v1645, %v3499
        %3501 = vmatmul.bf16.gmra.mxu0 %v3008
        %v3502 = vpop.f32.mrf.mxu0
        %v3503 = vadd.f32 %v1650, %v3502
        %v3504 = vpop.f32.mrf.mxu0
        %v3505 = vadd.f32 %v1655, %v3504
        %3506 = vmatmul.bf16.gmra.mxu0 %v3011
        %v3507 = vpop.f32.mrf.mxu0
        %v3508 = vadd.f32 %v1660, %v3507
        %v3509 = vpop.f32.mrf.mxu0
        %v3510 = vadd.f32 %v1665, %v3509
        %3511 = vmatmul.bf16.gmra.mxu0 %v3014
        %v3512 = vpop.f32.mrf.mxu0
        %v3513 = vadd.f32 %v1670, %v3512
        %v3514 = vpop.f32.mrf.mxu0
        %v3515 = vadd.f32 %v1675, %v3514
        %3516 = vmatmul.bf16.gmra.mxu0 %v3017
        %v3517 = vpop.f32.mrf.mxu0
        %v3518 = vadd.f32 %v1680, %v3517
        %v3519 = vpop.f32.mrf.mxu0
        %v3520 = vadd.f32 %v1685, %v3519
        %3521 = vmatmul.bf16.gmra.mxu0 %v3020
        %v3522 = vpop.f32.mrf.mxu0
        %v3523 = vadd.f32 %v1690, %v3522
        %v3524 = vpop.f32.mrf.mxu0
        %v3525 = vadd.f32 %v1695, %v3524
        %3526 = vmatmul.bf16.gmra.mxu0 %v3023
        %v3527 = vpop.f32.mrf.mxu0
        %v3528 = vadd.f32 %v1700, %v3527
        %v3529 = vpop.f32.mrf.mxu0
        %v3530 = vadd.f32 %v1705, %v3529
        %3531 = vmatmul.bf16.gmra.mxu0 %v3026
        %v3532 = vpop.f32.mrf.mxu0
        %v3533 = vadd.f32 %v1710, %v3532
        %v3534 = vpop.f32.mrf.mxu0
        %v3535 = vadd.f32 %v1715, %v3534
        %3536 = vmatmul.bf16.gmra.mxu0 %v3029
        %v3537 = vpop.f32.mrf.mxu0
        %v3538 = vadd.f32 %v1720, %v3537
        %v3539 = vpop.f32.mrf.mxu0
        %v3540 = vadd.f32 %v1725, %v3539
        %3541 = vmatmul.bf16.gmra.mxu0 %v3032
        %v3542 = vpop.f32.mrf.mxu0
        %v3543 = vadd.f32 %v1730, %v3542
        %v3544 = vpop.f32.mrf.mxu0
        %v3545 = vadd.f32 %v1735, %v3544
        %3546 = vmatmul.bf16.gmra.mxu0 %v3035
        %v3547 = vpop.f32.mrf.mxu0
        %v3548 = vadd.f32 %v1740, %v3547
        %v3549 = vpop.f32.mrf.mxu0
        %v3550 = vadd.f32 %v1745, %v3549
        %3551 = vmatmul.bf16.gmra.mxu0 %v3038
        %v3552 = vpop.f32.mrf.mxu0
        %v3553 = vadd.f32 %v1750, %v3552
        %v3554 = vpop.f32.mrf.mxu0
        %v3555 = vadd.f32 %v1755, %v3554
        %3556 = vmatmul.bf16.gmra.mxu0 %v3041
        %v3557 = vpop.f32.mrf.mxu0
        %v3558 = vadd.f32 %v1760, %v3557
        %v3559 = vpop.f32.mrf.mxu0
        %v3560 = vadd.f32 %v1765, %v3559
        %3561 = vmatmul.bf16.gmra.mxu0 %v3044
        %v3562 = vpop.f32.mrf.mxu0
        %v3563 = vadd.f32 %v1770, %v3562
        %v3564 = vpop.f32.mrf.mxu0
        %v3565 = vadd.f32 %v1775, %v3564
        %3566 = vmatmul.bf16.gmra.mxu0 %v3047
        %v3567 = vpop.f32.mrf.mxu0
        %v3568 = vadd.f32 %v1780, %v3567
        %v3569 = vpop.f32.mrf.mxu0
        %v3570 = vadd.f32 %v1785, %v3569
        %3571 = vmatmul.bf16.gmra.mxu0 %v3050
        %v3572 = vpop.f32.mrf.mxu0
        %v3573 = vadd.f32 %v1790, %v3572
        %v3574 = vpop.f32.mrf.mxu0
        %v3575 = vadd.f32 %v1795, %v3574
        %3576 = vmatmul.bf16.gmra.mxu0 %v3053
        %v3577 = vpop.f32.mrf.mxu0
        %v3578 = vadd.f32 %v1800, %v3577
        %v3579 = vpop.f32.mrf.mxu0
        %v3580 = vadd.f32 %v1805, %v3579
        %3581 = vmatmul.bf16.gmra.mxu0 %v3056
        %v3582 = vpop.f32.mrf.mxu0
        %v3583 = vadd.f32 %v1810, %v3582
        %v3584 = vpop.f32.mrf.mxu0
        %v3585 = vadd.f32 %v1815, %v3584
        %3586 = vmatmul.bf16.gmra.mxu0 %v3059
        %v3587 = vpop.f32.mrf.mxu0
        %v3588 = vadd.f32 %v1820, %v3587
        %v3589 = vpop.f32.mrf.mxu0
        %v3590 = vadd.f32 %v1825, %v3589
        %3591 = vmatmul.bf16.gmra.mxu0 %v3062
        %v3592 = vpop.f32.mrf.mxu0
        %v3593 = vadd.f32 %v1830, %v3592
        %v3594 = vpop.f32.mrf.mxu0
        %v3595 = vadd.f32 %v1835, %v3594
        %3596 = vmatmul.bf16.gmra.mxu0 %v3065
        %v3597 = vpop.f32.mrf.mxu0
        %v3598 = vadd.f32 %v1840, %v3597
        %v3599 = vpop.f32.mrf.mxu0
        %v3600 = vadd.f32 %v1845, %v3599
        %3601 = vmatmul.bf16.gmra.mxu0 %v3068
        %v3602 = vpop.f32.mrf.mxu0
        %v3603 = vadd.f32 %v1850, %v3602
        %v3604 = vpop.f32.mrf.mxu0
        %v3605 = vadd.f32 %v1855, %v3604
        %3606 = vmatmul.bf16.gmra.mxu0 %v3071
        %v3607 = vpop.f32.mrf.mxu0
        %v3608 = vadd.f32 %v1860, %v3607
        %v3609 = vpop.f32.mrf.mxu0
        %v3610 = vadd.f32 %v1865, %v3609
        %3611 = vmatmul.bf16.gmra.mxu0 %v3074
        %v3612 = vpop.f32.mrf.mxu0
        %v3613 = vadd.f32 %v1870, %v3612
        %v3614 = vpop.f32.mrf.mxu0
        %v3615 = vadd.f32 %v1875, %v3614
        %3616 = vmatmul.bf16.gmra.mxu0 %v3077
        %v3617 = vpop.f32.mrf.mxu0
        %v3618 = vadd.f32 %v1880, %v3617
        %v3619 = vpop.f32.mrf.mxu0
        %v3620 = vadd.f32 %v1885, %v3619
        %3621 = vmatmul.bf16.gmra.mxu0 %v3080
        %v3622 = vpop.f32.mrf.mxu0
        %v3623 = vadd.f32 %v1890, %v3622
        %v3624 = vpop.f32.mrf.mxu0
        %v3625 = vadd.f32 %v1895, %v3624
        %3626 = vmatmul.bf16.gmra.mxu0 %v3083
        %v3627 = vpop.f32.mrf.mxu0
        %v3628 = vadd.f32 %v1900, %v3627
        %v3629 = vpop.f32.mrf.mxu0
        %v3630 = vadd.f32 %v1905, %v3629
        %3631 = vmatmul.bf16.gmra.mxu0 %v3086
        %v3632 = vpop.f32.mrf.mxu0
        %v3633 = vadd.f32 %v1910, %v3632
        %v3634 = vpop.f32.mrf.mxu0
        %v3635 = vadd.f32 %v1915, %v3634
        %3636 = vmatmul.bf16.gmra.mxu0 %v3089
        %v3637 = vpop.f32.mrf.mxu0
        %v3638 = vadd.f32 %v1920, %v3637
        %v3639 = vpop.f32.mrf.mxu0
        %v3640 = vadd.f32 %v1925, %v3639
        %3641 = vmatmul.bf16.gmra.mxu0 %v3092
        %v3642 = vpop.f32.mrf.mxu0
        %v3643 = vadd.f32 %v1930, %v3642
        %v3644 = vpop.f32.mrf.mxu0
        %v3645 = vadd.f32 %v1935, %v3644
        %3646 = vmatmul.bf16.gmra.mxu0 %v3095
        %v3647 = vpop.f32.mrf.mxu0
        %v3648 = vadd.f32 %v1940, %v3647
        %v3649 = vpop.f32.mrf.mxu0
        %v3650 = vadd.f32 %v1945, %v3649
        %3651 = vmatmul.bf16.gmra.mxu0 %v3098
        %v3652 = vpop.f32.mrf.mxu0
        %v3653 = vadd.f32 %v1950, %v3652
        %v3654 = vpop.f32.mrf.mxu0
        %v3655 = vadd.f32 %v1955, %v3654
        %3656 = vmatmul.bf16.gmra.mxu0 %v3101
        %v3657 = vpop.f32.mrf.mxu0
        %v3658 = vadd.f32 %v1960, %v3657
        %v3659 = vpop.f32.mrf.mxu0
        %v3660 = vadd.f32 %v1965, %v3659
        %3661 = vmatmul.bf16.gmra.mxu0 %v3104
        %v3662 = vpop.f32.mrf.mxu0
        %v3663 = vadd.f32 %v1970, %v3662
        %v3664 = vpop.f32.mrf.mxu0
        %v3665 = vadd.f32 %v1975, %v3664
        %3666 = vmatmul.bf16.gmra.mxu0 %v3107
        %v3667 = vpop.f32.mrf.mxu0
        %v3668 = vadd.f32 %v1980, %v3667
        %v3669 = vpop.f32.mrf.mxu0
        %v3670 = vadd.f32 %v1985, %v3669
        %3671 = vmatmul.bf16.gmra.mxu0 %v3110
        %v3672 = vpop.f32.mrf.mxu0
        %v3673 = vadd.f32 %v1990, %v3672
        %v3674 = vpop.f32.mrf.mxu0
        %v3675 = vadd.f32 %v1995, %v3674
        %3676 = vmatmul.bf16.gmra.mxu0 %v3113
        %v3677 = vpop.f32.mrf.mxu0
        %v3678 = vadd.f32 %v2000, %v3677
        %v3679 = vpop.f32.mrf.mxu0
        %v3680 = vadd.f32 %v2005, %v3679
        %3681 = vmatmul.bf16.gmra.mxu0 %v3116
        %v3682 = vpop.f32.mrf.mxu0
        %v3683 = vadd.f32 %v2010, %v3682
        %v3684 = vpop.f32.mrf.mxu0
        %v3685 = vadd.f32 %v2015, %v3684
        %3686 = vmatmul.bf16.gmra.mxu0 %v3119
        %v3687 = vpop.f32.mrf.mxu0
        %v3688 = vadd.f32 %v2020, %v3687
        %v3689 = vpop.f32.mrf.mxu0
        %v3690 = vadd.f32 %v2025, %v3689
        %3691 = vmatmul.bf16.gmra.mxu0 %v3122
        %v3692 = vpop.f32.mrf.mxu0
        %v3693 = vadd.f32 %v2030, %v3692
        %v3694 = vpop.f32.mrf.mxu0
        %v3695 = vadd.f32 %v2035, %v3694
        %3696 = vmatmul.bf16.gmra.mxu0 %v3125
        %v3697 = vpop.f32.mrf.mxu0
        %v3698 = vadd.f32 %v2040, %v3697
        %v3699 = vpop.f32.mrf.mxu0
        %v3700 = vadd.f32 %v2045, %v3699
        %3701 = vmatmul.bf16.gmra.mxu0 %v3128
        %v3702 = vpop.f32.mrf.mxu0
        %v3703 = vadd.f32 %v2050, %v3702
        %v3704 = vpop.f32.mrf.mxu0
        %v3705 = vadd.f32 %v2055, %v3704
        %3706 = vmatmul.bf16.gmra.mxu0 %v3131
        %v3707 = vpop.f32.mrf.mxu0
        %v3708 = vadd.f32 %v2060, %v3707
        %v3709 = vpop.f32.mrf.mxu0
        %v3710 = vadd.f32 %v2065, %v3709
        %3711 = vmatmul.bf16.gmra.mxu0 %v3134
        %v3712 = vpop.f32.mrf.mxu0
        %v3713 = vadd.f32 %v2070, %v3712
        %v3714 = vpop.f32.mrf.mxu0
        %v3715 = vadd.f32 %v2075, %v3714
        %3716 = vmatmul.bf16.gmra.mxu0 %v3137
        %v3717 = vpop.f32.mrf.mxu0
        %v3718 = vadd.f32 %v2080, %v3717
        %v3719 = vpop.f32.mrf.mxu0
        %v3720 = vadd.f32 %v2085, %v3719
        %3721 = vmatmul.bf16.gmra.mxu0 %v3140
        %v3722 = vpop.f32.mrf.mxu0
        %v3723 = vadd.f32 %v2090, %v3722
        %v3724 = vpop.f32.mrf.mxu0
        %v3725 = vadd.f32 %v2095, %v3724
        %3726 = vmatmul.bf16.gmra.mxu0 %v3143
        %v3727 = vpop.f32.mrf.mxu0
        %v3728 = vadd.f32 %v2100, %v3727
        %v3729 = vpop.f32.mrf.mxu0
        %v3730 = vadd.f32 %v2105, %v3729
        %3731 = vmatmul.bf16.gmra.mxu0 %v3146
        %v3732 = vpop.f32.mrf.mxu0
        %v3733 = vadd.f32 %v2110, %v3732
        %v3734 = vpop.f32.mrf.mxu0
        %v3735 = vadd.f32 %v2115, %v3734
        %3736 = vmatmul.bf16.gmra.mxu0 %v3149
        %v3737 = vpop.f32.mrf.mxu0
        %v3738 = vadd.f32 %v2120, %v3737
        %v3739 = vpop.f32.mrf.mxu0
        %v3740 = vadd.f32 %v2125, %v3739
        %3741 = vmatmul.bf16.gmra.mxu0 %v3152
        %v3742 = vpop.f32.mrf.mxu0
        %v3743 = vadd.f32 %v2130, %v3742
        %v3744 = vpop.f32.mrf.mxu0
        %v3745 = vadd.f32 %v2135, %v3744
        %3746 = vmatmul.bf16.gmra.mxu0 %v3155
        %v3747 = vpop.f32.mrf.mxu0
        %v3748 = vadd.f32 %v2140, %v3747
        %v3749 = vpop.f32.mrf.mxu0
        %v3750 = vadd.f32 %v2145, %v3749
        %3751 = vmatmul.bf16.gmra.mxu0 %v3158
        %v3752 = vpop.f32.mrf.mxu0
        %v3753 = vadd.f32 %v2150, %v3752
        %v3754 = vpop.f32.mrf.mxu0
        %v3755 = vadd.f32 %v2155, %v3754
        %3756 = vmatmul.bf16.gmra.mxu0 %v3161
        %v3757 = vpop.f32.mrf.mxu0
        %v3758 = vadd.f32 %v2160, %v3757
        %v3759 = vpop.f32.mrf.mxu0
        %v3760 = vadd.f32 %v2165, %v3759
        %3761 = vmatmul.bf16.gmra.mxu0 %v3164
        %v3762 = vpop.f32.mrf.mxu0
        %v3763 = vadd.f32 %v2170, %v3762
        %v3764 = vpop.f32.mrf.mxu0
        %v3765 = vadd.f32 %v2175, %v3764
        %3766 = vmatmul.bf16.gmra.mxu0 %v3167
        %v3767 = vpop.f32.mrf.mxu0
        %v3768 = vadd.f32 %v2180, %v3767
        %v3769 = vpop.f32.mrf.mxu0
        %v3770 = vadd.f32 %v2185, %v3769
        %3771 = vmatmul.bf16.gmra.mxu0 %v3170
        %v3772 = vpop.f32.mrf.mxu0
        %v3773 = vadd.f32 %v2190, %v3772
        %v3774 = vpop.f32.mrf.mxu0
        %v3775 = vadd.f32 %v2195, %v3774
        %3776 = vmatmul.bf16.gmra.mxu0 %v3173
        %v3777 = vpop.f32.mrf.mxu0
        %v3778 = vadd.f32 %v2200, %v3777
        %v3779 = vpop.f32.mrf.mxu0
        %v3780 = vadd.f32 %v2205, %v3779
        %3781 = vmatmul.bf16.gmra.mxu0 %v3176
        %v3782 = vpop.f32.mrf.mxu0
        %v3783 = vadd.f32 %v2210, %v3782
        %v3784 = vpop.f32.mrf.mxu0
        %v3785 = vadd.f32 %v2215, %v3784
        %3786 = vdwg.mxu0
        %v3787 = vmax.f32 %v3188, 0.0
        %v3788 = vmax.f32 %v3190, 0.0
        %v3789 = vmax.f32 %v3193, 0.0
        %v3790 = vmax.f32 %v3195, 0.0
        %v3791 = vmax.f32 %v3198, 0.0
        %v3792 = vmax.f32 %v3200, 0.0
        %v3793 = vmax.f32 %v3203, 0.0
        %v3794 = vmax.f32 %v3205, 0.0
        %v3795 = vmax.f32 %v3208, 0.0
        %v3796 = vmax.f32 %v3210, 0.0
        %v3797 = vmax.f32 %v3213, 0.0
        %v3798 = vmax.f32 %v3215, 0.0
        %v3799 = vmax.f32 %v3218, 0.0
        %v3800 = vmax.f32 %v3220, 0.0
        %v3801 = vmax.f32 %v3223, 0.0
        %v3802 = vmax.f32 %v3225, 0.0
        %v3803 = vmax.f32 %v3228, 0.0
        %v3804 = vmax.f32 %v3230, 0.0
        %v3805 = vmax.f32 %v3233, 0.0
        %v3806 = vmax.f32 %v3235, 0.0
        %v3807 = vmax.f32 %v3238, 0.0
        %v3808 = vmax.f32 %v3240, 0.0
        %v3809 = vmax.f32 %v3243, 0.0
        %v3810 = vmax.f32 %v3245, 0.0
        %v3811 = vmax.f32 %v3248, 0.0
        %v3812 = vmax.f32 %v3250, 0.0
        %v3813 = vmax.f32 %v3253, 0.0
        %v3814 = vmax.f32 %v3255, 0.0
        %v3815 = vmax.f32 %v3258, 0.0
        %v3816 = vmax.f32 %v3260, 0.0
        %v3817 = vmax.f32 %v3263, 0.0
        %v3818 = vmax.f32 %v3265, 0.0
        %v3819 = vmax.f32 %v3268, 0.0
        %v3820 = vmax.f32 %v3270, 0.0
        %v3821 = vmax.f32 %v3273, 0.0
        %v3822 = vmax.f32 %v3275, 0.0
        %v3823 = vmax.f32 %v3278, 0.0
        %v3824 = vmax.f32 %v3280, 0.0
        %v3825 = vmax.f32 %v3283, 0.0
        %v3826 = vmax.f32 %v3285, 0.0
        %v3827 = vmax.f32 %v3288, 0.0
        %v3828 = vmax.f32 %v3290, 0.0
        %v3829 = vmax.f32 %v3293, 0.0
        %v3830 = vmax.f32 %v3295, 0.0
        %v3831 = vmax.f32 %v3298, 0.0
        %v3832 = vmax.f32 %v3300, 0.0
        %v3833 = vmax.f32 %v3303, 0.0
        %v3834 = vmax.f32 %v3305, 0.0
        %v3835 = vmax.f32 %v3308, 0.0
        %v3836 = vmax.f32 %v3310, 0.0
        %v3837 = vmax.f32 %v3313, 0.0
        %v3838 = vmax.f32 %v3315, 0.0
        %v3839 = vmax.f32 %v3318, 0.0
        %v3840 = vmax.f32 %v3320, 0.0
        %v3841 = vmax.f32 %v3323, 0.0
        %v3842 = vmax.f32 %v3325, 0.0
        %v3843 = vmax.f32 %v3328, 0.0
        %v3844 = vmax.f32 %v3330, 0.0
        %v3845 = vmax.f32 %v3333, 0.0
        %v3846 = vmax.f32 %v3335, 0.0
        %v3847 = vmax.f32 %v3338, 0.0
        %v3848 = vmax.f32 %v3340, 0.0
        %v3849 = vmax.f32 %v3343, 0.0
        %v3850 = vmax.f32 %v3345, 0.0
        %v3851 = vmax.f32 %v3348, 0.0
        %v3852 = vmax.f32 %v3350, 0.0
        %v3853 = vmax.f32 %v3353, 0.0
        %v3854 = vmax.f32 %v3355, 0.0
        %v3855 = vmax.f32 %v3358, 0.0
        %v3856 = vmax.f32 %v3360, 0.0
        %v3857 = vmax.f32 %v3363, 0.0
        %v3858 = vmax.f32 %v3365, 0.0
        %v3859 = vmax.f32 %v3368, 0.0
        %v3860 = vmax.f32 %v3370, 0.0
        %v3861 = vmax.f32 %v3373, 0.0
        %v3862 = vmax.f32 %v3375, 0.0
        %v3863 = vmax.f32 %v3378, 0.0
        %v3864 = vmax.f32 %v3380, 0.0
        %v3865 = vmax.f32 %v3383, 0.0
        %v3866 = vmax.f32 %v3385, 0.0
        %v3867 = vmax.f32 %v3388, 0.0
        %v3868 = vmax.f32 %v3390, 0.0
        %v3869 = vmax.f32 %v3393, 0.0
        %v3870 = vmax.f32 %v3395, 0.0
        %v3871 = vmax.f32 %v3398, 0.0
        %v3872 = vmax.f32 %v3400, 0.0
        %v3873 = vmax.f32 %v3403, 0.0
        %v3874 = vmax.f32 %v3405, 0.0
        %v3875 = vmax.f32 %v3408, 0.0
        %v3876 = vmax.f32 %v3410, 0.0
        %v3877 = vmax.f32 %v3413, 0.0
        %v3878 = vmax.f32 %v3415, 0.0
        %v3879 = vmax.f32 %v3418, 0.0
        %v3880 = vmax.f32 %v3420, 0.0
        %v3881 = vmax.f32 %v3423, 0.0
        %v3882 = vmax.f32 %v3425, 0.0
        %v3883 = vmax.f32 %v3428, 0.0
        %v3884 = vmax.f32 %v3430, 0.0
        %v3885 = vmax.f32 %v3433, 0.0
        %v3886 = vmax.f32 %v3435, 0.0
        %v3887 = vmax.f32 %v3438, 0.0
        %v3888 = vmax.f32 %v3440, 0.0
        %v3889 = vmax.f32 %v3443, 0.0
        %v3890 = vmax.f32 %v3445, 0.0
        %v3891 = vmax.f32 %v3448, 0.0
        %v3892 = vmax.f32 %v3450, 0.0
        %v3893 = vmax.f32 %v3453, 0.0
        %v3894 = vmax.f32 %v3455, 0.0
        %v3895 = vmax.f32 %v3458, 0.0
        %v3896 = vmax.f32 %v3460, 0.0
        %v3897 = vmax.f32 %v3463, 0.0
        %v3898 = vmax.f32 %v3465, 0.0
        %v3899 = vmax.f32 %v3468, 0.0
        %v3900 = vmax.f32 %v3470, 0.0
        %v3901 = vmax.f32 %v3473, 0.0
        %v3902 = vmax.f32 %v3475, 0.0
        %v3903 = vmax.f32 %v3478, 0.0
        %v3904 = vmax.f32 %v3480, 0.0
        %v3905 = vmax.f32 %v3483, 0.0
        %v3906 = vmax.f32 %v3485, 0.0
        %v3907 = vmax.f32 %v3488, 0.0
        %v3908 = vmax.f32 %v3490, 0.0
        %v3909 = vmax.f32 %v3493, 0.0
        %v3910 = vmax.f32 %v3495, 0.0
        %v3911 = vmax.f32 %v3498, 0.0
        %v3912 = vmax.f32 %v3500, 0.0
        %v3913 = vmax.f32 %v3503, 0.0
        %v3914 = vmax.f32 %v3505, 0.0
        %v3915 = vmax.f32 %v3508, 0.0
        %v3916 = vmax.f32 %v3510, 0.0
        %v3917 = vmax.f32 %v3513, 0.0
        %v3918 = vmax.f32 %v3515, 0.0
        %v3919 = vmax.f32 %v3518, 0.0
        %v3920 = vmax.f32 %v3520, 0.0
        %v3921 = vmax.f32 %v3523, 0.0
        %v3922 = vmax.f32 %v3525, 0.0
        %v3923 = vmax.f32 %v3528, 0.0
        %v3924 = vmax.f32 %v3530, 0.0
        %v3925 = vmax.f32 %v3533, 0.0
        %v3926 = vmax.f32 %v3535, 0.0
        %v3927 = vmax.f32 %v3538, 0.0
        %v3928 = vmax.f32 %v3540, 0.0
        %v3929 = vmax.f32 %v3543, 0.0
        %v3930 = vmax.f32 %v3545, 0.0
        %v3931 = vmax.f32 %v3548, 0.0
        %v3932 = vmax.f32 %v3550, 0.0
        %v3933 = vmax.f32 %v3553, 0.0
        %v3934 = vmax.f32 %v3555, 0.0
        %v3935 = vmax.f32 %v3558, 0.0
        %v3936 = vmax.f32 %v3560, 0.0
        %v3937 = vmax.f32 %v3563, 0.0
        %v3938 = vmax.f32 %v3565, 0.0
        %v3939 = vmax.f32 %v3568, 0.0
        %v3940 = vmax.f32 %v3570, 0.0
        %v3941 = vmax.f32 %v3573, 0.0
        %v3942 = vmax.f32 %v3575, 0.0
        %v3943 = vmax.f32 %v3578, 0.0
        %v3944 = vmax.f32 %v3580, 0.0
        %v3945 = vmax.f32 %v3583, 0.0
        %v3946 = vmax.f32 %v3585, 0.0
        %v3947 = vmax.f32 %v3588, 0.0
        %v3948 = vmax.f32 %v3590, 0.0
        %v3949 = vmax.f32 %v3593, 0.0
        %v3950 = vmax.f32 %v3595, 0.0
        %v3951 = vmax.f32 %v3598, 0.0
        %v3952 = vmax.f32 %v3600, 0.0
        %v3953 = vmax.f32 %v3603, 0.0
        %v3954 = vmax.f32 %v3605, 0.0
        %v3955 = vmax.f32 %v3608, 0.0
        %v3956 = vmax.f32 %v3610, 0.0
        %v3957 = vmax.f32 %v3613, 0.0
        %v3958 = vmax.f32 %v3615, 0.0
        %v3959 = vmax.f32 %v3618, 0.0
        %v3960 = vmax.f32 %v3620, 0.0
        %v3961 = vmax.f32 %v3623, 0.0
        %v3962 = vmax.f32 %v3625, 0.0
        %v3963 = vmax.f32 %v3628, 0.0
        %v3964 = vmax.f32 %v3630, 0.0
        %v3965 = vmax.f32 %v3633, 0.0
        %v3966 = vmax.f32 %v3635, 0.0
        %v3967 = vmax.f32 %v3638, 0.0
        %v3968 = vmax.f32 %v3640, 0.0
        %v3969 = vmax.f32 %v3643, 0.0
        %v3970 = vmax.f32 %v3645, 0.0
        %v3971 = vmax.f32 %v3648, 0.0
        %v3972 = vmax.f32 %v3650, 0.0
        %v3973 = vmax.f32 %v3653, 0.0
        %v3974 = vmax.f32 %v3655, 0.0
        %v3975 = vmax.f32 %v3658, 0.0
        %v3976 = vmax.f32 %v3660, 0.0
        %v3977 = vmax.f32 %v3663, 0.0
        %v3978 = vmax.f32 %v3665, 0.0
        %v3979 = vmax.f32 %v3668, 0.0
        %v3980 = vmax.f32 %v3670, 0.0
        %v3981 = vmax.f32 %v3673, 0.0
        %v3982 = vmax.f32 %v3675, 0.0
        %v3983 = vmax.f32 %v3678, 0.0
        %v3984 = vmax.f32 %v3680, 0.0
        %v3985 = vmax.f32 %v3683, 0.0
        %v3986 = vmax.f32 %v3685, 0.0
        %v3987 = vmax.f32 %v3688, 0.0
        %v3988 = vmax.f32 %v3690, 0.0
        %v3989 = vmax.f32 %v3693, 0.0
        %v3990 = vmax.f32 %v3695, 0.0
        %v3991 = vmax.f32 %v3698, 0.0
        %v3992 = vmax.f32 %v3700, 0.0
        %v3993 = vmax.f32 %v3703, 0.0
        %v3994 = vmax.f32 %v3705, 0.0
        %v3995 = vmax.f32 %v3708, 0.0
        %v3996 = vmax.f32 %v3710, 0.0
        %v3997 = vmax.f32 %v3713, 0.0
        %v3998 = vmax.f32 %v3715, 0.0
        %v3999 = vmax.f32 %v3718, 0.0
        %v4000 = vmax.f32 %v3720, 0.0
        %v4001 = vmax.f32 %v3723, 0.0
        %v4002 = vmax.f32 %v3725, 0.0
        %v4003 = vmax.f32 %v3728, 0.0
        %v4004 = vmax.f32 %v3730, 0.0
        %v4005 = vmax.f32 %v3733, 0.0
        %v4006 = vmax.f32 %v3735, 0.0
        %v4007 = vmax.f32 %v3738, 0.0
        %v4008 = vmax.f32 %v3740, 0.0
        %v4009 = vmax.f32 %v3743, 0.0
        %v4010 = vmax.f32 %v3745, 0.0
        %v4011 = vmax.f32 %v3748, 0.0
        %v4012 = vmax.f32 %v3750, 0.0
        %v4013 = vmax.f32 %v3753, 0.0
        %v4014 = vmax.f32 %v3755, 0.0
        %v4015 = vmax.f32 %v3758, 0.0
        %v4016 = vmax.f32 %v3760, 0.0
        %v4017 = vmax.f32 %v3763, 0.0
        %v4018 = vmax.f32 %v3765, 0.0
        %v4019 = vmax.f32 %v3768, 0.0
        %v4020 = vmax.f32 %v3770, 0.0
        %v4021 = vmax.f32 %v3773, 0.0
        %v4022 = vmax.f32 %v3775, 0.0
        %v4023 = vmax.f32 %v3778, 0.0
        %v4024 = vmax.f32 %v3780, 0.0
        %v4025 = vmax.f32 %v3783, 0.0
        %v4026 = vmax.f32 %v3785, 0.0
        %v4027 = vld [vmem:[#allocation2] sm:$0xff]
        %v4028 = vld [vmem:[#allocation2 + $0x8] sm:$0xff]
        %v4029 = vld [vmem:[#allocation2 + $0x10] sm:$0xff]
        %v4030 = vld [vmem:[#allocation2 + $0x18] sm:$0xff]
        %v4031 = vld [vmem:[#allocation2 + $0x20] sm:$0xff]
        %v4032 = vld [vmem:[#allocation2 + $0x28] sm:$0xff]
        %v4033 = vld [vmem:[#allocation2 + $0x30] sm:$0xff]
        %v4034 = vld [vmem:[#allocation2 + $0x38] sm:$0xff]
        %v4035 = vld [vmem:[#allocation2 + $0x40] sm:$0xff]
        %v4036 = vld [vmem:[#allocation2 + $0x48] sm:$0xff]
        %v4037 = vld [vmem:[#allocation2 + $0x50] sm:$0xff]
        %v4038 = vld [vmem:[#allocation2 + $0x58] sm:$0xff]
        %v4039 = vld [vmem:[#allocation2 + $0x60] sm:$0xff]
        %v4040 = vld [vmem:[#allocation2 + $0x68] sm:$0xff]
        %v4041 = vld [vmem:[#allocation2 + $0x70] sm:$0xff]
        %v4042 = vld [vmem:[#allocation2 + $0x78] sm:$0xff]
        %v4043 = vld [vmem:[#allocation2 + $0x80] sm:$0xff]
        %v4044 = vld [vmem:[#allocation2 + $0x88] sm:$0xff]
        %v4045 = vld [vmem:[#allocation2 + $0x90] sm:$0xff]
        %v4046 = vld [vmem:[#allocation2 + $0x98] sm:$0xff]
        %v4047 = vld [vmem:[#allocation2 + $0xa0] sm:$0xff]
        %v4048 = vld [vmem:[#allocation2 + $0xa8] sm:$0xff]
        %v4049 = vld [vmem:[#allocation2 + $0xb0] sm:$0xff]
        %v4050 = vld [vmem:[#allocation2 + $0xb8] sm:$0xff]
        %v4051 = vld [vmem:[#allocation2 + $0xc0] sm:$0xff]
        %v4052 = vld [vmem:[#allocation2 + $0xc8] sm:$0xff]
        %v4053 = vld [vmem:[#allocation2 + $0xd0] sm:$0xff]
        %v4054 = vld [vmem:[#allocation2 + $0xd8] sm:$0xff]
        %v4055 = vld [vmem:[#allocation2 + $0xe0] sm:$0xff]
        %v4056 = vld [vmem:[#allocation2 + $0xe8] sm:$0xff]
        %v4057 = vld [vmem:[#allocation2 + $0xf0] sm:$0xff]
        %v4058 = vld [vmem:[#allocation2 + $0xf8] sm:$0xff]
        %v4059 = vld [vmem:[#allocation2 + $0x100] sm:$0xff]
        %v4060 = vld [vmem:[#allocation2 + $0x108] sm:$0xff]
        %v4061 = vld [vmem:[#allocation2 + $0x110] sm:$0xff]
        %v4062 = vld [vmem:[#allocation2 + $0x118] sm:$0xff]
        %v4063 = vld [vmem:[#allocation2 + $0x120] sm:$0xff]
        %v4064 = vld [vmem:[#allocation2 + $0x128] sm:$0xff]
        %v4065 = vld [vmem:[#allocation2 + $0x130] sm:$0xff]
        %v4066 = vld [vmem:[#allocation2 + $0x138] sm:$0xff]
        %v4067 = vld [vmem:[#allocation2 + $0x140] sm:$0xff]
        %v4068 = vld [vmem:[#allocation2 + $0x148] sm:$0xff]
        %v4069 = vld [vmem:[#allocation2 + $0x150] sm:$0xff]
        %v4070 = vld [vmem:[#allocation2 + $0x158] sm:$0xff]
        %v4071 = vld [vmem:[#allocation2 + $0x160] sm:$0xff]
        %v4072 = vld [vmem:[#allocation2 + $0x168] sm:$0xff]
        %v4073 = vld [vmem:[#allocation2 + $0x170] sm:$0xff]
        %v4074 = vld [vmem:[#allocation2 + $0x178] sm:$0xff]
        %v4075 = vld [vmem:[#allocation2 + $0x180] sm:$0xff]
        %v4076 = vld [vmem:[#allocation2 + $0x188] sm:$0xff]
        %v4077 = vld [vmem:[#allocation2 + $0x190] sm:$0xff]
        %v4078 = vld [vmem:[#allocation2 + $0x198] sm:$0xff]
        %v4079 = vld [vmem:[#allocation2 + $0x1a0] sm:$0xff]
        %v4080 = vld [vmem:[#allocation2 + $0x1a8] sm:$0xff]
        %v4081 = vld [vmem:[#allocation2 + $0x1b0] sm:$0xff]
        %v4082 = vld [vmem:[#allocation2 + $0x1b8] sm:$0xff]
        %v4083 = vld [vmem:[#allocation2 + $0x1c0] sm:$0xff]
        %v4084 = vld [vmem:[#allocation2 + $0x1c8] sm:$0xff]
        %v4085 = vld [vmem:[#allocation2 + $0x1d0] sm:$0xff]
        %v4086 = vld [vmem:[#allocation2 + $0x1d8] sm:$0xff]
        %v4087 = vld [vmem:[#allocation2 + $0x1e0] sm:$0xff]
        %v4088 = vld [vmem:[#allocation2 + $0x1e8] sm:$0xff]
        %v4089 = vld [vmem:[#allocation2 + $0x1f0] sm:$0xff]
        %v4090 = vld [vmem:[#allocation2 + $0x1f8] sm:$0xff]
        %v4091 = vld [vmem:[#allocation2 + $0x200] sm:$0xff]
        %v4092 = vld [vmem:[#allocation2 + $0x208] sm:$0xff]
        %v4093 = vld [vmem:[#allocation2 + $0x210] sm:$0xff]
        %v4094 = vld [vmem:[#allocation2 + $0x218] sm:$0xff]
        %v4095 = vld [vmem:[#allocation2 + $0x220] sm:$0xff]
        %v4096 = vld [vmem:[#allocation2 + $0x228] sm:$0xff]
        %v4097 = vld [vmem:[#allocation2 + $0x230] sm:$0xff]
        %v4098 = vld [vmem:[#allocation2 + $0x238] sm:$0xff]
        %v4099 = vld [vmem:[#allocation2 + $0x240] sm:$0xff]
        %v4100 = vld [vmem:[#allocation2 + $0x248] sm:$0xff]
        %v4101 = vld [vmem:[#allocation2 + $0x250] sm:$0xff]
        %v4102 = vld [vmem:[#allocation2 + $0x258] sm:$0xff]
        %v4103 = vld [vmem:[#allocation2 + $0x260] sm:$0xff]
        %v4104 = vld [vmem:[#allocation2 + $0x268] sm:$0xff]
        %v4105 = vld [vmem:[#allocation2 + $0x270] sm:$0xff]
        %v4106 = vld [vmem:[#allocation2 + $0x278] sm:$0xff]
        %v4107 = vld [vmem:[#allocation2 + $0x280] sm:$0xff]
        %v4108 = vld [vmem:[#allocation2 + $0x288] sm:$0xff]
        %v4109 = vld [vmem:[#allocation2 + $0x290] sm:$0xff]
        %v4110 = vld [vmem:[#allocation2 + $0x298] sm:$0xff]
        %v4111 = vld [vmem:[#allocation2 + $0x2a0] sm:$0xff]
        %v4112 = vld [vmem:[#allocation2 + $0x2a8] sm:$0xff]
        %v4113 = vld [vmem:[#allocation2 + $0x2b0] sm:$0xff]
        %v4114 = vld [vmem:[#allocation2 + $0x2b8] sm:$0xff]
        %v4115 = vld [vmem:[#allocation2 + $0x2c0] sm:$0xff]
        %v4116 = vld [vmem:[#allocation2 + $0x2c8] sm:$0xff]
        %v4117 = vld [vmem:[#allocation2 + $0x2d0] sm:$0xff]
        %v4118 = vld [vmem:[#allocation2 + $0x2d8] sm:$0xff]
        %v4119 = vld [vmem:[#allocation2 + $0x2e0] sm:$0xff]
        %v4120 = vld [vmem:[#allocation2 + $0x2e8] sm:$0xff]
        %v4121 = vld [vmem:[#allocation2 + $0x2f0] sm:$0xff]
        %v4122 = vld [vmem:[#allocation2 + $0x2f8] sm:$0xff]
        %v4123 = vld [vmem:[#allocation2 + $0x300] sm:$0xff]
        %v4124 = vld [vmem:[#allocation2 + $0x308] sm:$0xff]
        %v4125 = vld [vmem:[#allocation2 + $0x310] sm:$0xff]
        %v4126 = vld [vmem:[#allocation2 + $0x318] sm:$0xff]
        %v4127 = vld [vmem:[#allocation2 + $0x320] sm:$0xff]
        %v4128 = vld [vmem:[#allocation2 + $0x328] sm:$0xff]
        %v4129 = vld [vmem:[#allocation2 + $0x330] sm:$0xff]
        %v4130 = vld [vmem:[#allocation2 + $0x338] sm:$0xff]
        %v4131 = vld [vmem:[#allocation2 + $0x340] sm:$0xff]
        %v4132 = vld [vmem:[#allocation2 + $0x348] sm:$0xff]
        %v4133 = vld [vmem:[#allocation2 + $0x350] sm:$0xff]
        %v4134 = vld [vmem:[#allocation2 + $0x358] sm:$0xff]
        %v4135 = vld [vmem:[#allocation2 + $0x360] sm:$0xff]
        %v4136 = vld [vmem:[#allocation2 + $0x368] sm:$0xff]
        %v4137 = vld [vmem:[#allocation2 + $0x370] sm:$0xff]
        %v4138 = vld [vmem:[#allocation2 + $0x378] sm:$0xff]
        %v4139 = vld [vmem:[#allocation2 + $0x380] sm:$0xff]
        %v4140 = vld [vmem:[#allocation2 + $0x388] sm:$0xff]
        %v4141 = vld [vmem:[#allocation2 + $0x390] sm:$0xff]
        %v4142 = vld [vmem:[#allocation2 + $0x398] sm:$0xff]
        %v4143 = vld [vmem:[#allocation2 + $0x3a0] sm:$0xff]
        %v4144 = vld [vmem:[#allocation2 + $0x3a8] sm:$0xff]
        %v4145 = vld [vmem:[#allocation2 + $0x3b0] sm:$0xff]
        %v4146 = vld [vmem:[#allocation2 + $0x3b8] sm:$0xff]
        %v4147 = vld [vmem:[#allocation2 + $0x3c0] sm:$0xff]
        %v4148 = vld [vmem:[#allocation2 + $0x3c8] sm:$0xff]
        %v4149 = vld [vmem:[#allocation2 + $0x3d0] sm:$0xff]
        %v4150 = vld [vmem:[#allocation2 + $0x3d8] sm:$0xff]
        %v4151 = vld [vmem:[#allocation2 + $0x3e0] sm:$0xff]
        %v4152 = vld [vmem:[#allocation2 + $0x3e8] sm:$0xff]
        %v4153 = vld [vmem:[#allocation2 + $0x3f0] sm:$0xff]
        %v4154 = vld [vmem:[#allocation2 + $0x3f8] sm:$0xff]
        %v4155 = vld [vmem:[#allocation2 + $0x400] sm:$0xff]
        %v4156 = vld [vmem:[#allocation2 + $0x408] sm:$0xff]
        %v4157 = vld [vmem:[#allocation2 + $0x410] sm:$0xff]
        %v4158 = vld [vmem:[#allocation2 + $0x418] sm:$0xff]
        %v4159 = vld [vmem:[#allocation2 + $0x420] sm:$0xff]
        %v4160 = vld [vmem:[#allocation2 + $0x428] sm:$0xff]
        %v4161 = vld [vmem:[#allocation2 + $0x430] sm:$0xff]
        %v4162 = vld [vmem:[#allocation2 + $0x438] sm:$0xff]
        %v4163 = vld [vmem:[#allocation2 + $0x440] sm:$0xff]
        %v4164 = vld [vmem:[#allocation2 + $0x448] sm:$0xff]
        %v4165 = vld [vmem:[#allocation2 + $0x450] sm:$0xff]
        %v4166 = vld [vmem:[#allocation2 + $0x458] sm:$0xff]
        %v4167 = vld [vmem:[#allocation2 + $0x460] sm:$0xff]
        %v4168 = vld [vmem:[#allocation2 + $0x468] sm:$0xff]
        %v4169 = vld [vmem:[#allocation2 + $0x470] sm:$0xff]
        %v4170 = vld [vmem:[#allocation2 + $0x478] sm:$0xff]
        %v4171 = vld [vmem:[#allocation2 + $0x480] sm:$0xff]
        %v4172 = vld [vmem:[#allocation2 + $0x488] sm:$0xff]
        %v4173 = vld [vmem:[#allocation2 + $0x490] sm:$0xff]
        %v4174 = vld [vmem:[#allocation2 + $0x498] sm:$0xff]
        %v4175 = vld [vmem:[#allocation2 + $0x4a0] sm:$0xff]
        %v4176 = vld [vmem:[#allocation2 + $0x4a8] sm:$0xff]
        %v4177 = vld [vmem:[#allocation2 + $0x4b0] sm:$0xff]
        %v4178 = vld [vmem:[#allocation2 + $0x4b8] sm:$0xff]
        %v4179 = vld [vmem:[#allocation2 + $0x4c0] sm:$0xff]
        %v4180 = vld [vmem:[#allocation2 + $0x4c8] sm:$0xff]
        %v4181 = vld [vmem:[#allocation2 + $0x4d0] sm:$0xff]
        %v4182 = vld [vmem:[#allocation2 + $0x4d8] sm:$0xff]
        %v4183 = vld [vmem:[#allocation2 + $0x4e0] sm:$0xff]
        %v4184 = vld [vmem:[#allocation2 + $0x4e8] sm:$0xff]
        %v4185 = vld [vmem:[#allocation2 + $0x4f0] sm:$0xff]
        %v4186 = vld [vmem:[#allocation2 + $0x4f8] sm:$0xff]
        %v4187 = vld [vmem:[#allocation2 + $0x500] sm:$0xff]
        %v4188 = vld [vmem:[#allocation2 + $0x508] sm:$0xff]
        %v4189 = vld [vmem:[#allocation2 + $0x510] sm:$0xff]
        %v4190 = vld [vmem:[#allocation2 + $0x518] sm:$0xff]
        %v4191 = vld [vmem:[#allocation2 + $0x520] sm:$0xff]
        %v4192 = vld [vmem:[#allocation2 + $0x528] sm:$0xff]
        %v4193 = vld [vmem:[#allocation2 + $0x530] sm:$0xff]
        %v4194 = vld [vmem:[#allocation2 + $0x538] sm:$0xff]
        %v4195 = vld [vmem:[#allocation2 + $0x540] sm:$0xff]
        %v4196 = vld [vmem:[#allocation2 + $0x548] sm:$0xff]
        %v4197 = vld [vmem:[#allocation2 + $0x550] sm:$0xff]
        %v4198 = vld [vmem:[#allocation2 + $0x558] sm:$0xff]
        %v4199 = vld [vmem:[#allocation2 + $0x560] sm:$0xff]
        %v4200 = vld [vmem:[#allocation2 + $0x568] sm:$0xff]
        %v4201 = vld [vmem:[#allocation2 + $0x570] sm:$0xff]
        %v4202 = vld [vmem:[#allocation2 + $0x578] sm:$0xff]
        %v4203 = vld [vmem:[#allocation2 + $0x580] sm:$0xff]
        %v4204 = vld [vmem:[#allocation2 + $0x588] sm:$0xff]
        %v4205 = vld [vmem:[#allocation2 + $0x590] sm:$0xff]
        %v4206 = vld [vmem:[#allocation2 + $0x598] sm:$0xff]
        %v4207 = vld [vmem:[#allocation2 + $0x5a0] sm:$0xff]
        %v4208 = vld [vmem:[#allocation2 + $0x5a8] sm:$0xff]
        %v4209 = vld [vmem:[#allocation2 + $0x5b0] sm:$0xff]
        %v4210 = vld [vmem:[#allocation2 + $0x5b8] sm:$0xff]
        %v4211 = vld [vmem:[#allocation2 + $0x5c0] sm:$0xff]
        %v4212 = vld [vmem:[#allocation2 + $0x5c8] sm:$0xff]
        %v4213 = vld [vmem:[#allocation2 + $0x5d0] sm:$0xff]
        %v4214 = vld [vmem:[#allocation2 + $0x5d8] sm:$0xff]
        %v4215 = vld [vmem:[#allocation2 + $0x5e0] sm:$0xff]
        %v4216 = vld [vmem:[#allocation2 + $0x5e8] sm:$0xff]
        %v4217 = vld [vmem:[#allocation2 + $0x5f0] sm:$0xff]
        %v4218 = vld [vmem:[#allocation2 + $0x5f8] sm:$0xff]
        %v4219 = vld [vmem:[#allocation2 + $0x600] sm:$0xff]
        %v4220 = vld [vmem:[#allocation2 + $0x608] sm:$0xff]
        %v4221 = vld [vmem:[#allocation2 + $0x610] sm:$0xff]
        %v4222 = vld [vmem:[#allocation2 + $0x618] sm:$0xff]
        %v4223 = vld [vmem:[#allocation2 + $0x620] sm:$0xff]
        %v4224 = vld [vmem:[#allocation2 + $0x628] sm:$0xff]
        %v4225 = vld [vmem:[#allocation2 + $0x630] sm:$0xff]
        %v4226 = vld [vmem:[#allocation2 + $0x638] sm:$0xff]
        %v4227 = vld [vmem:[#allocation2 + $0x640] sm:$0xff]
        %v4228 = vld [vmem:[#allocation2 + $0x648] sm:$0xff]
        %v4229 = vld [vmem:[#allocation2 + $0x650] sm:$0xff]
        %v4230 = vld [vmem:[#allocation2 + $0x658] sm:$0xff]
        %v4231 = vld [vmem:[#allocation2 + $0x660] sm:$0xff]
        %v4232 = vld [vmem:[#allocation2 + $0x668] sm:$0xff]
        %v4233 = vld [vmem:[#allocation2 + $0x670] sm:$0xff]
        %v4234 = vld [vmem:[#allocation2 + $0x678] sm:$0xff]
        %v4235 = vld [vmem:[#allocation2 + $0x680] sm:$0xff]
        %v4236 = vld [vmem:[#allocation2 + $0x688] sm:$0xff]
        %v4237 = vld [vmem:[#allocation2 + $0x690] sm:$0xff]
        %v4238 = vld [vmem:[#allocation2 + $0x698] sm:$0xff]
        %v4239 = vld [vmem:[#allocation2 + $0x6a0] sm:$0xff]
        %v4240 = vld [vmem:[#allocation2 + $0x6a8] sm:$0xff]
        %v4241 = vld [vmem:[#allocation2 + $0x6b0] sm:$0xff]
        %v4242 = vld [vmem:[#allocation2 + $0x6b8] sm:$0xff]
        %v4243 = vld [vmem:[#allocation2 + $0x6c0] sm:$0xff]
        %v4244 = vld [vmem:[#allocation2 + $0x6c8] sm:$0xff]
        %v4245 = vld [vmem:[#allocation2 + $0x6d0] sm:$0xff]
        %v4246 = vld [vmem:[#allocation2 + $0x6d8] sm:$0xff]
        %v4247 = vld [vmem:[#allocation2 + $0x6e0] sm:$0xff]
        %v4248 = vld [vmem:[#allocation2 + $0x6e8] sm:$0xff]
        %v4249 = vld [vmem:[#allocation2 + $0x6f0] sm:$0xff]
        %v4250 = vld [vmem:[#allocation2 + $0x6f8] sm:$0xff]
        %v4251 = vld [vmem:[#allocation2 + $0x700] sm:$0xff]
        %v4252 = vld [vmem:[#allocation2 + $0x708] sm:$0xff]
        %v4253 = vld [vmem:[#allocation2 + $0x710] sm:$0xff]
        %v4254 = vld [vmem:[#allocation2 + $0x718] sm:$0xff]
        %v4255 = vld [vmem:[#allocation2 + $0x720] sm:$0xff]
        %v4256 = vld [vmem:[#allocation2 + $0x728] sm:$0xff]
        %v4257 = vld [vmem:[#allocation2 + $0x730] sm:$0xff]
        %v4258 = vld [vmem:[#allocation2 + $0x738] sm:$0xff]
        %v4259 = vld [vmem:[#allocation2 + $0x740] sm:$0xff]
        %v4260 = vld [vmem:[#allocation2 + $0x748] sm:$0xff]
        %v4261 = vld [vmem:[#allocation2 + $0x750] sm:$0xff]
        %v4262 = vld [vmem:[#allocation2 + $0x758] sm:$0xff]
        %v4263 = vld [vmem:[#allocation2 + $0x760] sm:$0xff]
        %v4264 = vld [vmem:[#allocation2 + $0x768] sm:$0xff]
        %v4265 = vld [vmem:[#allocation2 + $0x770] sm:$0xff]
        %v4266 = vld [vmem:[#allocation2 + $0x778] sm:$0xff]
        %vm4267 = vcmask 130048
        %v4268 = vsel %vm4267, %v3787, 0.0
        %4269 = vadd.xlane.f32.xlu0 %v4268
        %v4270 = vpop.xlane.xlu0 %4269
        %v4271 = vsel %vm4267, %v3788, 0.0
        %4272 = vadd.xlane.f32.xlu0 %v4271
        %v4273 = vpop.xlane.xlu0 %4272
        %v4274 = vsel %vm4267, %v3789, 0.0
        %4275 = vadd.xlane.f32.xlu0 %v4274
        %v4276 = vpop.xlane.xlu0 %4275
        %v4277 = vsel %vm4267, %v3790, 0.0
        %4278 = vadd.xlane.f32.xlu0 %v4277
        %v4279 = vpop.xlane.xlu0 %4278
        %v4280 = vsel %vm4267, %v3791, 0.0
        %4281 = vadd.xlane.f32.xlu0 %v4280
        %v4282 = vpop.xlane.xlu0 %4281
        %v4283 = vsel %vm4267, %v3792, 0.0
        %4284 = vadd.xlane.f32.xlu0 %v4283
        %v4285 = vpop.xlane.xlu0 %4284
        %v4286 = vsel %vm4267, %v3793, 0.0
        %4287 = vadd.xlane.f32.xlu0 %v4286
        %v4288 = vpop.xlane.xlu0 %4287
        %v4289 = vsel %vm4267, %v3794, 0.0
        %4290 = vadd.xlane.f32.xlu0 %v4289
        %v4291 = vpop.xlane.xlu0 %4290
        %v4292 = vsel %vm4267, %v3795, 0.0
        %4293 = vadd.xlane.f32.xlu0 %v4292
        %v4294 = vpop.xlane.xlu0 %4293
        %v4295 = vsel %vm4267, %v3796, 0.0
        %4296 = vadd.xlane.f32.xlu0 %v4295
        %v4297 = vpop.xlane.xlu0 %4296
        %v4298 = vsel %vm4267, %v3797, 0.0
        %4299 = vadd.xlane.f32.xlu0 %v4298
        %v4300 = vpop.xlane.xlu0 %4299
        %v4301 = vsel %vm4267, %v3798, 0.0
        %4302 = vadd.xlane.f32.xlu0 %v4301
        %v4303 = vpop.xlane.xlu0 %4302
        %v4304 = vsel %vm4267, %v3799, 0.0
        %4305 = vadd.xlane.f32.xlu0 %v4304
        %v4306 = vpop.xlane.xlu0 %4305
        %v4307 = vsel %vm4267, %v3800, 0.0
        %4308 = vadd.xlane.f32.xlu0 %v4307
        %v4309 = vpop.xlane.xlu0 %4308
        %v4310 = vsel %vm4267, %v3801, 0.0
        %4311 = vadd.xlane.f32.xlu0 %v4310
        %v4312 = vpop.xlane.xlu0 %4311
        %v4313 = vsel %vm4267, %v3802, 0.0
        %4314 = vadd.xlane.f32.xlu0 %v4313
        %v4315 = vpop.xlane.xlu0 %4314
        %v4316 = vsel %vm4267, %v3803, 0.0
        %4317 = vadd.xlane.f32.xlu0 %v4316
        %v4318 = vpop.xlane.xlu0 %4317
        %v4319 = vsel %vm4267, %v3804, 0.0
        %4320 = vadd.xlane.f32.xlu0 %v4319
        %v4321 = vpop.xlane.xlu0 %4320
        %v4322 = vsel %vm4267, %v3805, 0.0
        %4323 = vadd.xlane.f32.xlu0 %v4322
        %v4324 = vpop.xlane.xlu0 %4323
        %v4325 = vsel %vm4267, %v3806, 0.0
        %4326 = vadd.xlane.f32.xlu0 %v4325
        %v4327 = vpop.xlane.xlu0 %4326
        %v4328 = vsel %vm4267, %v3807, 0.0
        %4329 = vadd.xlane.f32.xlu0 %v4328
        %v4330 = vpop.xlane.xlu0 %4329
        %v4331 = vsel %vm4267, %v3808, 0.0
        %4332 = vadd.xlane.f32.xlu0 %v4331
        %v4333 = vpop.xlane.xlu0 %4332
        %v4334 = vsel %vm4267, %v3809, 0.0
        %4335 = vadd.xlane.f32.xlu0 %v4334
        %v4336 = vpop.xlane.xlu0 %4335
        %v4337 = vsel %vm4267, %v3810, 0.0
        %4338 = vadd.xlane.f32.xlu0 %v4337
        %v4339 = vpop.xlane.xlu0 %4338
        %v4340 = vsel %vm4267, %v3811, 0.0
        %4341 = vadd.xlane.f32.xlu0 %v4340
        %v4342 = vpop.xlane.xlu0 %4341
        %v4343 = vsel %vm4267, %v3812, 0.0
        %4344 = vadd.xlane.f32.xlu0 %v4343
        %v4345 = vpop.xlane.xlu0 %4344
        %v4346 = vsel %vm4267, %v3813, 0.0
        %4347 = vadd.xlane.f32.xlu0 %v4346
        %v4348 = vpop.xlane.xlu0 %4347
        %v4349 = vsel %vm4267, %v3814, 0.0
        %4350 = vadd.xlane.f32.xlu0 %v4349
        %v4351 = vpop.xlane.xlu0 %4350
        %v4352 = vsel %vm4267, %v3815, 0.0
        %4353 = vadd.xlane.f32.xlu0 %v4352
        %v4354 = vpop.xlane.xlu0 %4353
        %v4355 = vsel %vm4267, %v3816, 0.0
        %4356 = vadd.xlane.f32.xlu0 %v4355
        %v4357 = vpop.xlane.xlu0 %4356
        %v4358 = vsel %vm4267, %v3817, 0.0
        %4359 = vadd.xlane.f32.xlu0 %v4358
        %v4360 = vpop.xlane.xlu0 %4359
        %v4361 = vsel %vm4267, %v3818, 0.0
        %4362 = vadd.xlane.f32.xlu0 %v4361
        %v4363 = vpop.xlane.xlu0 %4362
        %v4364 = vsel %vm4267, %v3819, 0.0
        %4365 = vadd.xlane.f32.xlu0 %v4364
        %v4366 = vpop.xlane.xlu0 %4365
        %v4367 = vsel %vm4267, %v3820, 0.0
        %4368 = vadd.xlane.f32.xlu0 %v4367
        %v4369 = vpop.xlane.xlu0 %4368
        %v4370 = vsel %vm4267, %v3821, 0.0
        %4371 = vadd.xlane.f32.xlu0 %v4370
        %v4372 = vpop.xlane.xlu0 %4371
        %v4373 = vsel %vm4267, %v3822, 0.0
        %4374 = vadd.xlane.f32.xlu0 %v4373
        %v4375 = vpop.xlane.xlu0 %4374
        %v4376 = vsel %vm4267, %v3823, 0.0
        %4377 = vadd.xlane.f32.xlu0 %v4376
        %v4378 = vpop.xlane.xlu0 %4377
        %v4379 = vsel %vm4267, %v3824, 0.0
        %4380 = vadd.xlane.f32.xlu0 %v4379
        %v4381 = vpop.xlane.xlu0 %4380
        %v4382 = vsel %vm4267, %v3825, 0.0
        %4383 = vadd.xlane.f32.xlu0 %v4382
        %v4384 = vpop.xlane.xlu0 %4383
        %v4385 = vsel %vm4267, %v3826, 0.0
        %4386 = vadd.xlane.f32.xlu0 %v4385
        %v4387 = vpop.xlane.xlu0 %4386
        %v4388 = vsel %vm4267, %v3827, 0.0
        %4389 = vadd.xlane.f32.xlu0 %v4388
        %v4390 = vpop.xlane.xlu0 %4389
        %v4391 = vsel %vm4267, %v3828, 0.0
        %4392 = vadd.xlane.f32.xlu0 %v4391
        %v4393 = vpop.xlane.xlu0 %4392
        %v4394 = vsel %vm4267, %v3829, 0.0
        %4395 = vadd.xlane.f32.xlu0 %v4394
        %v4396 = vpop.xlane.xlu0 %4395
        %v4397 = vsel %vm4267, %v3830, 0.0
        %4398 = vadd.xlane.f32.xlu0 %v4397
        %v4399 = vpop.xlane.xlu0 %4398
        %v4400 = vsel %vm4267, %v3831, 0.0
        %4401 = vadd.xlane.f32.xlu0 %v4400
        %v4402 = vpop.xlane.xlu0 %4401
        %v4403 = vsel %vm4267, %v3832, 0.0
        %4404 = vadd.xlane.f32.xlu0 %v4403
        %v4405 = vpop.xlane.xlu0 %4404
        %v4406 = vsel %vm4267, %v3833, 0.0
        %4407 = vadd.xlane.f32.xlu0 %v4406
        %v4408 = vpop.xlane.xlu0 %4407
        %v4409 = vsel %vm4267, %v3834, 0.0
        %4410 = vadd.xlane.f32.xlu0 %v4409
        %v4411 = vpop.xlane.xlu0 %4410
        %v4412 = vsel %vm4267, %v3835, 0.0
        %4413 = vadd.xlane.f32.xlu0 %v4412
        %v4414 = vpop.xlane.xlu0 %4413
        %v4415 = vsel %vm4267, %v3836, 0.0
        %4416 = vadd.xlane.f32.xlu0 %v4415
        %v4417 = vpop.xlane.xlu0 %4416
        %v4418 = vsel %vm4267, %v3837, 0.0
        %4419 = vadd.xlane.f32.xlu0 %v4418
        %v4420 = vpop.xlane.xlu0 %4419
        %v4421 = vsel %vm4267, %v3838, 0.0
        %4422 = vadd.xlane.f32.xlu0 %v4421
        %v4423 = vpop.xlane.xlu0 %4422
        %v4424 = vsel %vm4267, %v3839, 0.0
        %4425 = vadd.xlane.f32.xlu0 %v4424
        %v4426 = vpop.xlane.xlu0 %4425
        %v4427 = vsel %vm4267, %v3840, 0.0
        %4428 = vadd.xlane.f32.xlu0 %v4427
        %v4429 = vpop.xlane.xlu0 %4428
        %v4430 = vsel %vm4267, %v3841, 0.0
        %4431 = vadd.xlane.f32.xlu0 %v4430
        %v4432 = vpop.xlane.xlu0 %4431
        %v4433 = vsel %vm4267, %v3842, 0.0
        %4434 = vadd.xlane.f32.xlu0 %v4433
        %v4435 = vpop.xlane.xlu0 %4434
        %v4436 = vsel %vm4267, %v3843, 0.0
        %4437 = vadd.xlane.f32.xlu0 %v4436
        %v4438 = vpop.xlane.xlu0 %4437
        %v4439 = vsel %vm4267, %v3844, 0.0
        %4440 = vadd.xlane.f32.xlu0 %v4439
        %v4441 = vpop.xlane.xlu0 %4440
        %v4442 = vsel %vm4267, %v3845, 0.0
        %4443 = vadd.xlane.f32.xlu0 %v4442
        %v4444 = vpop.xlane.xlu0 %4443
        %v4445 = vsel %vm4267, %v3846, 0.0
        %4446 = vadd.xlane.f32.xlu0 %v4445
        %v4447 = vpop.xlane.xlu0 %4446
        %v4448 = vsel %vm4267, %v3847, 0.0
        %4449 = vadd.xlane.f32.xlu0 %v4448
        %v4450 = vpop.xlane.xlu0 %4449
        %v4451 = vsel %vm4267, %v3848, 0.0
        %4452 = vadd.xlane.f32.xlu0 %v4451
        %v4453 = vpop.xlane.xlu0 %4452
        %v4454 = vsel %vm4267, %v3849, 0.0
        %4455 = vadd.xlane.f32.xlu0 %v4454
        %v4456 = vpop.xlane.xlu0 %4455
        %v4457 = vsel %vm4267, %v3850, 0.0
        %4458 = vadd.xlane.f32.xlu0 %v4457
        %v4459 = vpop.xlane.xlu0 %4458
        %v4460 = vsel %vm4267, %v3851, 0.0
        %4461 = vadd.xlane.f32.xlu0 %v4460
        %v4462 = vpop.xlane.xlu0 %4461
        %v4463 = vsel %vm4267, %v3852, 0.0
        %4464 = vadd.xlane.f32.xlu0 %v4463
        %v4465 = vpop.xlane.xlu0 %4464
        %v4466 = vsel %vm4267, %v3853, 0.0
        %4467 = vadd.xlane.f32.xlu0 %v4466
        %v4468 = vpop.xlane.xlu0 %4467
        %v4469 = vsel %vm4267, %v3854, 0.0
        %4470 = vadd.xlane.f32.xlu0 %v4469
        %v4471 = vpop.xlane.xlu0 %4470
        %v4472 = vsel %vm4267, %v3855, 0.0
        %4473 = vadd.xlane.f32.xlu0 %v4472
        %v4474 = vpop.xlane.xlu0 %4473
        %v4475 = vsel %vm4267, %v3856, 0.0
        %4476 = vadd.xlane.f32.xlu0 %v4475
        %v4477 = vpop.xlane.xlu0 %4476
        %v4478 = vsel %vm4267, %v3857, 0.0
        %4479 = vadd.xlane.f32.xlu0 %v4478
        %v4480 = vpop.xlane.xlu0 %4479
        %v4481 = vsel %vm4267, %v3858, 0.0
        %4482 = vadd.xlane.f32.xlu0 %v4481
        %v4483 = vpop.xlane.xlu0 %4482
        %v4484 = vsel %vm4267, %v3859, 0.0
        %4485 = vadd.xlane.f32.xlu0 %v4484
        %v4486 = vpop.xlane.xlu0 %4485
        %v4487 = vsel %vm4267, %v3860, 0.0
        %4488 = vadd.xlane.f32.xlu0 %v4487
        %v4489 = vpop.xlane.xlu0 %4488
        %v4490 = vsel %vm4267, %v3861, 0.0
        %4491 = vadd.xlane.f32.xlu0 %v4490
        %v4492 = vpop.xlane.xlu0 %4491
        %v4493 = vsel %vm4267, %v3862, 0.0
        %4494 = vadd.xlane.f32.xlu0 %v4493
        %v4495 = vpop.xlane.xlu0 %4494
        %v4496 = vsel %vm4267, %v3863, 0.0
        %4497 = vadd.xlane.f32.xlu0 %v4496
        %v4498 = vpop.xlane.xlu0 %4497
        %v4499 = vsel %vm4267, %v3864, 0.0
        %4500 = vadd.xlane.f32.xlu0 %v4499
        %v4501 = vpop.xlane.xlu0 %4500
        %v4502 = vsel %vm4267, %v3865, 0.0
        %4503 = vadd.xlane.f32.xlu0 %v4502
        %v4504 = vpop.xlane.xlu0 %4503
        %v4505 = vsel %vm4267, %v3866, 0.0
        %4506 = vadd.xlane.f32.xlu0 %v4505
        %v4507 = vpop.xlane.xlu0 %4506
        %v4508 = vsel %vm4267, %v3867, 0.0
        %4509 = vadd.xlane.f32.xlu0 %v4508
        %v4510 = vpop.xlane.xlu0 %4509
        %v4511 = vsel %vm4267, %v3868, 0.0
        %4512 = vadd.xlane.f32.xlu0 %v4511
        %v4513 = vpop.xlane.xlu0 %4512
        %v4514 = vsel %vm4267, %v3869, 0.0
        %4515 = vadd.xlane.f32.xlu0 %v4514
        %v4516 = vpop.xlane.xlu0 %4515
        %v4517 = vsel %vm4267, %v3870, 0.0
        %4518 = vadd.xlane.f32.xlu0 %v4517
        %v4519 = vpop.xlane.xlu0 %4518
        %v4520 = vsel %vm4267, %v3871, 0.0
        %4521 = vadd.xlane.f32.xlu0 %v4520
        %v4522 = vpop.xlane.xlu0 %4521
        %v4523 = vsel %vm4267, %v3872, 0.0
        %4524 = vadd.xlane.f32.xlu0 %v4523
        %v4525 = vpop.xlane.xlu0 %4524
        %v4526 = vsel %vm4267, %v3873, 0.0
        %4527 = vadd.xlane.f32.xlu0 %v4526
        %v4528 = vpop.xlane.xlu0 %4527
        %v4529 = vsel %vm4267, %v3874, 0.0
        %4530 = vadd.xlane.f32.xlu0 %v4529
        %v4531 = vpop.xlane.xlu0 %4530
        %v4532 = vsel %vm4267, %v3875, 0.0
        %4533 = vadd.xlane.f32.xlu0 %v4532
        %v4534 = vpop.xlane.xlu0 %4533
        %v4535 = vsel %vm4267, %v3876, 0.0
        %4536 = vadd.xlane.f32.xlu0 %v4535
        %v4537 = vpop.xlane.xlu0 %4536
        %v4538 = vsel %vm4267, %v3877, 0.0
        %4539 = vadd.xlane.f32.xlu0 %v4538
        %v4540 = vpop.xlane.xlu0 %4539
        %v4541 = vsel %vm4267, %v3878, 0.0
        %4542 = vadd.xlane.f32.xlu0 %v4541
        %v4543 = vpop.xlane.xlu0 %4542
        %v4544 = vsel %vm4267, %v3879, 0.0
        %4545 = vadd.xlane.f32.xlu0 %v4544
        %v4546 = vpop.xlane.xlu0 %4545
        %v4547 = vsel %vm4267, %v3880, 0.0
        %4548 = vadd.xlane.f32.xlu0 %v4547
        %v4549 = vpop.xlane.xlu0 %4548
        %v4550 = vsel %vm4267, %v3881, 0.0
        %4551 = vadd.xlane.f32.xlu0 %v4550
        %v4552 = vpop.xlane.xlu0 %4551
        %v4553 = vsel %vm4267, %v3882, 0.0
        %4554 = vadd.xlane.f32.xlu0 %v4553
        %v4555 = vpop.xlane.xlu0 %4554
        %v4556 = vsel %vm4267, %v3883, 0.0
        %4557 = vadd.xlane.f32.xlu0 %v4556
        %v4558 = vpop.xlane.xlu0 %4557
        %v4559 = vsel %vm4267, %v3884, 0.0
        %4560 = vadd.xlane.f32.xlu0 %v4559
        %v4561 = vpop.xlane.xlu0 %4560
        %v4562 = vsel %vm4267, %v3885, 0.0
        %4563 = vadd.xlane.f32.xlu0 %v4562
        %v4564 = vpop.xlane.xlu0 %4563
        %v4565 = vsel %vm4267, %v3886, 0.0
        %4566 = vadd.xlane.f32.xlu0 %v4565
        %v4567 = vpop.xlane.xlu0 %4566
        %v4568 = vsel %vm4267, %v3887, 0.0
        %4569 = vadd.xlane.f32.xlu0 %v4568
        %v4570 = vpop.xlane.xlu0 %4569
        %v4571 = vsel %vm4267, %v3888, 0.0
        %4572 = vadd.xlane.f32.xlu0 %v4571
        %v4573 = vpop.xlane.xlu0 %4572
        %v4574 = vsel %vm4267, %v3889, 0.0
        %4575 = vadd.xlane.f32.xlu0 %v4574
        %v4576 = vpop.xlane.xlu0 %4575
        %v4577 = vsel %vm4267, %v3890, 0.0
        %4578 = vadd.xlane.f32.xlu0 %v4577
        %v4579 = vpop.xlane.xlu0 %4578
        %v4580 = vsel %vm4267, %v3891, 0.0
        %4581 = vadd.xlane.f32.xlu0 %v4580
        %v4582 = vpop.xlane.xlu0 %4581
        %v4583 = vsel %vm4267, %v3892, 0.0
        %4584 = vadd.xlane.f32.xlu0 %v4583
        %v4585 = vpop.xlane.xlu0 %4584
        %v4586 = vsel %vm4267, %v3893, 0.0
        %4587 = vadd.xlane.f32.xlu0 %v4586
        %v4588 = vpop.xlane.xlu0 %4587
        %v4589 = vsel %vm4267, %v3894, 0.0
        %4590 = vadd.xlane.f32.xlu0 %v4589
        %v4591 = vpop.xlane.xlu0 %4590
        %v4592 = vsel %vm4267, %v3895, 0.0
        %4593 = vadd.xlane.f32.xlu0 %v4592
        %v4594 = vpop.xlane.xlu0 %4593
        %v4595 = vsel %vm4267, %v3896, 0.0
        %4596 = vadd.xlane.f32.xlu0 %v4595
        %v4597 = vpop.xlane.xlu0 %4596
        %v4598 = vsel %vm4267, %v3897, 0.0
        %4599 = vadd.xlane.f32.xlu0 %v4598
        %v4600 = vpop.xlane.xlu0 %4599
        %v4601 = vsel %vm4267, %v3898, 0.0
        %4602 = vadd.xlane.f32.xlu0 %v4601
        %v4603 = vpop.xlane.xlu0 %4602
        %v4604 = vsel %vm4267, %v3899, 0.0
        %4605 = vadd.xlane.f32.xlu0 %v4604
        %v4606 = vpop.xlane.xlu0 %4605
        %v4607 = vsel %vm4267, %v3900, 0.0
        %4608 = vadd.xlane.f32.xlu0 %v4607
        %v4609 = vpop.xlane.xlu0 %4608
        %v4610 = vsel %vm4267, %v3901, 0.0
        %4611 = vadd.xlane.f32.xlu0 %v4610
        %v4612 = vpop.xlane.xlu0 %4611
        %v4613 = vsel %vm4267, %v3902, 0.0
        %4614 = vadd.xlane.f32.xlu0 %v4613
        %v4615 = vpop.xlane.xlu0 %4614
        %v4616 = vsel %vm4267, %v3903, 0.0
        %4617 = vadd.xlane.f32.xlu0 %v4616
        %v4618 = vpop.xlane.xlu0 %4617
        %v4619 = vsel %vm4267, %v3904, 0.0
        %4620 = vadd.xlane.f32.xlu0 %v4619
        %v4621 = vpop.xlane.xlu0 %4620
        %v4622 = vsel %vm4267, %v3905, 0.0
        %4623 = vadd.xlane.f32.xlu0 %v4622
        %v4624 = vpop.xlane.xlu0 %4623
        %v4625 = vsel %vm4267, %v3906, 0.0
        %4626 = vadd.xlane.f32.xlu0 %v4625
        %v4627 = vpop.xlane.xlu0 %4626
        %v4628 = vsel %vm4267, %v3907, 0.0
        %4629 = vadd.xlane.f32.xlu0 %v4628
        %v4630 = vpop.xlane.xlu0 %4629
        %v4631 = vsel %vm4267, %v3908, 0.0
        %4632 = vadd.xlane.f32.xlu0 %v4631
        %v4633 = vpop.xlane.xlu0 %4632
        %v4634 = vsel %vm4267, %v3909, 0.0
        %4635 = vadd.xlane.f32.xlu0 %v4634
        %v4636 = vpop.xlane.xlu0 %4635
        %v4637 = vsel %vm4267, %v3910, 0.0
        %4638 = vadd.xlane.f32.xlu0 %v4637
        %v4639 = vpop.xlane.xlu0 %4638
        %v4640 = vsel %vm4267, %v3911, 0.0
        %4641 = vadd.xlane.f32.xlu0 %v4640
        %v4642 = vpop.xlane.xlu0 %4641
        %v4643 = vsel %vm4267, %v3912, 0.0
        %4644 = vadd.xlane.f32.xlu0 %v4643
        %v4645 = vpop.xlane.xlu0 %4644
        %v4646 = vsel %vm4267, %v3913, 0.0
        %4647 = vadd.xlane.f32.xlu0 %v4646
        %v4648 = vpop.xlane.xlu0 %4647
        %v4649 = vsel %vm4267, %v3914, 0.0
        %4650 = vadd.xlane.f32.xlu0 %v4649
        %v4651 = vpop.xlane.xlu0 %4650
        %v4652 = vsel %vm4267, %v3915, 0.0
        %4653 = vadd.xlane.f32.xlu0 %v4652
        %v4654 = vpop.xlane.xlu0 %4653
        %v4655 = vsel %vm4267, %v3916, 0.0
        %4656 = vadd.xlane.f32.xlu0 %v4655
        %v4657 = vpop.xlane.xlu0 %4656
        %v4658 = vsel %vm4267, %v3917, 0.0
        %4659 = vadd.xlane.f32.xlu0 %v4658
        %v4660 = vpop.xlane.xlu0 %4659
        %v4661 = vsel %vm4267, %v3918, 0.0
        %4662 = vadd.xlane.f32.xlu0 %v4661
        %v4663 = vpop.xlane.xlu0 %4662
        %v4664 = vsel %vm4267, %v3919, 0.0
        %4665 = vadd.xlane.f32.xlu0 %v4664
        %v4666 = vpop.xlane.xlu0 %4665
        %v4667 = vsel %vm4267, %v3920, 0.0
        %4668 = vadd.xlane.f32.xlu0 %v4667
        %v4669 = vpop.xlane.xlu0 %4668
        %v4670 = vsel %vm4267, %v3921, 0.0
        %4671 = vadd.xlane.f32.xlu0 %v4670
        %v4672 = vpop.xlane.xlu0 %4671
        %v4673 = vsel %vm4267, %v3922, 0.0
        %4674 = vadd.xlane.f32.xlu0 %v4673
        %v4675 = vpop.xlane.xlu0 %4674
        %v4676 = vsel %vm4267, %v3923, 0.0
        %4677 = vadd.xlane.f32.xlu0 %v4676
        %v4678 = vpop.xlane.xlu0 %4677
        %v4679 = vsel %vm4267, %v3924, 0.0
        %4680 = vadd.xlane.f32.xlu0 %v4679
        %v4681 = vpop.xlane.xlu0 %4680
        %v4682 = vsel %vm4267, %v3925, 0.0
        %4683 = vadd.xlane.f32.xlu0 %v4682
        %v4684 = vpop.xlane.xlu0 %4683
        %v4685 = vsel %vm4267, %v3926, 0.0
        %4686 = vadd.xlane.f32.xlu0 %v4685
        %v4687 = vpop.xlane.xlu0 %4686
        %v4688 = vsel %vm4267, %v3927, 0.0
        %4689 = vadd.xlane.f32.xlu0 %v4688
        %v4690 = vpop.xlane.xlu0 %4689
        %v4691 = vsel %vm4267, %v3928, 0.0
        %4692 = vadd.xlane.f32.xlu0 %v4691
        %v4693 = vpop.xlane.xlu0 %4692
        %v4694 = vsel %vm4267, %v3929, 0.0
        %4695 = vadd.xlane.f32.xlu0 %v4694
        %v4696 = vpop.xlane.xlu0 %4695
        %v4697 = vsel %vm4267, %v3930, 0.0
        %4698 = vadd.xlane.f32.xlu0 %v4697
        %v4699 = vpop.xlane.xlu0 %4698
        %v4700 = vsel %vm4267, %v3931, 0.0
        %4701 = vadd.xlane.f32.xlu0 %v4700
        %v4702 = vpop.xlane.xlu0 %4701
        %v4703 = vsel %vm4267, %v3932, 0.0
        %4704 = vadd.xlane.f32.xlu0 %v4703
        %v4705 = vpop.xlane.xlu0 %4704
        %v4706 = vsel %vm4267, %v3933, 0.0
        %4707 = vadd.xlane.f32.xlu0 %v4706
        %v4708 = vpop.xlane.xlu0 %4707
        %v4709 = vsel %vm4267, %v3934, 0.0
        %4710 = vadd.xlane.f32.xlu0 %v4709
        %v4711 = vpop.xlane.xlu0 %4710
        %v4712 = vsel %vm4267, %v3935, 0.0
        %4713 = vadd.xlane.f32.xlu0 %v4712
        %v4714 = vpop.xlane.xlu0 %4713
        %v4715 = vsel %vm4267, %v3936, 0.0
        %4716 = vadd.xlane.f32.xlu0 %v4715
        %v4717 = vpop.xlane.xlu0 %4716
        %v4718 = vsel %vm4267, %v3937, 0.0
        %4719 = vadd.xlane.f32.xlu0 %v4718
        %v4720 = vpop.xlane.xlu0 %4719
        %v4721 = vsel %vm4267, %v3938, 0.0
        %4722 = vadd.xlane.f32.xlu0 %v4721
        %v4723 = vpop.xlane.xlu0 %4722
        %v4724 = vsel %vm4267, %v3939, 0.0
        %4725 = vadd.xlane.f32.xlu0 %v4724
        %v4726 = vpop.xlane.xlu0 %4725
        %v4727 = vsel %vm4267, %v3940, 0.0
        %4728 = vadd.xlane.f32.xlu0 %v4727
        %v4729 = vpop.xlane.xlu0 %4728
        %v4730 = vsel %vm4267, %v3941, 0.0
        %4731 = vadd.xlane.f32.xlu0 %v4730
        %v4732 = vpop.xlane.xlu0 %4731
        %v4733 = vsel %vm4267, %v3942, 0.0
        %4734 = vadd.xlane.f32.xlu0 %v4733
        %v4735 = vpop.xlane.xlu0 %4734
        %v4736 = vsel %vm4267, %v3943, 0.0
        %4737 = vadd.xlane.f32.xlu0 %v4736
        %v4738 = vpop.xlane.xlu0 %4737
        %v4739 = vsel %vm4267, %v3944, 0.0
        %4740 = vadd.xlane.f32.xlu0 %v4739
        %v4741 = vpop.xlane.xlu0 %4740
        %v4742 = vsel %vm4267, %v3945, 0.0
        %4743 = vadd.xlane.f32.xlu0 %v4742
        %v4744 = vpop.xlane.xlu0 %4743
        %v4745 = vsel %vm4267, %v3946, 0.0
        %4746 = vadd.xlane.f32.xlu0 %v4745
        %v4747 = vpop.xlane.xlu0 %4746
        %v4748 = vsel %vm4267, %v3947, 0.0
        %4749 = vadd.xlane.f32.xlu0 %v4748
        %v4750 = vpop.xlane.xlu0 %4749
        %v4751 = vsel %vm4267, %v3948, 0.0
        %4752 = vadd.xlane.f32.xlu0 %v4751
        %v4753 = vpop.xlane.xlu0 %4752
        %v4754 = vsel %vm4267, %v3949, 0.0
        %4755 = vadd.xlane.f32.xlu0 %v4754
        %v4756 = vpop.xlane.xlu0 %4755
        %v4757 = vsel %vm4267, %v3950, 0.0
        %4758 = vadd.xlane.f32.xlu0 %v4757
        %v4759 = vpop.xlane.xlu0 %4758
        %v4760 = vsel %vm4267, %v3951, 0.0
        %4761 = vadd.xlane.f32.xlu0 %v4760
        %v4762 = vpop.xlane.xlu0 %4761
        %v4763 = vsel %vm4267, %v3952, 0.0
        %4764 = vadd.xlane.f32.xlu0 %v4763
        %v4765 = vpop.xlane.xlu0 %4764
        %v4766 = vsel %vm4267, %v3953, 0.0
        %4767 = vadd.xlane.f32.xlu0 %v4766
        %v4768 = vpop.xlane.xlu0 %4767
        %v4769 = vsel %vm4267, %v3954, 0.0
        %4770 = vadd.xlane.f32.xlu0 %v4769
        %v4771 = vpop.xlane.xlu0 %4770
        %v4772 = vsel %vm4267, %v3955, 0.0
        %4773 = vadd.xlane.f32.xlu0 %v4772
        %v4774 = vpop.xlane.xlu0 %4773
        %v4775 = vsel %vm4267, %v3956, 0.0
        %4776 = vadd.xlane.f32.xlu0 %v4775
        %v4777 = vpop.xlane.xlu0 %4776
        %v4778 = vsel %vm4267, %v3957, 0.0
        %4779 = vadd.xlane.f32.xlu0 %v4778
        %v4780 = vpop.xlane.xlu0 %4779
        %v4781 = vsel %vm4267, %v3958, 0.0
        %4782 = vadd.xlane.f32.xlu0 %v4781
        %v4783 = vpop.xlane.xlu0 %4782
        %v4784 = vsel %vm4267, %v3959, 0.0
        %4785 = vadd.xlane.f32.xlu0 %v4784
        %v4786 = vpop.xlane.xlu0 %4785
        %v4787 = vsel %vm4267, %v3960, 0.0
        %4788 = vadd.xlane.f32.xlu0 %v4787
        %v4789 = vpop.xlane.xlu0 %4788
        %v4790 = vsel %vm4267, %v3961, 0.0
        %4791 = vadd.xlane.f32.xlu0 %v4790
        %v4792 = vpop.xlane.xlu0 %4791
        %v4793 = vsel %vm4267, %v3962, 0.0
        %4794 = vadd.xlane.f32.xlu0 %v4793
        %v4795 = vpop.xlane.xlu0 %4794
        %v4796 = vsel %vm4267, %v3963, 0.0
        %4797 = vadd.xlane.f32.xlu0 %v4796
        %v4798 = vpop.xlane.xlu0 %4797
        %v4799 = vsel %vm4267, %v3964, 0.0
        %4800 = vadd.xlane.f32.xlu0 %v4799
        %v4801 = vpop.xlane.xlu0 %4800
        %v4802 = vsel %vm4267, %v3965, 0.0
        %4803 = vadd.xlane.f32.xlu0 %v4802
        %v4804 = vpop.xlane.xlu0 %4803
        %v4805 = vsel %vm4267, %v3966, 0.0
        %4806 = vadd.xlane.f32.xlu0 %v4805
        %v4807 = vpop.xlane.xlu0 %4806
        %v4808 = vsel %vm4267, %v3967, 0.0
        %4809 = vadd.xlane.f32.xlu0 %v4808
        %v4810 = vpop.xlane.xlu0 %4809
        %v4811 = vsel %vm4267, %v3968, 0.0
        %4812 = vadd.xlane.f32.xlu0 %v4811
        %v4813 = vpop.xlane.xlu0 %4812
        %v4814 = vsel %vm4267, %v3969, 0.0
        %4815 = vadd.xlane.f32.xlu0 %v4814
        %v4816 = vpop.xlane.xlu0 %4815
        %v4817 = vsel %vm4267, %v3970, 0.0
        %4818 = vadd.xlane.f32.xlu0 %v4817
        %v4819 = vpop.xlane.xlu0 %4818
        %v4820 = vsel %vm4267, %v3971, 0.0
        %4821 = vadd.xlane.f32.xlu0 %v4820
        %v4822 = vpop.xlane.xlu0 %4821
        %v4823 = vsel %vm4267, %v3972, 0.0
        %4824 = vadd.xlane.f32.xlu0 %v4823
        %v4825 = vpop.xlane.xlu0 %4824
        %v4826 = vsel %vm4267, %v3973, 0.0
        %4827 = vadd.xlane.f32.xlu0 %v4826
        %v4828 = vpop.xlane.xlu0 %4827
        %v4829 = vsel %vm4267, %v3974, 0.0
        %4830 = vadd.xlane.f32.xlu0 %v4829
        %v4831 = vpop.xlane.xlu0 %4830
        %v4832 = vsel %vm4267, %v3975, 0.0
        %4833 = vadd.xlane.f32.xlu0 %v4832
        %v4834 = vpop.xlane.xlu0 %4833
        %v4835 = vsel %vm4267, %v3976, 0.0
        %4836 = vadd.xlane.f32.xlu0 %v4835
        %v4837 = vpop.xlane.xlu0 %4836
        %v4838 = vsel %vm4267, %v3977, 0.0
        %4839 = vadd.xlane.f32.xlu0 %v4838
        %v4840 = vpop.xlane.xlu0 %4839
        %v4841 = vsel %vm4267, %v3978, 0.0
        %4842 = vadd.xlane.f32.xlu0 %v4841
        %v4843 = vpop.xlane.xlu0 %4842
        %v4844 = vsel %vm4267, %v3979, 0.0
        %4845 = vadd.xlane.f32.xlu0 %v4844
        %v4846 = vpop.xlane.xlu0 %4845
        %v4847 = vsel %vm4267, %v3980, 0.0
        %4848 = vadd.xlane.f32.xlu0 %v4847
        %v4849 = vpop.xlane.xlu0 %4848
        %v4850 = vsel %vm4267, %v3981, 0.0
        %4851 = vadd.xlane.f32.xlu0 %v4850
        %v4852 = vpop.xlane.xlu0 %4851
        %v4853 = vsel %vm4267, %v3982, 0.0
        %4854 = vadd.xlane.f32.xlu0 %v4853
        %v4855 = vpop.xlane.xlu0 %4854
        %v4856 = vsel %vm4267, %v3983, 0.0
        %4857 = vadd.xlane.f32.xlu0 %v4856
        %v4858 = vpop.xlane.xlu0 %4857
        %v4859 = vsel %vm4267, %v3984, 0.0
        %4860 = vadd.xlane.f32.xlu0 %v4859
        %v4861 = vpop.xlane.xlu0 %4860
        %v4862 = vsel %vm4267, %v3985, 0.0
        %4863 = vadd.xlane.f32.xlu0 %v4862
        %v4864 = vpop.xlane.xlu0 %4863
        %v4865 = vsel %vm4267, %v3986, 0.0
        %4866 = vadd.xlane.f32.xlu0 %v4865
        %v4867 = vpop.xlane.xlu0 %4866
        %v4868 = vsel %vm4267, %v3987, 0.0
        %4869 = vadd.xlane.f32.xlu0 %v4868
        %v4870 = vpop.xlane.xlu0 %4869
        %v4871 = vsel %vm4267, %v3988, 0.0
        %4872 = vadd.xlane.f32.xlu0 %v4871
        %v4873 = vpop.xlane.xlu0 %4872
        %v4874 = vsel %vm4267, %v3989, 0.0
        %4875 = vadd.xlane.f32.xlu0 %v4874
        %v4876 = vpop.xlane.xlu0 %4875
        %v4877 = vsel %vm4267, %v3990, 0.0
        %4878 = vadd.xlane.f32.xlu0 %v4877
        %v4879 = vpop.xlane.xlu0 %4878
        %v4880 = vsel %vm4267, %v3991, 0.0
        %4881 = vadd.xlane.f32.xlu0 %v4880
        %v4882 = vpop.xlane.xlu0 %4881
        %v4883 = vsel %vm4267, %v3992, 0.0
        %4884 = vadd.xlane.f32.xlu0 %v4883
        %v4885 = vpop.xlane.xlu0 %4884
        %v4886 = vsel %vm4267, %v3993, 0.0
        %4887 = vadd.xlane.f32.xlu0 %v4886
        %v4888 = vpop.xlane.xlu0 %4887
        %v4889 = vsel %vm4267, %v3994, 0.0
        %4890 = vadd.xlane.f32.xlu0 %v4889
        %v4891 = vpop.xlane.xlu0 %4890
        %v4892 = vsel %vm4267, %v3995, 0.0
        %4893 = vadd.xlane.f32.xlu0 %v4892
        %v4894 = vpop.xlane.xlu0 %4893
        %v4895 = vsel %vm4267, %v3996, 0.0
        %4896 = vadd.xlane.f32.xlu0 %v4895
        %v4897 = vpop.xlane.xlu0 %4896
        %v4898 = vsel %vm4267, %v3997, 0.0
        %4899 = vadd.xlane.f32.xlu0 %v4898
        %v4900 = vpop.xlane.xlu0 %4899
        %v4901 = vsel %vm4267, %v3998, 0.0
        %4902 = vadd.xlane.f32.xlu0 %v4901
        %v4903 = vpop.xlane.xlu0 %4902
        %v4904 = vsel %vm4267, %v3999, 0.0
        %4905 = vadd.xlane.f32.xlu0 %v4904
        %v4906 = vpop.xlane.xlu0 %4905
        %v4907 = vsel %vm4267, %v4000, 0.0
        %4908 = vadd.xlane.f32.xlu0 %v4907
        %v4909 = vpop.xlane.xlu0 %4908
        %v4910 = vsel %vm4267, %v4001, 0.0
        %4911 = vadd.xlane.f32.xlu0 %v4910
        %v4912 = vpop.xlane.xlu0 %4911
        %v4913 = vsel %vm4267, %v4002, 0.0
        %4914 = vadd.xlane.f32.xlu0 %v4913
        %v4915 = vpop.xlane.xlu0 %4914
        %v4916 = vsel %vm4267, %v4003, 0.0
        %4917 = vadd.xlane.f32.xlu0 %v4916
        %v4918 = vpop.xlane.xlu0 %4917
        %v4919 = vsel %vm4267, %v4004, 0.0
        %4920 = vadd.xlane.f32.xlu0 %v4919
        %v4921 = vpop.xlane.xlu0 %4920
        %v4922 = vsel %vm4267, %v4005, 0.0
        %4923 = vadd.xlane.f32.xlu0 %v4922
        %v4924 = vpop.xlane.xlu0 %4923
        %v4925 = vsel %vm4267, %v4006, 0.0
        %4926 = vadd.xlane.f32.xlu0 %v4925
        %v4927 = vpop.xlane.xlu0 %4926
        %v4928 = vsel %vm4267, %v4007, 0.0
        %4929 = vadd.xlane.f32.xlu0 %v4928
        %v4930 = vpop.xlane.xlu0 %4929
        %v4931 = vsel %vm4267, %v4008, 0.0
        %4932 = vadd.xlane.f32.xlu0 %v4931
        %v4933 = vpop.xlane.xlu0 %4932
        %v4934 = vsel %vm4267, %v4009, 0.0
        %4935 = vadd.xlane.f32.xlu0 %v4934
        %v4936 = vpop.xlane.xlu0 %4935
        %v4937 = vsel %vm4267, %v4010, 0.0
        %4938 = vadd.xlane.f32.xlu0 %v4937
        %v4939 = vpop.xlane.xlu0 %4938
        %v4940 = vsel %vm4267, %v4011, 0.0
        %4941 = vadd.xlane.f32.xlu0 %v4940
        %v4942 = vpop.xlane.xlu0 %4941
        %v4943 = vsel %vm4267, %v4012, 0.0
        %4944 = vadd.xlane.f32.xlu0 %v4943
        %v4945 = vpop.xlane.xlu0 %4944
        %v4946 = vsel %vm4267, %v4013, 0.0
        %4947 = vadd.xlane.f32.xlu0 %v4946
        %v4948 = vpop.xlane.xlu0 %4947
        %v4949 = vsel %vm4267, %v4014, 0.0
        %4950 = vadd.xlane.f32.xlu0 %v4949
        %v4951 = vpop.xlane.xlu0 %4950
        %v4952 = vsel %vm4267, %v4015, 0.0
        %4953 = vadd.xlane.f32.xlu0 %v4952
        %v4954 = vpop.xlane.xlu0 %4953
        %v4955 = vsel %vm4267, %v4016, 0.0
        %4956 = vadd.xlane.f32.xlu0 %v4955
        %v4957 = vpop.xlane.xlu0 %4956
        %v4958 = vsel %vm4267, %v4017, 0.0
        %4959 = vadd.xlane.f32.xlu0 %v4958
        %v4960 = vpop.xlane.xlu0 %4959
        %v4961 = vsel %vm4267, %v4018, 0.0
        %4962 = vadd.xlane.f32.xlu0 %v4961
        %v4963 = vpop.xlane.xlu0 %4962
        %v4964 = vsel %vm4267, %v4019, 0.0
        %4965 = vadd.xlane.f32.xlu0 %v4964
        %v4966 = vpop.xlane.xlu0 %4965
        %v4967 = vsel %vm4267, %v4020, 0.0
        %4968 = vadd.xlane.f32.xlu0 %v4967
        %v4969 = vpop.xlane.xlu0 %4968
        %v4970 = vsel %vm4267, %v4021, 0.0
        %4971 = vadd.xlane.f32.xlu0 %v4970
        %v4972 = vpop.xlane.xlu0 %4971
        %v4973 = vsel %vm4267, %v4022, 0.0
        %4974 = vadd.xlane.f32.xlu0 %v4973
        %v4975 = vpop.xlane.xlu0 %4974
        %v4976 = vsel %vm4267, %v4023, 0.0
        %4977 = vadd.xlane.f32.xlu0 %v4976
        %v4978 = vpop.xlane.xlu0 %4977
        %v4979 = vsel %vm4267, %v4024, 0.0
        %4980 = vadd.xlane.f32.xlu0 %v4979
        %v4981 = vpop.xlane.xlu0 %4980
        %v4982 = vsel %vm4267, %v4025, 0.0
        %4983 = vadd.xlane.f32.xlu0 %v4982
        %v4984 = vpop.xlane.xlu0 %4983
        %v4985 = vsel %vm4267, %v4026, 0.0
        %4986 = vadd.xlane.f32.xlu0 %v4985
        %v4987 = vpop.xlane.xlu0 %4986
        %v4988 = vadd.f32 %v4027, %v4270
        %v4989 = vadd.f32 %v4028, %v4273
        %v4990 = vadd.f32 %v4029, %v4276
        %v4991 = vadd.f32 %v4030, %v4279
        %v4992 = vadd.f32 %v4031, %v4282
        %v4993 = vadd.f32 %v4032, %v4285
        %v4994 = vadd.f32 %v4033, %v4288
        %v4995 = vadd.f32 %v4034, %v4291
        %v4996 = vadd.f32 %v4035, %v4294
        %v4997 = vadd.f32 %v4036, %v4297
        %v4998 = vadd.f32 %v4037, %v4300
        %v4999 = vadd.f32 %v4038, %v4303
        %v5000 = vadd.f32 %v4039, %v4306
        %v5001 = vadd.f32 %v4040, %v4309
        %v5002 = vadd.f32 %v4041, %v4312
        %v5003 = vadd.f32 %v4042, %v4315
        %v5004 = vadd.f32 %v4043, %v4318
        %v5005 = vadd.f32 %v4044, %v4321
        %v5006 = vadd.f32 %v4045, %v4324
        %v5007 = vadd.f32 %v4046, %v4327
        %v5008 = vadd.f32 %v4047, %v4330
        %v5009 = vadd.f32 %v4048, %v4333
        %v5010 = vadd.f32 %v4049, %v4336
        %v5011 = vadd.f32 %v4050, %v4339
        %v5012 = vadd.f32 %v4051, %v4342
        %v5013 = vadd.f32 %v4052, %v4345
        %v5014 = vadd.f32 %v4053, %v4348
        %v5015 = vadd.f32 %v4054, %v4351
        %v5016 = vadd.f32 %v4055, %v4354
        %v5017 = vadd.f32 %v4056, %v4357
        %v5018 = vadd.f32 %v4057, %v4360
        %v5019 = vadd.f32 %v4058, %v4363
        %v5020 = vadd.f32 %v4059, %v4366
        %v5021 = vadd.f32 %v4060, %v4369
        %v5022 = vadd.f32 %v4061, %v4372
        %v5023 = vadd.f32 %v4062, %v4375
        %v5024 = vadd.f32 %v4063, %v4378
        %v5025 = vadd.f32 %v4064, %v4381
        %v5026 = vadd.f32 %v4065, %v4384
        %v5027 = vadd.f32 %v4066, %v4387
        %v5028 = vadd.f32 %v4067, %v4390
        %v5029 = vadd.f32 %v4068, %v4393
        %v5030 = vadd.f32 %v4069, %v4396
        %v5031 = vadd.f32 %v4070, %v4399
        %v5032 = vadd.f32 %v4071, %v4402
        %v5033 = vadd.f32 %v4072, %v4405
        %v5034 = vadd.f32 %v4073, %v4408
        %v5035 = vadd.f32 %v4074, %v4411
        %v5036 = vadd.f32 %v4075, %v4414
        %v5037 = vadd.f32 %v4076, %v4417
        %v5038 = vadd.f32 %v4077, %v4420
        %v5039 = vadd.f32 %v4078, %v4423
        %v5040 = vadd.f32 %v4079, %v4426
        %v5041 = vadd.f32 %v4080, %v4429
        %v5042 = vadd.f32 %v4081, %v4432
        %v5043 = vadd.f32 %v4082, %v4435
        %v5044 = vadd.f32 %v4083, %v4438
        %v5045 = vadd.f32 %v4084, %v4441
        %v5046 = vadd.f32 %v4085, %v4444
        %v5047 = vadd.f32 %v4086, %v4447
        %v5048 = vadd.f32 %v4087, %v4450
        %v5049 = vadd.f32 %v4088, %v4453
        %v5050 = vadd.f32 %v4089, %v4456
        %v5051 = vadd.f32 %v4090, %v4459
        %v5052 = vadd.f32 %v4091, %v4462
        %v5053 = vadd.f32 %v4092, %v4465
        %v5054 = vadd.f32 %v4093, %v4468
        %v5055 = vadd.f32 %v4094, %v4471
        %v5056 = vadd.f32 %v4095, %v4474
        %v5057 = vadd.f32 %v4096, %v4477
        %v5058 = vadd.f32 %v4097, %v4480
        %v5059 = vadd.f32 %v4098, %v4483
        %v5060 = vadd.f32 %v4099, %v4486
        %v5061 = vadd.f32 %v4100, %v4489
        %v5062 = vadd.f32 %v4101, %v4492
        %v5063 = vadd.f32 %v4102, %v4495
        %v5064 = vadd.f32 %v4103, %v4498
        %v5065 = vadd.f32 %v4104, %v4501
        %v5066 = vadd.f32 %v4105, %v4504
        %v5067 = vadd.f32 %v4106, %v4507
        %v5068 = vadd.f32 %v4107, %v4510
        %v5069 = vadd.f32 %v4108, %v4513
        %v5070 = vadd.f32 %v4109, %v4516
        %v5071 = vadd.f32 %v4110, %v4519
        %v5072 = vadd.f32 %v4111, %v4522
        %v5073 = vadd.f32 %v4112, %v4525
        %v5074 = vadd.f32 %v4113, %v4528
        %v5075 = vadd.f32 %v4114, %v4531
        %v5076 = vadd.f32 %v4115, %v4534
        %v5077 = vadd.f32 %v4116, %v4537
        %v5078 = vadd.f32 %v4117, %v4540
        %v5079 = vadd.f32 %v4118, %v4543
        %v5080 = vadd.f32 %v4119, %v4546
        %v5081 = vadd.f32 %v4120, %v4549
        %v5082 = vadd.f32 %v4121, %v4552
        %v5083 = vadd.f32 %v4122, %v4555
        %v5084 = vadd.f32 %v4123, %v4558
        %v5085 = vadd.f32 %v4124, %v4561
        %v5086 = vadd.f32 %v4125, %v4564
        %v5087 = vadd.f32 %v4126, %v4567
        %v5088 = vadd.f32 %v4127, %v4570
        %v5089 = vadd.f32 %v4128, %v4573
        %v5090 = vadd.f32 %v4129, %v4576
        %v5091 = vadd.f32 %v4130, %v4579
        %v5092 = vadd.f32 %v4131, %v4582
        %v5093 = vadd.f32 %v4132, %v4585
        %v5094 = vadd.f32 %v4133, %v4588
        %v5095 = vadd.f32 %v4134, %v4591
        %v5096 = vadd.f32 %v4135, %v4594
        %v5097 = vadd.f32 %v4136, %v4597
        %v5098 = vadd.f32 %v4137, %v4600
        %v5099 = vadd.f32 %v4138, %v4603
        %v5100 = vadd.f32 %v4139, %v4606
        %v5101 = vadd.f32 %v4140, %v4609
        %v5102 = vadd.f32 %v4141, %v4612
        %v5103 = vadd.f32 %v4142, %v4615
        %v5104 = vadd.f32 %v4143, %v4618
        %v5105 = vadd.f32 %v4144, %v4621
        %v5106 = vadd.f32 %v4145, %v4624
        %v5107 = vadd.f32 %v4146, %v4627
        %v5108 = vadd.f32 %v4147, %v4630
        %v5109 = vadd.f32 %v4148, %v4633
        %v5110 = vadd.f32 %v4149, %v4636
        %v5111 = vadd.f32 %v4150, %v4639
        %v5112 = vadd.f32 %v4151, %v4642
        %v5113 = vadd.f32 %v4152, %v4645
        %v5114 = vadd.f32 %v4153, %v4648
        %v5115 = vadd.f32 %v4154, %v4651
        %v5116 = vadd.f32 %v4155, %v4654
        %v5117 = vadd.f32 %v4156, %v4657
        %v5118 = vadd.f32 %v4157, %v4660
        %v5119 = vadd.f32 %v4158, %v4663
        %v5120 = vadd.f32 %v4159, %v4666
        %v5121 = vadd.f32 %v4160, %v4669
        %v5122 = vadd.f32 %v4161, %v4672
        %v5123 = vadd.f32 %v4162, %v4675
        %v5124 = vadd.f32 %v4163, %v4678
        %v5125 = vadd.f32 %v4164, %v4681
        %v5126 = vadd.f32 %v4165, %v4684
        %v5127 = vadd.f32 %v4166, %v4687
        %v5128 = vadd.f32 %v4167, %v4690
        %v5129 = vadd.f32 %v4168, %v4693
        %v5130 = vadd.f32 %v4169, %v4696
        %v5131 = vadd.f32 %v4170, %v4699
        %v5132 = vadd.f32 %v4171, %v4702
        %v5133 = vadd.f32 %v4172, %v4705
        %v5134 = vadd.f32 %v4173, %v4708
        %v5135 = vadd.f32 %v4174, %v4711
        %v5136 = vadd.f32 %v4175, %v4714
        %v5137 = vadd.f32 %v4176, %v4717
        %v5138 = vadd.f32 %v4177, %v4720
        %v5139 = vadd.f32 %v4178, %v4723
        %v5140 = vadd.f32 %v4179, %v4726
        %v5141 = vadd.f32 %v4180, %v4729
        %v5142 = vadd.f32 %v4181, %v4732
        %v5143 = vadd.f32 %v4182, %v4735
        %v5144 = vadd.f32 %v4183, %v4738
        %v5145 = vadd.f32 %v4184, %v4741
        %v5146 = vadd.f32 %v4185, %v4744
        %v5147 = vadd.f32 %v4186, %v4747
        %v5148 = vadd.f32 %v4187, %v4750
        %v5149 = vadd.f32 %v4188, %v4753
        %v5150 = vadd.f32 %v4189, %v4756
        %v5151 = vadd.f32 %v4190, %v4759
        %v5152 = vadd.f32 %v4191, %v4762
        %v5153 = vadd.f32 %v4192, %v4765
        %v5154 = vadd.f32 %v4193, %v4768
        %v5155 = vadd.f32 %v4194, %v4771
        %v5156 = vadd.f32 %v4195, %v4774
        %v5157 = vadd.f32 %v4196, %v4777
        %v5158 = vadd.f32 %v4197, %v4780
        %v5159 = vadd.f32 %v4198, %v4783
        %v5160 = vadd.f32 %v4199, %v4786
        %v5161 = vadd.f32 %v4200, %v4789
        %v5162 = vadd.f32 %v4201, %v4792
        %v5163 = vadd.f32 %v4202, %v4795
        %v5164 = vadd.f32 %v4203, %v4798
        %v5165 = vadd.f32 %v4204, %v4801
        %v5166 = vadd.f32 %v4205, %v4804
        %v5167 = vadd.f32 %v4206, %v4807
        %v5168 = vadd.f32 %v4207, %v4810
        %v5169 = vadd.f32 %v4208, %v4813
        %v5170 = vadd.f32 %v4209, %v4816
        %v5171 = vadd.f32 %v4210, %v4819
        %v5172 = vadd.f32 %v4211, %v4822
        %v5173 = vadd.f32 %v4212, %v4825
        %v5174 = vadd.f32 %v4213, %v4828
        %v5175 = vadd.f32 %v4214, %v4831
        %v5176 = vadd.f32 %v4215, %v4834
        %v5177 = vadd.f32 %v4216, %v4837
        %v5178 = vadd.f32 %v4217, %v4840
        %v5179 = vadd.f32 %v4218, %v4843
        %v5180 = vadd.f32 %v4219, %v4846
        %v5181 = vadd.f32 %v4220, %v4849
        %v5182 = vadd.f32 %v4221, %v4852
        %v5183 = vadd.f32 %v4222, %v4855
        %v5184 = vadd.f32 %v4223, %v4858
        %v5185 = vadd.f32 %v4224, %v4861
        %v5186 = vadd.f32 %v4225, %v4864
        %v5187 = vadd.f32 %v4226, %v4867
        %v5188 = vadd.f32 %v4227, %v4870
        %v5189 = vadd.f32 %v4228, %v4873
        %v5190 = vadd.f32 %v4229, %v4876
        %v5191 = vadd.f32 %v4230, %v4879
        %v5192 = vadd.f32 %v4231, %v4882
        %v5193 = vadd.f32 %v4232, %v4885
        %v5194 = vadd.f32 %v4233, %v4888
        %v5195 = vadd.f32 %v4234, %v4891
        %v5196 = vadd.f32 %v4235, %v4894
        %v5197 = vadd.f32 %v4236, %v4897
        %v5198 = vadd.f32 %v4237, %v4900
        %v5199 = vadd.f32 %v4238, %v4903
        %v5200 = vadd.f32 %v4239, %v4906
        %v5201 = vadd.f32 %v4240, %v4909
        %v5202 = vadd.f32 %v4241, %v4912
        %v5203 = vadd.f32 %v4242, %v4915
        %v5204 = vadd.f32 %v4243, %v4918
        %v5205 = vadd.f32 %v4244, %v4921
        %v5206 = vadd.f32 %v4245, %v4924
        %v5207 = vadd.f32 %v4246, %v4927
        %v5208 = vadd.f32 %v4247, %v4930
        %v5209 = vadd.f32 %v4248, %v4933
        %v5210 = vadd.f32 %v4249, %v4936
        %v5211 = vadd.f32 %v4250, %v4939
        %v5212 = vadd.f32 %v4251, %v4942
        %v5213 = vadd.f32 %v4252, %v4945
        %v5214 = vadd.f32 %v4253, %v4948
        %v5215 = vadd.f32 %v4254, %v4951
        %v5216 = vadd.f32 %v4255, %v4954
        %v5217 = vadd.f32 %v4256, %v4957
        %v5218 = vadd.f32 %v4257, %v4960
        %v5219 = vadd.f32 %v4258, %v4963
        %v5220 = vadd.f32 %v4259, %v4966
        %v5221 = vadd.f32 %v4260, %v4969
        %v5222 = vadd.f32 %v4261, %v4972
        %v5223 = vadd.f32 %v4262, %v4975
        %v5224 = vadd.f32 %v4263, %v4978
        %v5225 = vadd.f32 %v4264, %v4981
        %v5226 = vadd.f32 %v4265, %v4984
        %v5227 = vadd.f32 %v4266, %v4987
        %vm5228 = vcmask 7168
        %5229 = vst.msk [vmem:[#allocation2] sm:$0xff] %vm5228, %v4988
        %5230 = vst.msk [vmem:[#allocation2 + $0x8] sm:$0xff] %vm5228, %v4989
        %5231 = vst.msk [vmem:[#allocation2 + $0x10] sm:$0xff] %vm5228, %v4990
        %5232 = vst.msk [vmem:[#allocation2 + $0x18] sm:$0xff] %vm5228, %v4991
        %5233 = vst.msk [vmem:[#allocation2 + $0x20] sm:$0xff] %vm5228, %v4992
        %5234 = vst.msk [vmem:[#allocation2 + $0x28] sm:$0xff] %vm5228, %v4993
        %5235 = vst.msk [vmem:[#allocation2 + $0x30] sm:$0xff] %vm5228, %v4994
        %5236 = vst.msk [vmem:[#allocation2 + $0x38] sm:$0xff] %vm5228, %v4995
        %5237 = vst.msk [vmem:[#allocation2 + $0x40] sm:$0xff] %vm5228, %v4996
        %5238 = vst.msk [vmem:[#allocation2 + $0x48] sm:$0xff] %vm5228, %v4997
        %5239 = vst.msk [vmem:[#allocation2 + $0x50] sm:$0xff] %vm5228, %v4998
        %5240 = vst.msk [vmem:[#allocation2 + $0x58] sm:$0xff] %vm5228, %v4999
        %5241 = vst.msk [vmem:[#allocation2 + $0x60] sm:$0xff] %vm5228, %v5000
        %5242 = vst.msk [vmem:[#allocation2 + $0x68] sm:$0xff] %vm5228, %v5001
        %5243 = vst.msk [vmem:[#allocation2 + $0x70] sm:$0xff] %vm5228, %v5002
        %5244 = vst.msk [vmem:[#allocation2 + $0x78] sm:$0xff] %vm5228, %v5003
        %5245 = vst.msk [vmem:[#allocation2 + $0x80] sm:$0xff] %vm5228, %v5004
        %5246 = vst.msk [vmem:[#allocation2 + $0x88] sm:$0xff] %vm5228, %v5005
        %5247 = vst.msk [vmem:[#allocation2 + $0x90] sm:$0xff] %vm5228, %v5006
        %5248 = vst.msk [vmem:[#allocation2 + $0x98] sm:$0xff] %vm5228, %v5007
        %5249 = vst.msk [vmem:[#allocation2 + $0xa0] sm:$0xff] %vm5228, %v5008
        %5250 = vst.msk [vmem:[#allocation2 + $0xa8] sm:$0xff] %vm5228, %v5009
        %5251 = vst.msk [vmem:[#allocation2 + $0xb0] sm:$0xff] %vm5228, %v5010
        %5252 = vst.msk [vmem:[#allocation2 + $0xb8] sm:$0xff] %vm5228, %v5011
        %5253 = vst.msk [vmem:[#allocation2 + $0xc0] sm:$0xff] %vm5228, %v5012
        %5254 = vst.msk [vmem:[#allocation2 + $0xc8] sm:$0xff] %vm5228, %v5013
        %5255 = vst.msk [vmem:[#allocation2 + $0xd0] sm:$0xff] %vm5228, %v5014
        %5256 = vst.msk [vmem:[#allocation2 + $0xd8] sm:$0xff] %vm5228, %v5015
        %5257 = vst.msk [vmem:[#allocation2 + $0xe0] sm:$0xff] %vm5228, %v5016
        %5258 = vst.msk [vmem:[#allocation2 + $0xe8] sm:$0xff] %vm5228, %v5017
        %5259 = vst.msk [vmem:[#allocation2 + $0xf0] sm:$0xff] %vm5228, %v5018
        %5260 = vst.msk [vmem:[#allocation2 + $0xf8] sm:$0xff] %vm5228, %v5019
        %5261 = vst.msk [vmem:[#allocation2 + $0x100] sm:$0xff] %vm5228, %v5020
        %5262 = vst.msk [vmem:[#allocation2 + $0x108] sm:$0xff] %vm5228, %v5021
        %5263 = vst.msk [vmem:[#allocation2 + $0x110] sm:$0xff] %vm5228, %v5022
        %5264 = vst.msk [vmem:[#allocation2 + $0x118] sm:$0xff] %vm5228, %v5023
        %5265 = vst.msk [vmem:[#allocation2 + $0x120] sm:$0xff] %vm5228, %v5024
        %5266 = vst.msk [vmem:[#allocation2 + $0x128] sm:$0xff] %vm5228, %v5025
        %5267 = vst.msk [vmem:[#allocation2 + $0x130] sm:$0xff] %vm5228, %v5026
        %5268 = vst.msk [vmem:[#allocation2 + $0x138] sm:$0xff] %vm5228, %v5027
        %5269 = vst.msk [vmem:[#allocation2 + $0x140] sm:$0xff] %vm5228, %v5028
        %5270 = vst.msk [vmem:[#allocation2 + $0x148] sm:$0xff] %vm5228, %v5029
        %5271 = vst.msk [vmem:[#allocation2 + $0x150] sm:$0xff] %vm5228, %v5030
        %5272 = vst.msk [vmem:[#allocation2 + $0x158] sm:$0xff] %vm5228, %v5031
        %5273 = vst.msk [vmem:[#allocation2 + $0x160] sm:$0xff] %vm5228, %v5032
        %5274 = vst.msk [vmem:[#allocation2 + $0x168] sm:$0xff] %vm5228, %v5033
        %5275 = vst.msk [vmem:[#allocation2 + $0x170] sm:$0xff] %vm5228, %v5034
        %5276 = vst.msk [vmem:[#allocation2 + $0x178] sm:$0xff] %vm5228, %v5035
        %5277 = vst.msk [vmem:[#allocation2 + $0x180] sm:$0xff] %vm5228, %v5036
        %5278 = vst.msk [vmem:[#allocation2 + $0x188] sm:$0xff] %vm5228, %v5037
        %5279 = vst.msk [vmem:[#allocation2 + $0x190] sm:$0xff] %vm5228, %v5038
        %5280 = vst.msk [vmem:[#allocation2 + $0x198] sm:$0xff] %vm5228, %v5039
        %5281 = vst.msk [vmem:[#allocation2 + $0x1a0] sm:$0xff] %vm5228, %v5040
        %5282 = vst.msk [vmem:[#allocation2 + $0x1a8] sm:$0xff] %vm5228, %v5041
        %5283 = vst.msk [vmem:[#allocation2 + $0x1b0] sm:$0xff] %vm5228, %v5042
        %5284 = vst.msk [vmem:[#allocation2 + $0x1b8] sm:$0xff] %vm5228, %v5043
        %5285 = vst.msk [vmem:[#allocation2 + $0x1c0] sm:$0xff] %vm5228, %v5044
        %5286 = vst.msk [vmem:[#allocation2 + $0x1c8] sm:$0xff] %vm5228, %v5045
        %5287 = vst.msk [vmem:[#allocation2 + $0x1d0] sm:$0xff] %vm5228, %v5046
        %5288 = vst.msk [vmem:[#allocation2 + $0x1d8] sm:$0xff] %vm5228, %v5047
        %5289 = vst.msk [vmem:[#allocation2 + $0x1e0] sm:$0xff] %vm5228, %v5048
        %5290 = vst.msk [vmem:[#allocation2 + $0x1e8] sm:$0xff] %vm5228, %v5049
        %5291 = vst.msk [vmem:[#allocation2 + $0x1f0] sm:$0xff] %vm5228, %v5050
        %5292 = vst.msk [vmem:[#allocation2 + $0x1f8] sm:$0xff] %vm5228, %v5051
        %5293 = vst.msk [vmem:[#allocation2 + $0x200] sm:$0xff] %vm5228, %v5052
        %5294 = vst.msk [vmem:[#allocation2 + $0x208] sm:$0xff] %vm5228, %v5053
        %5295 = vst.msk [vmem:[#allocation2 + $0x210] sm:$0xff] %vm5228, %v5054
        %5296 = vst.msk [vmem:[#allocation2 + $0x218] sm:$0xff] %vm5228, %v5055
        %5297 = vst.msk [vmem:[#allocation2 + $0x220] sm:$0xff] %vm5228, %v5056
        %5298 = vst.msk [vmem:[#allocation2 + $0x228] sm:$0xff] %vm5228, %v5057
        %5299 = vst.msk [vmem:[#allocation2 + $0x230] sm:$0xff] %vm5228, %v5058
        %5300 = vst.msk [vmem:[#allocation2 + $0x238] sm:$0xff] %vm5228, %v5059
        %5301 = vst.msk [vmem:[#allocation2 + $0x240] sm:$0xff] %vm5228, %v5060
        %5302 = vst.msk [vmem:[#allocation2 + $0x248] sm:$0xff] %vm5228, %v5061
        %5303 = vst.msk [vmem:[#allocation2 + $0x250] sm:$0xff] %vm5228, %v5062
        %5304 = vst.msk [vmem:[#allocation2 + $0x258] sm:$0xff] %vm5228, %v5063
        %5305 = vst.msk [vmem:[#allocation2 + $0x260] sm:$0xff] %vm5228, %v5064
        %5306 = vst.msk [vmem:[#allocation2 + $0x268] sm:$0xff] %vm5228, %v5065
        %5307 = vst.msk [vmem:[#allocation2 + $0x270] sm:$0xff] %vm5228, %v5066
        %5308 = vst.msk [vmem:[#allocation2 + $0x278] sm:$0xff] %vm5228, %v5067
        %5309 = vst.msk [vmem:[#allocation2 + $0x280] sm:$0xff] %vm5228, %v5068
        %5310 = vst.msk [vmem:[#allocation2 + $0x288] sm:$0xff] %vm5228, %v5069
        %5311 = vst.msk [vmem:[#allocation2 + $0x290] sm:$0xff] %vm5228, %v5070
        %5312 = vst.msk [vmem:[#allocation2 + $0x298] sm:$0xff] %vm5228, %v5071
        %5313 = vst.msk [vmem:[#allocation2 + $0x2a0] sm:$0xff] %vm5228, %v5072
        %5314 = vst.msk [vmem:[#allocation2 + $0x2a8] sm:$0xff] %vm5228, %v5073
        %5315 = vst.msk [vmem:[#allocation2 + $0x2b0] sm:$0xff] %vm5228, %v5074
        %5316 = vst.msk [vmem:[#allocation2 + $0x2b8] sm:$0xff] %vm5228, %v5075
        %5317 = vst.msk [vmem:[#allocation2 + $0x2c0] sm:$0xff] %vm5228, %v5076
        %5318 = vst.msk [vmem:[#allocation2 + $0x2c8] sm:$0xff] %vm5228, %v5077
        %5319 = vst.msk [vmem:[#allocation2 + $0x2d0] sm:$0xff] %vm5228, %v5078
        %5320 = vst.msk [vmem:[#allocation2 + $0x2d8] sm:$0xff] %vm5228, %v5079
        %5321 = vst.msk [vmem:[#allocation2 + $0x2e0] sm:$0xff] %vm5228, %v5080
        %5322 = vst.msk [vmem:[#allocation2 + $0x2e8] sm:$0xff] %vm5228, %v5081
        %5323 = vst.msk [vmem:[#allocation2 + $0x2f0] sm:$0xff] %vm5228, %v5082
        %5324 = vst.msk [vmem:[#allocation2 + $0x2f8] sm:$0xff] %vm5228, %v5083
        %5325 = vst.msk [vmem:[#allocation2 + $0x300] sm:$0xff] %vm5228, %v5084
        %5326 = vst.msk [vmem:[#allocation2 + $0x308] sm:$0xff] %vm5228, %v5085
        %5327 = vst.msk [vmem:[#allocation2 + $0x310] sm:$0xff] %vm5228, %v5086
        %5328 = vst.msk [vmem:[#allocation2 + $0x318] sm:$0xff] %vm5228, %v5087
        %5329 = vst.msk [vmem:[#allocation2 + $0x320] sm:$0xff] %vm5228, %v5088
        %5330 = vst.msk [vmem:[#allocation2 + $0x328] sm:$0xff] %vm5228, %v5089
        %5331 = vst.msk [vmem:[#allocation2 + $0x330] sm:$0xff] %vm5228, %v5090
        %5332 = vst.msk [vmem:[#allocation2 + $0x338] sm:$0xff] %vm5228, %v5091
        %5333 = vst.msk [vmem:[#allocation2 + $0x340] sm:$0xff] %vm5228, %v5092
        %5334 = vst.msk [vmem:[#allocation2 + $0x348] sm:$0xff] %vm5228, %v5093
        %5335 = vst.msk [vmem:[#allocation2 + $0x350] sm:$0xff] %vm5228, %v5094
        %5336 = vst.msk [vmem:[#allocation2 + $0x358] sm:$0xff] %vm5228, %v5095
        %5337 = vst.msk [vmem:[#allocation2 + $0x360] sm:$0xff] %vm5228, %v5096
        %5338 = vst.msk [vmem:[#allocation2 + $0x368] sm:$0xff] %vm5228, %v5097
        %5339 = vst.msk [vmem:[#allocation2 + $0x370] sm:$0xff] %vm5228, %v5098
        %5340 = vst.msk [vmem:[#allocation2 + $0x378] sm:$0xff] %vm5228, %v5099
        %5341 = vst.msk [vmem:[#allocation2 + $0x380] sm:$0xff] %vm5228, %v5100
        %5342 = vst.msk [vmem:[#allocation2 + $0x388] sm:$0xff] %vm5228, %v5101
        %5343 = vst.msk [vmem:[#allocation2 + $0x390] sm:$0xff] %vm5228, %v5102
        %5344 = vst.msk [vmem:[#allocation2 + $0x398] sm:$0xff] %vm5228, %v5103
        %5345 = vst.msk [vmem:[#allocation2 + $0x3a0] sm:$0xff] %vm5228, %v5104
        %5346 = vst.msk [vmem:[#allocation2 + $0x3a8] sm:$0xff] %vm5228, %v5105
        %5347 = vst.msk [vmem:[#allocation2 + $0x3b0] sm:$0xff] %vm5228, %v5106
        %5348 = vst.msk [vmem:[#allocation2 + $0x3b8] sm:$0xff] %vm5228, %v5107
        %5349 = vst.msk [vmem:[#allocation2 + $0x3c0] sm:$0xff] %vm5228, %v5108
        %5350 = vst.msk [vmem:[#allocation2 + $0x3c8] sm:$0xff] %vm5228, %v5109
        %5351 = vst.msk [vmem:[#allocation2 + $0x3d0] sm:$0xff] %vm5228, %v5110
        %5352 = vst.msk [vmem:[#allocation2 + $0x3d8] sm:$0xff] %vm5228, %v5111
        %5353 = vst.msk [vmem:[#allocation2 + $0x3e0] sm:$0xff] %vm5228, %v5112
        %5354 = vst.msk [vmem:[#allocation2 + $0x3e8] sm:$0xff] %vm5228, %v5113
        %5355 = vst.msk [vmem:[#allocation2 + $0x3f0] sm:$0xff] %vm5228, %v5114
        %5356 = vst.msk [vmem:[#allocation2 + $0x3f8] sm:$0xff] %vm5228, %v5115
        %5357 = vst.msk [vmem:[#allocation2 + $0x400] sm:$0xff] %vm5228, %v5116
        %5358 = vst.msk [vmem:[#allocation2 + $0x408] sm:$0xff] %vm5228, %v5117
        %5359 = vst.msk [vmem:[#allocation2 + $0x410] sm:$0xff] %vm5228, %v5118
        %5360 = vst.msk [vmem:[#allocation2 + $0x418] sm:$0xff] %vm5228, %v5119
        %5361 = vst.msk [vmem:[#allocation2 + $0x420] sm:$0xff] %vm5228, %v5120
        %5362 = vst.msk [vmem:[#allocation2 + $0x428] sm:$0xff] %vm5228, %v5121
        %5363 = vst.msk [vmem:[#allocation2 + $0x430] sm:$0xff] %vm5228, %v5122
        %5364 = vst.msk [vmem:[#allocation2 + $0x438] sm:$0xff] %vm5228, %v5123
        %5365 = vst.msk [vmem:[#allocation2 + $0x440] sm:$0xff] %vm5228, %v5124
        %5366 = vst.msk [vmem:[#allocation2 + $0x448] sm:$0xff] %vm5228, %v5125
        %5367 = vst.msk [vmem:[#allocation2 + $0x450] sm:$0xff] %vm5228, %v5126
        %5368 = vst.msk [vmem:[#allocation2 + $0x458] sm:$0xff] %vm5228, %v5127
        %5369 = vst.msk [vmem:[#allocation2 + $0x460] sm:$0xff] %vm5228, %v5128
        %5370 = vst.msk [vmem:[#allocation2 + $0x468] sm:$0xff] %vm5228, %v5129
        %5371 = vst.msk [vmem:[#allocation2 + $0x470] sm:$0xff] %vm5228, %v5130
        %5372 = vst.msk [vmem:[#allocation2 + $0x478] sm:$0xff] %vm5228, %v5131
        %5373 = vst.msk [vmem:[#allocation2 + $0x480] sm:$0xff] %vm5228, %v5132
        %5374 = vst.msk [vmem:[#allocation2 + $0x488] sm:$0xff] %vm5228, %v5133
        %5375 = vst.msk [vmem:[#allocation2 + $0x490] sm:$0xff] %vm5228, %v5134
        %5376 = vst.msk [vmem:[#allocation2 + $0x498] sm:$0xff] %vm5228, %v5135
        %5377 = vst.msk [vmem:[#allocation2 + $0x4a0] sm:$0xff] %vm5228, %v5136
        %5378 = vst.msk [vmem:[#allocation2 + $0x4a8] sm:$0xff] %vm5228, %v5137
        %5379 = vst.msk [vmem:[#allocation2 + $0x4b0] sm:$0xff] %vm5228, %v5138
        %5380 = vst.msk [vmem:[#allocation2 + $0x4b8] sm:$0xff] %vm5228, %v5139
        %5381 = vst.msk [vmem:[#allocation2 + $0x4c0] sm:$0xff] %vm5228, %v5140
        %5382 = vst.msk [vmem:[#allocation2 + $0x4c8] sm:$0xff] %vm5228, %v5141
        %5383 = vst.msk [vmem:[#allocation2 + $0x4d0] sm:$0xff] %vm5228, %v5142
        %5384 = vst.msk [vmem:[#allocation2 + $0x4d8] sm:$0xff] %vm5228, %v5143
        %5385 = vst.msk [vmem:[#allocation2 + $0x4e0] sm:$0xff] %vm5228, %v5144
        %5386 = vst.msk [vmem:[#allocation2 + $0x4e8] sm:$0xff] %vm5228, %v5145
        %5387 = vst.msk [vmem:[#allocation2 + $0x4f0] sm:$0xff] %vm5228, %v5146
        %5388 = vst.msk [vmem:[#allocation2 + $0x4f8] sm:$0xff] %vm5228, %v5147
        %5389 = vst.msk [vmem:[#allocation2 + $0x500] sm:$0xff] %vm5228, %v5148
        %5390 = vst.msk [vmem:[#allocation2 + $0x508] sm:$0xff] %vm5228, %v5149
        %5391 = vst.msk [vmem:[#allocation2 + $0x510] sm:$0xff] %vm5228, %v5150
        %5392 = vst.msk [vmem:[#allocation2 + $0x518] sm:$0xff] %vm5228, %v5151
        %5393 = vst.msk [vmem:[#allocation2 + $0x520] sm:$0xff] %vm5228, %v5152
        %5394 = vst.msk [vmem:[#allocation2 + $0x528] sm:$0xff] %vm5228, %v5153
        %5395 = vst.msk [vmem:[#allocation2 + $0x530] sm:$0xff] %vm5228, %v5154
        %5396 = vst.msk [vmem:[#allocation2 + $0x538] sm:$0xff] %vm5228, %v5155
        %5397 = vst.msk [vmem:[#allocation2 + $0x540] sm:$0xff] %vm5228, %v5156
        %5398 = vst.msk [vmem:[#allocation2 + $0x548] sm:$0xff] %vm5228, %v5157
        %5399 = vst.msk [vmem:[#allocation2 + $0x550] sm:$0xff] %vm5228, %v5158
        %5400 = vst.msk [vmem:[#allocation2 + $0x558] sm:$0xff] %vm5228, %v5159
        %5401 = vst.msk [vmem:[#allocation2 + $0x560] sm:$0xff] %vm5228, %v5160
        %5402 = vst.msk [vmem:[#allocation2 + $0x568] sm:$0xff] %vm5228, %v5161
        %5403 = vst.msk [vmem:[#allocation2 + $0x570] sm:$0xff] %vm5228, %v5162
        %5404 = vst.msk [vmem:[#allocation2 + $0x578] sm:$0xff] %vm5228, %v5163
        %5405 = vst.msk [vmem:[#allocation2 + $0x580] sm:$0xff] %vm5228, %v5164
        %5406 = vst.msk [vmem:[#allocation2 + $0x588] sm:$0xff] %vm5228, %v5165
        %5407 = vst.msk [vmem:[#allocation2 + $0x590] sm:$0xff] %vm5228, %v5166
        %5408 = vst.msk [vmem:[#allocation2 + $0x598] sm:$0xff] %vm5228, %v5167
        %5409 = vst.msk [vmem:[#allocation2 + $0x5a0] sm:$0xff] %vm5228, %v5168
        %5410 = vst.msk [vmem:[#allocation2 + $0x5a8] sm:$0xff] %vm5228, %v5169
        %5411 = vst.msk [vmem:[#allocation2 + $0x5b0] sm:$0xff] %vm5228, %v5170
        %5412 = vst.msk [vmem:[#allocation2 + $0x5b8] sm:$0xff] %vm5228, %v5171
        %5413 = vst.msk [vmem:[#allocation2 + $0x5c0] sm:$0xff] %vm5228, %v5172
        %5414 = vst.msk [vmem:[#allocation2 + $0x5c8] sm:$0xff] %vm5228, %v5173
        %5415 = vst.msk [vmem:[#allocation2 + $0x5d0] sm:$0xff] %vm5228, %v5174
        %5416 = vst.msk [vmem:[#allocation2 + $0x5d8] sm:$0xff] %vm5228, %v5175
        %5417 = vst.msk [vmem:[#allocation2 + $0x5e0] sm:$0xff] %vm5228, %v5176
        %5418 = vst.msk [vmem:[#allocation2 + $0x5e8] sm:$0xff] %vm5228, %v5177
        %5419 = vst.msk [vmem:[#allocation2 + $0x5f0] sm:$0xff] %vm5228, %v5178
        %5420 = vst.msk [vmem:[#allocation2 + $0x5f8] sm:$0xff] %vm5228, %v5179
        %5421 = vst.msk [vmem:[#allocation2 + $0x600] sm:$0xff] %vm5228, %v5180
        %5422 = vst.msk [vmem:[#allocation2 + $0x608] sm:$0xff] %vm5228, %v5181
        %5423 = vst.msk [vmem:[#allocation2 + $0x610] sm:$0xff] %vm5228, %v5182
        %5424 = vst.msk [vmem:[#allocation2 + $0x618] sm:$0xff] %vm5228, %v5183
        %5425 = vst.msk [vmem:[#allocation2 + $0x620] sm:$0xff] %vm5228, %v5184
        %5426 = vst.msk [vmem:[#allocation2 + $0x628] sm:$0xff] %vm5228, %v5185
        %5427 = vst.msk [vmem:[#allocation2 + $0x630] sm:$0xff] %vm5228, %v5186
        %5428 = vst.msk [vmem:[#allocation2 + $0x638] sm:$0xff] %vm5228, %v5187
        %5429 = vst.msk [vmem:[#allocation2 + $0x640] sm:$0xff] %vm5228, %v5188
        %5430 = vst.msk [vmem:[#allocation2 + $0x648] sm:$0xff] %vm5228, %v5189
        %5431 = vst.msk [vmem:[#allocation2 + $0x650] sm:$0xff] %vm5228, %v5190
        %5432 = vst.msk [vmem:[#allocation2 + $0x658] sm:$0xff] %vm5228, %v5191
        %5433 = vst.msk [vmem:[#allocation2 + $0x660] sm:$0xff] %vm5228, %v5192
        %5434 = vst.msk [vmem:[#allocation2 + $0x668] sm:$0xff] %vm5228, %v5193
        %5435 = vst.msk [vmem:[#allocation2 + $0x670] sm:$0xff] %vm5228, %v5194
        %5436 = vst.msk [vmem:[#allocation2 + $0x678] sm:$0xff] %vm5228, %v5195
        %5437 = vst.msk [vmem:[#allocation2 + $0x680] sm:$0xff] %vm5228, %v5196
        %5438 = vst.msk [vmem:[#allocation2 + $0x688] sm:$0xff] %vm5228, %v5197
        %5439 = vst.msk [vmem:[#allocation2 + $0x690] sm:$0xff] %vm5228, %v5198
        %5440 = vst.msk [vmem:[#allocation2 + $0x698] sm:$0xff] %vm5228, %v5199
        %5441 = vst.msk [vmem:[#allocation2 + $0x6a0] sm:$0xff] %vm5228, %v5200
        %5442 = vst.msk [vmem:[#allocation2 + $0x6a8] sm:$0xff] %vm5228, %v5201
        %5443 = vst.msk [vmem:[#allocation2 + $0x6b0] sm:$0xff] %vm5228, %v5202
        %5444 = vst.msk [vmem:[#allocation2 + $0x6b8] sm:$0xff] %vm5228, %v5203
        %5445 = vst.msk [vmem:[#allocation2 + $0x6c0] sm:$0xff] %vm5228, %v5204
        %5446 = vst.msk [vmem:[#allocation2 + $0x6c8] sm:$0xff] %vm5228, %v5205
        %5447 = vst.msk [vmem:[#allocation2 + $0x6d0] sm:$0xff] %vm5228, %v5206
        %5448 = vst.msk [vmem:[#allocation2 + $0x6d8] sm:$0xff] %vm5228, %v5207
        %5449 = vst.msk [vmem:[#allocation2 + $0x6e0] sm:$0xff] %vm5228, %v5208
        %5450 = vst.msk [vmem:[#allocation2 + $0x6e8] sm:$0xff] %vm5228, %v5209
        %5451 = vst.msk [vmem:[#allocation2 + $0x6f0] sm:$0xff] %vm5228, %v5210
        %5452 = vst.msk [vmem:[#allocation2 + $0x6f8] sm:$0xff] %vm5228, %v5211
        %5453 = vst.msk [vmem:[#allocation2 + $0x700] sm:$0xff] %vm5228, %v5212
        %5454 = vst.msk [vmem:[#allocation2 + $0x708] sm:$0xff] %vm5228, %v5213
        %5455 = vst.msk [vmem:[#allocation2 + $0x710] sm:$0xff] %vm5228, %v5214
        %5456 = vst.msk [vmem:[#allocation2 + $0x718] sm:$0xff] %vm5228, %v5215
        %5457 = vst.msk [vmem:[#allocation2 + $0x720] sm:$0xff] %vm5228, %v5216
        %5458 = vst.msk [vmem:[#allocation2 + $0x728] sm:$0xff] %vm5228, %v5217
        %5459 = vst.msk [vmem:[#allocation2 + $0x730] sm:$0xff] %vm5228, %v5218
        %5460 = vst.msk [vmem:[#allocation2 + $0x738] sm:$0xff] %vm5228, %v5219
        %5461 = vst.msk [vmem:[#allocation2 + $0x740] sm:$0xff] %vm5228, %v5220
        %5462 = vst.msk [vmem:[#allocation2 + $0x748] sm:$0xff] %vm5228, %v5221
        %5463 = vst.msk [vmem:[#allocation2 + $0x750] sm:$0xff] %vm5228, %v5222
        %5464 = vst.msk [vmem:[#allocation2 + $0x758] sm:$0xff] %vm5228, %v5223
        %5465 = vst.msk [vmem:[#allocation2 + $0x760] sm:$0xff] %vm5228, %v5224
        %5466 = vst.msk [vmem:[#allocation2 + $0x768] sm:$0xff] %vm5228, %v5225
        %5467 = vst.msk [vmem:[#allocation2 + $0x770] sm:$0xff] %vm5228, %v5226
        %5468 = vst.msk [vmem:[#allocation2 + $0x778] sm:$0xff] %vm5228, %v5227
        // Predicated region
        $region53: #{_lambda_.5} parent=39 // pred_check
          %p5469 = pneg %p280
        $region54: #{_lambda_.5} parent=39 // pred_check_branch
          %5471 = sbr.rel (%p5469) target = $region56
        $region55: #{_lambda_.5} parent=39 // pred_region
          %v5472 = vld [vmem:[#allocation2] sm:$0xff]
          %v5473 = vld [vmem:[#allocation2 + $0x8] sm:$0xff]
          %v5474 = vld [vmem:[#allocation2 + $0x10] sm:$0xff]
          %v5475 = vld [vmem:[#allocation2 + $0x18] sm:$0xff]
          %v5476 = vld [vmem:[#allocation2 + $0x20] sm:$0xff]
          %v5477 = vld [vmem:[#allocation2 + $0x28] sm:$0xff]
          %v5478 = vld [vmem:[#allocation2 + $0x30] sm:$0xff]
          %v5479 = vld [vmem:[#allocation2 + $0x38] sm:$0xff]
          %v5480 = vld [vmem:[#allocation2 + $0x40] sm:$0xff]
          %v5481 = vld [vmem:[#allocation2 + $0x48] sm:$0xff]
          %v5482 = vld [vmem:[#allocation2 + $0x50] sm:$0xff]
          %v5483 = vld [vmem:[#allocation2 + $0x58] sm:$0xff]
          %v5484 = vld [vmem:[#allocation2 + $0x60] sm:$0xff]
          %v5485 = vld [vmem:[#allocation2 + $0x68] sm:$0xff]
          %v5486 = vld [vmem:[#allocation2 + $0x70] sm:$0xff]
          %v5487 = vld [vmem:[#allocation2 + $0x78] sm:$0xff]
          %v5488 = vld [vmem:[#allocation2 + $0x80] sm:$0xff]
          %v5489 = vld [vmem:[#allocation2 + $0x88] sm:$0xff]
          %v5490 = vld [vmem:[#allocation2 + $0x90] sm:$0xff]
          %v5491 = vld [vmem:[#allocation2 + $0x98] sm:$0xff]
          %v5492 = vld [vmem:[#allocation2 + $0xa0] sm:$0xff]
          %v5493 = vld [vmem:[#allocation2 + $0xa8] sm:$0xff]
          %v5494 = vld [vmem:[#allocation2 + $0xb0] sm:$0xff]
          %v5495 = vld [vmem:[#allocation2 + $0xb8] sm:$0xff]
          %v5496 = vld [vmem:[#allocation2 + $0xc0] sm:$0xff]
          %v5497 = vld [vmem:[#allocation2 + $0xc8] sm:$0xff]
          %v5498 = vld [vmem:[#allocation2 + $0xd0] sm:$0xff]
          %v5499 = vld [vmem:[#allocation2 + $0xd8] sm:$0xff]
          %v5500 = vld [vmem:[#allocation2 + $0xe0] sm:$0xff]
          %v5501 = vld [vmem:[#allocation2 + $0xe8] sm:$0xff]
          %v5502 = vld [vmem:[#allocation2 + $0xf0] sm:$0xff]
          %v5503 = vld [vmem:[#allocation2 + $0xf8] sm:$0xff]
          %v5504 = vld [vmem:[#allocation2 + $0x100] sm:$0xff]
          %v5505 = vld [vmem:[#allocation2 + $0x108] sm:$0xff]
          %v5506 = vld [vmem:[#allocation2 + $0x110] sm:$0xff]
          %v5507 = vld [vmem:[#allocation2 + $0x118] sm:$0xff]
          %v5508 = vld [vmem:[#allocation2 + $0x120] sm:$0xff]
          %v5509 = vld [vmem:[#allocation2 + $0x128] sm:$0xff]
          %v5510 = vld [vmem:[#allocation2 + $0x130] sm:$0xff]
          %v5511 = vld [vmem:[#allocation2 + $0x138] sm:$0xff]
          %v5512 = vld [vmem:[#allocation2 + $0x140] sm:$0xff]
          %v5513 = vld [vmem:[#allocation2 + $0x148] sm:$0xff]
          %v5514 = vld [vmem:[#allocation2 + $0x150] sm:$0xff]
          %v5515 = vld [vmem:[#allocation2 + $0x158] sm:$0xff]
          %v5516 = vld [vmem:[#allocation2 + $0x160] sm:$0xff]
          %v5517 = vld [vmem:[#allocation2 + $0x168] sm:$0xff]
          %v5518 = vld [vmem:[#allocation2 + $0x170] sm:$0xff]
          %v5519 = vld [vmem:[#allocation2 + $0x178] sm:$0xff]
          %v5520 = vld [vmem:[#allocation2 + $0x180] sm:$0xff]
          %v5521 = vld [vmem:[#allocation2 + $0x188] sm:$0xff]
          %v5522 = vld [vmem:[#allocation2 + $0x190] sm:$0xff]
          %v5523 = vld [vmem:[#allocation2 + $0x198] sm:$0xff]
          %v5524 = vld [vmem:[#allocation2 + $0x1a0] sm:$0xff]
          %v5525 = vld [vmem:[#allocation2 + $0x1a8] sm:$0xff]
          %v5526 = vld [vmem:[#allocation2 + $0x1b0] sm:$0xff]
          %v5527 = vld [vmem:[#allocation2 + $0x1b8] sm:$0xff]
          %v5528 = vld [vmem:[#allocation2 + $0x1c0] sm:$0xff]
          %v5529 = vld [vmem:[#allocation2 + $0x1c8] sm:$0xff]
          %v5530 = vld [vmem:[#allocation2 + $0x1d0] sm:$0xff]
          %v5531 = vld [vmem:[#allocation2 + $0x1d8] sm:$0xff]
          %v5532 = vld [vmem:[#allocation2 + $0x1e0] sm:$0xff]
          %v5533 = vld [vmem:[#allocation2 + $0x1e8] sm:$0xff]
          %v5534 = vld [vmem:[#allocation2 + $0x1f0] sm:$0xff]
          %v5535 = vld [vmem:[#allocation2 + $0x1f8] sm:$0xff]
          %v5536 = vld [vmem:[#allocation2 + $0x200] sm:$0xff]
          %v5537 = vld [vmem:[#allocation2 + $0x208] sm:$0xff]
          %v5538 = vld [vmem:[#allocation2 + $0x210] sm:$0xff]
          %v5539 = vld [vmem:[#allocation2 + $0x218] sm:$0xff]
          %v5540 = vld [vmem:[#allocation2 + $0x220] sm:$0xff]
          %v5541 = vld [vmem:[#allocation2 + $0x228] sm:$0xff]
          %v5542 = vld [vmem:[#allocation2 + $0x230] sm:$0xff]
          %v5543 = vld [vmem:[#allocation2 + $0x238] sm:$0xff]
          %v5544 = vld [vmem:[#allocation2 + $0x240] sm:$0xff]
          %v5545 = vld [vmem:[#allocation2 + $0x248] sm:$0xff]
          %v5546 = vld [vmem:[#allocation2 + $0x250] sm:$0xff]
          %v5547 = vld [vmem:[#allocation2 + $0x258] sm:$0xff]
          %v5548 = vld [vmem:[#allocation2 + $0x260] sm:$0xff]
          %v5549 = vld [vmem:[#allocation2 + $0x268] sm:$0xff]
          %v5550 = vld [vmem:[#allocation2 + $0x270] sm:$0xff]
          %v5551 = vld [vmem:[#allocation2 + $0x278] sm:$0xff]
          %v5552 = vld [vmem:[#allocation2 + $0x280] sm:$0xff]
          %v5553 = vld [vmem:[#allocation2 + $0x288] sm:$0xff]
          %v5554 = vld [vmem:[#allocation2 + $0x290] sm:$0xff]
          %v5555 = vld [vmem:[#allocation2 + $0x298] sm:$0xff]
          %v5556 = vld [vmem:[#allocation2 + $0x2a0] sm:$0xff]
          %v5557 = vld [vmem:[#allocation2 + $0x2a8] sm:$0xff]
          %v5558 = vld [vmem:[#allocation2 + $0x2b0] sm:$0xff]
          %v5559 = vld [vmem:[#allocation2 + $0x2b8] sm:$0xff]
          %v5560 = vld [vmem:[#allocation2 + $0x2c0] sm:$0xff]
          %v5561 = vld [vmem:[#allocation2 + $0x2c8] sm:$0xff]
          %v5562 = vld [vmem:[#allocation2 + $0x2d0] sm:$0xff]
          %v5563 = vld [vmem:[#allocation2 + $0x2d8] sm:$0xff]
          %v5564 = vld [vmem:[#allocation2 + $0x2e0] sm:$0xff]
          %v5565 = vld [vmem:[#allocation2 + $0x2e8] sm:$0xff]
          %v5566 = vld [vmem:[#allocation2 + $0x2f0] sm:$0xff]
          %v5567 = vld [vmem:[#allocation2 + $0x2f8] sm:$0xff]
          %v5568 = vld [vmem:[#allocation2 + $0x300] sm:$0xff]
          %v5569 = vld [vmem:[#allocation2 + $0x308] sm:$0xff]
          %v5570 = vld [vmem:[#allocation2 + $0x310] sm:$0xff]
          %v5571 = vld [vmem:[#allocation2 + $0x318] sm:$0xff]
          %v5572 = vld [vmem:[#allocation2 + $0x320] sm:$0xff]
          %v5573 = vld [vmem:[#allocation2 + $0x328] sm:$0xff]
          %v5574 = vld [vmem:[#allocation2 + $0x330] sm:$0xff]
          %v5575 = vld [vmem:[#allocation2 + $0x338] sm:$0xff]
          %v5576 = vld [vmem:[#allocation2 + $0x340] sm:$0xff]
          %v5577 = vld [vmem:[#allocation2 + $0x348] sm:$0xff]
          %v5578 = vld [vmem:[#allocation2 + $0x350] sm:$0xff]
          %v5579 = vld [vmem:[#allocation2 + $0x358] sm:$0xff]
          %v5580 = vld [vmem:[#allocation2 + $0x360] sm:$0xff]
          %v5581 = vld [vmem:[#allocation2 + $0x368] sm:$0xff]
          %v5582 = vld [vmem:[#allocation2 + $0x370] sm:$0xff]
          %v5583 = vld [vmem:[#allocation2 + $0x378] sm:$0xff]
          %v5584 = vld [vmem:[#allocation2 + $0x380] sm:$0xff]
          %v5585 = vld [vmem:[#allocation2 + $0x388] sm:$0xff]
          %v5586 = vld [vmem:[#allocation2 + $0x390] sm:$0xff]
          %v5587 = vld [vmem:[#allocation2 + $0x398] sm:$0xff]
          %v5588 = vld [vmem:[#allocation2 + $0x3a0] sm:$0xff]
          %v5589 = vld [vmem:[#allocation2 + $0x3a8] sm:$0xff]
          %v5590 = vld [vmem:[#allocation2 + $0x3b0] sm:$0xff]
          %v5591 = vld [vmem:[#allocation2 + $0x3b8] sm:$0xff]
          %v5592 = vld [vmem:[#allocation2 + $0x3c0] sm:$0xff]
          %v5593 = vld [vmem:[#allocation2 + $0x3c8] sm:$0xff]
          %v5594 = vld [vmem:[#allocation2 + $0x3d0] sm:$0xff]
          %v5595 = vld [vmem:[#allocation2 + $0x3d8] sm:$0xff]
          %v5596 = vld [vmem:[#allocation2 + $0x3e0] sm:$0xff]
          %v5597 = vld [vmem:[#allocation2 + $0x3e8] sm:$0xff]
          %v5598 = vld [vmem:[#allocation2 + $0x3f0] sm:$0xff]
          %v5599 = vld [vmem:[#allocation2 + $0x3f8] sm:$0xff]
          %v5600 = vld [vmem:[#allocation2 + $0x400] sm:$0xff]
          %v5601 = vld [vmem:[#allocation2 + $0x408] sm:$0xff]
          %v5602 = vld [vmem:[#allocation2 + $0x410] sm:$0xff]
          %v5603 = vld [vmem:[#allocation2 + $0x418] sm:$0xff]
          %v5604 = vld [vmem:[#allocation2 + $0x420] sm:$0xff]
          %v5605 = vld [vmem:[#allocation2 + $0x428] sm:$0xff]
          %v5606 = vld [vmem:[#allocation2 + $0x430] sm:$0xff]
          %v5607 = vld [vmem:[#allocation2 + $0x438] sm:$0xff]
          %v5608 = vld [vmem:[#allocation2 + $0x440] sm:$0xff]
          %v5609 = vld [vmem:[#allocation2 + $0x448] sm:$0xff]
          %v5610 = vld [vmem:[#allocation2 + $0x450] sm:$0xff]
          %v5611 = vld [vmem:[#allocation2 + $0x458] sm:$0xff]
          %v5612 = vld [vmem:[#allocation2 + $0x460] sm:$0xff]
          %v5613 = vld [vmem:[#allocation2 + $0x468] sm:$0xff]
          %v5614 = vld [vmem:[#allocation2 + $0x470] sm:$0xff]
          %v5615 = vld [vmem:[#allocation2 + $0x478] sm:$0xff]
          %v5616 = vld [vmem:[#allocation2 + $0x480] sm:$0xff]
          %v5617 = vld [vmem:[#allocation2 + $0x488] sm:$0xff]
          %v5618 = vld [vmem:[#allocation2 + $0x490] sm:$0xff]
          %v5619 = vld [vmem:[#allocation2 + $0x498] sm:$0xff]
          %v5620 = vld [vmem:[#allocation2 + $0x4a0] sm:$0xff]
          %v5621 = vld [vmem:[#allocation2 + $0x4a8] sm:$0xff]
          %v5622 = vld [vmem:[#allocation2 + $0x4b0] sm:$0xff]
          %v5623 = vld [vmem:[#allocation2 + $0x4b8] sm:$0xff]
          %v5624 = vld [vmem:[#allocation2 + $0x4c0] sm:$0xff]
          %v5625 = vld [vmem:[#allocation2 + $0x4c8] sm:$0xff]
          %v5626 = vld [vmem:[#allocation2 + $0x4d0] sm:$0xff]
          %v5627 = vld [vmem:[#allocation2 + $0x4d8] sm:$0xff]
          %v5628 = vld [vmem:[#allocation2 + $0x4e0] sm:$0xff]
          %v5629 = vld [vmem:[#allocation2 + $0x4e8] sm:$0xff]
          %v5630 = vld [vmem:[#allocation2 + $0x4f0] sm:$0xff]
          %v5631 = vld [vmem:[#allocation2 + $0x4f8] sm:$0xff]
          %v5632 = vld [vmem:[#allocation2 + $0x500] sm:$0xff]
          %v5633 = vld [vmem:[#allocation2 + $0x508] sm:$0xff]
          %v5634 = vld [vmem:[#allocation2 + $0x510] sm:$0xff]
          %v5635 = vld [vmem:[#allocation2 + $0x518] sm:$0xff]
          %v5636 = vld [vmem:[#allocation2 + $0x520] sm:$0xff]
          %v5637 = vld [vmem:[#allocation2 + $0x528] sm:$0xff]
          %v5638 = vld [vmem:[#allocation2 + $0x530] sm:$0xff]
          %v5639 = vld [vmem:[#allocation2 + $0x538] sm:$0xff]
          %v5640 = vld [vmem:[#allocation2 + $0x540] sm:$0xff]
          %v5641 = vld [vmem:[#allocation2 + $0x548] sm:$0xff]
          %v5642 = vld [vmem:[#allocation2 + $0x550] sm:$0xff]
          %v5643 = vld [vmem:[#allocation2 + $0x558] sm:$0xff]
          %v5644 = vld [vmem:[#allocation2 + $0x560] sm:$0xff]
          %v5645 = vld [vmem:[#allocation2 + $0x568] sm:$0xff]
          %v5646 = vld [vmem:[#allocation2 + $0x570] sm:$0xff]
          %v5647 = vld [vmem:[#allocation2 + $0x578] sm:$0xff]
          %v5648 = vld [vmem:[#allocation2 + $0x580] sm:$0xff]
          %v5649 = vld [vmem:[#allocation2 + $0x588] sm:$0xff]
          %v5650 = vld [vmem:[#allocation2 + $0x590] sm:$0xff]
          %v5651 = vld [vmem:[#allocation2 + $0x598] sm:$0xff]
          %v5652 = vld [vmem:[#allocation2 + $0x5a0] sm:$0xff]
          %v5653 = vld [vmem:[#allocation2 + $0x5a8] sm:$0xff]
          %v5654 = vld [vmem:[#allocation2 + $0x5b0] sm:$0xff]
          %v5655 = vld [vmem:[#allocation2 + $0x5b8] sm:$0xff]
          %v5656 = vld [vmem:[#allocation2 + $0x5c0] sm:$0xff]
          %v5657 = vld [vmem:[#allocation2 + $0x5c8] sm:$0xff]
          %v5658 = vld [vmem:[#allocation2 + $0x5d0] sm:$0xff]
          %v5659 = vld [vmem:[#allocation2 + $0x5d8] sm:$0xff]
          %v5660 = vld [vmem:[#allocation2 + $0x5e0] sm:$0xff]
          %v5661 = vld [vmem:[#allocation2 + $0x5e8] sm:$0xff]
          %v5662 = vld [vmem:[#allocation2 + $0x5f0] sm:$0xff]
          %v5663 = vld [vmem:[#allocation2 + $0x5f8] sm:$0xff]
          %v5664 = vld [vmem:[#allocation2 + $0x600] sm:$0xff]
          %v5665 = vld [vmem:[#allocation2 + $0x608] sm:$0xff]
          %v5666 = vld [vmem:[#allocation2 + $0x610] sm:$0xff]
          %v5667 = vld [vmem:[#allocation2 + $0x618] sm:$0xff]
          %v5668 = vld [vmem:[#allocation2 + $0x620] sm:$0xff]
          %v5669 = vld [vmem:[#allocation2 + $0x628] sm:$0xff]
          %v5670 = vld [vmem:[#allocation2 + $0x630] sm:$0xff]
          %v5671 = vld [vmem:[#allocation2 + $0x638] sm:$0xff]
          %v5672 = vld [vmem:[#allocation2 + $0x640] sm:$0xff]
          %v5673 = vld [vmem:[#allocation2 + $0x648] sm:$0xff]
          %v5674 = vld [vmem:[#allocation2 + $0x650] sm:$0xff]
          %v5675 = vld [vmem:[#allocation2 + $0x658] sm:$0xff]
          %v5676 = vld [vmem:[#allocation2 + $0x660] sm:$0xff]
          %v5677 = vld [vmem:[#allocation2 + $0x668] sm:$0xff]
          %v5678 = vld [vmem:[#allocation2 + $0x670] sm:$0xff]
          %v5679 = vld [vmem:[#allocation2 + $0x678] sm:$0xff]
          %v5680 = vld [vmem:[#allocation2 + $0x680] sm:$0xff]
          %v5681 = vld [vmem:[#allocation2 + $0x688] sm:$0xff]
          %v5682 = vld [vmem:[#allocation2 + $0x690] sm:$0xff]
          %v5683 = vld [vmem:[#allocation2 + $0x698] sm:$0xff]
          %v5684 = vld [vmem:[#allocation2 + $0x6a0] sm:$0xff]
          %v5685 = vld [vmem:[#allocation2 + $0x6a8] sm:$0xff]
          %v5686 = vld [vmem:[#allocation2 + $0x6b0] sm:$0xff]
          %v5687 = vld [vmem:[#allocation2 + $0x6b8] sm:$0xff]
          %v5688 = vld [vmem:[#allocation2 + $0x6c0] sm:$0xff]
          %v5689 = vld [vmem:[#allocation2 + $0x6c8] sm:$0xff]
          %v5690 = vld [vmem:[#allocation2 + $0x6d0] sm:$0xff]
          %v5691 = vld [vmem:[#allocation2 + $0x6d8] sm:$0xff]
          %v5692 = vld [vmem:[#allocation2 + $0x6e0] sm:$0xff]
          %v5693 = vld [vmem:[#allocation2 + $0x6e8] sm:$0xff]
          %v5694 = vld [vmem:[#allocation2 + $0x6f0] sm:$0xff]
          %v5695 = vld [vmem:[#allocation2 + $0x6f8] sm:$0xff]
          %v5696 = vld [vmem:[#allocation2 + $0x700] sm:$0xff]
          %v5697 = vld [vmem:[#allocation2 + $0x708] sm:$0xff]
          %v5698 = vld [vmem:[#allocation2 + $0x710] sm:$0xff]
          %v5699 = vld [vmem:[#allocation2 + $0x718] sm:$0xff]
          %v5700 = vld [vmem:[#allocation2 + $0x720] sm:$0xff]
          %v5701 = vld [vmem:[#allocation2 + $0x728] sm:$0xff]
          %v5702 = vld [vmem:[#allocation2 + $0x730] sm:$0xff]
          %v5703 = vld [vmem:[#allocation2 + $0x738] sm:$0xff]
          %v5704 = vld [vmem:[#allocation2 + $0x740] sm:$0xff]
          %v5705 = vld [vmem:[#allocation2 + $0x748] sm:$0xff]
          %v5706 = vld [vmem:[#allocation2 + $0x750] sm:$0xff]
          %v5707 = vld [vmem:[#allocation2 + $0x758] sm:$0xff]
          %v5708 = vld [vmem:[#allocation2 + $0x760] sm:$0xff]
          %v5709 = vld [vmem:[#allocation2 + $0x768] sm:$0xff]
          %v5710 = vld [vmem:[#allocation2 + $0x770] sm:$0xff]
          %v5711 = vld [vmem:[#allocation2 + $0x778] sm:$0xff]
          %v5712 = vmul.f32 %v5472, 0.0625
          %v5713 = vmul.f32 %v5473, 0.0625
          %v5714 = vmul.f32 %v5474, 0.0625
          %v5715 = vmul.f32 %v5475, 0.0625
          %v5716 = vmul.f32 %v5476, 0.0625
          %v5717 = vmul.f32 %v5477, 0.0625
          %v5718 = vmul.f32 %v5478, 0.0625
          %v5719 = vmul.f32 %v5479, 0.0625
          %v5720 = vmul.f32 %v5480, 0.0625
          %v5721 = vmul.f32 %v5481, 0.0625
          %v5722 = vmul.f32 %v5482, 0.0625
          %v5723 = vmul.f32 %v5483, 0.0625
          %v5724 = vmul.f32 %v5484, 0.0625
          %v5725 = vmul.f32 %v5485, 0.0625
          %v5726 = vmul.f32 %v5486, 0.0625
          %v5727 = vmul.f32 %v5487, 0.0625
          %v5728 = vmul.f32 %v5488, 0.0625
          %v5729 = vmul.f32 %v5489, 0.0625
          %v5730 = vmul.f32 %v5490, 0.0625
          %v5731 = vmul.f32 %v5491, 0.0625
          %v5732 = vmul.f32 %v5492, 0.0625
          %v5733 = vmul.f32 %v5493, 0.0625
          %v5734 = vmul.f32 %v5494, 0.0625
          %v5735 = vmul.f32 %v5495, 0.0625
          %v5736 = vmul.f32 %v5496, 0.0625
          %v5737 = vmul.f32 %v5497, 0.0625
          %v5738 = vmul.f32 %v5498, 0.0625
          %v5739 = vmul.f32 %v5499, 0.0625
          %v5740 = vmul.f32 %v5500, 0.0625
          %v5741 = vmul.f32 %v5501, 0.0625
          %v5742 = vmul.f32 %v5502, 0.0625
          %v5743 = vmul.f32 %v5503, 0.0625
          %v5744 = vmul.f32 %v5504, 0.0625
          %v5745 = vmul.f32 %v5505, 0.0625
          %v5746 = vmul.f32 %v5506, 0.0625
          %v5747 = vmul.f32 %v5507, 0.0625
          %v5748 = vmul.f32 %v5508, 0.0625
          %v5749 = vmul.f32 %v5509, 0.0625
          %v5750 = vmul.f32 %v5510, 0.0625
          %v5751 = vmul.f32 %v5511, 0.0625
          %v5752 = vmul.f32 %v5512, 0.0625
          %v5753 = vmul.f32 %v5513, 0.0625
          %v5754 = vmul.f32 %v5514, 0.0625
          %v5755 = vmul.f32 %v5515, 0.0625
          %v5756 = vmul.f32 %v5516, 0.0625
          %v5757 = vmul.f32 %v5517, 0.0625
          %v5758 = vmul.f32 %v5518, 0.0625
          %v5759 = vmul.f32 %v5519, 0.0625
          %v5760 = vmul.f32 %v5520, 0.0625
          %v5761 = vmul.f32 %v5521, 0.0625
          %v5762 = vmul.f32 %v5522, 0.0625
          %v5763 = vmul.f32 %v5523, 0.0625
          %v5764 = vmul.f32 %v5524, 0.0625
          %v5765 = vmul.f32 %v5525, 0.0625
          %v5766 = vmul.f32 %v5526, 0.0625
          %v5767 = vmul.f32 %v5527, 0.0625
          %v5768 = vmul.f32 %v5528, 0.0625
          %v5769 = vmul.f32 %v5529, 0.0625
          %v5770 = vmul.f32 %v5530, 0.0625
          %v5771 = vmul.f32 %v5531, 0.0625
          %v5772 = vmul.f32 %v5532, 0.0625
          %v5773 = vmul.f32 %v5533, 0.0625
          %v5774 = vmul.f32 %v5534, 0.0625
          %v5775 = vmul.f32 %v5535, 0.0625
          %v5776 = vmul.f32 %v5536, 0.0625
          %v5777 = vmul.f32 %v5537, 0.0625
          %v5778 = vmul.f32 %v5538, 0.0625
          %v5779 = vmul.f32 %v5539, 0.0625
          %v5780 = vmul.f32 %v5540, 0.0625
          %v5781 = vmul.f32 %v5541, 0.0625
          %v5782 = vmul.f32 %v5542, 0.0625
          %v5783 = vmul.f32 %v5543, 0.0625
          %v5784 = vmul.f32 %v5544, 0.0625
          %v5785 = vmul.f32 %v5545, 0.0625
          %v5786 = vmul.f32 %v5546, 0.0625
          %v5787 = vmul.f32 %v5547, 0.0625
          %v5788 = vmul.f32 %v5548, 0.0625
          %v5789 = vmul.f32 %v5549, 0.0625
          %v5790 = vmul.f32 %v5550, 0.0625
          %v5791 = vmul.f32 %v5551, 0.0625
          %v5792 = vmul.f32 %v5552, 0.0625
          %v5793 = vmul.f32 %v5553, 0.0625
          %v5794 = vmul.f32 %v5554, 0.0625
          %v5795 = vmul.f32 %v5555, 0.0625
          %v5796 = vmul.f32 %v5556, 0.0625
          %v5797 = vmul.f32 %v5557, 0.0625
          %v5798 = vmul.f32 %v5558, 0.0625
          %v5799 = vmul.f32 %v5559, 0.0625
          %v5800 = vmul.f32 %v5560, 0.0625
          %v5801 = vmul.f32 %v5561, 0.0625
          %v5802 = vmul.f32 %v5562, 0.0625
          %v5803 = vmul.f32 %v5563, 0.0625
          %v5804 = vmul.f32 %v5564, 0.0625
          %v5805 = vmul.f32 %v5565, 0.0625
          %v5806 = vmul.f32 %v5566, 0.0625
          %v5807 = vmul.f32 %v5567, 0.0625
          %v5808 = vmul.f32 %v5568, 0.0625
          %v5809 = vmul.f32 %v5569, 0.0625
          %v5810 = vmul.f32 %v5570, 0.0625
          %v5811 = vmul.f32 %v5571, 0.0625
          %v5812 = vmul.f32 %v5572, 0.0625
          %v5813 = vmul.f32 %v5573, 0.0625
          %v5814 = vmul.f32 %v5574, 0.0625
          %v5815 = vmul.f32 %v5575, 0.0625
          %v5816 = vmul.f32 %v5576, 0.0625
          %v5817 = vmul.f32 %v5577, 0.0625
          %v5818 = vmul.f32 %v5578, 0.0625
          %v5819 = vmul.f32 %v5579, 0.0625
          %v5820 = vmul.f32 %v5580, 0.0625
          %v5821 = vmul.f32 %v5581, 0.0625
          %v5822 = vmul.f32 %v5582, 0.0625
          %v5823 = vmul.f32 %v5583, 0.0625
          %v5824 = vmul.f32 %v5584, 0.0625
          %v5825 = vmul.f32 %v5585, 0.0625
          %v5826 = vmul.f32 %v5586, 0.0625
          %v5827 = vmul.f32 %v5587, 0.0625
          %v5828 = vmul.f32 %v5588, 0.0625
          %v5829 = vmul.f32 %v5589, 0.0625
          %v5830 = vmul.f32 %v5590, 0.0625
          %v5831 = vmul.f32 %v5591, 0.0625
          %v5832 = vmul.f32 %v5592, 0.0625
          %v5833 = vmul.f32 %v5593, 0.0625
          %v5834 = vmul.f32 %v5594, 0.0625
          %v5835 = vmul.f32 %v5595, 0.0625
          %v5836 = vmul.f32 %v5596, 0.0625
          %v5837 = vmul.f32 %v5597, 0.0625
          %v5838 = vmul.f32 %v5598, 0.0625
          %v5839 = vmul.f32 %v5599, 0.0625
          %v5840 = vmul.f32 %v5600, 0.0625
          %v5841 = vmul.f32 %v5601, 0.0625
          %v5842 = vmul.f32 %v5602, 0.0625
          %v5843 = vmul.f32 %v5603, 0.0625
          %v5844 = vmul.f32 %v5604, 0.0625
          %v5845 = vmul.f32 %v5605, 0.0625
          %v5846 = vmul.f32 %v5606, 0.0625
          %v5847 = vmul.f32 %v5607, 0.0625
          %v5848 = vmul.f32 %v5608, 0.0625
          %v5849 = vmul.f32 %v5609, 0.0625
          %v5850 = vmul.f32 %v5610, 0.0625
          %v5851 = vmul.f32 %v5611, 0.0625
          %v5852 = vmul.f32 %v5612, 0.0625
          %v5853 = vmul.f32 %v5613, 0.0625
          %v5854 = vmul.f32 %v5614, 0.0625
          %v5855 = vmul.f32 %v5615, 0.0625
          %v5856 = vmul.f32 %v5616, 0.0625
          %v5857 = vmul.f32 %v5617, 0.0625
          %v5858 = vmul.f32 %v5618, 0.0625
          %v5859 = vmul.f32 %v5619, 0.0625
          %v5860 = vmul.f32 %v5620, 0.0625
          %v5861 = vmul.f32 %v5621, 0.0625
          %v5862 = vmul.f32 %v5622, 0.0625
          %v5863 = vmul.f32 %v5623, 0.0625
          %v5864 = vmul.f32 %v5624, 0.0625
          %v5865 = vmul.f32 %v5625, 0.0625
          %v5866 = vmul.f32 %v5626, 0.0625
          %v5867 = vmul.f32 %v5627, 0.0625
          %v5868 = vmul.f32 %v5628, 0.0625
          %v5869 = vmul.f32 %v5629, 0.0625
          %v5870 = vmul.f32 %v5630, 0.0625
          %v5871 = vmul.f32 %v5631, 0.0625
          %v5872 = vmul.f32 %v5632, 0.0625
          %v5873 = vmul.f32 %v5633, 0.0625
          %v5874 = vmul.f32 %v5634, 0.0625
          %v5875 = vmul.f32 %v5635, 0.0625
          %v5876 = vmul.f32 %v5636, 0.0625
          %v5877 = vmul.f32 %v5637, 0.0625
          %v5878 = vmul.f32 %v5638, 0.0625
          %v5879 = vmul.f32 %v5639, 0.0625
          %v5880 = vmul.f32 %v5640, 0.0625
          %v5881 = vmul.f32 %v5641, 0.0625
          %v5882 = vmul.f32 %v5642, 0.0625
          %v5883 = vmul.f32 %v5643, 0.0625
          %v5884 = vmul.f32 %v5644, 0.0625
          %v5885 = vmul.f32 %v5645, 0.0625
          %v5886 = vmul.f32 %v5646, 0.0625
          %v5887 = vmul.f32 %v5647, 0.0625
          %v5888 = vmul.f32 %v5648, 0.0625
          %v5889 = vmul.f32 %v5649, 0.0625
          %v5890 = vmul.f32 %v5650, 0.0625
          %v5891 = vmul.f32 %v5651, 0.0625
          %v5892 = vmul.f32 %v5652, 0.0625
          %v5893 = vmul.f32 %v5653, 0.0625
          %v5894 = vmul.f32 %v5654, 0.0625
          %v5895 = vmul.f32 %v5655, 0.0625
          %v5896 = vmul.f32 %v5656, 0.0625
          %v5897 = vmul.f32 %v5657, 0.0625
          %v5898 = vmul.f32 %v5658, 0.0625
          %v5899 = vmul.f32 %v5659, 0.0625
          %v5900 = vmul.f32 %v5660, 0.0625
          %v5901 = vmul.f32 %v5661, 0.0625
          %v5902 = vmul.f32 %v5662, 0.0625
          %v5903 = vmul.f32 %v5663, 0.0625
          %v5904 = vmul.f32 %v5664, 0.0625
          %v5905 = vmul.f32 %v5665, 0.0625
          %v5906 = vmul.f32 %v5666, 0.0625
          %v5907 = vmul.f32 %v5667, 0.0625
          %v5908 = vmul.f32 %v5668, 0.0625
          %v5909 = vmul.f32 %v5669, 0.0625
          %v5910 = vmul.f32 %v5670, 0.0625
          %v5911 = vmul.f32 %v5671, 0.0625
          %v5912 = vmul.f32 %v5672, 0.0625
          %v5913 = vmul.f32 %v5673, 0.0625
          %v5914 = vmul.f32 %v5674, 0.0625
          %v5915 = vmul.f32 %v5675, 0.0625
          %v5916 = vmul.f32 %v5676, 0.0625
          %v5917 = vmul.f32 %v5677, 0.0625
          %v5918 = vmul.f32 %v5678, 0.0625
          %v5919 = vmul.f32 %v5679, 0.0625
          %v5920 = vmul.f32 %v5680, 0.0625
          %v5921 = vmul.f32 %v5681, 0.0625
          %v5922 = vmul.f32 %v5682, 0.0625
          %v5923 = vmul.f32 %v5683, 0.0625
          %v5924 = vmul.f32 %v5684, 0.0625
          %v5925 = vmul.f32 %v5685, 0.0625
          %v5926 = vmul.f32 %v5686, 0.0625
          %v5927 = vmul.f32 %v5687, 0.0625
          %v5928 = vmul.f32 %v5688, 0.0625
          %v5929 = vmul.f32 %v5689, 0.0625
          %v5930 = vmul.f32 %v5690, 0.0625
          %v5931 = vmul.f32 %v5691, 0.0625
          %v5932 = vmul.f32 %v5692, 0.0625
          %v5933 = vmul.f32 %v5693, 0.0625
          %v5934 = vmul.f32 %v5694, 0.0625
          %v5935 = vmul.f32 %v5695, 0.0625
          %v5936 = vmul.f32 %v5696, 0.0625
          %v5937 = vmul.f32 %v5697, 0.0625
          %v5938 = vmul.f32 %v5698, 0.0625
          %v5939 = vmul.f32 %v5699, 0.0625
          %v5940 = vmul.f32 %v5700, 0.0625
          %v5941 = vmul.f32 %v5701, 0.0625
          %v5942 = vmul.f32 %v5702, 0.0625
          %v5943 = vmul.f32 %v5703, 0.0625
          %v5944 = vmul.f32 %v5704, 0.0625
          %v5945 = vmul.f32 %v5705, 0.0625
          %v5946 = vmul.f32 %v5706, 0.0625
          %v5947 = vmul.f32 %v5707, 0.0625
          %v5948 = vmul.f32 %v5708, 0.0625
          %v5949 = vmul.f32 %v5709, 0.0625
          %v5950 = vmul.f32 %v5710, 0.0625
          %v5951 = vmul.f32 %v5711, 0.0625
          %v5952 = vld [vmem:[%s3] sm:$0xff]
          %v5953 = vld [vmem:[%s3 + $0x8] sm:$0xff]
          %v5954 = vld [vmem:[%s3 + $0x10] sm:$0xff]
          %v5955 = vld [vmem:[%s3 + $0x18] sm:$0xff]
          %v5956 = vld [vmem:[%s3 + $0x20] sm:$0xff]
          %v5957 = vld [vmem:[%s3 + $0x28] sm:$0xff]
          %v5958 = vld [vmem:[%s3 + $0x30] sm:$0xff]
          %v5959 = vld [vmem:[%s3 + $0x38] sm:$0xff]
          %v5960 = vld [vmem:[%s3 + $0x40] sm:$0xff]
          %v5961 = vld [vmem:[%s3 + $0x48] sm:$0xff]
          %v5962 = vld [vmem:[%s3 + $0x50] sm:$0xff]
          %v5963 = vld [vmem:[%s3 + $0x58] sm:$0xff]
          %v5964 = vld [vmem:[%s3 + $0x60] sm:$0xff]
          %v5965 = vld [vmem:[%s3 + $0x68] sm:$0xff]
          %v5966 = vld [vmem:[%s3 + $0x70] sm:$0xff]
          %v5967 = vld [vmem:[%s3 + $0x78] sm:$0xff]
          %v5968 = vld [vmem:[%s3 + $0x80] sm:$0xff]
          %v5969 = vld [vmem:[%s3 + $0x88] sm:$0xff]
          %v5970 = vld [vmem:[%s3 + $0x90] sm:$0xff]
          %v5971 = vld [vmem:[%s3 + $0x98] sm:$0xff]
          %v5972 = vld [vmem:[%s3 + $0xa0] sm:$0xff]
          %v5973 = vld [vmem:[%s3 + $0xa8] sm:$0xff]
          %v5974 = vld [vmem:[%s3 + $0xb0] sm:$0xff]
          %v5975 = vld [vmem:[%s3 + $0xb8] sm:$0xff]
          %v5976 = vld [vmem:[%s3 + $0xc0] sm:$0xff]
          %v5977 = vld [vmem:[%s3 + $0xc8] sm:$0xff]
          %v5978 = vld [vmem:[%s3 + $0xd0] sm:$0xff]
          %v5979 = vld [vmem:[%s3 + $0xd8] sm:$0xff]
          %v5980 = vld [vmem:[%s3 + $0xe0] sm:$0xff]
          %v5981 = vld [vmem:[%s3 + $0xe8] sm:$0xff]
          %v5982 = vld [vmem:[%s3 + $0xf0] sm:$0xff]
          %v5983 = vld [vmem:[%s3 + $0xf8] sm:$0xff]
          %v5984 = vld [vmem:[%s3 + $0x100] sm:$0xff]
          %v5985 = vld [vmem:[%s3 + $0x108] sm:$0xff]
          %v5986 = vld [vmem:[%s3 + $0x110] sm:$0xff]
          %v5987 = vld [vmem:[%s3 + $0x118] sm:$0xff]
          %v5988 = vld [vmem:[%s3 + $0x120] sm:$0xff]
          %v5989 = vld [vmem:[%s3 + $0x128] sm:$0xff]
          %v5990 = vld [vmem:[%s3 + $0x130] sm:$0xff]
          %v5991 = vld [vmem:[%s3 + $0x138] sm:$0xff]
          %v5992 = vld [vmem:[%s3 + $0x140] sm:$0xff]
          %v5993 = vld [vmem:[%s3 + $0x148] sm:$0xff]
          %v5994 = vld [vmem:[%s3 + $0x150] sm:$0xff]
          %v5995 = vld [vmem:[%s3 + $0x158] sm:$0xff]
          %v5996 = vld [vmem:[%s3 + $0x160] sm:$0xff]
          %v5997 = vld [vmem:[%s3 + $0x168] sm:$0xff]
          %v5998 = vld [vmem:[%s3 + $0x170] sm:$0xff]
          %v5999 = vld [vmem:[%s3 + $0x178] sm:$0xff]
          %v6000 = vld [vmem:[%s3 + $0x180] sm:$0xff]
          %v6001 = vld [vmem:[%s3 + $0x188] sm:$0xff]
          %v6002 = vld [vmem:[%s3 + $0x190] sm:$0xff]
          %v6003 = vld [vmem:[%s3 + $0x198] sm:$0xff]
          %v6004 = vld [vmem:[%s3 + $0x1a0] sm:$0xff]
          %v6005 = vld [vmem:[%s3 + $0x1a8] sm:$0xff]
          %v6006 = vld [vmem:[%s3 + $0x1b0] sm:$0xff]
          %v6007 = vld [vmem:[%s3 + $0x1b8] sm:$0xff]
          %v6008 = vld [vmem:[%s3 + $0x1c0] sm:$0xff]
          %v6009 = vld [vmem:[%s3 + $0x1c8] sm:$0xff]
          %v6010 = vld [vmem:[%s3 + $0x1d0] sm:$0xff]
          %v6011 = vld [vmem:[%s3 + $0x1d8] sm:$0xff]
          %v6012 = vld [vmem:[%s3 + $0x1e0] sm:$0xff]
          %v6013 = vld [vmem:[%s3 + $0x1e8] sm:$0xff]
          %v6014 = vld [vmem:[%s3 + $0x1f0] sm:$0xff]
          %v6015 = vld [vmem:[%s3 + $0x1f8] sm:$0xff]
          %v6016 = vld [vmem:[%s3 + $0x200] sm:$0xff]
          %v6017 = vld [vmem:[%s3 + $0x208] sm:$0xff]
          %v6018 = vld [vmem:[%s3 + $0x210] sm:$0xff]
          %v6019 = vld [vmem:[%s3 + $0x218] sm:$0xff]
          %v6020 = vld [vmem:[%s3 + $0x220] sm:$0xff]
          %v6021 = vld [vmem:[%s3 + $0x228] sm:$0xff]
          %v6022 = vld [vmem:[%s3 + $0x230] sm:$0xff]
          %v6023 = vld [vmem:[%s3 + $0x238] sm:$0xff]
          %v6024 = vld [vmem:[%s3 + $0x240] sm:$0xff]
          %v6025 = vld [vmem:[%s3 + $0x248] sm:$0xff]
          %v6026 = vld [vmem:[%s3 + $0x250] sm:$0xff]
          %v6027 = vld [vmem:[%s3 + $0x258] sm:$0xff]
          %v6028 = vld [vmem:[%s3 + $0x260] sm:$0xff]
          %v6029 = vld [vmem:[%s3 + $0x268] sm:$0xff]
          %v6030 = vld [vmem:[%s3 + $0x270] sm:$0xff]
          %v6031 = vld [vmem:[%s3 + $0x278] sm:$0xff]
          %v6032 = vld [vmem:[%s3 + $0x280] sm:$0xff]
          %v6033 = vld [vmem:[%s3 + $0x288] sm:$0xff]
          %v6034 = vld [vmem:[%s3 + $0x290] sm:$0xff]
          %v6035 = vld [vmem:[%s3 + $0x298] sm:$0xff]
          %v6036 = vld [vmem:[%s3 + $0x2a0] sm:$0xff]
          %v6037 = vld [vmem:[%s3 + $0x2a8] sm:$0xff]
          %v6038 = vld [vmem:[%s3 + $0x2b0] sm:$0xff]
          %v6039 = vld [vmem:[%s3 + $0x2b8] sm:$0xff]
          %v6040 = vld [vmem:[%s3 + $0x2c0] sm:$0xff]
          %v6041 = vld [vmem:[%s3 + $0x2c8] sm:$0xff]
          %v6042 = vld [vmem:[%s3 + $0x2d0] sm:$0xff]
          %v6043 = vld [vmem:[%s3 + $0x2d8] sm:$0xff]
          %v6044 = vld [vmem:[%s3 + $0x2e0] sm:$0xff]
          %v6045 = vld [vmem:[%s3 + $0x2e8] sm:$0xff]
          %v6046 = vld [vmem:[%s3 + $0x2f0] sm:$0xff]
          %v6047 = vld [vmem:[%s3 + $0x2f8] sm:$0xff]
          %v6048 = vld [vmem:[%s3 + $0x300] sm:$0xff]
          %v6049 = vld [vmem:[%s3 + $0x308] sm:$0xff]
          %v6050 = vld [vmem:[%s3 + $0x310] sm:$0xff]
          %v6051 = vld [vmem:[%s3 + $0x318] sm:$0xff]
          %v6052 = vld [vmem:[%s3 + $0x320] sm:$0xff]
          %v6053 = vld [vmem:[%s3 + $0x328] sm:$0xff]
          %v6054 = vld [vmem:[%s3 + $0x330] sm:$0xff]
          %v6055 = vld [vmem:[%s3 + $0x338] sm:$0xff]
          %v6056 = vld [vmem:[%s3 + $0x340] sm:$0xff]
          %v6057 = vld [vmem:[%s3 + $0x348] sm:$0xff]
          %v6058 = vld [vmem:[%s3 + $0x350] sm:$0xff]
          %v6059 = vld [vmem:[%s3 + $0x358] sm:$0xff]
          %v6060 = vld [vmem:[%s3 + $0x360] sm:$0xff]
          %v6061 = vld [vmem:[%s3 + $0x368] sm:$0xff]
          %v6062 = vld [vmem:[%s3 + $0x370] sm:$0xff]
          %v6063 = vld [vmem:[%s3 + $0x378] sm:$0xff]
          %v6064 = vld [vmem:[%s3 + $0x380] sm:$0xff]
          %v6065 = vld [vmem:[%s3 + $0x388] sm:$0xff]
          %v6066 = vld [vmem:[%s3 + $0x390] sm:$0xff]
          %v6067 = vld [vmem:[%s3 + $0x398] sm:$0xff]
          %v6068 = vld [vmem:[%s3 + $0x3a0] sm:$0xff]
          %v6069 = vld [vmem:[%s3 + $0x3a8] sm:$0xff]
          %v6070 = vld [vmem:[%s3 + $0x3b0] sm:$0xff]
          %v6071 = vld [vmem:[%s3 + $0x3b8] sm:$0xff]
          %v6072 = vld [vmem:[%s3 + $0x3c0] sm:$0xff]
          %v6073 = vld [vmem:[%s3 + $0x3c8] sm:$0xff]
          %v6074 = vld [vmem:[%s3 + $0x3d0] sm:$0xff]
          %v6075 = vld [vmem:[%s3 + $0x3d8] sm:$0xff]
          %v6076 = vld [vmem:[%s3 + $0x3e0] sm:$0xff]
          %v6077 = vld [vmem:[%s3 + $0x3e8] sm:$0xff]
          %v6078 = vld [vmem:[%s3 + $0x3f0] sm:$0xff]
          %v6079 = vld [vmem:[%s3 + $0x3f8] sm:$0xff]
          %v6080 = vld [vmem:[%s3 + $0x400] sm:$0xff]
          %v6081 = vld [vmem:[%s3 + $0x408] sm:$0xff]
          %v6082 = vld [vmem:[%s3 + $0x410] sm:$0xff]
          %v6083 = vld [vmem:[%s3 + $0x418] sm:$0xff]
          %v6084 = vld [vmem:[%s3 + $0x420] sm:$0xff]
          %v6085 = vld [vmem:[%s3 + $0x428] sm:$0xff]
          %v6086 = vld [vmem:[%s3 + $0x430] sm:$0xff]
          %v6087 = vld [vmem:[%s3 + $0x438] sm:$0xff]
          %v6088 = vld [vmem:[%s3 + $0x440] sm:$0xff]
          %v6089 = vld [vmem:[%s3 + $0x448] sm:$0xff]
          %v6090 = vld [vmem:[%s3 + $0x450] sm:$0xff]
          %v6091 = vld [vmem:[%s3 + $0x458] sm:$0xff]
          %v6092 = vld [vmem:[%s3 + $0x460] sm:$0xff]
          %v6093 = vld [vmem:[%s3 + $0x468] sm:$0xff]
          %v6094 = vld [vmem:[%s3 + $0x470] sm:$0xff]
          %v6095 = vld [vmem:[%s3 + $0x478] sm:$0xff]
          %v6096 = vld [vmem:[%s3 + $0x480] sm:$0xff]
          %v6097 = vld [vmem:[%s3 + $0x488] sm:$0xff]
          %v6098 = vld [vmem:[%s3 + $0x490] sm:$0xff]
          %v6099 = vld [vmem:[%s3 + $0x498] sm:$0xff]
          %v6100 = vld [vmem:[%s3 + $0x4a0] sm:$0xff]
          %v6101 = vld [vmem:[%s3 + $0x4a8] sm:$0xff]
          %v6102 = vld [vmem:[%s3 + $0x4b0] sm:$0xff]
          %v6103 = vld [vmem:[%s3 + $0x4b8] sm:$0xff]
          %v6104 = vld [vmem:[%s3 + $0x4c0] sm:$0xff]
          %v6105 = vld [vmem:[%s3 + $0x4c8] sm:$0xff]
          %v6106 = vld [vmem:[%s3 + $0x4d0] sm:$0xff]
          %v6107 = vld [vmem:[%s3 + $0x4d8] sm:$0xff]
          %v6108 = vld [vmem:[%s3 + $0x4e0] sm:$0xff]
          %v6109 = vld [vmem:[%s3 + $0x4e8] sm:$0xff]
          %v6110 = vld [vmem:[%s3 + $0x4f0] sm:$0xff]
          %v6111 = vld [vmem:[%s3 + $0x4f8] sm:$0xff]
          %v6112 = vld [vmem:[%s3 + $0x500] sm:$0xff]
          %v6113 = vld [vmem:[%s3 + $0x508] sm:$0xff]
          %v6114 = vld [vmem:[%s3 + $0x510] sm:$0xff]
          %v6115 = vld [vmem:[%s3 + $0x518] sm:$0xff]
          %v6116 = vld [vmem:[%s3 + $0x520] sm:$0xff]
          %v6117 = vld [vmem:[%s3 + $0x528] sm:$0xff]
          %v6118 = vld [vmem:[%s3 + $0x530] sm:$0xff]
          %v6119 = vld [vmem:[%s3 + $0x538] sm:$0xff]
          %v6120 = vld [vmem:[%s3 + $0x540] sm:$0xff]
          %v6121 = vld [vmem:[%s3 + $0x548] sm:$0xff]
          %v6122 = vld [vmem:[%s3 + $0x550] sm:$0xff]
          %v6123 = vld [vmem:[%s3 + $0x558] sm:$0xff]
          %v6124 = vld [vmem:[%s3 + $0x560] sm:$0xff]
          %v6125 = vld [vmem:[%s3 + $0x568] sm:$0xff]
          %v6126 = vld [vmem:[%s3 + $0x570] sm:$0xff]
          %v6127 = vld [vmem:[%s3 + $0x578] sm:$0xff]
          %v6128 = vld [vmem:[%s3 + $0x580] sm:$0xff]
          %v6129 = vld [vmem:[%s3 + $0x588] sm:$0xff]
          %v6130 = vld [vmem:[%s3 + $0x590] sm:$0xff]
          %v6131 = vld [vmem:[%s3 + $0x598] sm:$0xff]
          %v6132 = vld [vmem:[%s3 + $0x5a0] sm:$0xff]
          %v6133 = vld [vmem:[%s3 + $0x5a8] sm:$0xff]
          %v6134 = vld [vmem:[%s3 + $0x5b0] sm:$0xff]
          %v6135 = vld [vmem:[%s3 + $0x5b8] sm:$0xff]
          %v6136 = vld [vmem:[%s3 + $0x5c0] sm:$0xff]
          %v6137 = vld [vmem:[%s3 + $0x5c8] sm:$0xff]
          %v6138 = vld [vmem:[%s3 + $0x5d0] sm:$0xff]
          %v6139 = vld [vmem:[%s3 + $0x5d8] sm:$0xff]
          %v6140 = vld [vmem:[%s3 + $0x5e0] sm:$0xff]
          %v6141 = vld [vmem:[%s3 + $0x5e8] sm:$0xff]
          %v6142 = vld [vmem:[%s3 + $0x5f0] sm:$0xff]
          %v6143 = vld [vmem:[%s3 + $0x5f8] sm:$0xff]
          %v6144 = vld [vmem:[%s3 + $0x600] sm:$0xff]
          %v6145 = vld [vmem:[%s3 + $0x608] sm:$0xff]
          %v6146 = vld [vmem:[%s3 + $0x610] sm:$0xff]
          %v6147 = vld [vmem:[%s3 + $0x618] sm:$0xff]
          %v6148 = vld [vmem:[%s3 + $0x620] sm:$0xff]
          %v6149 = vld [vmem:[%s3 + $0x628] sm:$0xff]
          %v6150 = vld [vmem:[%s3 + $0x630] sm:$0xff]
          %v6151 = vld [vmem:[%s3 + $0x638] sm:$0xff]
          %v6152 = vld [vmem:[%s3 + $0x640] sm:$0xff]
          %v6153 = vld [vmem:[%s3 + $0x648] sm:$0xff]
          %v6154 = vld [vmem:[%s3 + $0x650] sm:$0xff]
          %v6155 = vld [vmem:[%s3 + $0x658] sm:$0xff]
          %v6156 = vld [vmem:[%s3 + $0x660] sm:$0xff]
          %v6157 = vld [vmem:[%s3 + $0x668] sm:$0xff]
          %v6158 = vld [vmem:[%s3 + $0x670] sm:$0xff]
          %v6159 = vld [vmem:[%s3 + $0x678] sm:$0xff]
          %v6160 = vld [vmem:[%s3 + $0x680] sm:$0xff]
          %v6161 = vld [vmem:[%s3 + $0x688] sm:$0xff]
          %v6162 = vld [vmem:[%s3 + $0x690] sm:$0xff]
          %v6163 = vld [vmem:[%s3 + $0x698] sm:$0xff]
          %v6164 = vld [vmem:[%s3 + $0x6a0] sm:$0xff]
          %v6165 = vld [vmem:[%s3 + $0x6a8] sm:$0xff]
          %v6166 = vld [vmem:[%s3 + $0x6b0] sm:$0xff]
          %v6167 = vld [vmem:[%s3 + $0x6b8] sm:$0xff]
          %v6168 = vld [vmem:[%s3 + $0x6c0] sm:$0xff]
          %v6169 = vld [vmem:[%s3 + $0x6c8] sm:$0xff]
          %v6170 = vld [vmem:[%s3 + $0x6d0] sm:$0xff]
          %v6171 = vld [vmem:[%s3 + $0x6d8] sm:$0xff]
          %v6172 = vld [vmem:[%s3 + $0x6e0] sm:$0xff]
          %v6173 = vld [vmem:[%s3 + $0x6e8] sm:$0xff]
          %v6174 = vld [vmem:[%s3 + $0x6f0] sm:$0xff]
          %v6175 = vld [vmem:[%s3 + $0x6f8] sm:$0xff]
          %v6176 = vld [vmem:[%s3 + $0x700] sm:$0xff]
          %v6177 = vld [vmem:[%s3 + $0x708] sm:$0xff]
          %v6178 = vld [vmem:[%s3 + $0x710] sm:$0xff]
          %v6179 = vld [vmem:[%s3 + $0x718] sm:$0xff]
          %v6180 = vld [vmem:[%s3 + $0x720] sm:$0xff]
          %v6181 = vld [vmem:[%s3 + $0x728] sm:$0xff]
          %v6182 = vld [vmem:[%s3 + $0x730] sm:$0xff]
          %v6183 = vld [vmem:[%s3 + $0x738] sm:$0xff]
          %v6184 = vld [vmem:[%s3 + $0x740] sm:$0xff]
          %v6185 = vld [vmem:[%s3 + $0x748] sm:$0xff]
          %v6186 = vld [vmem:[%s3 + $0x750] sm:$0xff]
          %v6187 = vld [vmem:[%s3 + $0x758] sm:$0xff]
          %v6188 = vld [vmem:[%s3 + $0x760] sm:$0xff]
          %v6189 = vld [vmem:[%s3 + $0x768] sm:$0xff]
          %v6190 = vld [vmem:[%s3 + $0x770] sm:$0xff]
          %v6191 = vld [vmem:[%s3 + $0x778] sm:$0xff]
          %6193 = vset.pattern.permute.xlu0 0
          %6194 = vperm.xlu0 %6193, %v5712
          %v6195 = vpop.permute.xlu0 %6194
          %6198 = vset.pattern.permute.xlu0 0
          %6199 = vperm.xlu0 %6198, %v5713
          %v6200 = vpop.permute.xlu0 %6199
          %6203 = vset.pattern.permute.xlu0 0
          %6204 = vperm.xlu0 %6203, %v5714
          %v6205 = vpop.permute.xlu0 %6204
          %6208 = vset.pattern.permute.xlu0 0
          %6209 = vperm.xlu0 %6208, %v5715
          %v6210 = vpop.permute.xlu0 %6209
          %6213 = vset.pattern.permute.xlu0 0
          %6214 = vperm.xlu0 %6213, %v5716
          %v6215 = vpop.permute.xlu0 %6214
          %6218 = vset.pattern.permute.xlu0 0
          %6219 = vperm.xlu0 %6218, %v5717
          %v6220 = vpop.permute.xlu0 %6219
          %6223 = vset.pattern.permute.xlu0 0
          %6224 = vperm.xlu0 %6223, %v5718
          %v6225 = vpop.permute.xlu0 %6224
          %6228 = vset.pattern.permute.xlu0 0
          %6229 = vperm.xlu0 %6228, %v5719
          %v6230 = vpop.permute.xlu0 %6229
          %6233 = vset.pattern.permute.xlu0 0
          %6234 = vperm.xlu0 %6233, %v5720
          %v6235 = vpop.permute.xlu0 %6234
          %6238 = vset.pattern.permute.xlu0 0
          %6239 = vperm.xlu0 %6238, %v5721
          %v6240 = vpop.permute.xlu0 %6239
          %6243 = vset.pattern.permute.xlu0 0
          %6244 = vperm.xlu0 %6243, %v5722
          %v6245 = vpop.permute.xlu0 %6244
          %6248 = vset.pattern.permute.xlu0 0
          %6249 = vperm.xlu0 %6248, %v5723
          %v6250 = vpop.permute.xlu0 %6249
          %6253 = vset.pattern.permute.xlu0 0
          %6254 = vperm.xlu0 %6253, %v5724
          %v6255 = vpop.permute.xlu0 %6254
          %6258 = vset.pattern.permute.xlu0 0
          %6259 = vperm.xlu0 %6258, %v5725
          %v6260 = vpop.permute.xlu0 %6259
          %6263 = vset.pattern.permute.xlu0 0
          %6264 = vperm.xlu0 %6263, %v5726
          %v6265 = vpop.permute.xlu0 %6264
          %6268 = vset.pattern.permute.xlu0 0
          %6269 = vperm.xlu0 %6268, %v5727
          %v6270 = vpop.permute.xlu0 %6269
          %6273 = vset.pattern.permute.xlu0 0
          %6274 = vperm.xlu0 %6273, %v5728
          %v6275 = vpop.permute.xlu0 %6274
          %6278 = vset.pattern.permute.xlu0 0
          %6279 = vperm.xlu0 %6278, %v5729
          %v6280 = vpop.permute.xlu0 %6279
          %6283 = vset.pattern.permute.xlu0 0
          %6284 = vperm.xlu0 %6283, %v5730
          %v6285 = vpop.permute.xlu0 %6284
          %6288 = vset.pattern.permute.xlu0 0
          %6289 = vperm.xlu0 %6288, %v5731
          %v6290 = vpop.permute.xlu0 %6289
          %6293 = vset.pattern.permute.xlu0 0
          %6294 = vperm.xlu0 %6293, %v5732
          %v6295 = vpop.permute.xlu0 %6294
          %6298 = vset.pattern.permute.xlu0 0
          %6299 = vperm.xlu0 %6298, %v5733
          %v6300 = vpop.permute.xlu0 %6299
          %6303 = vset.pattern.permute.xlu0 0
          %6304 = vperm.xlu0 %6303, %v5734
          %v6305 = vpop.permute.xlu0 %6304
          %6308 = vset.pattern.permute.xlu0 0
          %6309 = vperm.xlu0 %6308, %v5735
          %v6310 = vpop.permute.xlu0 %6309
          %6313 = vset.pattern.permute.xlu0 0
          %6314 = vperm.xlu0 %6313, %v5736
          %v6315 = vpop.permute.xlu0 %6314
          %6318 = vset.pattern.permute.xlu0 0
          %6319 = vperm.xlu0 %6318, %v5737
          %v6320 = vpop.permute.xlu0 %6319
          %6323 = vset.pattern.permute.xlu0 0
          %6324 = vperm.xlu0 %6323, %v5738
          %v6325 = vpop.permute.xlu0 %6324
          %6328 = vset.pattern.permute.xlu0 0
          %6329 = vperm.xlu0 %6328, %v5739
          %v6330 = vpop.permute.xlu0 %6329
          %6333 = vset.pattern.permute.xlu0 0
          %6334 = vperm.xlu0 %6333, %v5740
          %v6335 = vpop.permute.xlu0 %6334
          %6338 = vset.pattern.permute.xlu0 0
          %6339 = vperm.xlu0 %6338, %v5741
          %v6340 = vpop.permute.xlu0 %6339
          %6343 = vset.pattern.permute.xlu0 0
          %6344 = vperm.xlu0 %6343, %v5742
          %v6345 = vpop.permute.xlu0 %6344
          %6348 = vset.pattern.permute.xlu0 0
          %6349 = vperm.xlu0 %6348, %v5743
          %v6350 = vpop.permute.xlu0 %6349
          %6353 = vset.pattern.permute.xlu0 0
          %6354 = vperm.xlu0 %6353, %v5744
          %v6355 = vpop.permute.xlu0 %6354
          %6358 = vset.pattern.permute.xlu0 0
          %6359 = vperm.xlu0 %6358, %v5745
          %v6360 = vpop.permute.xlu0 %6359
          %6363 = vset.pattern.permute.xlu0 0
          %6364 = vperm.xlu0 %6363, %v5746
          %v6365 = vpop.permute.xlu0 %6364
          %6368 = vset.pattern.permute.xlu0 0
          %6369 = vperm.xlu0 %6368, %v5747
          %v6370 = vpop.permute.xlu0 %6369
          %6373 = vset.pattern.permute.xlu0 0
          %6374 = vperm.xlu0 %6373, %v5748
          %v6375 = vpop.permute.xlu0 %6374
          %6378 = vset.pattern.permute.xlu0 0
          %6379 = vperm.xlu0 %6378, %v5749
          %v6380 = vpop.permute.xlu0 %6379
          %6383 = vset.pattern.permute.xlu0 0
          %6384 = vperm.xlu0 %6383, %v5750
          %v6385 = vpop.permute.xlu0 %6384
          %6388 = vset.pattern.permute.xlu0 0
          %6389 = vperm.xlu0 %6388, %v5751
          %v6390 = vpop.permute.xlu0 %6389
          %6393 = vset.pattern.permute.xlu0 0
          %6394 = vperm.xlu0 %6393, %v5752
          %v6395 = vpop.permute.xlu0 %6394
          %6398 = vset.pattern.permute.xlu0 0
          %6399 = vperm.xlu0 %6398, %v5753
          %v6400 = vpop.permute.xlu0 %6399
          %6403 = vset.pattern.permute.xlu0 0
          %6404 = vperm.xlu0 %6403, %v5754
          %v6405 = vpop.permute.xlu0 %6404
          %6408 = vset.pattern.permute.xlu0 0
          %6409 = vperm.xlu0 %6408, %v5755
          %v6410 = vpop.permute.xlu0 %6409
          %6413 = vset.pattern.permute.xlu0 0
          %6414 = vperm.xlu0 %6413, %v5756
          %v6415 = vpop.permute.xlu0 %6414
          %6418 = vset.pattern.permute.xlu0 0
          %6419 = vperm.xlu0 %6418, %v5757
          %v6420 = vpop.permute.xlu0 %6419
          %6423 = vset.pattern.permute.xlu0 0
          %6424 = vperm.xlu0 %6423, %v5758
          %v6425 = vpop.permute.xlu0 %6424
          %6428 = vset.pattern.permute.xlu0 0
          %6429 = vperm.xlu0 %6428, %v5759
          %v6430 = vpop.permute.xlu0 %6429
          %6433 = vset.pattern.permute.xlu0 0
          %6434 = vperm.xlu0 %6433, %v5760
          %v6435 = vpop.permute.xlu0 %6434
          %6438 = vset.pattern.permute.xlu0 0
          %6439 = vperm.xlu0 %6438, %v5761
          %v6440 = vpop.permute.xlu0 %6439
          %6443 = vset.pattern.permute.xlu0 0
          %6444 = vperm.xlu0 %6443, %v5762
          %v6445 = vpop.permute.xlu0 %6444
          %6448 = vset.pattern.permute.xlu0 0
          %6449 = vperm.xlu0 %6448, %v5763
          %v6450 = vpop.permute.xlu0 %6449
          %6453 = vset.pattern.permute.xlu0 0
          %6454 = vperm.xlu0 %6453, %v5764
          %v6455 = vpop.permute.xlu0 %6454
          %6458 = vset.pattern.permute.xlu0 0
          %6459 = vperm.xlu0 %6458, %v5765
          %v6460 = vpop.permute.xlu0 %6459
          %6463 = vset.pattern.permute.xlu0 0
          %6464 = vperm.xlu0 %6463, %v5766
          %v6465 = vpop.permute.xlu0 %6464
          %6468 = vset.pattern.permute.xlu0 0
          %6469 = vperm.xlu0 %6468, %v5767
          %v6470 = vpop.permute.xlu0 %6469
          %6473 = vset.pattern.permute.xlu0 0
          %6474 = vperm.xlu0 %6473, %v5768
          %v6475 = vpop.permute.xlu0 %6474
          %6478 = vset.pattern.permute.xlu0 0
          %6479 = vperm.xlu0 %6478, %v5769
          %v6480 = vpop.permute.xlu0 %6479
          %6483 = vset.pattern.permute.xlu0 0
          %6484 = vperm.xlu0 %6483, %v5770
          %v6485 = vpop.permute.xlu0 %6484
          %6488 = vset.pattern.permute.xlu0 0
          %6489 = vperm.xlu0 %6488, %v5771
          %v6490 = vpop.permute.xlu0 %6489
          %6493 = vset.pattern.permute.xlu0 0
          %6494 = vperm.xlu0 %6493, %v5772
          %v6495 = vpop.permute.xlu0 %6494
          %6498 = vset.pattern.permute.xlu0 0
          %6499 = vperm.xlu0 %6498, %v5773
          %v6500 = vpop.permute.xlu0 %6499
          %6503 = vset.pattern.permute.xlu0 0
          %6504 = vperm.xlu0 %6503, %v5774
          %v6505 = vpop.permute.xlu0 %6504
          %6508 = vset.pattern.permute.xlu0 0
          %6509 = vperm.xlu0 %6508, %v5775
          %v6510 = vpop.permute.xlu0 %6509
          %6513 = vset.pattern.permute.xlu0 0
          %6514 = vperm.xlu0 %6513, %v5776
          %v6515 = vpop.permute.xlu0 %6514
          %6518 = vset.pattern.permute.xlu0 0
          %6519 = vperm.xlu0 %6518, %v5777
          %v6520 = vpop.permute.xlu0 %6519
          %6523 = vset.pattern.permute.xlu0 0
          %6524 = vperm.xlu0 %6523, %v5778
          %v6525 = vpop.permute.xlu0 %6524
          %6528 = vset.pattern.permute.xlu0 0
          %6529 = vperm.xlu0 %6528, %v5779
          %v6530 = vpop.permute.xlu0 %6529
          %6533 = vset.pattern.permute.xlu0 0
          %6534 = vperm.xlu0 %6533, %v5780
          %v6535 = vpop.permute.xlu0 %6534
          %6538 = vset.pattern.permute.xlu0 0
          %6539 = vperm.xlu0 %6538, %v5781
          %v6540 = vpop.permute.xlu0 %6539
          %6543 = vset.pattern.permute.xlu0 0
          %6544 = vperm.xlu0 %6543, %v5782
          %v6545 = vpop.permute.xlu0 %6544
          %6548 = vset.pattern.permute.xlu0 0
          %6549 = vperm.xlu0 %6548, %v5783
          %v6550 = vpop.permute.xlu0 %6549
          %6553 = vset.pattern.permute.xlu0 0
          %6554 = vperm.xlu0 %6553, %v5784
          %v6555 = vpop.permute.xlu0 %6554
          %6558 = vset.pattern.permute.xlu0 0
          %6559 = vperm.xlu0 %6558, %v5785
          %v6560 = vpop.permute.xlu0 %6559
          %6563 = vset.pattern.permute.xlu0 0
          %6564 = vperm.xlu0 %6563, %v5786
          %v6565 = vpop.permute.xlu0 %6564
          %6568 = vset.pattern.permute.xlu0 0
          %6569 = vperm.xlu0 %6568, %v5787
          %v6570 = vpop.permute.xlu0 %6569
          %6573 = vset.pattern.permute.xlu0 0
          %6574 = vperm.xlu0 %6573, %v5788
          %v6575 = vpop.permute.xlu0 %6574
          %6578 = vset.pattern.permute.xlu0 0
          %6579 = vperm.xlu0 %6578, %v5789
          %v6580 = vpop.permute.xlu0 %6579
          %6583 = vset.pattern.permute.xlu0 0
          %6584 = vperm.xlu0 %6583, %v5790
          %v6585 = vpop.permute.xlu0 %6584
          %6588 = vset.pattern.permute.xlu0 0
          %6589 = vperm.xlu0 %6588, %v5791
          %v6590 = vpop.permute.xlu0 %6589
          %6593 = vset.pattern.permute.xlu0 0
          %6594 = vperm.xlu0 %6593, %v5792
          %v6595 = vpop.permute.xlu0 %6594
          %6598 = vset.pattern.permute.xlu0 0
          %6599 = vperm.xlu0 %6598, %v5793
          %v6600 = vpop.permute.xlu0 %6599
          %6603 = vset.pattern.permute.xlu0 0
          %6604 = vperm.xlu0 %6603, %v5794
          %v6605 = vpop.permute.xlu0 %6604
          %6608 = vset.pattern.permute.xlu0 0
          %6609 = vperm.xlu0 %6608, %v5795
          %v6610 = vpop.permute.xlu0 %6609
          %6613 = vset.pattern.permute.xlu0 0
          %6614 = vperm.xlu0 %6613, %v5796
          %v6615 = vpop.permute.xlu0 %6614
          %6618 = vset.pattern.permute.xlu0 0
          %6619 = vperm.xlu0 %6618, %v5797
          %v6620 = vpop.permute.xlu0 %6619
          %6623 = vset.pattern.permute.xlu0 0
          %6624 = vperm.xlu0 %6623, %v5798
          %v6625 = vpop.permute.xlu0 %6624
          %6628 = vset.pattern.permute.xlu0 0
          %6629 = vperm.xlu0 %6628, %v5799
          %v6630 = vpop.permute.xlu0 %6629
          %6633 = vset.pattern.permute.xlu0 0
          %6634 = vperm.xlu0 %6633, %v5800
          %v6635 = vpop.permute.xlu0 %6634
          %6638 = vset.pattern.permute.xlu0 0
          %6639 = vperm.xlu0 %6638, %v5801
          %v6640 = vpop.permute.xlu0 %6639
          %6643 = vset.pattern.permute.xlu0 0
          %6644 = vperm.xlu0 %6643, %v5802
          %v6645 = vpop.permute.xlu0 %6644
          %6648 = vset.pattern.permute.xlu0 0
          %6649 = vperm.xlu0 %6648, %v5803
          %v6650 = vpop.permute.xlu0 %6649
          %6653 = vset.pattern.permute.xlu0 0
          %6654 = vperm.xlu0 %6653, %v5804
          %v6655 = vpop.permute.xlu0 %6654
          %6658 = vset.pattern.permute.xlu0 0
          %6659 = vperm.xlu0 %6658, %v5805
          %v6660 = vpop.permute.xlu0 %6659
          %6663 = vset.pattern.permute.xlu0 0
          %6664 = vperm.xlu0 %6663, %v5806
          %v6665 = vpop.permute.xlu0 %6664
          %6668 = vset.pattern.permute.xlu0 0
          %6669 = vperm.xlu0 %6668, %v5807
          %v6670 = vpop.permute.xlu0 %6669
          %6673 = vset.pattern.permute.xlu0 0
          %6674 = vperm.xlu0 %6673, %v5808
          %v6675 = vpop.permute.xlu0 %6674
          %6678 = vset.pattern.permute.xlu0 0
          %6679 = vperm.xlu0 %6678, %v5809
          %v6680 = vpop.permute.xlu0 %6679
          %6683 = vset.pattern.permute.xlu0 0
          %6684 = vperm.xlu0 %6683, %v5810
          %v6685 = vpop.permute.xlu0 %6684
          %6688 = vset.pattern.permute.xlu0 0
          %6689 = vperm.xlu0 %6688, %v5811
          %v6690 = vpop.permute.xlu0 %6689
          %6693 = vset.pattern.permute.xlu0 0
          %6694 = vperm.xlu0 %6693, %v5812
          %v6695 = vpop.permute.xlu0 %6694
          %6698 = vset.pattern.permute.xlu0 0
          %6699 = vperm.xlu0 %6698, %v5813
          %v6700 = vpop.permute.xlu0 %6699
          %6703 = vset.pattern.permute.xlu0 0
          %6704 = vperm.xlu0 %6703, %v5814
          %v6705 = vpop.permute.xlu0 %6704
          %6708 = vset.pattern.permute.xlu0 0
          %6709 = vperm.xlu0 %6708, %v5815
          %v6710 = vpop.permute.xlu0 %6709
          %6713 = vset.pattern.permute.xlu0 0
          %6714 = vperm.xlu0 %6713, %v5816
          %v6715 = vpop.permute.xlu0 %6714
          %6718 = vset.pattern.permute.xlu0 0
          %6719 = vperm.xlu0 %6718, %v5817
          %v6720 = vpop.permute.xlu0 %6719
          %6723 = vset.pattern.permute.xlu0 0
          %6724 = vperm.xlu0 %6723, %v5818
          %v6725 = vpop.permute.xlu0 %6724
          %6728 = vset.pattern.permute.xlu0 0
          %6729 = vperm.xlu0 %6728, %v5819
          %v6730 = vpop.permute.xlu0 %6729
          %6733 = vset.pattern.permute.xlu0 0
          %6734 = vperm.xlu0 %6733, %v5820
          %v6735 = vpop.permute.xlu0 %6734
          %6738 = vset.pattern.permute.xlu0 0
          %6739 = vperm.xlu0 %6738, %v5821
          %v6740 = vpop.permute.xlu0 %6739
          %6743 = vset.pattern.permute.xlu0 0
          %6744 = vperm.xlu0 %6743, %v5822
          %v6745 = vpop.permute.xlu0 %6744
          %6748 = vset.pattern.permute.xlu0 0
          %6749 = vperm.xlu0 %6748, %v5823
          %v6750 = vpop.permute.xlu0 %6749
          %6753 = vset.pattern.permute.xlu0 0
          %6754 = vperm.xlu0 %6753, %v5824
          %v6755 = vpop.permute.xlu0 %6754
          %6758 = vset.pattern.permute.xlu0 0
          %6759 = vperm.xlu0 %6758, %v5825
          %v6760 = vpop.permute.xlu0 %6759
          %6763 = vset.pattern.permute.xlu0 0
          %6764 = vperm.xlu0 %6763, %v5826
          %v6765 = vpop.permute.xlu0 %6764
          %6768 = vset.pattern.permute.xlu0 0
          %6769 = vperm.xlu0 %6768, %v5827
          %v6770 = vpop.permute.xlu0 %6769
          %6773 = vset.pattern.permute.xlu0 0
          %6774 = vperm.xlu0 %6773, %v5828
          %v6775 = vpop.permute.xlu0 %6774
          %6778 = vset.pattern.permute.xlu0 0
          %6779 = vperm.xlu0 %6778, %v5829
          %v6780 = vpop.permute.xlu0 %6779
          %6783 = vset.pattern.permute.xlu0 0
          %6784 = vperm.xlu0 %6783, %v5830
          %v6785 = vpop.permute.xlu0 %6784
          %6788 = vset.pattern.permute.xlu0 0
          %6789 = vperm.xlu0 %6788, %v5831
          %v6790 = vpop.permute.xlu0 %6789
          %6793 = vset.pattern.permute.xlu0 0
          %6794 = vperm.xlu0 %6793, %v5832
          %v6795 = vpop.permute.xlu0 %6794
          %6798 = vset.pattern.permute.xlu0 0
          %6799 = vperm.xlu0 %6798, %v5833
          %v6800 = vpop.permute.xlu0 %6799
          %6803 = vset.pattern.permute.xlu0 0
          %6804 = vperm.xlu0 %6803, %v5834
          %v6805 = vpop.permute.xlu0 %6804
          %6808 = vset.pattern.permute.xlu0 0
          %6809 = vperm.xlu0 %6808, %v5835
          %v6810 = vpop.permute.xlu0 %6809
          %6813 = vset.pattern.permute.xlu0 0
          %6814 = vperm.xlu0 %6813, %v5836
          %v6815 = vpop.permute.xlu0 %6814
          %6818 = vset.pattern.permute.xlu0 0
          %6819 = vperm.xlu0 %6818, %v5837
          %v6820 = vpop.permute.xlu0 %6819
          %6823 = vset.pattern.permute.xlu0 0
          %6824 = vperm.xlu0 %6823, %v5838
          %v6825 = vpop.permute.xlu0 %6824
          %6828 = vset.pattern.permute.xlu0 0
          %6829 = vperm.xlu0 %6828, %v5839
          %v6830 = vpop.permute.xlu0 %6829
          %6833 = vset.pattern.permute.xlu0 0
          %6834 = vperm.xlu0 %6833, %v5840
          %v6835 = vpop.permute.xlu0 %6834
          %6838 = vset.pattern.permute.xlu0 0
          %6839 = vperm.xlu0 %6838, %v5841
          %v6840 = vpop.permute.xlu0 %6839
          %6843 = vset.pattern.permute.xlu0 0
          %6844 = vperm.xlu0 %6843, %v5842
          %v6845 = vpop.permute.xlu0 %6844
          %6848 = vset.pattern.permute.xlu0 0
          %6849 = vperm.xlu0 %6848, %v5843
          %v6850 = vpop.permute.xlu0 %6849
          %6853 = vset.pattern.permute.xlu0 0
          %6854 = vperm.xlu0 %6853, %v5844
          %v6855 = vpop.permute.xlu0 %6854
          %6858 = vset.pattern.permute.xlu0 0
          %6859 = vperm.xlu0 %6858, %v5845
          %v6860 = vpop.permute.xlu0 %6859
          %6863 = vset.pattern.permute.xlu0 0
          %6864 = vperm.xlu0 %6863, %v5846
          %v6865 = vpop.permute.xlu0 %6864
          %6868 = vset.pattern.permute.xlu0 0
          %6869 = vperm.xlu0 %6868, %v5847
          %v6870 = vpop.permute.xlu0 %6869
          %6873 = vset.pattern.permute.xlu0 0
          %6874 = vperm.xlu0 %6873, %v5848
          %v6875 = vpop.permute.xlu0 %6874
          %6878 = vset.pattern.permute.xlu0 0
          %6879 = vperm.xlu0 %6878, %v5849
          %v6880 = vpop.permute.xlu0 %6879
          %6883 = vset.pattern.permute.xlu0 0
          %6884 = vperm.xlu0 %6883, %v5850
          %v6885 = vpop.permute.xlu0 %6884
          %6888 = vset.pattern.permute.xlu0 0
          %6889 = vperm.xlu0 %6888, %v5851
          %v6890 = vpop.permute.xlu0 %6889
          %6893 = vset.pattern.permute.xlu0 0
          %6894 = vperm.xlu0 %6893, %v5852
          %v6895 = vpop.permute.xlu0 %6894
          %6898 = vset.pattern.permute.xlu0 0
          %6899 = vperm.xlu0 %6898, %v5853
          %v6900 = vpop.permute.xlu0 %6899
          %6903 = vset.pattern.permute.xlu0 0
          %6904 = vperm.xlu0 %6903, %v5854
          %v6905 = vpop.permute.xlu0 %6904
          %6908 = vset.pattern.permute.xlu0 0
          %6909 = vperm.xlu0 %6908, %v5855
          %v6910 = vpop.permute.xlu0 %6909
          %6913 = vset.pattern.permute.xlu0 0
          %6914 = vperm.xlu0 %6913, %v5856
          %v6915 = vpop.permute.xlu0 %6914
          %6918 = vset.pattern.permute.xlu0 0
          %6919 = vperm.xlu0 %6918, %v5857
          %v6920 = vpop.permute.xlu0 %6919
          %6923 = vset.pattern.permute.xlu0 0
          %6924 = vperm.xlu0 %6923, %v5858
          %v6925 = vpop.permute.xlu0 %6924
          %6928 = vset.pattern.permute.xlu0 0
          %6929 = vperm.xlu0 %6928, %v5859
          %v6930 = vpop.permute.xlu0 %6929
          %6933 = vset.pattern.permute.xlu0 0
          %6934 = vperm.xlu0 %6933, %v5860
          %v6935 = vpop.permute.xlu0 %6934
          %6938 = vset.pattern.permute.xlu0 0
          %6939 = vperm.xlu0 %6938, %v5861
          %v6940 = vpop.permute.xlu0 %6939
          %6943 = vset.pattern.permute.xlu0 0
          %6944 = vperm.xlu0 %6943, %v5862
          %v6945 = vpop.permute.xlu0 %6944
          %6948 = vset.pattern.permute.xlu0 0
          %6949 = vperm.xlu0 %6948, %v5863
          %v6950 = vpop.permute.xlu0 %6949
          %6953 = vset.pattern.permute.xlu0 0
          %6954 = vperm.xlu0 %6953, %v5864
          %v6955 = vpop.permute.xlu0 %6954
          %6958 = vset.pattern.permute.xlu0 0
          %6959 = vperm.xlu0 %6958, %v5865
          %v6960 = vpop.permute.xlu0 %6959
          %6963 = vset.pattern.permute.xlu0 0
          %6964 = vperm.xlu0 %6963, %v5866
          %v6965 = vpop.permute.xlu0 %6964
          %6968 = vset.pattern.permute.xlu0 0
          %6969 = vperm.xlu0 %6968, %v5867
          %v6970 = vpop.permute.xlu0 %6969
          %6973 = vset.pattern.permute.xlu0 0
          %6974 = vperm.xlu0 %6973, %v5868
          %v6975 = vpop.permute.xlu0 %6974
          %6978 = vset.pattern.permute.xlu0 0
          %6979 = vperm.xlu0 %6978, %v5869
          %v6980 = vpop.permute.xlu0 %6979
          %6983 = vset.pattern.permute.xlu0 0
          %6984 = vperm.xlu0 %6983, %v5870
          %v6985 = vpop.permute.xlu0 %6984
          %6988 = vset.pattern.permute.xlu0 0
          %6989 = vperm.xlu0 %6988, %v5871
          %v6990 = vpop.permute.xlu0 %6989
          %6993 = vset.pattern.permute.xlu0 0
          %6994 = vperm.xlu0 %6993, %v5872
          %v6995 = vpop.permute.xlu0 %6994
          %6998 = vset.pattern.permute.xlu0 0
          %6999 = vperm.xlu0 %6998, %v5873
          %v7000 = vpop.permute.xlu0 %6999
          %7003 = vset.pattern.permute.xlu0 0
          %7004 = vperm.xlu0 %7003, %v5874
          %v7005 = vpop.permute.xlu0 %7004
          %7008 = vset.pattern.permute.xlu0 0
          %7009 = vperm.xlu0 %7008, %v5875
          %v7010 = vpop.permute.xlu0 %7009
          %7013 = vset.pattern.permute.xlu0 0
          %7014 = vperm.xlu0 %7013, %v5876
          %v7015 = vpop.permute.xlu0 %7014
          %7018 = vset.pattern.permute.xlu0 0
          %7019 = vperm.xlu0 %7018, %v5877
          %v7020 = vpop.permute.xlu0 %7019
          %7023 = vset.pattern.permute.xlu0 0
          %7024 = vperm.xlu0 %7023, %v5878
          %v7025 = vpop.permute.xlu0 %7024
          %7028 = vset.pattern.permute.xlu0 0
          %7029 = vperm.xlu0 %7028, %v5879
          %v7030 = vpop.permute.xlu0 %7029
          %7033 = vset.pattern.permute.xlu0 0
          %7034 = vperm.xlu0 %7033, %v5880
          %v7035 = vpop.permute.xlu0 %7034
          %7038 = vset.pattern.permute.xlu0 0
          %7039 = vperm.xlu0 %7038, %v5881
          %v7040 = vpop.permute.xlu0 %7039
          %7043 = vset.pattern.permute.xlu0 0
          %7044 = vperm.xlu0 %7043, %v5882
          %v7045 = vpop.permute.xlu0 %7044
          %7048 = vset.pattern.permute.xlu0 0
          %7049 = vperm.xlu0 %7048, %v5883
          %v7050 = vpop.permute.xlu0 %7049
          %7053 = vset.pattern.permute.xlu0 0
          %7054 = vperm.xlu0 %7053, %v5884
          %v7055 = vpop.permute.xlu0 %7054
          %7058 = vset.pattern.permute.xlu0 0
          %7059 = vperm.xlu0 %7058, %v5885
          %v7060 = vpop.permute.xlu0 %7059
          %7063 = vset.pattern.permute.xlu0 0
          %7064 = vperm.xlu0 %7063, %v5886
          %v7065 = vpop.permute.xlu0 %7064
          %7068 = vset.pattern.permute.xlu0 0
          %7069 = vperm.xlu0 %7068, %v5887
          %v7070 = vpop.permute.xlu0 %7069
          %7073 = vset.pattern.permute.xlu0 0
          %7074 = vperm.xlu0 %7073, %v5888
          %v7075 = vpop.permute.xlu0 %7074
          %7078 = vset.pattern.permute.xlu0 0
          %7079 = vperm.xlu0 %7078, %v5889
          %v7080 = vpop.permute.xlu0 %7079
          %7083 = vset.pattern.permute.xlu0 0
          %7084 = vperm.xlu0 %7083, %v5890
          %v7085 = vpop.permute.xlu0 %7084
          %7088 = vset.pattern.permute.xlu0 0
          %7089 = vperm.xlu0 %7088, %v5891
          %v7090 = vpop.permute.xlu0 %7089
          %7093 = vset.pattern.permute.xlu0 0
          %7094 = vperm.xlu0 %7093, %v5892
          %v7095 = vpop.permute.xlu0 %7094
          %7098 = vset.pattern.permute.xlu0 0
          %7099 = vperm.xlu0 %7098, %v5893
          %v7100 = vpop.permute.xlu0 %7099
          %7103 = vset.pattern.permute.xlu0 0
          %7104 = vperm.xlu0 %7103, %v5894
          %v7105 = vpop.permute.xlu0 %7104
          %7108 = vset.pattern.permute.xlu0 0
          %7109 = vperm.xlu0 %7108, %v5895
          %v7110 = vpop.permute.xlu0 %7109
          %7113 = vset.pattern.permute.xlu0 0
          %7114 = vperm.xlu0 %7113, %v5896
          %v7115 = vpop.permute.xlu0 %7114
          %7118 = vset.pattern.permute.xlu0 0
          %7119 = vperm.xlu0 %7118, %v5897
          %v7120 = vpop.permute.xlu0 %7119
          %7123 = vset.pattern.permute.xlu0 0
          %7124 = vperm.xlu0 %7123, %v5898
          %v7125 = vpop.permute.xlu0 %7124
          %7128 = vset.pattern.permute.xlu0 0
          %7129 = vperm.xlu0 %7128, %v5899
          %v7130 = vpop.permute.xlu0 %7129
          %7133 = vset.pattern.permute.xlu0 0
          %7134 = vperm.xlu0 %7133, %v5900
          %v7135 = vpop.permute.xlu0 %7134
          %7138 = vset.pattern.permute.xlu0 0
          %7139 = vperm.xlu0 %7138, %v5901
          %v7140 = vpop.permute.xlu0 %7139
          %7143 = vset.pattern.permute.xlu0 0
          %7144 = vperm.xlu0 %7143, %v5902
          %v7145 = vpop.permute.xlu0 %7144
          %7148 = vset.pattern.permute.xlu0 0
          %7149 = vperm.xlu0 %7148, %v5903
          %v7150 = vpop.permute.xlu0 %7149
          %7153 = vset.pattern.permute.xlu0 0
          %7154 = vperm.xlu0 %7153, %v5904
          %v7155 = vpop.permute.xlu0 %7154
          %7158 = vset.pattern.permute.xlu0 0
          %7159 = vperm.xlu0 %7158, %v5905
          %v7160 = vpop.permute.xlu0 %7159
          %7163 = vset.pattern.permute.xlu0 0
          %7164 = vperm.xlu0 %7163, %v5906
          %v7165 = vpop.permute.xlu0 %7164
          %7168 = vset.pattern.permute.xlu0 0
          %7169 = vperm.xlu0 %7168, %v5907
          %v7170 = vpop.permute.xlu0 %7169
          %7173 = vset.pattern.permute.xlu0 0
          %7174 = vperm.xlu0 %7173, %v5908
          %v7175 = vpop.permute.xlu0 %7174
          %7178 = vset.pattern.permute.xlu0 0
          %7179 = vperm.xlu0 %7178, %v5909
          %v7180 = vpop.permute.xlu0 %7179
          %7183 = vset.pattern.permute.xlu0 0
          %7184 = vperm.xlu0 %7183, %v5910
          %v7185 = vpop.permute.xlu0 %7184
          %7188 = vset.pattern.permute.xlu0 0
          %7189 = vperm.xlu0 %7188, %v5911
          %v7190 = vpop.permute.xlu0 %7189
          %7193 = vset.pattern.permute.xlu0 0
          %7194 = vperm.xlu0 %7193, %v5912
          %v7195 = vpop.permute.xlu0 %7194
          %7198 = vset.pattern.permute.xlu0 0
          %7199 = vperm.xlu0 %7198, %v5913
          %v7200 = vpop.permute.xlu0 %7199
          %7203 = vset.pattern.permute.xlu0 0
          %7204 = vperm.xlu0 %7203, %v5914
          %v7205 = vpop.permute.xlu0 %7204
          %7208 = vset.pattern.permute.xlu0 0
          %7209 = vperm.xlu0 %7208, %v5915
          %v7210 = vpop.permute.xlu0 %7209
          %7213 = vset.pattern.permute.xlu0 0
          %7214 = vperm.xlu0 %7213, %v5916
          %v7215 = vpop.permute.xlu0 %7214
          %7218 = vset.pattern.permute.xlu0 0
          %7219 = vperm.xlu0 %7218, %v5917
          %v7220 = vpop.permute.xlu0 %7219
          %7223 = vset.pattern.permute.xlu0 0
          %7224 = vperm.xlu0 %7223, %v5918
          %v7225 = vpop.permute.xlu0 %7224
          %7228 = vset.pattern.permute.xlu0 0
          %7229 = vperm.xlu0 %7228, %v5919
          %v7230 = vpop.permute.xlu0 %7229
          %7233 = vset.pattern.permute.xlu0 0
          %7234 = vperm.xlu0 %7233, %v5920
          %v7235 = vpop.permute.xlu0 %7234
          %7238 = vset.pattern.permute.xlu0 0
          %7239 = vperm.xlu0 %7238, %v5921
          %v7240 = vpop.permute.xlu0 %7239
          %7243 = vset.pattern.permute.xlu0 0
          %7244 = vperm.xlu0 %7243, %v5922
          %v7245 = vpop.permute.xlu0 %7244
          %7248 = vset.pattern.permute.xlu0 0
          %7249 = vperm.xlu0 %7248, %v5923
          %v7250 = vpop.permute.xlu0 %7249
          %7253 = vset.pattern.permute.xlu0 0
          %7254 = vperm.xlu0 %7253, %v5924
          %v7255 = vpop.permute.xlu0 %7254
          %7258 = vset.pattern.permute.xlu0 0
          %7259 = vperm.xlu0 %7258, %v5925
          %v7260 = vpop.permute.xlu0 %7259
          %7263 = vset.pattern.permute.xlu0 0
          %7264 = vperm.xlu0 %7263, %v5926
          %v7265 = vpop.permute.xlu0 %7264
          %7268 = vset.pattern.permute.xlu0 0
          %7269 = vperm.xlu0 %7268, %v5927
          %v7270 = vpop.permute.xlu0 %7269
          %7273 = vset.pattern.permute.xlu0 0
          %7274 = vperm.xlu0 %7273, %v5928
          %v7275 = vpop.permute.xlu0 %7274
          %7278 = vset.pattern.permute.xlu0 0
          %7279 = vperm.xlu0 %7278, %v5929
          %v7280 = vpop.permute.xlu0 %7279
          %7283 = vset.pattern.permute.xlu0 0
          %7284 = vperm.xlu0 %7283, %v5930
          %v7285 = vpop.permute.xlu0 %7284
          %7288 = vset.pattern.permute.xlu0 0
          %7289 = vperm.xlu0 %7288, %v5931
          %v7290 = vpop.permute.xlu0 %7289
          %7293 = vset.pattern.permute.xlu0 0
          %7294 = vperm.xlu0 %7293, %v5932
          %v7295 = vpop.permute.xlu0 %7294
          %7298 = vset.pattern.permute.xlu0 0
          %7299 = vperm.xlu0 %7298, %v5933
          %v7300 = vpop.permute.xlu0 %7299
          %7303 = vset.pattern.permute.xlu0 0
          %7304 = vperm.xlu0 %7303, %v5934
          %v7305 = vpop.permute.xlu0 %7304
          %7308 = vset.pattern.permute.xlu0 0
          %7309 = vperm.xlu0 %7308, %v5935
          %v7310 = vpop.permute.xlu0 %7309
          %7313 = vset.pattern.permute.xlu0 0
          %7314 = vperm.xlu0 %7313, %v5936
          %v7315 = vpop.permute.xlu0 %7314
          %7318 = vset.pattern.permute.xlu0 0
          %7319 = vperm.xlu0 %7318, %v5937
          %v7320 = vpop.permute.xlu0 %7319
          %7323 = vset.pattern.permute.xlu0 0
          %7324 = vperm.xlu0 %7323, %v5938
          %v7325 = vpop.permute.xlu0 %7324
          %7328 = vset.pattern.permute.xlu0 0
          %7329 = vperm.xlu0 %7328, %v5939
          %v7330 = vpop.permute.xlu0 %7329
          %7333 = vset.pattern.permute.xlu0 0
          %7334 = vperm.xlu0 %7333, %v5940
          %v7335 = vpop.permute.xlu0 %7334
          %7338 = vset.pattern.permute.xlu0 0
          %7339 = vperm.xlu0 %7338, %v5941
          %v7340 = vpop.permute.xlu0 %7339
          %7343 = vset.pattern.permute.xlu0 0
          %7344 = vperm.xlu0 %7343, %v5942
          %v7345 = vpop.permute.xlu0 %7344
          %7348 = vset.pattern.permute.xlu0 0
          %7349 = vperm.xlu0 %7348, %v5943
          %v7350 = vpop.permute.xlu0 %7349
          %7353 = vset.pattern.permute.xlu0 0
          %7354 = vperm.xlu0 %7353, %v5944
          %v7355 = vpop.permute.xlu0 %7354
          %7358 = vset.pattern.permute.xlu0 0
          %7359 = vperm.xlu0 %7358, %v5945
          %v7360 = vpop.permute.xlu0 %7359
          %7363 = vset.pattern.permute.xlu0 0
          %7364 = vperm.xlu0 %7363, %v5946
          %v7365 = vpop.permute.xlu0 %7364
          %7368 = vset.pattern.permute.xlu0 0
          %7369 = vperm.xlu0 %7368, %v5947
          %v7370 = vpop.permute.xlu0 %7369
          %7373 = vset.pattern.permute.xlu0 0
          %7374 = vperm.xlu0 %7373, %v5948
          %v7375 = vpop.permute.xlu0 %7374
          %7378 = vset.pattern.permute.xlu0 0
          %7379 = vperm.xlu0 %7378, %v5949
          %v7380 = vpop.permute.xlu0 %7379
          %7383 = vset.pattern.permute.xlu0 0
          %7384 = vperm.xlu0 %7383, %v5950
          %v7385 = vpop.permute.xlu0 %7384
          %7388 = vset.pattern.permute.xlu0 0
          %7389 = vperm.xlu0 %7388, %v5951
          %v7390 = vpop.permute.xlu0 %7389
          %v7392 = vmul.f32 %v6195, %v5952
          %v7393 = vmul.f32 %v6200, %v5953
          %v7394 = vmul.f32 %v6205, %v5954
          %v7395 = vmul.f32 %v6210, %v5955
          %v7396 = vmul.f32 %v6215, %v5956
          %v7397 = vmul.f32 %v6220, %v5957
          %v7398 = vmul.f32 %v6225, %v5958
          %v7399 = vmul.f32 %v6230, %v5959
          %v7400 = vmul.f32 %v6235, %v5960
          %v7401 = vmul.f32 %v6240, %v5961
          %v7402 = vmul.f32 %v6245, %v5962
          %v7403 = vmul.f32 %v6250, %v5963
          %v7404 = vmul.f32 %v6255, %v5964
          %v7405 = vmul.f32 %v6260, %v5965
          %v7406 = vmul.f32 %v6265, %v5966
          %v7407 = vmul.f32 %v6270, %v5967
          %v7408 = vmul.f32 %v6275, %v5968
          %v7409 = vmul.f32 %v6280, %v5969
          %v7410 = vmul.f32 %v6285, %v5970
          %v7411 = vmul.f32 %v6290, %v5971
          %v7412 = vmul.f32 %v6295, %v5972
          %v7413 = vmul.f32 %v6300, %v5973
          %v7414 = vmul.f32 %v6305, %v5974
          %v7415 = vmul.f32 %v6310, %v5975
          %v7416 = vmul.f32 %v6315, %v5976
          %v7417 = vmul.f32 %v6320, %v5977
          %v7418 = vmul.f32 %v6325, %v5978
          %v7419 = vmul.f32 %v6330, %v5979
          %v7420 = vmul.f32 %v6335, %v5980
          %v7421 = vmul.f32 %v6340, %v5981
          %v7422 = vmul.f32 %v6345, %v5982
          %v7423 = vmul.f32 %v6350, %v5983
          %v7424 = vmul.f32 %v6355, %v5984
          %v7425 = vmul.f32 %v6360, %v5985
          %v7426 = vmul.f32 %v6365, %v5986
          %v7427 = vmul.f32 %v6370, %v5987
          %v7428 = vmul.f32 %v6375, %v5988
          %v7429 = vmul.f32 %v6380, %v5989
          %v7430 = vmul.f32 %v6385, %v5990
          %v7431 = vmul.f32 %v6390, %v5991
          %v7432 = vmul.f32 %v6395, %v5992
          %v7433 = vmul.f32 %v6400, %v5993
          %v7434 = vmul.f32 %v6405, %v5994
          %v7435 = vmul.f32 %v6410, %v5995
          %v7436 = vmul.f32 %v6415, %v5996
          %v7437 = vmul.f32 %v6420, %v5997
          %v7438 = vmul.f32 %v6425, %v5998
          %v7439 = vmul.f32 %v6430, %v5999
          %v7440 = vmul.f32 %v6435, %v6000
          %v7441 = vmul.f32 %v6440, %v6001
          %v7442 = vmul.f32 %v6445, %v6002
          %v7443 = vmul.f32 %v6450, %v6003
          %v7444 = vmul.f32 %v6455, %v6004
          %v7445 = vmul.f32 %v6460, %v6005
          %v7446 = vmul.f32 %v6465, %v6006
          %v7447 = vmul.f32 %v6470, %v6007
          %v7448 = vmul.f32 %v6475, %v6008
          %v7449 = vmul.f32 %v6480, %v6009
          %v7450 = vmul.f32 %v6485, %v6010
          %v7451 = vmul.f32 %v6490, %v6011
          %v7452 = vmul.f32 %v6495, %v6012
          %v7453 = vmul.f32 %v6500, %v6013
          %v7454 = vmul.f32 %v6505, %v6014
          %v7455 = vmul.f32 %v6510, %v6015
          %v7456 = vmul.f32 %v6515, %v6016
          %v7457 = vmul.f32 %v6520, %v6017
          %v7458 = vmul.f32 %v6525, %v6018
          %v7459 = vmul.f32 %v6530, %v6019
          %v7460 = vmul.f32 %v6535, %v6020
          %v7461 = vmul.f32 %v6540, %v6021
          %v7462 = vmul.f32 %v6545, %v6022
          %v7463 = vmul.f32 %v6550, %v6023
          %v7464 = vmul.f32 %v6555, %v6024
          %v7465 = vmul.f32 %v6560, %v6025
          %v7466 = vmul.f32 %v6565, %v6026
          %v7467 = vmul.f32 %v6570, %v6027
          %v7468 = vmul.f32 %v6575, %v6028
          %v7469 = vmul.f32 %v6580, %v6029
          %v7470 = vmul.f32 %v6585, %v6030
          %v7471 = vmul.f32 %v6590, %v6031
          %v7472 = vmul.f32 %v6595, %v6032
          %v7473 = vmul.f32 %v6600, %v6033
          %v7474 = vmul.f32 %v6605, %v6034
          %v7475 = vmul.f32 %v6610, %v6035
          %v7476 = vmul.f32 %v6615, %v6036
          %v7477 = vmul.f32 %v6620, %v6037
          %v7478 = vmul.f32 %v6625, %v6038
          %v7479 = vmul.f32 %v6630, %v6039
          %v7480 = vmul.f32 %v6635, %v6040
          %v7481 = vmul.f32 %v6640, %v6041
          %v7482 = vmul.f32 %v6645, %v6042
          %v7483 = vmul.f32 %v6650, %v6043
          %v7484 = vmul.f32 %v6655, %v6044
          %v7485 = vmul.f32 %v6660, %v6045
          %v7486 = vmul.f32 %v6665, %v6046
          %v7487 = vmul.f32 %v6670, %v6047
          %v7488 = vmul.f32 %v6675, %v6048
          %v7489 = vmul.f32 %v6680, %v6049
          %v7490 = vmul.f32 %v6685, %v6050
          %v7491 = vmul.f32 %v6690, %v6051
          %v7492 = vmul.f32 %v6695, %v6052
          %v7493 = vmul.f32 %v6700, %v6053
          %v7494 = vmul.f32 %v6705, %v6054
          %v7495 = vmul.f32 %v6710, %v6055
          %v7496 = vmul.f32 %v6715, %v6056
          %v7497 = vmul.f32 %v6720, %v6057
          %v7498 = vmul.f32 %v6725, %v6058
          %v7499 = vmul.f32 %v6730, %v6059
          %v7500 = vmul.f32 %v6735, %v6060
          %v7501 = vmul.f32 %v6740, %v6061
          %v7502 = vmul.f32 %v6745, %v6062
          %v7503 = vmul.f32 %v6750, %v6063
          %v7504 = vmul.f32 %v6755, %v6064
          %v7505 = vmul.f32 %v6760, %v6065
          %v7506 = vmul.f32 %v6765, %v6066
          %v7507 = vmul.f32 %v6770, %v6067
          %v7508 = vmul.f32 %v6775, %v6068
          %v7509 = vmul.f32 %v6780, %v6069
          %v7510 = vmul.f32 %v6785, %v6070
          %v7511 = vmul.f32 %v6790, %v6071
          %v7512 = vmul.f32 %v6795, %v6072
          %v7513 = vmul.f32 %v6800, %v6073
          %v7514 = vmul.f32 %v6805, %v6074
          %v7515 = vmul.f32 %v6810, %v6075
          %v7516 = vmul.f32 %v6815, %v6076
          %v7517 = vmul.f32 %v6820, %v6077
          %v7518 = vmul.f32 %v6825, %v6078
          %v7519 = vmul.f32 %v6830, %v6079
          %v7520 = vmul.f32 %v6835, %v6080
          %v7521 = vmul.f32 %v6840, %v6081
          %v7522 = vmul.f32 %v6845, %v6082
          %v7523 = vmul.f32 %v6850, %v6083
          %v7524 = vmul.f32 %v6855, %v6084
          %v7525 = vmul.f32 %v6860, %v6085
          %v7526 = vmul.f32 %v6865, %v6086
          %v7527 = vmul.f32 %v6870, %v6087
          %v7528 = vmul.f32 %v6875, %v6088
          %v7529 = vmul.f32 %v6880, %v6089
          %v7530 = vmul.f32 %v6885, %v6090
          %v7531 = vmul.f32 %v6890, %v6091
          %v7532 = vmul.f32 %v6895, %v6092
          %v7533 = vmul.f32 %v6900, %v6093
          %v7534 = vmul.f32 %v6905, %v6094
          %v7535 = vmul.f32 %v6910, %v6095
          %v7536 = vmul.f32 %v6915, %v6096
          %v7537 = vmul.f32 %v6920, %v6097
          %v7538 = vmul.f32 %v6925, %v6098
          %v7539 = vmul.f32 %v6930, %v6099
          %v7540 = vmul.f32 %v6935, %v6100
          %v7541 = vmul.f32 %v6940, %v6101
          %v7542 = vmul.f32 %v6945, %v6102
          %v7543 = vmul.f32 %v6950, %v6103
          %v7544 = vmul.f32 %v6955, %v6104
          %v7545 = vmul.f32 %v6960, %v6105
          %v7546 = vmul.f32 %v6965, %v6106
          %v7547 = vmul.f32 %v6970, %v6107
          %v7548 = vmul.f32 %v6975, %v6108
          %v7549 = vmul.f32 %v6980, %v6109
          %v7550 = vmul.f32 %v6985, %v6110
          %v7551 = vmul.f32 %v6990, %v6111
          %v7552 = vmul.f32 %v6995, %v6112
          %v7553 = vmul.f32 %v7000, %v6113
          %v7554 = vmul.f32 %v7005, %v6114
          %v7555 = vmul.f32 %v7010, %v6115
          %v7556 = vmul.f32 %v7015, %v6116
          %v7557 = vmul.f32 %v7020, %v6117
          %v7558 = vmul.f32 %v7025, %v6118
          %v7559 = vmul.f32 %v7030, %v6119
          %v7560 = vmul.f32 %v7035, %v6120
          %v7561 = vmul.f32 %v7040, %v6121
          %v7562 = vmul.f32 %v7045, %v6122
          %v7563 = vmul.f32 %v7050, %v6123
          %v7564 = vmul.f32 %v7055, %v6124
          %v7565 = vmul.f32 %v7060, %v6125
          %v7566 = vmul.f32 %v7065, %v6126
          %v7567 = vmul.f32 %v7070, %v6127
          %v7568 = vmul.f32 %v7075, %v6128
          %v7569 = vmul.f32 %v7080, %v6129
          %v7570 = vmul.f32 %v7085, %v6130
          %v7571 = vmul.f32 %v7090, %v6131
          %v7572 = vmul.f32 %v7095, %v6132
          %v7573 = vmul.f32 %v7100, %v6133
          %v7574 = vmul.f32 %v7105, %v6134
          %v7575 = vmul.f32 %v7110, %v6135
          %v7576 = vmul.f32 %v7115, %v6136
          %v7577 = vmul.f32 %v7120, %v6137
          %v7578 = vmul.f32 %v7125, %v6138
          %v7579 = vmul.f32 %v7130, %v6139
          %v7580 = vmul.f32 %v7135, %v6140
          %v7581 = vmul.f32 %v7140, %v6141
          %v7582 = vmul.f32 %v7145, %v6142
          %v7583 = vmul.f32 %v7150, %v6143
          %v7584 = vmul.f32 %v7155, %v6144
          %v7585 = vmul.f32 %v7160, %v6145
          %v7586 = vmul.f32 %v7165, %v6146
          %v7587 = vmul.f32 %v7170, %v6147
          %v7588 = vmul.f32 %v7175, %v6148
          %v7589 = vmul.f32 %v7180, %v6149
          %v7590 = vmul.f32 %v7185, %v6150
          %v7591 = vmul.f32 %v7190, %v6151
          %v7592 = vmul.f32 %v7195, %v6152
          %v7593 = vmul.f32 %v7200, %v6153
          %v7594 = vmul.f32 %v7205, %v6154
          %v7595 = vmul.f32 %v7210, %v6155
          %v7596 = vmul.f32 %v7215, %v6156
          %v7597 = vmul.f32 %v7220, %v6157
          %v7598 = vmul.f32 %v7225, %v6158
          %v7599 = vmul.f32 %v7230, %v6159
          %v7600 = vmul.f32 %v7235, %v6160
          %v7601 = vmul.f32 %v7240, %v6161
          %v7602 = vmul.f32 %v7245, %v6162
          %v7603 = vmul.f32 %v7250, %v6163
          %v7604 = vmul.f32 %v7255, %v6164
          %v7605 = vmul.f32 %v7260, %v6165
          %v7606 = vmul.f32 %v7265, %v6166
          %v7607 = vmul.f32 %v7270, %v6167
          %v7608 = vmul.f32 %v7275, %v6168
          %v7609 = vmul.f32 %v7280, %v6169
          %v7610 = vmul.f32 %v7285, %v6170
          %v7611 = vmul.f32 %v7290, %v6171
          %v7612 = vmul.f32 %v7295, %v6172
          %v7613 = vmul.f32 %v7300, %v6173
          %v7614 = vmul.f32 %v7305, %v6174
          %v7615 = vmul.f32 %v7310, %v6175
          %v7616 = vmul.f32 %v7315, %v6176
          %v7617 = vmul.f32 %v7320, %v6177
          %v7618 = vmul.f32 %v7325, %v6178
          %v7619 = vmul.f32 %v7330, %v6179
          %v7620 = vmul.f32 %v7335, %v6180
          %v7621 = vmul.f32 %v7340, %v6181
          %v7622 = vmul.f32 %v7345, %v6182
          %v7623 = vmul.f32 %v7350, %v6183
          %v7624 = vmul.f32 %v7355, %v6184
          %v7625 = vmul.f32 %v7360, %v6185
          %v7626 = vmul.f32 %v7365, %v6186
          %v7627 = vmul.f32 %v7370, %v6187
          %v7628 = vmul.f32 %v7375, %v6188
          %v7629 = vmul.f32 %v7380, %v6189
          %v7630 = vmul.f32 %v7385, %v6190
          %v7631 = vmul.f32 %v7390, %v6191
          %vm7632 = vcmask 23552
          %v7633 = vsel %vm7632, %v7392, 0.0
          %v7634 = vsel %vm7632, %v7393, 0.0
          %v7635 = vadd.f32 %v7633, %v7634
          %v7636 = vsel %vm7632, %v7394, 0.0
          %v7637 = vadd.f32 %v7635, %v7636
          %v7638 = vsel %vm7632, %v7395, 0.0
          %v7639 = vadd.f32 %v7637, %v7638
          %v7640 = vsel %vm7632, %v7396, 0.0
          %v7641 = vadd.f32 %v7639, %v7640
          %v7642 = vsel %vm7632, %v7397, 0.0
          %v7643 = vadd.f32 %v7641, %v7642
          %v7644 = vsel %vm7632, %v7398, 0.0
          %v7645 = vadd.f32 %v7643, %v7644
          %v7646 = vsel %vm7632, %v7399, 0.0
          %v7647 = vadd.f32 %v7645, %v7646
          %v7648 = vsel %vm7632, %v7400, 0.0
          %v7649 = vadd.f32 %v7647, %v7648
          %v7650 = vsel %vm7632, %v7401, 0.0
          %v7651 = vadd.f32 %v7649, %v7650
          %v7652 = vsel %vm7632, %v7402, 0.0
          %v7653 = vadd.f32 %v7651, %v7652
          %v7654 = vsel %vm7632, %v7403, 0.0
          %v7655 = vadd.f32 %v7653, %v7654
          %v7656 = vsel %vm7632, %v7404, 0.0
          %v7657 = vadd.f32 %v7655, %v7656
          %v7658 = vsel %vm7632, %v7405, 0.0
          %v7659 = vadd.f32 %v7657, %v7658
          %v7660 = vsel %vm7632, %v7406, 0.0
          %v7661 = vadd.f32 %v7659, %v7660
          %v7662 = vsel %vm7632, %v7407, 0.0
          %v7663 = vadd.f32 %v7661, %v7662
          %v7664 = vsel %vm7632, %v7408, 0.0
          %v7665 = vadd.f32 %v7663, %v7664
          %v7666 = vsel %vm7632, %v7409, 0.0
          %v7667 = vadd.f32 %v7665, %v7666
          %v7668 = vsel %vm7632, %v7410, 0.0
          %v7669 = vadd.f32 %v7667, %v7668
          %v7670 = vsel %vm7632, %v7411, 0.0
          %v7671 = vadd.f32 %v7669, %v7670
          %v7672 = vsel %vm7632, %v7412, 0.0
          %v7673 = vadd.f32 %v7671, %v7672
          %v7674 = vsel %vm7632, %v7413, 0.0
          %v7675 = vadd.f32 %v7673, %v7674
          %v7676 = vsel %vm7632, %v7414, 0.0
          %v7677 = vadd.f32 %v7675, %v7676
          %v7678 = vsel %vm7632, %v7415, 0.0
          %v7679 = vadd.f32 %v7677, %v7678
          %v7680 = vsel %vm7632, %v7416, 0.0
          %v7681 = vadd.f32 %v7679, %v7680
          %v7682 = vsel %vm7632, %v7417, 0.0
          %v7683 = vadd.f32 %v7681, %v7682
          %v7684 = vsel %vm7632, %v7418, 0.0
          %v7685 = vadd.f32 %v7683, %v7684
          %v7686 = vsel %vm7632, %v7419, 0.0
          %v7687 = vadd.f32 %v7685, %v7686
          %v7688 = vsel %vm7632, %v7420, 0.0
          %v7689 = vadd.f32 %v7687, %v7688
          %v7690 = vsel %vm7632, %v7421, 0.0
          %v7691 = vadd.f32 %v7689, %v7690
          %v7692 = vsel %vm7632, %v7422, 0.0
          %v7693 = vadd.f32 %v7691, %v7692
          %v7694 = vsel %vm7632, %v7423, 0.0
          %v7695 = vadd.f32 %v7693, %v7694
          %v7696 = vsel %vm7632, %v7424, 0.0
          %v7697 = vadd.f32 %v7695, %v7696
          %v7698 = vsel %vm7632, %v7425, 0.0
          %v7699 = vadd.f32 %v7697, %v7698
          %v7700 = vsel %vm7632, %v7426, 0.0
          %v7701 = vadd.f32 %v7699, %v7700
          %v7702 = vsel %vm7632, %v7427, 0.0
          %v7703 = vadd.f32 %v7701, %v7702
          %v7704 = vsel %vm7632, %v7428, 0.0
          %v7705 = vadd.f32 %v7703, %v7704
          %v7706 = vsel %vm7632, %v7429, 0.0
          %v7707 = vadd.f32 %v7705, %v7706
          %v7708 = vsel %vm7632, %v7430, 0.0
          %v7709 = vadd.f32 %v7707, %v7708
          %v7710 = vsel %vm7632, %v7431, 0.0
          %v7711 = vadd.f32 %v7709, %v7710
          %v7712 = vsel %vm7632, %v7432, 0.0
          %v7713 = vadd.f32 %v7711, %v7712
          %v7714 = vsel %vm7632, %v7433, 0.0
          %v7715 = vadd.f32 %v7713, %v7714
          %v7716 = vsel %vm7632, %v7434, 0.0
          %v7717 = vadd.f32 %v7715, %v7716
          %v7718 = vsel %vm7632, %v7435, 0.0
          %v7719 = vadd.f32 %v7717, %v7718
          %v7720 = vsel %vm7632, %v7436, 0.0
          %v7721 = vadd.f32 %v7719, %v7720
          %v7722 = vsel %vm7632, %v7437, 0.0
          %v7723 = vadd.f32 %v7721, %v7722
          %v7724 = vsel %vm7632, %v7438, 0.0
          %v7725 = vadd.f32 %v7723, %v7724
          %v7726 = vsel %vm7632, %v7439, 0.0
          %v7727 = vadd.f32 %v7725, %v7726
          %v7728 = vsel %vm7632, %v7440, 0.0
          %v7729 = vadd.f32 %v7727, %v7728
          %v7730 = vsel %vm7632, %v7441, 0.0
          %v7731 = vadd.f32 %v7729, %v7730
          %v7732 = vsel %vm7632, %v7442, 0.0
          %v7733 = vadd.f32 %v7731, %v7732
          %v7734 = vsel %vm7632, %v7443, 0.0
          %v7735 = vadd.f32 %v7733, %v7734
          %v7736 = vsel %vm7632, %v7444, 0.0
          %v7737 = vadd.f32 %v7735, %v7736
          %v7738 = vsel %vm7632, %v7445, 0.0
          %v7739 = vadd.f32 %v7737, %v7738
          %v7740 = vsel %vm7632, %v7446, 0.0
          %v7741 = vadd.f32 %v7739, %v7740
          %v7742 = vsel %vm7632, %v7447, 0.0
          %v7743 = vadd.f32 %v7741, %v7742
          %v7744 = vsel %vm7632, %v7448, 0.0
          %v7745 = vadd.f32 %v7743, %v7744
          %v7746 = vsel %vm7632, %v7449, 0.0
          %v7747 = vadd.f32 %v7745, %v7746
          %v7748 = vsel %vm7632, %v7450, 0.0
          %v7749 = vadd.f32 %v7747, %v7748
          %v7750 = vsel %vm7632, %v7451, 0.0
          %v7751 = vadd.f32 %v7749, %v7750
          %v7752 = vsel %vm7632, %v7452, 0.0
          %v7753 = vadd.f32 %v7751, %v7752
          %v7754 = vsel %vm7632, %v7453, 0.0
          %v7755 = vadd.f32 %v7753, %v7754
          %v7756 = vsel %vm7632, %v7454, 0.0
          %v7757 = vadd.f32 %v7755, %v7756
          %v7758 = vsel %vm7632, %v7455, 0.0
          %v7759 = vadd.f32 %v7757, %v7758
          %v7760 = vsel %vm7632, %v7456, 0.0
          %v7761 = vadd.f32 %v7759, %v7760
          %v7762 = vsel %vm7632, %v7457, 0.0
          %v7763 = vadd.f32 %v7761, %v7762
          %v7764 = vsel %vm7632, %v7458, 0.0
          %v7765 = vadd.f32 %v7763, %v7764
          %v7766 = vsel %vm7632, %v7459, 0.0
          %v7767 = vadd.f32 %v7765, %v7766
          %v7768 = vsel %vm7632, %v7460, 0.0
          %v7769 = vadd.f32 %v7767, %v7768
          %v7770 = vsel %vm7632, %v7461, 0.0
          %v7771 = vadd.f32 %v7769, %v7770
          %v7772 = vsel %vm7632, %v7462, 0.0
          %v7773 = vadd.f32 %v7771, %v7772
          %v7774 = vsel %vm7632, %v7463, 0.0
          %v7775 = vadd.f32 %v7773, %v7774
          %v7776 = vsel %vm7632, %v7464, 0.0
          %v7777 = vadd.f32 %v7775, %v7776
          %v7778 = vsel %vm7632, %v7465, 0.0
          %v7779 = vadd.f32 %v7777, %v7778
          %v7780 = vsel %vm7632, %v7466, 0.0
          %v7781 = vadd.f32 %v7779, %v7780
          %v7782 = vsel %vm7632, %v7467, 0.0
          %v7783 = vadd.f32 %v7781, %v7782
          %v7784 = vsel %vm7632, %v7468, 0.0
          %v7785 = vadd.f32 %v7783, %v7784
          %v7786 = vsel %vm7632, %v7469, 0.0
          %v7787 = vadd.f32 %v7785, %v7786
          %v7788 = vsel %vm7632, %v7470, 0.0
          %v7789 = vadd.f32 %v7787, %v7788
          %v7790 = vsel %vm7632, %v7471, 0.0
          %v7791 = vadd.f32 %v7789, %v7790
          %v7792 = vsel %vm7632, %v7472, 0.0
          %v7793 = vadd.f32 %v7791, %v7792
          %v7794 = vsel %vm7632, %v7473, 0.0
          %v7795 = vadd.f32 %v7793, %v7794
          %v7796 = vsel %vm7632, %v7474, 0.0
          %v7797 = vadd.f32 %v7795, %v7796
          %v7798 = vsel %vm7632, %v7475, 0.0
          %v7799 = vadd.f32 %v7797, %v7798
          %v7800 = vsel %vm7632, %v7476, 0.0
          %v7801 = vadd.f32 %v7799, %v7800
          %v7802 = vsel %vm7632, %v7477, 0.0
          %v7803 = vadd.f32 %v7801, %v7802
          %v7804 = vsel %vm7632, %v7478, 0.0
          %v7805 = vadd.f32 %v7803, %v7804
          %v7806 = vsel %vm7632, %v7479, 0.0
          %v7807 = vadd.f32 %v7805, %v7806
          %v7808 = vsel %vm7632, %v7480, 0.0
          %v7809 = vadd.f32 %v7807, %v7808
          %v7810 = vsel %vm7632, %v7481, 0.0
          %v7811 = vadd.f32 %v7809, %v7810
          %v7812 = vsel %vm7632, %v7482, 0.0
          %v7813 = vadd.f32 %v7811, %v7812
          %v7814 = vsel %vm7632, %v7483, 0.0
          %v7815 = vadd.f32 %v7813, %v7814
          %v7816 = vsel %vm7632, %v7484, 0.0
          %v7817 = vadd.f32 %v7815, %v7816
          %v7818 = vsel %vm7632, %v7485, 0.0
          %v7819 = vadd.f32 %v7817, %v7818
          %v7820 = vsel %vm7632, %v7486, 0.0
          %v7821 = vadd.f32 %v7819, %v7820
          %v7822 = vsel %vm7632, %v7487, 0.0
          %v7823 = vadd.f32 %v7821, %v7822
          %v7824 = vsel %vm7632, %v7488, 0.0
          %v7825 = vadd.f32 %v7823, %v7824
          %v7826 = vsel %vm7632, %v7489, 0.0
          %v7827 = vadd.f32 %v7825, %v7826
          %v7828 = vsel %vm7632, %v7490, 0.0
          %v7829 = vadd.f32 %v7827, %v7828
          %v7830 = vsel %vm7632, %v7491, 0.0
          %v7831 = vadd.f32 %v7829, %v7830
          %v7832 = vsel %vm7632, %v7492, 0.0
          %v7833 = vadd.f32 %v7831, %v7832
          %v7834 = vsel %vm7632, %v7493, 0.0
          %v7835 = vadd.f32 %v7833, %v7834
          %v7836 = vsel %vm7632, %v7494, 0.0
          %v7837 = vadd.f32 %v7835, %v7836
          %v7838 = vsel %vm7632, %v7495, 0.0
          %v7839 = vadd.f32 %v7837, %v7838
          %v7840 = vsel %vm7632, %v7496, 0.0
          %v7841 = vadd.f32 %v7839, %v7840
          %v7842 = vsel %vm7632, %v7497, 0.0
          %v7843 = vadd.f32 %v7841, %v7842
          %v7844 = vsel %vm7632, %v7498, 0.0
          %v7845 = vadd.f32 %v7843, %v7844
          %v7846 = vsel %vm7632, %v7499, 0.0
          %v7847 = vadd.f32 %v7845, %v7846
          %v7848 = vsel %vm7632, %v7500, 0.0
          %v7849 = vadd.f32 %v7847, %v7848
          %v7850 = vsel %vm7632, %v7501, 0.0
          %v7851 = vadd.f32 %v7849, %v7850
          %v7852 = vsel %vm7632, %v7502, 0.0
          %v7853 = vadd.f32 %v7851, %v7852
          %v7854 = vsel %vm7632, %v7503, 0.0
          %v7855 = vadd.f32 %v7853, %v7854
          %v7856 = vsel %vm7632, %v7504, 0.0
          %v7857 = vadd.f32 %v7855, %v7856
          %v7858 = vsel %vm7632, %v7505, 0.0
          %v7859 = vadd.f32 %v7857, %v7858
          %v7860 = vsel %vm7632, %v7506, 0.0
          %v7861 = vadd.f32 %v7859, %v7860
          %v7862 = vsel %vm7632, %v7507, 0.0
          %v7863 = vadd.f32 %v7861, %v7862
          %v7864 = vsel %vm7632, %v7508, 0.0
          %v7865 = vadd.f32 %v7863, %v7864
          %v7866 = vsel %vm7632, %v7509, 0.0
          %v7867 = vadd.f32 %v7865, %v7866
          %v7868 = vsel %vm7632, %v7510, 0.0
          %v7869 = vadd.f32 %v7867, %v7868
          %v7870 = vsel %vm7632, %v7511, 0.0
          %v7871 = vadd.f32 %v7869, %v7870
          %v7872 = vsel %vm7632, %v7512, 0.0
          %v7873 = vadd.f32 %v7871, %v7872
          %v7874 = vsel %vm7632, %v7513, 0.0
          %v7875 = vadd.f32 %v7873, %v7874
          %v7876 = vsel %vm7632, %v7514, 0.0
          %v7877 = vadd.f32 %v7875, %v7876
          %v7878 = vsel %vm7632, %v7515, 0.0
          %v7879 = vadd.f32 %v7877, %v7878
          %v7880 = vsel %vm7632, %v7516, 0.0
          %v7881 = vadd.f32 %v7879, %v7880
          %v7882 = vsel %vm7632, %v7517, 0.0
          %v7883 = vadd.f32 %v7881, %v7882
          %v7884 = vsel %vm7632, %v7518, 0.0
          %v7885 = vadd.f32 %v7883, %v7884
          %v7886 = vsel %vm7632, %v7519, 0.0
          %v7887 = vadd.f32 %v7885, %v7886
          %v7888 = vsel %vm7632, %v7520, 0.0
          %v7889 = vadd.f32 %v7887, %v7888
          %v7890 = vsel %vm7632, %v7521, 0.0
          %v7891 = vadd.f32 %v7889, %v7890
          %v7892 = vsel %vm7632, %v7522, 0.0
          %v7893 = vadd.f32 %v7891, %v7892
          %v7894 = vsel %vm7632, %v7523, 0.0
          %v7895 = vadd.f32 %v7893, %v7894
          %v7896 = vsel %vm7632, %v7524, 0.0
          %v7897 = vadd.f32 %v7895, %v7896
          %v7898 = vsel %vm7632, %v7525, 0.0
          %v7899 = vadd.f32 %v7897, %v7898
          %v7900 = vsel %vm7632, %v7526, 0.0
          %v7901 = vadd.f32 %v7899, %v7900
          %v7902 = vsel %vm7632, %v7527, 0.0
          %v7903 = vadd.f32 %v7901, %v7902
          %v7904 = vsel %vm7632, %v7528, 0.0
          %v7905 = vadd.f32 %v7903, %v7904
          %v7906 = vsel %vm7632, %v7529, 0.0
          %v7907 = vadd.f32 %v7905, %v7906
          %v7908 = vsel %vm7632, %v7530, 0.0
          %v7909 = vadd.f32 %v7907, %v7908
          %v7910 = vsel %vm7632, %v7531, 0.0
          %v7911 = vadd.f32 %v7909, %v7910
          %v7912 = vsel %vm7632, %v7532, 0.0
          %v7913 = vadd.f32 %v7911, %v7912
          %v7914 = vsel %vm7632, %v7533, 0.0
          %v7915 = vadd.f32 %v7913, %v7914
          %v7916 = vsel %vm7632, %v7534, 0.0
          %v7917 = vadd.f32 %v7915, %v7916
          %v7918 = vsel %vm7632, %v7535, 0.0
          %v7919 = vadd.f32 %v7917, %v7918
          %v7920 = vsel %vm7632, %v7536, 0.0
          %v7921 = vadd.f32 %v7919, %v7920
          %v7922 = vsel %vm7632, %v7537, 0.0
          %v7923 = vadd.f32 %v7921, %v7922
          %v7924 = vsel %vm7632, %v7538, 0.0
          %v7925 = vadd.f32 %v7923, %v7924
          %v7926 = vsel %vm7632, %v7539, 0.0
          %v7927 = vadd.f32 %v7925, %v7926
          %v7928 = vsel %vm7632, %v7540, 0.0
          %v7929 = vadd.f32 %v7927, %v7928
          %v7930 = vsel %vm7632, %v7541, 0.0
          %v7931 = vadd.f32 %v7929, %v7930
          %v7932 = vsel %vm7632, %v7542, 0.0
          %v7933 = vadd.f32 %v7931, %v7932
          %v7934 = vsel %vm7632, %v7543, 0.0
          %v7935 = vadd.f32 %v7933, %v7934
          %v7936 = vsel %vm7632, %v7544, 0.0
          %v7937 = vadd.f32 %v7935, %v7936
          %v7938 = vsel %vm7632, %v7545, 0.0
          %v7939 = vadd.f32 %v7937, %v7938
          %v7940 = vsel %vm7632, %v7546, 0.0
          %v7941 = vadd.f32 %v7939, %v7940
          %v7942 = vsel %vm7632, %v7547, 0.0
          %v7943 = vadd.f32 %v7941, %v7942
          %v7944 = vsel %vm7632, %v7548, 0.0
          %v7945 = vadd.f32 %v7943, %v7944
          %v7946 = vsel %vm7632, %v7549, 0.0
          %v7947 = vadd.f32 %v7945, %v7946
          %v7948 = vsel %vm7632, %v7550, 0.0
          %v7949 = vadd.f32 %v7947, %v7948
          %v7950 = vsel %vm7632, %v7551, 0.0
          %v7951 = vadd.f32 %v7949, %v7950
          %v7952 = vsel %vm7632, %v7552, 0.0
          %v7953 = vadd.f32 %v7951, %v7952
          %v7954 = vsel %vm7632, %v7553, 0.0
          %v7955 = vadd.f32 %v7953, %v7954
          %v7956 = vsel %vm7632, %v7554, 0.0
          %v7957 = vadd.f32 %v7955, %v7956
          %v7958 = vsel %vm7632, %v7555, 0.0
          %v7959 = vadd.f32 %v7957, %v7958
          %v7960 = vsel %vm7632, %v7556, 0.0
          %v7961 = vadd.f32 %v7959, %v7960
          %v7962 = vsel %vm7632, %v7557, 0.0
          %v7963 = vadd.f32 %v7961, %v7962
          %v7964 = vsel %vm7632, %v7558, 0.0
          %v7965 = vadd.f32 %v7963, %v7964
          %v7966 = vsel %vm7632, %v7559, 0.0
          %v7967 = vadd.f32 %v7965, %v7966
          %v7968 = vsel %vm7632, %v7560, 0.0
          %v7969 = vadd.f32 %v7967, %v7968
          %v7970 = vsel %vm7632, %v7561, 0.0
          %v7971 = vadd.f32 %v7969, %v7970
          %v7972 = vsel %vm7632, %v7562, 0.0
          %v7973 = vadd.f32 %v7971, %v7972
          %v7974 = vsel %vm7632, %v7563, 0.0
          %v7975 = vadd.f32 %v7973, %v7974
          %v7976 = vsel %vm7632, %v7564, 0.0
          %v7977 = vadd.f32 %v7975, %v7976
          %v7978 = vsel %vm7632, %v7565, 0.0
          %v7979 = vadd.f32 %v7977, %v7978
          %v7980 = vsel %vm7632, %v7566, 0.0
          %v7981 = vadd.f32 %v7979, %v7980
          %v7982 = vsel %vm7632, %v7567, 0.0
          %v7983 = vadd.f32 %v7981, %v7982
          %v7984 = vsel %vm7632, %v7568, 0.0
          %v7985 = vadd.f32 %v7983, %v7984
          %v7986 = vsel %vm7632, %v7569, 0.0
          %v7987 = vadd.f32 %v7985, %v7986
          %v7988 = vsel %vm7632, %v7570, 0.0
          %v7989 = vadd.f32 %v7987, %v7988
          %v7990 = vsel %vm7632, %v7571, 0.0
          %v7991 = vadd.f32 %v7989, %v7990
          %v7992 = vsel %vm7632, %v7572, 0.0
          %v7993 = vadd.f32 %v7991, %v7992
          %v7994 = vsel %vm7632, %v7573, 0.0
          %v7995 = vadd.f32 %v7993, %v7994
          %v7996 = vsel %vm7632, %v7574, 0.0
          %v7997 = vadd.f32 %v7995, %v7996
          %v7998 = vsel %vm7632, %v7575, 0.0
          %v7999 = vadd.f32 %v7997, %v7998
          %v8000 = vsel %vm7632, %v7576, 0.0
          %v8001 = vadd.f32 %v7999, %v8000
          %v8002 = vsel %vm7632, %v7577, 0.0
          %v8003 = vadd.f32 %v8001, %v8002
          %v8004 = vsel %vm7632, %v7578, 0.0
          %v8005 = vadd.f32 %v8003, %v8004
          %v8006 = vsel %vm7632, %v7579, 0.0
          %v8007 = vadd.f32 %v8005, %v8006
          %v8008 = vsel %vm7632, %v7580, 0.0
          %v8009 = vadd.f32 %v8007, %v8008
          %v8010 = vsel %vm7632, %v7581, 0.0
          %v8011 = vadd.f32 %v8009, %v8010
          %v8012 = vsel %vm7632, %v7582, 0.0
          %v8013 = vadd.f32 %v8011, %v8012
          %v8014 = vsel %vm7632, %v7583, 0.0
          %v8015 = vadd.f32 %v8013, %v8014
          %v8016 = vsel %vm7632, %v7584, 0.0
          %v8017 = vadd.f32 %v8015, %v8016
          %v8018 = vsel %vm7632, %v7585, 0.0
          %v8019 = vadd.f32 %v8017, %v8018
          %v8020 = vsel %vm7632, %v7586, 0.0
          %v8021 = vadd.f32 %v8019, %v8020
          %v8022 = vsel %vm7632, %v7587, 0.0
          %v8023 = vadd.f32 %v8021, %v8022
          %v8024 = vsel %vm7632, %v7588, 0.0
          %v8025 = vadd.f32 %v8023, %v8024
          %v8026 = vsel %vm7632, %v7589, 0.0
          %v8027 = vadd.f32 %v8025, %v8026
          %v8028 = vsel %vm7632, %v7590, 0.0
          %v8029 = vadd.f32 %v8027, %v8028
          %v8030 = vsel %vm7632, %v7591, 0.0
          %v8031 = vadd.f32 %v8029, %v8030
          %v8032 = vsel %vm7632, %v7592, 0.0
          %v8033 = vadd.f32 %v8031, %v8032
          %v8034 = vsel %vm7632, %v7593, 0.0
          %v8035 = vadd.f32 %v8033, %v8034
          %v8036 = vsel %vm7632, %v7594, 0.0
          %v8037 = vadd.f32 %v8035, %v8036
          %v8038 = vsel %vm7632, %v7595, 0.0
          %v8039 = vadd.f32 %v8037, %v8038
          %v8040 = vsel %vm7632, %v7596, 0.0
          %v8041 = vadd.f32 %v8039, %v8040
          %v8042 = vsel %vm7632, %v7597, 0.0
          %v8043 = vadd.f32 %v8041, %v8042
          %v8044 = vsel %vm7632, %v7598, 0.0
          %v8045 = vadd.f32 %v8043, %v8044
          %v8046 = vsel %vm7632, %v7599, 0.0
          %v8047 = vadd.f32 %v8045, %v8046
          %v8048 = vsel %vm7632, %v7600, 0.0
          %v8049 = vadd.f32 %v8047, %v8048
          %v8050 = vsel %vm7632, %v7601, 0.0
          %v8051 = vadd.f32 %v8049, %v8050
          %v8052 = vsel %vm7632, %v7602, 0.0
          %v8053 = vadd.f32 %v8051, %v8052
          %v8054 = vsel %vm7632, %v7603, 0.0
          %v8055 = vadd.f32 %v8053, %v8054
          %v8056 = vsel %vm7632, %v7604, 0.0
          %v8057 = vadd.f32 %v8055, %v8056
          %v8058 = vsel %vm7632, %v7605, 0.0
          %v8059 = vadd.f32 %v8057, %v8058
          %v8060 = vsel %vm7632, %v7606, 0.0
          %v8061 = vadd.f32 %v8059, %v8060
          %v8062 = vsel %vm7632, %v7607, 0.0
          %v8063 = vadd.f32 %v8061, %v8062
          %v8064 = vsel %vm7632, %v7608, 0.0
          %v8065 = vadd.f32 %v8063, %v8064
          %v8066 = vsel %vm7632, %v7609, 0.0
          %v8067 = vadd.f32 %v8065, %v8066
          %v8068 = vsel %vm7632, %v7610, 0.0
          %v8069 = vadd.f32 %v8067, %v8068
          %v8070 = vsel %vm7632, %v7611, 0.0
          %v8071 = vadd.f32 %v8069, %v8070
          %v8072 = vsel %vm7632, %v7612, 0.0
          %v8073 = vadd.f32 %v8071, %v8072
          %v8074 = vsel %vm7632, %v7613, 0.0
          %v8075 = vadd.f32 %v8073, %v8074
          %v8076 = vsel %vm7632, %v7614, 0.0
          %v8077 = vadd.f32 %v8075, %v8076
          %v8078 = vsel %vm7632, %v7615, 0.0
          %v8079 = vadd.f32 %v8077, %v8078
          %v8080 = vsel %vm7632, %v7616, 0.0
          %v8081 = vadd.f32 %v8079, %v8080
          %v8082 = vsel %vm7632, %v7617, 0.0
          %v8083 = vadd.f32 %v8081, %v8082
          %v8084 = vsel %vm7632, %v7618, 0.0
          %v8085 = vadd.f32 %v8083, %v8084
          %v8086 = vsel %vm7632, %v7619, 0.0
          %v8087 = vadd.f32 %v8085, %v8086
          %v8088 = vsel %vm7632, %v7620, 0.0
          %v8089 = vadd.f32 %v8087, %v8088
          %v8090 = vsel %vm7632, %v7621, 0.0
          %v8091 = vadd.f32 %v8089, %v8090
          %v8092 = vsel %vm7632, %v7622, 0.0
          %v8093 = vadd.f32 %v8091, %v8092
          %v8094 = vsel %vm7632, %v7623, 0.0
          %v8095 = vadd.f32 %v8093, %v8094
          %v8096 = vsel %vm7632, %v7624, 0.0
          %v8097 = vadd.f32 %v8095, %v8096
          %v8098 = vsel %vm7632, %v7625, 0.0
          %v8099 = vadd.f32 %v8097, %v8098
          %v8100 = vsel %vm7632, %v7626, 0.0
          %v8101 = vadd.f32 %v8099, %v8100
          %v8102 = vsel %vm7632, %v7627, 0.0
          %v8103 = vadd.f32 %v8101, %v8102
          %v8104 = vsel %vm7632, %v7628, 0.0
          %v8105 = vadd.f32 %v8103, %v8104
          %v8106 = vsel %vm7632, %v7629, 0.0
          %v8107 = vadd.f32 %v8105, %v8106
          %v8108 = vsel %vm7632, %v7630, 0.0
          %v8109 = vadd.f32 %v8107, %v8108
          %v8110 = vsel %vm7632, %v7631, 0.0
          %v8111 = vadd.f32 %v8109, %v8110
          %v8112 = vrot.slane %v8111, 4
          %v8113 = vadd.f32 %v8111, %v8112
          %v8114 = vrot.slane %v8113, 2
          %v8115 = vadd.f32 %v8113, %v8114
          %v8116 = vrot.slane %v8115, 1
          %v8117 = vadd.f32 %v8115, %v8116
          %v8118 = vld [vmem:[%s4] sm:$0x1]
          %v8119 = vadd.f32 %v8117, %v8118
          %vm8120 = vcmask 16384
          %8121 = vst.msk [vmem:[%s270] sm:$0x1] %vm8120, %v8119
        $region56: #{_lambda_.5} parent=39 // pred_fallthru
          _
        %s8122 = sand.u32 %s153, 1
        %s8123 = scalar_lea.sflag [#allocation5], %s8122
        %s8124 = sand.u32 %s153, 1
        %s8125 = scalar_lea.vmem [#allocation8], %s8124
        // Predicated region
        $region57: #{_lambda_.5} parent=39 // pred_check
          %p8126 = pneg %p163
        $region58: #{_lambda_.5} parent=39 // pred_check_branch
          %8128 = sbr.rel (%p8126) target = $region60
        $region59: #{_lambda_.5} parent=39 // pred_region
          %8130 = vsyncadd %s8123, 0
          %s8131 = scalar_lea.hbm %s5, %s25
          %s8133 = sshll.u32 %s8125, 4
          %s8134 = int_to_ptr.vmem [resolvable:$true] %s8133
          %s8135 = sshll.u32 %s8131, 4
          %s8136 = int_to_ptr.hbm [resolvable:$true] %s8135
          %8138 = dma.vmem_to_hbm [thread:$0]  %s8134, 16, %s8136, %s8123
        $region60: #{_lambda_.5} parent=39 // pred_fallthru
          _
      $region40: #{_lambda_.5} parent=5 // pred_fallthru
        _
      %p8139 = scmp.le.s32.totalorder 2, %s16
      // Predicated region
      $region61: #{_lambda_.5} parent=5 // pred_check
        %p8140 = pneg %p8139
      $region62: #{_lambda_.5} parent=5 // pred_check_branch
        %8142 = sbr.rel (%p8140) target = $region64
      $region63: #{_lambda_.5} parent=5 // pred_region
        %s8143 = ssub.s32 %s16, 2
        // Predicated region
        $region65: #{_lambda_.5} parent=63 // pred_check
          %p8144 = pneg %p169
        $region66: #{_lambda_.5} parent=63 // pred_check_branch
          %8146 = sbr.rel (%p8144) target = $region68
        $region67: #{_lambda_.5} parent=63 // pred_region
          %s8147 = sand.u32 %s154, 1
          %s8148 = scalar_lea.sflag [#allocation5], %s8147
          %s8149 = sand.u32 %s154, 1
          %s8150 = scalar_lea.vmem [#allocation8], %s8149
          %8152 = dma.done %s8148, 16
        $region68: #{_lambda_.5} parent=63 // pred_fallthru
          _
      $region64: #{_lambda_.5} parent=5 // pred_fallthru
        _
    $region6: #{_lambda_.5} parent=1 // loop_footer
      %s20 = sadd.s32 1, %s16
    $region7: #{_lambda_.5} parent=1 // loop_footer_branch
      %15 = sbr.rel target = $region3
    $region8: #{_lambda_.5} parent=1 // loop_exit
      _
    %8153 = vsyncpa [#allocation4], 1
    %s8154 = scalar_lea.sflag [#allocation4], 1
    %8155 = vsyncpa %s8154, 1
    %8156 = vsyncpa [#allocation7], 1
    %8157 = vsyncpa [#allocation5], 1
    %s8158 = scalar_lea.sflag [#allocation5], 1
    %8159 = vsyncpa %s8158, 1

</llo_original>
